<compile_context>
chip_gen: v6e
topology: v6e:2x2x1
jax: 0.10.0
libtpu: 0.0.40
codegen_flags: <defaults>
</compile_context>

<pallas_src>
import math

import jax
import jax.numpy as jnp
from jax.experimental import pallas as pl
from jax.experimental.pallas import tpu as pltpu


_TM_MAX = 7168                      # conv1: grid=2 -> one tile per v7x TC
_VMEM_LIMIT = 32 * 1024 * 1024      # explicit; safe on v5e/v6e/v7x

# name -> (out_channels, oc_pad, kernel, stride)  (static architecture config)
_CONV_CFG = {
    "conv1": (6, 8, 5, 3),
    "conv2": (12, 16, 5, 3),
    "conv3": (24, 24, 5, 3),
}


def _round_up(x, m):
    return ((x + m - 1) // m) * m


# ---------------------------------------------------------------------------
# Pallas kernel: one lane-dense tile  out(OCp, tm) = relu(W @ patches + b)
# Operands stored bf16; dot computed in f32 (f32 x f32 -> f32) for portability.
# ---------------------------------------------------------------------------
def _conv_matmul_kernel(w_ref, x_ref, b_ref, o_ref):
    # w_ref: (OCp, Kp) bf16, x_ref: (Kp, tm) bf16, b_ref: (OCp, 1) f32
    acc = jnp.dot(w_ref[...].astype(jnp.float32),
                  x_ref[...].astype(jnp.float32),
                  preferred_element_type=jnp.float32)
    acc = acc + b_ref[...]                       # (OCp, 1) broadcasts over lanes
    o_ref[...] = jnp.maximum(acc, 0.0).astype(o_ref.dtype)   # bf16 store


def conv_layer(x_cm, w_mat, b_col, oc, kh, kw, stride):
    """Channel-major conv + ReLU.

    x_cm  : (IC, N, H, W) bf16  -- channel-major activation
    w_mat : (OCp, Kp) bf16      -- pre-formatted weights, (kh, kw, ic) row order
    b_col : (OCp, 1) f32
    returns (OC, N, OH, OW) bf16.
    """
    oc_pad, kp = w_mat.shape
    ic, n, h, w = x_cm.shape
    oh = (h - kh) // stride + 1
    ow = (w - kw) // stride + 1
    k = kh * kw * ic
    m = n * oh * ow
    mp = _round_up(m, 128)
    if mp <= _TM_MAX:
        tm = mp
    else:
        tm = _TM_MAX
        mp = _round_up(m, tm)

    # im2col in transposed (K, M) layout, built directly in bf16 (input is
    # already bf16).  Pure data rearrangement; fused by XLA with the pad.
    pieces = []
    for i in range(kh):
        for j in range(kw):
            pieces.append(jax.lax.slice(
                x_cm,
                (0, 0, i, j),
                (ic, n, i + (oh - 1) * stride + 1, j + (ow - 1) * stride + 1),
                (1, 1, stride, stride)))                  # (IC, N, OH, OW)
    cols = jnp.stack(pieces, axis=0).reshape(k, m)        # K order = (kh, kw, ic)
    cols = jnp.pad(cols, ((0, kp - k), (0, mp - m)))      # zero rows/cols, bf16

    out = pl.pallas_call(
        _conv_matmul_kernel,
        out_shape=jax.ShapeDtypeStruct((oc_pad, mp), jnp.bfloat16),
        grid=(mp // tm,),
        in_specs=[
            pl.BlockSpec((oc_pad, kp), lambda i: (0, 0)),
            pl.BlockSpec((kp, tm), lambda i: (0, i)),
            pl.BlockSpec((oc_pad, 1), lambda i: (0, 0)),
        ],
        out_specs=pl.BlockSpec((oc_pad, tm), lambda i: (0, i)),
        compiler_params=pltpu.CompilerParams(
            dimension_semantics=("parallel",),
            vmem_limit_bytes=_VMEM_LIMIT),
    )(w_mat, cols, b_col)

    # Drop padded channels / padded M columns; result stays channel-major bf16.
    return out[:oc, :m].reshape(oc, n, oh, ow)


# ---------------------------------------------------------------------------
# Pallas kernel: fused fc1 -> fc2 -> fc3 -> fc4 (bias + ReLU, all in f32)
# ---------------------------------------------------------------------------
def _fc_fused_kernel(x_ref, w1_ref, b1_ref, w2_ref, b2_ref,
                     w3_ref, b3_ref, w4_ref, b4_ref, o_ref):
    def layer(h, w_ref, b_ref, relu):
        acc = jnp.dot(h, w_ref[...].astype(jnp.float32),
                      preferred_element_type=jnp.float32)
        acc = acc + b_ref[...]
        return jnp.maximum(acc, 0.0) if relu else acc

    h = x_ref[...].astype(jnp.float32)
    h = layer(h, w1_ref, b1_ref, True)
    h = layer(h, w2_ref, b2_ref, True)
    h = layer(h, w3_ref, b3_ref, True)
    h = layer(h, w4_ref, b4_ref, False)
    o_ref[...] = h.astype(o_ref.dtype)


def fc_head(feat, prep):
    """feat: (N, 1536) bf16 -> (N, 2) f32; all four Linear layers in one call."""
    n = feat.shape[0]
    ops = [
        feat,
        prep["fc1_w"], prep["fc1_b"],
        prep["fc2_w"], prep["fc2_b"],
        prep["fc3_w"], prep["fc3_b"],
        prep["fc4_w"], prep["fc4_b"],
    ]
    n_out = prep["fc4_w"].shape[1]
    return pl.pallas_call(
        _fc_fused_kernel,
        out_shape=jax.ShapeDtypeStruct((n, n_out), jnp.float32),
        grid=(1,),
        in_specs=[pl.BlockSpec(op.shape, lambda i: (0, 0)) for op in ops],
        out_specs=pl.BlockSpec((n, n_out), lambda i: (0, 0)),
        compiler_params=pltpu.CompilerParams(
            dimension_semantics=("arbitrary",),
            vmem_limit_bytes=_VMEM_LIMIT),
    )(*ops)


# ---------------------------------------------------------------------------
# Parameter init (deterministic, PyTorch-default-style uniform bounds)
# ---------------------------------------------------------------------------
def _uniform(key, shape, bound):
    return jax.random.uniform(key, shape, jnp.float32, -bound, bound)


def init_params(key):
    ks = jax.random.split(key, 14)
    p = {}

    def conv_init(kw_key, kb_key, oc, ic, k):
        fan_in = ic * k * k
        bound = 1.0 / math.sqrt(fan_in)
        return (_uniform(kw_key, (oc, ic, k, k), bound),
                _uniform(kb_key, (oc,), bound))

    def fc_init(kw_key, kb_key, out_f, in_f):
        bound = 1.0 / math.sqrt(in_f)
        # stored already transposed: (in, out)
        return (_uniform(kw_key, (in_f, out_f), bound),
                _uniform(kb_key, (out_f,), bound))

    p["conv1_w"], p["conv1_b"] = conv_init(ks[0], ks[1], 6, 3, 5)
    p["conv2_w"], p["conv2_b"] = conv_init(ks[2], ks[3], 12, 6, 5)
    p["conv3_w"], p["conv3_b"] = conv_init(ks[4], ks[5], 24, 12, 5)
    p["fc1_w"], p["fc1_b"] = fc_init(ks[6], ks[7], 480, 24 * 8 * 8)
    p["fc2_w"], p["fc2_b"] = fc_init(ks[8], ks[9], 120, 480)
    p["fc3_w"], p["fc3_b"] = fc_init(ks[10], ks[11], 30, 120)
    p["fc4_w"], p["fc4_b"] = fc_init(ks[12], ks[13], 2, 30)
    return p


def prepare_params(p):
    """One-time weight formatting, hoisted out of the jitted forward pass."""
    prep = {}
    for name, (oc, oc_pad, ksz, _stride) in _CONV_CFG.items():
        w_pt = p[name + "_w"]                         # (OC, IC, KH, KW)
        _, ic, kh, kw = w_pt.shape
        k = kh * kw * ic
        kp = _round_up(k, 16)                         # bf16 sublane packing
        # (OC, K) with (kh, kw, ic) row order matching the im2col stack.
        w_mat = jnp.transpose(w_pt, (2, 3, 1, 0)).reshape(k, oc).T
        w_mat = jnp.pad(w_mat, ((0, oc_pad - oc), (0, kp - k))).astype(jnp.bfloat16)
        b_col = jnp.pad(p[name + "_b"], (0, oc_pad - oc)).astype(jnp.float32)
        prep[name + "_w"] = w_mat
        prep[name + "_b"] = b_col.reshape(oc_pad, 1)
    for i in (1, 2, 3, 4):
        prep[f"fc{i}_w"] = p[f"fc{i}_w"].astype(jnp.bfloat16)
        prep[f"fc{i}_b"] = p[f"fc{i}_b"].astype(jnp.float32).reshape(1, -1)
    return prep


# ---------------------------------------------------------------------------
# Forward pass (mirrors ConvNet256.forward)
# ---------------------------------------------------------------------------
def convnet256_forward(prep, x_nchw):
    # NCHW -> channel-major (C, N, H, W), cast to bf16 ONCE before im2col.
    x_cm = jnp.transpose(x_nchw, (1, 0, 2, 3)).astype(jnp.bfloat16)

    for name in ("conv1", "conv2", "conv3"):
        oc, _oc_pad, ksz, stride = _CONV_CFG[name]
        x_cm = conv_layer(x_cm, prep[name + "_w"], prep[name + "_b"],
                          oc, ksz, ksz, stride)
    # shapes: (6, N, 84, 84) -> (12, N, 27, 27) -> (24, N, 8, 8)

    # PyTorch flattens NCHW: feature index = c*64 + h*8 + w.
    oc, n, oh, ow = x_cm.shape
    feat = jnp.transpose(x_cm, (1, 0, 2, 3)).reshape(n, oc * oh * ow)  # (N, 1536)

    return fc_head(feat, prep)                                          # (N, 2)


if __name__ == "__main__":
    key = jax.random.PRNGKey(0)
    pkey, xkey = jax.random.split(key)
    params = init_params(pkey)
    prep = prepare_params(params)          # one-time formatting, outside jit

    # Architecture requires 256x256 spatial input so conv3 yields 8x8
    # (fc1 expects 24*8*8 features).  Batch kept small.
    x = jax.random.normal(xkey, (2, 3, 256, 256), dtype=jnp.float32)

    out = jax.jit(convnet256_forward)(prep, x)
    out = jax.block_until_ready(out)
    assert out.shape == (2, 2), out.shape
    print("KERNEL_OK")
</pallas_src>

<mosaic_0001>
module attributes {stable_mosaic.version = 11 : i64} {
  func.func @_conv_matmul_kernel(%arg0: i32, %arg1: memref<8x80xbf16, #tpu.memory_space<vmem>>, %arg2: memref<80x7168xbf16, #tpu.memory_space<vmem>>, %arg3: memref<8x1xf32, #tpu.memory_space<vmem>>, %arg4: memref<8x7168xbf16, #tpu.memory_space<vmem>>) attributes {dimension_semantics = [#tpu.dimension_semantics<parallel>], iteration_bounds = array<i64: 2>, scalar_prefetch = 0 : i64, scratch_operands = 0 : i64, tpu.core_type = #tpu.core_type<tc>, window_params = [{pipeline_mode = #tpu.pipeline_mode<synchronous>, transform_indices = @transform_0, window_bounds = array<i64: 8, 80>}, {transform_indices = @transform_1, window_bounds = array<i64: 80, 7168>}, {pipeline_mode = #tpu.pipeline_mode<synchronous>, transform_indices = @transform_2, window_bounds = array<i64: 8, 1>}, {transform_indices = @transform_3, window_bounds = array<i64: 8, 7168>}]} {
    %c0 = arith.constant 0 : index
    %c0_0 = arith.constant 0 : index
    %0 = vector.load %arg1[%c0, %c0_0] : memref<8x80xbf16, #tpu.memory_space<vmem>>, vector<8x80xbf16>
    %1 = arith.extf %0 : vector<8x80xbf16> to vector<8x80xf32>
    %c0_1 = arith.constant 0 : index
    %c0_2 = arith.constant 0 : index
    %2 = vector.load %arg2[%c0_1, %c0_2] : memref<80x7168xbf16, #tpu.memory_space<vmem>>, vector<80x7168xbf16>
    %3 = arith.extf %2 : vector<80x7168xbf16> to vector<80x7168xf32>
    %cst = arith.constant dense<0.000000e+00> : vector<8x7168xf32>
    %4 = tpu.matmul %1, %3, %cst {dimension_numbers = #tpu.dot_dimension_numbers<[1], [0], [0], [1], [0, 0, 1, 1], [], []>} : vector<8x80xf32>, vector<80x7168xf32>, vector<8x7168xf32> -> vector<8x7168xf32>
    %c0_3 = arith.constant 0 : index
    %c0_4 = arith.constant 0 : index
    %5 = vector.load %arg3[%c0_3, %c0_4] : memref<8x1xf32, #tpu.memory_space<vmem>>, vector<8x1xf32>
    %6 = vector.broadcast %5 : vector<8x1xf32> to vector<8x7168xf32>
    %7 = arith.addf %4, %6 : vector<8x7168xf32>
    %cst_5 = arith.constant 0.000000e+00 : f32
    %8 = vector.broadcast %cst_5 : f32 to vector<8x7168xf32>
    %9 = arith.maximumf %7, %8 : vector<8x7168xf32>
    %10 = arith.truncf %9 : vector<8x7168xf32> to vector<8x7168xbf16>
    %c0_6 = arith.constant 0 : index
    %c0_7 = arith.constant 0 : index
    %11 = vector.load %arg4[%c0_6, %c0_7] : memref<8x7168xbf16, #tpu.memory_space<vmem>>, vector<8x7168xbf16>
    tpu.vector_store %arg4[%c0_6, %c0_7], %10 {strides = array<i32>} : memref<8x7168xbf16, #tpu.memory_space<vmem>>, vector<8x7168xbf16>,
    return
  }
  func.func @transform_0(%arg0: i32) -> (i32, i32) {
    %c0_i32 = arith.constant 0 : i32
    %c0_i32_0 = arith.constant 0 : i32
    %c0_i32_1 = arith.constant 0 : i32
    return %c0_i32, %c0_i32_0 : i32, i32
  }
  func.func @transform_1(%arg0: i32) -> (i32, i32) {
    %c0_i32 = arith.constant 0 : i32
    %c0_i32_0 = arith.constant 0 : i32
    return %c0_i32, %arg0 : i32, i32
  }
  func.func @transform_2(%arg0: i32) -> (i32, i32) {
    %c0_i32 = arith.constant 0 : i32
    %c0_i32_0 = arith.constant 0 : i32
    %c0_i32_1 = arith.constant 0 : i32
    return %c0_i32, %c0_i32_0 : i32, i32
  }
  func.func @transform_3(%arg0: i32) -> (i32, i32) {
    %c0_i32 = arith.constant 0 : i32
    %c0_i32_0 = arith.constant 0 : i32
    return %c0_i32, %arg0 : i32, i32
  }
}

module attributes {stable_mosaic.version = 11 : i64} {
  func.func @_conv_matmul_kernel(%arg0: i32, %arg1: memref<16x160xbf16, #tpu.memory_space<vmem>>, %arg2: memref<160x1536xbf16, #tpu.memory_space<vmem>>, %arg3: memref<16x1xf32, #tpu.memory_space<vmem>>, %arg4: memref<16x1536xbf16, #tpu.memory_space<vmem>>) attributes {dimension_semantics = [#tpu.dimension_semantics<parallel>], iteration_bounds = array<i64: 1>, scalar_prefetch = 0 : i64, scratch_operands = 0 : i64, tpu.core_type = #tpu.core_type<tc>, window_params = [{pipeline_mode = #tpu.pipeline_mode<synchronous>, transform_indices = @transform_0, window_bounds = array<i64: 16, 160>}, {transform_indices = @transform_1, window_bounds = array<i64: 160, 1536>}, {pipeline_mode = #tpu.pipeline_mode<synchronous>, transform_indices = @transform_2, window_bounds = array<i64: 16, 1>}, {transform_indices = @transform_3, window_bounds = array<i64: 16, 1536>}]} {
    %c0 = arith.constant 0 : index
    %c0_0 = arith.constant 0 : index
    %0 = vector.load %arg1[%c0, %c0_0] : memref<16x160xbf16, #tpu.memory_space<vmem>>, vector<16x160xbf16>
    %1 = arith.extf %0 : vector<16x160xbf16> to vector<16x160xf32>
    %c0_1 = arith.constant 0 : index
    %c0_2 = arith.constant 0 : index
    %2 = vector.load %arg2[%c0_1, %c0_2] : memref<160x1536xbf16, #tpu.memory_space<vmem>>, vector<160x1536xbf16>
    %3 = arith.extf %2 : vector<160x1536xbf16> to vector<160x1536xf32>
    %cst = arith.constant dense<0.000000e+00> : vector<16x1536xf32>
    %4 = tpu.matmul %1, %3, %cst {dimension_numbers = #tpu.dot_dimension_numbers<[1], [0], [0], [1], [0, 0, 1, 1], [], []>} : vector<16x160xf32>, vector<160x1536xf32>, vector<16x1536xf32> -> vector<16x1536xf32>
    %c0_3 = arith.constant 0 : index
    %c0_4 = arith.constant 0 : index
    %5 = vector.load %arg3[%c0_3, %c0_4] : memref<16x1xf32, #tpu.memory_space<vmem>>, vector<16x1xf32>
    %6 = vector.broadcast %5 : vector<16x1xf32> to vector<16x1536xf32>
    %7 = arith.addf %4, %6 : vector<16x1536xf32>
    %cst_5 = arith.constant 0.000000e+00 : f32
    %8 = vector.broadcast %cst_5 : f32 to vector<16x1536xf32>
    %9 = arith.maximumf %7, %8 : vector<16x1536xf32>
    %10 = arith.truncf %9 : vector<16x1536xf32> to vector<16x1536xbf16>
    %c0_6 = arith.constant 0 : index
    %c0_7 = arith.constant 0 : index
    %11 = vector.load %arg4[%c0_6, %c0_7] : memref<16x1536xbf16, #tpu.memory_space<vmem>>, vector<16x1536xbf16>
    tpu.vector_store %arg4[%c0_6, %c0_7], %10 {strides = array<i32>} : memref<16x1536xbf16, #tpu.memory_space<vmem>>, vector<16x1536xbf16>,
    return
  }
  func.func @transform_0(%arg0: i32) -> (i32, i32) {
    %c0_i32 = arith.constant 0 : i32
    %c0_i32_0 = arith.constant 0 : i32
    %c0_i32_1 = arith.constant 0 : i32
    return %c0_i32, %c0_i32_0 : i32, i32
  }
  func.func @transform_1(%arg0: i32) -> (i32, i32) {
    %c0_i32 = arith.constant 0 : i32
    %c0_i32_0 = arith.constant 0 : i32
    return %c0_i32, %arg0 : i32, i32
  }
  func.func @transform_2(%arg0: i32) -> (i32, i32) {
    %c0_i32 = arith.constant 0 : i32
    %c0_i32_0 = arith.constant 0 : i32
    %c0_i32_1 = arith.constant 0 : i32
    return %c0_i32, %c0_i32_0 : i32, i32
  }
  func.func @transform_3(%arg0: i32) -> (i32, i32) {
    %c0_i32 = arith.constant 0 : i32
    %c0_i32_0 = arith.constant 0 : i32
    return %c0_i32, %arg0 : i32, i32
  }
}

module attributes {stable_mosaic.version = 11 : i64} {
  func.func @_conv_matmul_kernel(%arg0: i32, %arg1: memref<24x304xbf16, #tpu.memory_space<vmem>>, %arg2: memref<304x128xbf16, #tpu.memory_space<vmem>>, %arg3: memref<24x1xf32, #tpu.memory_space<vmem>>, %arg4: memref<24x128xbf16, #tpu.memory_space<vmem>>) attributes {dimension_semantics = [#tpu.dimension_semantics<parallel>], iteration_bounds = array<i64: 1>, scalar_prefetch = 0 : i64, scratch_operands = 0 : i64, tpu.core_type = #tpu.core_type<tc>, window_params = [{pipeline_mode = #tpu.pipeline_mode<synchronous>, transform_indices = @transform_0, window_bounds = array<i64: 24, 304>}, {transform_indices = @transform_1, window_bounds = array<i64: 304, 128>}, {pipeline_mode = #tpu.pipeline_mode<synchronous>, transform_indices = @transform_2, window_bounds = array<i64: 24, 1>}, {transform_indices = @transform_3, window_bounds = array<i64: 24, 128>}]} {
    %c0 = arith.constant 0 : index
    %c0_0 = arith.constant 0 : index
    %0 = vector.load %arg1[%c0, %c0_0] : memref<24x304xbf16, #tpu.memory_space<vmem>>, vector<24x304xbf16>
    %1 = arith.extf %0 : vector<24x304xbf16> to vector<24x304xf32>
    %c0_1 = arith.constant 0 : index
    %c0_2 = arith.constant 0 : index
    %2 = vector.load %arg2[%c0_1, %c0_2] : memref<304x128xbf16, #tpu.memory_space<vmem>>, vector<304x128xbf16>
    %3 = arith.extf %2 : vector<304x128xbf16> to vector<304x128xf32>
    %cst = arith.constant dense<0.000000e+00> : vector<24x128xf32>
    %4 = tpu.matmul %1, %3, %cst {dimension_numbers = #tpu.dot_dimension_numbers<[1], [0], [0], [1], [0, 0, 1, 1], [], []>} : vector<24x304xf32>, vector<304x128xf32>, vector<24x128xf32> -> vector<24x128xf32>
    %c0_3 = arith.constant 0 : index
    %c0_4 = arith.constant 0 : index
    %5 = vector.load %arg3[%c0_3, %c0_4] : memref<24x1xf32, #tpu.memory_space<vmem>>, vector<24x1xf32>
    %6 = vector.broadcast %5 : vector<24x1xf32> to vector<24x128xf32>
    %7 = arith.addf %4, %6 : vector<24x128xf32>
    %cst_5 = arith.constant 0.000000e+00 : f32
    %8 = vector.broadcast %cst_5 : f32 to vector<24x128xf32>
    %9 = arith.maximumf %7, %8 : vector<24x128xf32>
    %10 = arith.truncf %9 : vector<24x128xf32> to vector<24x128xbf16>
    %c0_6 = arith.constant 0 : index
    %c0_7 = arith.constant 0 : index
    %11 = vector.load %arg4[%c0_6, %c0_7] : memref<24x128xbf16, #tpu.memory_space<vmem>>, vector<24x128xbf16>
    tpu.vector_store %arg4[%c0_6, %c0_7], %10 {strides = array<i32>} : memref<24x128xbf16, #tpu.memory_space<vmem>>, vector<24x128xbf16>,
    return
  }
  func.func @transform_0(%arg0: i32) -> (i32, i32) {
    %c0_i32 = arith.constant 0 : i32
    %c0_i32_0 = arith.constant 0 : i32
    %c0_i32_1 = arith.constant 0 : i32
    return %c0_i32, %c0_i32_0 : i32, i32
  }
  func.func @transform_1(%arg0: i32) -> (i32, i32) {
    %c0_i32 = arith.constant 0 : i32
    %c0_i32_0 = arith.constant 0 : i32
    return %c0_i32, %arg0 : i32, i32
  }
  func.func @transform_2(%arg0: i32) -> (i32, i32) {
    %c0_i32 = arith.constant 0 : i32
    %c0_i32_0 = arith.constant 0 : i32
    %c0_i32_1 = arith.constant 0 : i32
    return %c0_i32, %c0_i32_0 : i32, i32
  }
  func.func @transform_3(%arg0: i32) -> (i32, i32) {
    %c0_i32 = arith.constant 0 : i32
    %c0_i32_0 = arith.constant 0 : i32
    return %c0_i32, %arg0 : i32, i32
  }
}

module attributes {stable_mosaic.version = 11 : i64} {
  func.func @_fc_fused_kernel(%arg0: i32, %arg1: memref<2x1536xbf16, #tpu.memory_space<vmem>>, %arg2: memref<1536x480xbf16, #tpu.memory_space<vmem>>, %arg3: memref<1x480xf32, #tpu.memory_space<vmem>>, %arg4: memref<480x120xbf16, #tpu.memory_space<vmem>>, %arg5: memref<1x120xf32, #tpu.memory_space<vmem>>, %arg6: memref<120x30xbf16, #tpu.memory_space<vmem>>, %arg7: memref<1x30xf32, #tpu.memory_space<vmem>>, %arg8: memref<30x2xbf16, #tpu.memory_space<vmem>>, %arg9: memref<1x2xf32, #tpu.memory_space<vmem>>, %arg10: memref<2x2xf32, #tpu.memory_space<vmem>>) attributes {dimension_semantics = [#tpu.dimension_semantics<arbitrary>], iteration_bounds = array<i64: 1>, scalar_prefetch = 0 : i64, scratch_operands = 0 : i64, tpu.core_type = #tpu.core_type<tc>, window_params = [{pipeline_mode = #tpu.pipeline_mode<synchronous>, transform_indices = @transform_0, window_bounds = array<i64: 2, 1536>}, {pipeline_mode = #tpu.pipeline_mode<synchronous>, transform_indices = @transform_1, window_bounds = array<i64: 1536, 480>}, {pipeline_mode = #tpu.pipeline_mode<synchronous>, transform_indices = @transform_2, window_bounds = array<i64: 1, 480>}, {pipeline_mode = #tpu.pipeline_mode<synchronous>, transform_indices = @transform_3, window_bounds = array<i64: 480, 120>}, {pipeline_mode = #tpu.pipeline_mode<synchronous>, transform_indices = @transform_4, window_bounds = array<i64: 1, 120>}, {pipeline_mode = #tpu.pipeline_mode<synchronous>, transform_indices = @transform_5, window_bounds = array<i64: 120, 30>}, {pipeline_mode = #tpu.pipeline_mode<synchronous>, transform_indices = @transform_6, window_bounds = array<i64: 1, 30>}, {pipeline_mode = #tpu.pipeline_mode<synchronous>, transform_indices = @transform_7, window_bounds = array<i64: 30, 2>}, {pipeline_mode = #tpu.pipeline_mode<synchronous>, transform_indices = @transform_8, window_bounds = array<i64: 1, 2>}, {pipeline_mode = #tpu.pipeline_mode<synchronous>, transform_indices = @transform_9, window_bounds = array<i64: 2, 2>}]} {
    %c0 = arith.constant 0 : index
    %c0_0 = arith.constant 0 : index
    %0 = vector.load %arg1[%c0, %c0_0] : memref<2x1536xbf16, #tpu.memory_space<vmem>>, vector<2x1536xbf16>
    %1 = arith.extf %0 : vector<2x1536xbf16> to vector<2x1536xf32>
    %c0_1 = arith.constant 0 : index
    %c0_2 = arith.constant 0 : index
    %2 = vector.load %arg2[%c0_1, %c0_2] : memref<1536x480xbf16, #tpu.memory_space<vmem>>, vector<1536x480xbf16>
    %3 = arith.extf %2 : vector<1536x480xbf16> to vector<1536x480xf32>
    %cst = arith.constant dense<0.000000e+00> : vector<2x480xf32>
    %4 = tpu.matmul %1, %3, %cst {dimension_numbers = #tpu.dot_dimension_numbers<[1], [0], [0], [1], [0, 0, 1, 1], [], []>} : vector<2x1536xf32>, vector<1536x480xf32>, vector<2x480xf32> -> vector<2x480xf32>
    %c0_3 = arith.constant 0 : index
    %c0_4 = arith.constant 0 : index
    %5 = vector.load %arg3[%c0_3, %c0_4] : memref<1x480xf32, #tpu.memory_space<vmem>>, vector<1x480xf32>
    %6 = vector.broadcast %5 : vector<1x480xf32> to vector<2x480xf32>
    %7 = arith.addf %4, %6 : vector<2x480xf32>
    %cst_5 = arith.constant 0.000000e+00 : f32
    %8 = vector.broadcast %cst_5 : f32 to vector<2x480xf32>
    %9 = arith.maximumf %7, %8 : vector<2x480xf32>
    %c0_6 = arith.constant 0 : index
    %c0_7 = arith.constant 0 : index
    %10 = vector.load %arg4[%c0_6, %c0_7] : memref<480x120xbf16, #tpu.memory_space<vmem>>, vector<480x120xbf16>
    %11 = arith.extf %10 : vector<480x120xbf16> to vector<480x120xf32>
    %cst_8 = arith.constant dense<0.000000e+00> : vector<2x120xf32>
    %12 = tpu.matmul %9, %11, %cst_8 {dimension_numbers = #tpu.dot_dimension_numbers<[1], [0], [0], [1], [0, 0, 1, 1], [], []>} : vector<2x480xf32>, vector<480x120xf32>, vector<2x120xf32> -> vector<2x120xf32>
    %c0_9 = arith.constant 0 : index
    %c0_10 = arith.constant 0 : index
    %13 = vector.load %arg5[%c0_9, %c0_10] : memref<1x120xf32, #tpu.memory_space<vmem>>, vector<1x120xf32>
    %14 = vector.broadcast %13 : vector<1x120xf32> to vector<2x120xf32>
    %15 = arith.addf %12, %14 : vector<2x120xf32>
    %cst_11 = arith.constant 0.000000e+00 : f32
    %16 = vector.broadcast %cst_11 : f32 to vector<2x120xf32>
    %17 = arith.maximumf %15, %16 : vector<2x120xf32>
    %c0_12 = arith.constant 0 : index
    %c0_13 = arith.constant 0 : index
    %18 = vector.load %arg6[%c0_12, %c0_13] : memref<120x30xbf16, #tpu.memory_space<vmem>>, vector<120x30xbf16>
    %19 = arith.extf %18 : vector<120x30xbf16> to vector<120x30xf32>
    %cst_14 = arith.constant dense<0.000000e+00> : vector<2x30xf32>
    %20 = tpu.matmul %17, %19, %cst_14 {dimension_numbers = #tpu.dot_dimension_numbers<[1], [0], [0], [1], [0, 0, 1, 1], [], []>} : vector<2x120xf32>, vector<120x30xf32>, vector<2x30xf32> -> vector<2x30xf32>
    %c0_15 = arith.constant 0 : index
    %c0_16 = arith.constant 0 : index
    %21 = vector.load %arg7[%c0_15, %c0_16] : memref<1x30xf32, #tpu.memory_space<vmem>>, vector<1x30xf32>
    %22 = vector.broadcast %21 : vector<1x30xf32> to vector<2x30xf32>
    %23 = arith.addf %20, %22 : vector<2x30xf32>
    %cst_17 = arith.constant 0.000000e+00 : f32
    %24 = vector.broadcast %cst_17 : f32 to vector<2x30xf32>
    %25 = arith.maximumf %23, %24 : vector<2x30xf32>
    %c0_18 = arith.constant 0 : index
    %c0_19 = arith.constant 0 : index
    %26 = vector.load %arg8[%c0_18, %c0_19] : memref<30x2xbf16, #tpu.memory_space<vmem>>, vector<30x2xbf16>
    %27 = arith.extf %26 : vector<30x2xbf16> to vector<30x2xf32>
    %cst_20 = arith.constant dense<0.000000e+00> : vector<2x2xf32>
    %28 = tpu.matmul %25, %27, %cst_20 {dimension_numbers = #tpu.dot_dimension_numbers<[1], [0], [0], [1], [0, 0, 1, 1], [], []>} : vector<2x30xf32>, vector<30x2xf32>, vector<2x2xf32> -> vector<2x2xf32>
    %c0_21 = arith.constant 0 : index
    %c0_22 = arith.constant 0 : index
    %29 = vector.load %arg9[%c0_21, %c0_22] : memref<1x2xf32, #tpu.memory_space<vmem>>, vector<1x2xf32>
    %30 = vector.broadcast %29 : vector<1x2xf32> to vector<2x2xf32>
    %31 = arith.addf %28, %30 : vector<2x2xf32>
    %c0_23 = arith.constant 0 : index
    %c0_24 = arith.constant 0 : index
    %32 = vector.load %arg10[%c0_23, %c0_24] : memref<2x2xf32, #tpu.memory_space<vmem>>, vector<2x2xf32>
    tpu.vector_store %arg10[%c0_23, %c0_24], %31 {strides = array<i32>} : memref<2x2xf32, #tpu.memory_space<vmem>>, vector<2x2xf32>,
    return
  }
  func.func @transform_0(%arg0: i32) -> (i32, i32) {
    %c0_i32 = arith.constant 0 : i32
    %c0_i32_0 = arith.constant 0 : i32
    %c0_i32_1 = arith.constant 0 : i32
    return %c0_i32, %c0_i32_0 : i32, i32
  }
  func.func @transform_1(%arg0: i32) -> (i32, i32) {
    %c0_i32 = arith.constant 0 : i32
    %c0_i32_0 = arith.constant 0 : i32
    %c0_i32_1 = arith.constant 0 : i32
    return %c0_i32, %c0_i32_0 : i32, i32
  }
  func.func @transform_2(%arg0: i32) -> (i32, i32) {
    %c0_i32 = arith.constant 0 : i32
    %c0_i32_0 = arith.constant 0 : i32
    %c0_i32_1 = arith.constant 0 : i32
    return %c0_i32, %c0_i32_0 : i32, i32
  }
  func.func @transform_3(%arg0: i32) -> (i32, i32) {
    %c0_i32 = arith.constant 0 : i32
    %c0_i32_0 = arith.constant 0 : i32
    %c0_i32_1 = arith.constant 0 : i32
    return %c0_i32, %c0_i32_0 : i32, i32
  }
  func.func @transform_4(%arg0: i32) -> (i32, i32) {
    %c0_i32 = arith.constant 0 : i32
    %c0_i32_0 = arith.constant 0 : i32
    %c0_i32_1 = arith.constant 0 : i32
    return %c0_i32, %c0_i32_0 : i32, i32
  }
  func.func @transform_5(%arg0: i32) -> (i32, i32) {
    %c0_i32 = arith.constant 0 : i32
    %c0_i32_0 = arith.constant 0 : i32
    %c0_i32_1 = arith.constant 0 : i32
    return %c0_i32, %c0_i32_0 : i32, i32
  }
  func.func @transform_6(%arg0: i32) -> (i32, i32) {
    %c0_i32 = arith.constant 0 : i32
    %c0_i32_0 = arith.constant 0 : i32
    %c0_i32_1 = arith.constant 0 : i32
    return %c0_i32, %c0_i32_0 : i32, i32
  }
  func.func @transform_7(%arg0: i32) -> (i32, i32) {
    %c0_i32 = arith.constant 0 : i32
    %c0_i32_0 = arith.constant 0 : i32
    %c0_i32_1 = arith.constant 0 : i32
    return %c0_i32, %c0_i32_0 : i32, i32
  }
  func.func @transform_8(%arg0: i32) -> (i32, i32) {
    %c0_i32 = arith.constant 0 : i32
    %c0_i32_0 = arith.constant 0 : i32
    %c0_i32_1 = arith.constant 0 : i32
    return %c0_i32, %c0_i32_0 : i32, i32
  }
  func.func @transform_9(%arg0: i32) -> (i32, i32) {
    %c0_i32 = arith.constant 0 : i32
    %c0_i32_0 = arith.constant 0 : i32
    %c0_i32_1 = arith.constant 0 : i32
    return %c0_i32, %c0_i32_0 : i32, i32
  }
}

</mosaic_0001>

<llo_original>
// kernel: convnet256_forward.4
$region0: #{convnet256_forward.4}
  #allocation0 [shape = 'u32[]', space=smem, size = 0x4, offset = 0x4, fixed_abs, tag = 'smem constant byte address 0x4 - core index']
  #allocation1 [shape = 'u32[144,128]{1,0:T(1,128)}', space=vmem, size = 0x12000, scoped, tag = 'internal scratch']
  %s0 = inlined_call_operand.vmem [shape: bf16[8,80], index: 0, kind: input, shape index: {}]
  %s1 = inlined_call_operand.vmem [shape: bf16[80,14336], index: 1, kind: input, shape index: {}]
  %s2 = inlined_call_operand.vmem [shape: f32[8,1], index: 2, kind: input, shape index: {}]
  %s3 = inlined_call_operand.vmem [shape: bf16[8,14336], index: 3, kind: output, shape index: {}]
  %s4 = sld [smem:[#allocation0]]
  $region68: #{convnet256_forward.4} parent=0
    _
  %s6 = ssub.s32 1, %s4
  %s7 = scalar_select 0, %s6, %s4
  $region1: #{convnet256_forward.4} parent=0
    #allocation2 [shape = 'u8[2293760]{0}', space=vmem, size = 0x230000, scoped, tag = 'input window, operand 1']
    loop: start=0, step=1, limit=4
    $region2: #{convnet256_forward.4} parent=1 // loop_pre_header
      _
    $region3: #{convnet256_forward.4} parent=1 // loop_header
      %s9 = sphi 0, %s13
      %p10 = scmp.ge.s32.totalorder %s9, 4
      %s17 = sphi 0, %s17
      %s19 = sphi 0, %s17
      %s20 = sphi 0, %s19
      %s34 = sphi 0, %s20
      %s40 = sphi 0, %s42
      %s43 = sphi 0, %s40
      %s44 = sphi 0, %s43
      %s60 = sphi 0, %s44
      %s64 = sphi 0, %s64
      %s66 = sphi 0, %s64
      %s67 = sphi 0, %s66
      %s81 = sphi 0, %s67
      %s87 = sphi 0, %s89
      %s90 = sphi 0, %s87
      %s91 = sphi 0, %s90
      %s107 = sphi 0, %s91
    $region4: #{convnet256_forward.4} parent=1 // loop_header_branch
      %12 = sbr.rel (%p10) target = $region8
    $region5: #{convnet256_forward.4} parent=1 // loop_body
      %s14 = ssub.s32 %s9, 1
      %s15 = ssub.s32 %s9, 2
      %s16 = sadd.s32 %s9, 1
      %s18 = sadd.s32 %s17, 1
      %p21 = scmp.eq.s32.totalorder %s9, 1
      %p22 = scmp.ne.s32.totalorder %s17, %s19
      %p23 = scmp.eq.s32.totalorder %s9, 0
      %p24 = por %p22, %p23
      %p25 = scmp.ne.s32.totalorder %s17, %s19
      %p26 = scmp.eq.s32.totalorder %s14, 1
      %p27 = por %p25, %p26
      %p28 = scmp.ne.s32.totalorder %s19, %s20
      %p29 = scmp.eq.s32.totalorder %s14, 0
      %p30 = por %p28, %p29
      %p31 = scmp.ne.s32.totalorder %s19, %s20
      %p32 = scmp.eq.s32.totalorder %s15, 1
      %p33 = por %p31, %p32
      %p35 = scmp.ne.s32.totalorder %s20, %s34
      %p36 = scmp.eq.s32.totalorder %s15, 0
      %p37 = por %p35, %p36
      %s38 = ssub.s32 %s9, %s16
      %p39 = scmp.eq.s32.totalorder %s38, 0
      %s41 = sadd.s32 %s40, 1
      %s42 = scalar_select %p39, %s40, %s41
      %p45 = pneg %p39
      %p46 = scmp.eq.s32.totalorder %s9, 1
      %p47 = por %p45, %p46
      %p48 = scmp.ne.s32.totalorder %s40, %s43
      %p49 = scmp.eq.s32.totalorder %s9, 0
      %p50 = por %p48, %p49
      %p51 = scmp.ne.s32.totalorder %s40, %s43
      %p52 = scmp.eq.s32.totalorder %s14, 1
      %p53 = por %p51, %p52
      %p54 = scmp.ne.s32.totalorder %s43, %s44
      %p55 = scmp.eq.s32.totalorder %s14, 0
      %p56 = por %p54, %p55
      %p57 = scmp.ne.s32.totalorder %s43, %s44
      %p58 = scmp.eq.s32.totalorder %s15, 1
      %p59 = por %p57, %p58
      %p61 = scmp.ne.s32.totalorder %s44, %s60
      %p62 = scmp.eq.s32.totalorder %s15, 0
      %p63 = por %p61, %p62
      %s65 = sadd.s32 %s64, 1
      %p68 = scmp.eq.s32.totalorder %s9, 1
      %p69 = scmp.ne.s32.totalorder %s64, %s66
      %p70 = scmp.eq.s32.totalorder %s9, 0
      %p71 = por %p69, %p70
      %p72 = scmp.ne.s32.totalorder %s64, %s66
      %p73 = scmp.eq.s32.totalorder %s14, 1
      %p74 = por %p72, %p73
      %p75 = scmp.ne.s32.totalorder %s66, %s67
      %p76 = scmp.eq.s32.totalorder %s14, 0
      %p77 = por %p75, %p76
      %p78 = scmp.ne.s32.totalorder %s66, %s67
      %p79 = scmp.eq.s32.totalorder %s15, 1
      %p80 = por %p78, %p79
      %p82 = scmp.ne.s32.totalorder %s67, %s81
      %p83 = scmp.eq.s32.totalorder %s15, 0
      %p84 = por %p82, %p83
      %s85 = ssub.s32 %s9, %s16
      %p86 = scmp.eq.s32.totalorder %s85, 0
      %s88 = sadd.s32 %s87, 1
      %s89 = scalar_select %p86, %s87, %s88
      %p92 = pneg %p86
      %p93 = scmp.eq.s32.totalorder %s9, 1
      %p94 = por %p92, %p93
      %p95 = scmp.ne.s32.totalorder %s87, %s90
      %p96 = scmp.eq.s32.totalorder %s9, 0
      %p97 = por %p95, %p96
      %p98 = scmp.ne.s32.totalorder %s87, %s90
      %p99 = scmp.eq.s32.totalorder %s14, 1
      %p100 = por %p98, %p99
      %p101 = scmp.ne.s32.totalorder %s90, %s91
      %p102 = scmp.eq.s32.totalorder %s14, 0
      %p103 = por %p101, %p102
      %p104 = scmp.ne.s32.totalorder %s90, %s91
      %p105 = scmp.eq.s32.totalorder %s15, 1
      %p106 = por %p104, %p105
      %p108 = scmp.ne.s32.totalorder %s91, %s107
      %p109 = scmp.eq.s32.totalorder %s15, 0
      %p110 = por %p108, %p109
      %p111 = scmp.le.s32.totalorder 1, %s9
      %p112 = scmp.lt.s32.totalorder %s9, 3
      %p113 = pnand %p111, %p112
      %p114 = pneg %p113
      // Predicated region
      $region9: #{convnet256_forward.4} parent=5 // pred_check
        _
      $region10: #{convnet256_forward.4} parent=5 // pred_check_branch
        %116 = sbr.rel (%p113) target = $region12
      $region11: #{convnet256_forward.4} parent=5 // pred_region
        %s117 = ssub.s32 %s9, 1
        // Predicated region
        $region13: #{convnet256_forward.4} parent=11 // pred_check
          %p118 = pneg %p30
        $region14: #{convnet256_forward.4} parent=11 // pred_check_branch
          %120 = sbr.rel (%p118) target = $region16
        $region15: #{convnet256_forward.4} parent=11 // pred_region
          _
        $region16: #{convnet256_forward.4} parent=11 // pred_fallthru
          _
        // Predicated region
        $region17: #{convnet256_forward.4} parent=11 // pred_check
          %p121 = pneg %p77
        $region18: #{convnet256_forward.4} parent=11 // pred_check_branch
          %123 = sbr.rel (%p121) target = $region20
        $region19: #{convnet256_forward.4} parent=11 // pred_region
          _
        $region20: #{convnet256_forward.4} parent=11 // pred_fallthru
          _
      $region12: #{convnet256_forward.4} parent=5 // pred_fallthru
        _
      %p124 = scmp.lt.s32.totalorder %s9, 2
      // Predicated region
      $region21: #{convnet256_forward.4} parent=5 // pred_check
        %p125 = pneg %p124
      $region22: #{convnet256_forward.4} parent=5 // pred_check_branch
        %127 = sbr.rel (%p125) target = $region24
      $region23: #{convnet256_forward.4} parent=5 // pred_region
        // Predicated region
        $region25: #{convnet256_forward.4} parent=23 // pred_check
          %p128 = pneg %p50
        $region26: #{convnet256_forward.4} parent=23 // pred_check_branch
          %130 = sbr.rel (%p128) target = $region28
        $region27: #{convnet256_forward.4} parent=23 // pred_region
          %s131 = sand.u32 %s40, 1
          %s132 = sand.u32 %s40, 1
          %s133 = smul.addr %s132, 2240
          %s134 = scalar_lea.vmem [#allocation2], %s133
          %s135 = smul.u32 56, %s9
          %s136 = smul.addr %s135, 4
          %s137 = scalar_lea.vmem %s1, %s136
          // Predicated region
          $region29: #{convnet256_forward.4} parent=27 // pred_check
            _
          $region30: #{convnet256_forward.4} parent=27 // pred_check_branch
            %139 = sbr.rel (0) target = $region32
          $region31: #{convnet256_forward.4} parent=27 // pred_region
            // Predicated region
            $region33: #{convnet256_forward.4} parent=31 // pred_check
              _
            $region34: #{convnet256_forward.4} parent=31 // pred_check_branch
              %141 = sbr.rel (0) target = $region36
            $region35: #{convnet256_forward.4} parent=31 // pred_region
              loop: start=0, step=1, limit=1
              $region37: #{convnet256_forward.4} parent=35 // loop_pre_header
                _
              $region38: #{convnet256_forward.4} parent=35 // loop_header
                %s143 = sphi 0, %s147
                %p144 = scmp.ge.s32.totalorder %s143, 1
                %s148 = sphi %s137, %s137
                %s149 = sphi %s134, %s134
              $region39: #{convnet256_forward.4} parent=35 // loop_header_branch
                %146 = sbr.rel (%p144) target = $region43
              $region40: #{convnet256_forward.4} parent=35 // loop_body
                %v150 = vld [vmem:[%s148] sm:$0xff]
                %151 = vst [vmem:[%s149] sm:$0xff] %v150
                %v152 = vld [vmem:[%s148 + $0x8] sm:$0xff]
                %153 = vst [vmem:[%s149 + $0x8] sm:$0xff] %v152
                %v154 = vld [vmem:[%s148 + $0x10] sm:$0xff]
                %155 = vst [vmem:[%s149 + $0x10] sm:$0xff] %v154
                %v156 = vld [vmem:[%s148 + $0x18] sm:$0xff]
                %157 = vst [vmem:[%s149 + $0x18] sm:$0xff] %v156
                %v158 = vld [vmem:[%s148 + $0x20] sm:$0xff]
                %159 = vst [vmem:[%s149 + $0x20] sm:$0xff] %v158
                %v160 = vld [vmem:[%s148 + $0x28] sm:$0xff]
                %161 = vst [vmem:[%s149 + $0x28] sm:$0xff] %v160
                %v162 = vld [vmem:[%s148 + $0x30] sm:$0xff]
                %163 = vst [vmem:[%s149 + $0x30] sm:$0xff] %v162
                %v164 = vld [vmem:[%s148 + $0x38] sm:$0xff]
                %165 = vst [vmem:[%s149 + $0x38] sm:$0xff] %v164
                %v166 = vld [vmem:[%s148 + $0x40] sm:$0xff]
                %167 = vst [vmem:[%s149 + $0x40] sm:$0xff] %v166
                %v168 = vld [vmem:[%s148 + $0x48] sm:$0xff]
                %169 = vst [vmem:[%s149 + $0x48] sm:$0xff] %v168
                %v170 = vld [vmem:[%s148 + $0x50] sm:$0xff]
                %171 = vst [vmem:[%s149 + $0x50] sm:$0xff] %v170
                %v172 = vld [vmem:[%s148 + $0x58] sm:$0xff]
                %173 = vst [vmem:[%s149 + $0x58] sm:$0xff] %v172
                %v174 = vld [vmem:[%s148 + $0x60] sm:$0xff]
                %175 = vst [vmem:[%s149 + $0x60] sm:$0xff] %v174
                %v176 = vld [vmem:[%s148 + $0x68] sm:$0xff]
                %177 = vst [vmem:[%s149 + $0x68] sm:$0xff] %v176
                %v178 = vld [vmem:[%s148 + $0x70] sm:$0xff]
                %179 = vst [vmem:[%s149 + $0x70] sm:$0xff] %v178
                %v180 = vld [vmem:[%s148 + $0x78] sm:$0xff]
                %181 = vst [vmem:[%s149 + $0x78] sm:$0xff] %v180
                %v182 = vld [vmem:[%s148 + $0x80] sm:$0xff]
                %183 = vst [vmem:[%s149 + $0x80] sm:$0xff] %v182
                %v184 = vld [vmem:[%s148 + $0x88] sm:$0xff]
                %185 = vst [vmem:[%s149 + $0x88] sm:$0xff] %v184
                %v186 = vld [vmem:[%s148 + $0x90] sm:$0xff]
                %187 = vst [vmem:[%s149 + $0x90] sm:$0xff] %v186
                %v188 = vld [vmem:[%s148 + $0x98] sm:$0xff]
                %189 = vst [vmem:[%s149 + $0x98] sm:$0xff] %v188
                %v190 = vld [vmem:[%s148 + $0xa0] sm:$0xff]
                %191 = vst [vmem:[%s149 + $0xa0] sm:$0xff] %v190
                %v192 = vld [vmem:[%s148 + $0xa8] sm:$0xff]
                %193 = vst [vmem:[%s149 + $0xa8] sm:$0xff] %v192
                %v194 = vld [vmem:[%s148 + $0xb0] sm:$0xff]
                %195 = vst [vmem:[%s149 + $0xb0] sm:$0xff] %v194
                %v196 = vld [vmem:[%s148 + $0xb8] sm:$0xff]
                %197 = vst [vmem:[%s149 + $0xb8] sm:$0xff] %v196
                %v198 = vld [vmem:[%s148 + $0xc0] sm:$0xff]
                %199 = vst [vmem:[%s149 + $0xc0] sm:$0xff] %v198
                %v200 = vld [vmem:[%s148 + $0xc8] sm:$0xff]
                %201 = vst [vmem:[%s149 + $0xc8] sm:$0xff] %v200
                %v202 = vld [vmem:[%s148 + $0xd0] sm:$0xff]
                %203 = vst [vmem:[%s149 + $0xd0] sm:$0xff] %v202
                %v204 = vld [vmem:[%s148 + $0xd8] sm:$0xff]
                %205 = vst [vmem:[%s149 + $0xd8] sm:$0xff] %v204
                %v206 = vld [vmem:[%s148 + $0x1c0] sm:$0xff]
                %207 = vst [vmem:[%s149 + $0xe0] sm:$0xff] %v206
                %v208 = vld [vmem:[%s148 + $0x1c8] sm:$0xff]
                %209 = vst [vmem:[%s149 + $0xe8] sm:$0xff] %v208
                %v210 = vld [vmem:[%s148 + $0x1d0] sm:$0xff]
                %211 = vst [vmem:[%s149 + $0xf0] sm:$0xff] %v210
                %v212 = vld [vmem:[%s148 + $0x1d8] sm:$0xff]
                %213 = vst [vmem:[%s149 + $0xf8] sm:$0xff] %v212
                %v214 = vld [vmem:[%s148 + $0x1e0] sm:$0xff]
                %215 = vst [vmem:[%s149 + $0x100] sm:$0xff] %v214
                %v216 = vld [vmem:[%s148 + $0x1e8] sm:$0xff]
                %217 = vst [vmem:[%s149 + $0x108] sm:$0xff] %v216
                %v218 = vld [vmem:[%s148 + $0x1f0] sm:$0xff]
                %219 = vst [vmem:[%s149 + $0x110] sm:$0xff] %v218
                %v220 = vld [vmem:[%s148 + $0x1f8] sm:$0xff]
                %221 = vst [vmem:[%s149 + $0x118] sm:$0xff] %v220
                %v222 = vld [vmem:[%s148 + $0x200] sm:$0xff]
                %223 = vst [vmem:[%s149 + $0x120] sm:$0xff] %v222
                %v224 = vld [vmem:[%s148 + $0x208] sm:$0xff]
                %225 = vst [vmem:[%s149 + $0x128] sm:$0xff] %v224
                %v226 = vld [vmem:[%s148 + $0x210] sm:$0xff]
                %227 = vst [vmem:[%s149 + $0x130] sm:$0xff] %v226
                %v228 = vld [vmem:[%s148 + $0x218] sm:$0xff]
                %229 = vst [vmem:[%s149 + $0x138] sm:$0xff] %v228
                %v230 = vld [vmem:[%s148 + $0x220] sm:$0xff]
                %231 = vst [vmem:[%s149 + $0x140] sm:$0xff] %v230
                %v232 = vld [vmem:[%s148 + $0x228] sm:$0xff]
                %233 = vst [vmem:[%s149 + $0x148] sm:$0xff] %v232
                %v234 = vld [vmem:[%s148 + $0x230] sm:$0xff]
                %235 = vst [vmem:[%s149 + $0x150] sm:$0xff] %v234
                %v236 = vld [vmem:[%s148 + $0x238] sm:$0xff]
                %237 = vst [vmem:[%s149 + $0x158] sm:$0xff] %v236
                %v238 = vld [vmem:[%s148 + $0x240] sm:$0xff]
                %239 = vst [vmem:[%s149 + $0x160] sm:$0xff] %v238
                %v240 = vld [vmem:[%s148 + $0x248] sm:$0xff]
                %241 = vst [vmem:[%s149 + $0x168] sm:$0xff] %v240
                %v242 = vld [vmem:[%s148 + $0x250] sm:$0xff]
                %243 = vst [vmem:[%s149 + $0x170] sm:$0xff] %v242
                %v244 = vld [vmem:[%s148 + $0x258] sm:$0xff]
                %245 = vst [vmem:[%s149 + $0x178] sm:$0xff] %v244
                %v246 = vld [vmem:[%s148 + $0x260] sm:$0xff]
                %247 = vst [vmem:[%s149 + $0x180] sm:$0xff] %v246
                %v248 = vld [vmem:[%s148 + $0x268] sm:$0xff]
                %249 = vst [vmem:[%s149 + $0x188] sm:$0xff] %v248
                %v250 = vld [vmem:[%s148 + $0x270] sm:$0xff]
                %251 = vst [vmem:[%s149 + $0x190] sm:$0xff] %v250
                %v252 = vld [vmem:[%s148 + $0x278] sm:$0xff]
                %253 = vst [vmem:[%s149 + $0x198] sm:$0xff] %v252
                %v254 = vld [vmem:[%s148 + $0x280] sm:$0xff]
                %255 = vst [vmem:[%s149 + $0x1a0] sm:$0xff] %v254
                %v256 = vld [vmem:[%s148 + $0x288] sm:$0xff]
                %257 = vst [vmem:[%s149 + $0x1a8] sm:$0xff] %v256
                %v258 = vld [vmem:[%s148 + $0x290] sm:$0xff]
                %259 = vst [vmem:[%s149 + $0x1b0] sm:$0xff] %v258
                %v260 = vld [vmem:[%s148 + $0x298] sm:$0xff]
                %261 = vst [vmem:[%s149 + $0x1b8] sm:$0xff] %v260
                %v262 = vld [vmem:[%s148 + $0x380] sm:$0xff]
                %263 = vst [vmem:[%s149 + $0x1c0] sm:$0xff] %v262
                %v264 = vld [vmem:[%s148 + $0x388] sm:$0xff]
                %265 = vst [vmem:[%s149 + $0x1c8] sm:$0xff] %v264
                %v266 = vld [vmem:[%s148 + $0x390] sm:$0xff]
                %267 = vst [vmem:[%s149 + $0x1d0] sm:$0xff] %v266
                %v268 = vld [vmem:[%s148 + $0x398] sm:$0xff]
                %269 = vst [vmem:[%s149 + $0x1d8] sm:$0xff] %v268
                %v270 = vld [vmem:[%s148 + $0x3a0] sm:$0xff]
                %271 = vst [vmem:[%s149 + $0x1e0] sm:$0xff] %v270
                %v272 = vld [vmem:[%s148 + $0x3a8] sm:$0xff]
                %273 = vst [vmem:[%s149 + $0x1e8] sm:$0xff] %v272
                %v274 = vld [vmem:[%s148 + $0x3b0] sm:$0xff]
                %275 = vst [vmem:[%s149 + $0x1f0] sm:$0xff] %v274
                %v276 = vld [vmem:[%s148 + $0x3b8] sm:$0xff]
                %277 = vst [vmem:[%s149 + $0x1f8] sm:$0xff] %v276
                %v278 = vld [vmem:[%s148 + $0x3c0] sm:$0xff]
                %279 = vst [vmem:[%s149 + $0x200] sm:$0xff] %v278
                %v280 = vld [vmem:[%s148 + $0x3c8] sm:$0xff]
                %281 = vst [vmem:[%s149 + $0x208] sm:$0xff] %v280
                %v282 = vld [vmem:[%s148 + $0x3d0] sm:$0xff]
                %283 = vst [vmem:[%s149 + $0x210] sm:$0xff] %v282
                %v284 = vld [vmem:[%s148 + $0x3d8] sm:$0xff]
                %285 = vst [vmem:[%s149 + $0x218] sm:$0xff] %v284
                %v286 = vld [vmem:[%s148 + $0x3e0] sm:$0xff]
                %287 = vst [vmem:[%s149 + $0x220] sm:$0xff] %v286
                %v288 = vld [vmem:[%s148 + $0x3e8] sm:$0xff]
                %289 = vst [vmem:[%s149 + $0x228] sm:$0xff] %v288
                %v290 = vld [vmem:[%s148 + $0x3f0] sm:$0xff]
                %291 = vst [vmem:[%s149 + $0x230] sm:$0xff] %v290
                %v292 = vld [vmem:[%s148 + $0x3f8] sm:$0xff]
                %293 = vst [vmem:[%s149 + $0x238] sm:$0xff] %v292
                %v294 = vld [vmem:[%s148 + $0x400] sm:$0xff]
                %295 = vst [vmem:[%s149 + $0x240] sm:$0xff] %v294
                %v296 = vld [vmem:[%s148 + $0x408] sm:$0xff]
                %297 = vst [vmem:[%s149 + $0x248] sm:$0xff] %v296
                %v298 = vld [vmem:[%s148 + $0x410] sm:$0xff]
                %299 = vst [vmem:[%s149 + $0x250] sm:$0xff] %v298
                %v300 = vld [vmem:[%s148 + $0x418] sm:$0xff]
                %301 = vst [vmem:[%s149 + $0x258] sm:$0xff] %v300
                %v302 = vld [vmem:[%s148 + $0x420] sm:$0xff]
                %303 = vst [vmem:[%s149 + $0x260] sm:$0xff] %v302
                %v304 = vld [vmem:[%s148 + $0x428] sm:$0xff]
                %305 = vst [vmem:[%s149 + $0x268] sm:$0xff] %v304
                %v306 = vld [vmem:[%s148 + $0x430] sm:$0xff]
                %307 = vst [vmem:[%s149 + $0x270] sm:$0xff] %v306
                %v308 = vld [vmem:[%s148 + $0x438] sm:$0xff]
                %309 = vst [vmem:[%s149 + $0x278] sm:$0xff] %v308
                %v310 = vld [vmem:[%s148 + $0x440] sm:$0xff]
                %311 = vst [vmem:[%s149 + $0x280] sm:$0xff] %v310
                %v312 = vld [vmem:[%s148 + $0x448] sm:$0xff]
                %313 = vst [vmem:[%s149 + $0x288] sm:$0xff] %v312
                %v314 = vld [vmem:[%s148 + $0x450] sm:$0xff]
                %315 = vst [vmem:[%s149 + $0x290] sm:$0xff] %v314
                %v316 = vld [vmem:[%s148 + $0x458] sm:$0xff]
                %317 = vst [vmem:[%s149 + $0x298] sm:$0xff] %v316
                %v318 = vld [vmem:[%s148 + $0x540] sm:$0xff]
                %319 = vst [vmem:[%s149 + $0x2a0] sm:$0xff] %v318
                %v320 = vld [vmem:[%s148 + $0x548] sm:$0xff]
                %321 = vst [vmem:[%s149 + $0x2a8] sm:$0xff] %v320
                %v322 = vld [vmem:[%s148 + $0x550] sm:$0xff]
                %323 = vst [vmem:[%s149 + $0x2b0] sm:$0xff] %v322
                %v324 = vld [vmem:[%s148 + $0x558] sm:$0xff]
                %325 = vst [vmem:[%s149 + $0x2b8] sm:$0xff] %v324
                %v326 = vld [vmem:[%s148 + $0x560] sm:$0xff]
                %327 = vst [vmem:[%s149 + $0x2c0] sm:$0xff] %v326
                %v328 = vld [vmem:[%s148 + $0x568] sm:$0xff]
                %329 = vst [vmem:[%s149 + $0x2c8] sm:$0xff] %v328
                %v330 = vld [vmem:[%s148 + $0x570] sm:$0xff]
                %331 = vst [vmem:[%s149 + $0x2d0] sm:$0xff] %v330
                %v332 = vld [vmem:[%s148 + $0x578] sm:$0xff]
                %333 = vst [vmem:[%s149 + $0x2d8] sm:$0xff] %v332
                %v334 = vld [vmem:[%s148 + $0x580] sm:$0xff]
                %335 = vst [vmem:[%s149 + $0x2e0] sm:$0xff] %v334
                %v336 = vld [vmem:[%s148 + $0x588] sm:$0xff]
                %337 = vst [vmem:[%s149 + $0x2e8] sm:$0xff] %v336
                %v338 = vld [vmem:[%s148 + $0x590] sm:$0xff]
                %339 = vst [vmem:[%s149 + $0x2f0] sm:$0xff] %v338
                %v340 = vld [vmem:[%s148 + $0x598] sm:$0xff]
                %341 = vst [vmem:[%s149 + $0x2f8] sm:$0xff] %v340
                %v342 = vld [vmem:[%s148 + $0x5a0] sm:$0xff]
                %343 = vst [vmem:[%s149 + $0x300] sm:$0xff] %v342
                %v344 = vld [vmem:[%s148 + $0x5a8] sm:$0xff]
                %345 = vst [vmem:[%s149 + $0x308] sm:$0xff] %v344
                %v346 = vld [vmem:[%s148 + $0x5b0] sm:$0xff]
                %347 = vst [vmem:[%s149 + $0x310] sm:$0xff] %v346
                %v348 = vld [vmem:[%s148 + $0x5b8] sm:$0xff]
                %349 = vst [vmem:[%s149 + $0x318] sm:$0xff] %v348
                %v350 = vld [vmem:[%s148 + $0x5c0] sm:$0xff]
                %351 = vst [vmem:[%s149 + $0x320] sm:$0xff] %v350
                %v352 = vld [vmem:[%s148 + $0x5c8] sm:$0xff]
                %353 = vst [vmem:[%s149 + $0x328] sm:$0xff] %v352
                %v354 = vld [vmem:[%s148 + $0x5d0] sm:$0xff]
                %355 = vst [vmem:[%s149 + $0x330] sm:$0xff] %v354
                %v356 = vld [vmem:[%s148 + $0x5d8] sm:$0xff]
                %357 = vst [vmem:[%s149 + $0x338] sm:$0xff] %v356
                %v358 = vld [vmem:[%s148 + $0x5e0] sm:$0xff]
                %359 = vst [vmem:[%s149 + $0x340] sm:$0xff] %v358
                %v360 = vld [vmem:[%s148 + $0x5e8] sm:$0xff]
                %361 = vst [vmem:[%s149 + $0x348] sm:$0xff] %v360
                %v362 = vld [vmem:[%s148 + $0x5f0] sm:$0xff]
                %363 = vst [vmem:[%s149 + $0x350] sm:$0xff] %v362
                %v364 = vld [vmem:[%s148 + $0x5f8] sm:$0xff]
                %365 = vst [vmem:[%s149 + $0x358] sm:$0xff] %v364
                %v366 = vld [vmem:[%s148 + $0x600] sm:$0xff]
                %367 = vst [vmem:[%s149 + $0x360] sm:$0xff] %v366
                %v368 = vld [vmem:[%s148 + $0x608] sm:$0xff]
                %369 = vst [vmem:[%s149 + $0x368] sm:$0xff] %v368
                %v370 = vld [vmem:[%s148 + $0x610] sm:$0xff]
                %371 = vst [vmem:[%s149 + $0x370] sm:$0xff] %v370
                %v372 = vld [vmem:[%s148 + $0x618] sm:$0xff]
                %373 = vst [vmem:[%s149 + $0x378] sm:$0xff] %v372
                %v374 = vld [vmem:[%s148 + $0x700] sm:$0xff]
                %375 = vst [vmem:[%s149 + $0x380] sm:$0xff] %v374
                %v376 = vld [vmem:[%s148 + $0x708] sm:$0xff]
                %377 = vst [vmem:[%s149 + $0x388] sm:$0xff] %v376
                %v378 = vld [vmem:[%s148 + $0x710] sm:$0xff]
                %379 = vst [vmem:[%s149 + $0x390] sm:$0xff] %v378
                %v380 = vld [vmem:[%s148 + $0x718] sm:$0xff]
                %381 = vst [vmem:[%s149 + $0x398] sm:$0xff] %v380
                %v382 = vld [vmem:[%s148 + $0x720] sm:$0xff]
                %383 = vst [vmem:[%s149 + $0x3a0] sm:$0xff] %v382
                %v384 = vld [vmem:[%s148 + $0x728] sm:$0xff]
                %385 = vst [vmem:[%s149 + $0x3a8] sm:$0xff] %v384
                %v386 = vld [vmem:[%s148 + $0x730] sm:$0xff]
                %387 = vst [vmem:[%s149 + $0x3b0] sm:$0xff] %v386
                %v388 = vld [vmem:[%s148 + $0x738] sm:$0xff]
                %389 = vst [vmem:[%s149 + $0x3b8] sm:$0xff] %v388
                %v390 = vld [vmem:[%s148 + $0x740] sm:$0xff]
                %391 = vst [vmem:[%s149 + $0x3c0] sm:$0xff] %v390
                %v392 = vld [vmem:[%s148 + $0x748] sm:$0xff]
                %393 = vst [vmem:[%s149 + $0x3c8] sm:$0xff] %v392
                %v394 = vld [vmem:[%s148 + $0x750] sm:$0xff]
                %395 = vst [vmem:[%s149 + $0x3d0] sm:$0xff] %v394
                %v396 = vld [vmem:[%s148 + $0x758] sm:$0xff]
                %397 = vst [vmem:[%s149 + $0x3d8] sm:$0xff] %v396
                %v398 = vld [vmem:[%s148 + $0x760] sm:$0xff]
                %399 = vst [vmem:[%s149 + $0x3e0] sm:$0xff] %v398
                %v400 = vld [vmem:[%s148 + $0x768] sm:$0xff]
                %401 = vst [vmem:[%s149 + $0x3e8] sm:$0xff] %v400
                %v402 = vld [vmem:[%s148 + $0x770] sm:$0xff]
                %403 = vst [vmem:[%s149 + $0x3f0] sm:$0xff] %v402
                %v404 = vld [vmem:[%s148 + $0x778] sm:$0xff]
                %405 = vst [vmem:[%s149 + $0x3f8] sm:$0xff] %v404
                %v406 = vld [vmem:[%s148 + $0x780] sm:$0xff]
                %407 = vst [vmem:[%s149 + $0x400] sm:$0xff] %v406
                %v408 = vld [vmem:[%s148 + $0x788] sm:$0xff]
                %409 = vst [vmem:[%s149 + $0x408] sm:$0xff] %v408
                %v410 = vld [vmem:[%s148 + $0x790] sm:$0xff]
                %411 = vst [vmem:[%s149 + $0x410] sm:$0xff] %v410
                %v412 = vld [vmem:[%s148 + $0x798] sm:$0xff]
                %413 = vst [vmem:[%s149 + $0x418] sm:$0xff] %v412
                %v414 = vld [vmem:[%s148 + $0x7a0] sm:$0xff]
                %415 = vst [vmem:[%s149 + $0x420] sm:$0xff] %v414
                %v416 = vld [vmem:[%s148 + $0x7a8] sm:$0xff]
                %417 = vst [vmem:[%s149 + $0x428] sm:$0xff] %v416
                %v418 = vld [vmem:[%s148 + $0x7b0] sm:$0xff]
                %419 = vst [vmem:[%s149 + $0x430] sm:$0xff] %v418
                %v420 = vld [vmem:[%s148 + $0x7b8] sm:$0xff]
                %421 = vst [vmem:[%s149 + $0x438] sm:$0xff] %v420
                %v422 = vld [vmem:[%s148 + $0x7c0] sm:$0xff]
                %423 = vst [vmem:[%s149 + $0x440] sm:$0xff] %v422
                %v424 = vld [vmem:[%s148 + $0x7c8] sm:$0xff]
                %425 = vst [vmem:[%s149 + $0x448] sm:$0xff] %v424
                %v426 = vld [vmem:[%s148 + $0x7d0] sm:$0xff]
                %427 = vst [vmem:[%s149 + $0x450] sm:$0xff] %v426
                %v428 = vld [vmem:[%s148 + $0x7d8] sm:$0xff]
                %429 = vst [vmem:[%s149 + $0x458] sm:$0xff] %v428
                %v430 = vld [vmem:[%s148 + $0x8c0] sm:$0xff]
                %431 = vst [vmem:[%s149 + $0x460] sm:$0xff] %v430
                %v432 = vld [vmem:[%s148 + $0x8c8] sm:$0xff]
                %433 = vst [vmem:[%s149 + $0x468] sm:$0xff] %v432
                %v434 = vld [vmem:[%s148 + $0x8d0] sm:$0xff]
                %435 = vst [vmem:[%s149 + $0x470] sm:$0xff] %v434
                %v436 = vld [vmem:[%s148 + $0x8d8] sm:$0xff]
                %437 = vst [vmem:[%s149 + $0x478] sm:$0xff] %v436
                %v438 = vld [vmem:[%s148 + $0x8e0] sm:$0xff]
                %439 = vst [vmem:[%s149 + $0x480] sm:$0xff] %v438
                %v440 = vld [vmem:[%s148 + $0x8e8] sm:$0xff]
                %441 = vst [vmem:[%s149 + $0x488] sm:$0xff] %v440
                %v442 = vld [vmem:[%s148 + $0x8f0] sm:$0xff]
                %443 = vst [vmem:[%s149 + $0x490] sm:$0xff] %v442
                %v444 = vld [vmem:[%s148 + $0x8f8] sm:$0xff]
                %445 = vst [vmem:[%s149 + $0x498] sm:$0xff] %v444
                %v446 = vld [vmem:[%s148 + $0x900] sm:$0xff]
                %447 = vst [vmem:[%s149 + $0x4a0] sm:$0xff] %v446
                %v448 = vld [vmem:[%s148 + $0x908] sm:$0xff]
                %449 = vst [vmem:[%s149 + $0x4a8] sm:$0xff] %v448
                %v450 = vld [vmem:[%s148 + $0x910] sm:$0xff]
                %451 = vst [vmem:[%s149 + $0x4b0] sm:$0xff] %v450
                %v452 = vld [vmem:[%s148 + $0x918] sm:$0xff]
                %453 = vst [vmem:[%s149 + $0x4b8] sm:$0xff] %v452
                %v454 = vld [vmem:[%s148 + $0x920] sm:$0xff]
                %455 = vst [vmem:[%s149 + $0x4c0] sm:$0xff] %v454
                %v456 = vld [vmem:[%s148 + $0x928] sm:$0xff]
                %457 = vst [vmem:[%s149 + $0x4c8] sm:$0xff] %v456
                %v458 = vld [vmem:[%s148 + $0x930] sm:$0xff]
                %459 = vst [vmem:[%s149 + $0x4d0] sm:$0xff] %v458
                %v460 = vld [vmem:[%s148 + $0x938] sm:$0xff]
                %461 = vst [vmem:[%s149 + $0x4d8] sm:$0xff] %v460
                %v462 = vld [vmem:[%s148 + $0x940] sm:$0xff]
                %463 = vst [vmem:[%s149 + $0x4e0] sm:$0xff] %v462
                %v464 = vld [vmem:[%s148 + $0x948] sm:$0xff]
                %465 = vst [vmem:[%s149 + $0x4e8] sm:$0xff] %v464
                %v466 = vld [vmem:[%s148 + $0x950] sm:$0xff]
                %467 = vst [vmem:[%s149 + $0x4f0] sm:$0xff] %v466
                %v468 = vld [vmem:[%s148 + $0x958] sm:$0xff]
                %469 = vst [vmem:[%s149 + $0x4f8] sm:$0xff] %v468
                %v470 = vld [vmem:[%s148 + $0x960] sm:$0xff]
                %471 = vst [vmem:[%s149 + $0x500] sm:$0xff] %v470
                %v472 = vld [vmem:[%s148 + $0x968] sm:$0xff]
                %473 = vst [vmem:[%s149 + $0x508] sm:$0xff] %v472
                %v474 = vld [vmem:[%s148 + $0x970] sm:$0xff]
                %475 = vst [vmem:[%s149 + $0x510] sm:$0xff] %v474
                %v476 = vld [vmem:[%s148 + $0x978] sm:$0xff]
                %477 = vst [vmem:[%s149 + $0x518] sm:$0xff] %v476
                %v478 = vld [vmem:[%s148 + $0x980] sm:$0xff]
                %479 = vst [vmem:[%s149 + $0x520] sm:$0xff] %v478
                %v480 = vld [vmem:[%s148 + $0x988] sm:$0xff]
                %481 = vst [vmem:[%s149 + $0x528] sm:$0xff] %v480
                %v482 = vld [vmem:[%s148 + $0x990] sm:$0xff]
                %483 = vst [vmem:[%s149 + $0x530] sm:$0xff] %v482
                %v484 = vld [vmem:[%s148 + $0x998] sm:$0xff]
                %485 = vst [vmem:[%s149 + $0x538] sm:$0xff] %v484
                %v486 = vld [vmem:[%s148 + $0xa80] sm:$0xff]
                %487 = vst [vmem:[%s149 + $0x540] sm:$0xff] %v486
                %v488 = vld [vmem:[%s148 + $0xa88] sm:$0xff]
                %489 = vst [vmem:[%s149 + $0x548] sm:$0xff] %v488
                %v490 = vld [vmem:[%s148 + $0xa90] sm:$0xff]
                %491 = vst [vmem:[%s149 + $0x550] sm:$0xff] %v490
                %v492 = vld [vmem:[%s148 + $0xa98] sm:$0xff]
                %493 = vst [vmem:[%s149 + $0x558] sm:$0xff] %v492
                %v494 = vld [vmem:[%s148 + $0xaa0] sm:$0xff]
                %495 = vst [vmem:[%s149 + $0x560] sm:$0xff] %v494
                %v496 = vld [vmem:[%s148 + $0xaa8] sm:$0xff]
                %497 = vst [vmem:[%s149 + $0x568] sm:$0xff] %v496
                %v498 = vld [vmem:[%s148 + $0xab0] sm:$0xff]
                %499 = vst [vmem:[%s149 + $0x570] sm:$0xff] %v498
                %v500 = vld [vmem:[%s148 + $0xab8] sm:$0xff]
                %501 = vst [vmem:[%s149 + $0x578] sm:$0xff] %v500
                %v502 = vld [vmem:[%s148 + $0xac0] sm:$0xff]
                %503 = vst [vmem:[%s149 + $0x580] sm:$0xff] %v502
                %v504 = vld [vmem:[%s148 + $0xac8] sm:$0xff]
                %505 = vst [vmem:[%s149 + $0x588] sm:$0xff] %v504
                %v506 = vld [vmem:[%s148 + $0xad0] sm:$0xff]
                %507 = vst [vmem:[%s149 + $0x590] sm:$0xff] %v506
                %v508 = vld [vmem:[%s148 + $0xad8] sm:$0xff]
                %509 = vst [vmem:[%s149 + $0x598] sm:$0xff] %v508
                %v510 = vld [vmem:[%s148 + $0xae0] sm:$0xff]
                %511 = vst [vmem:[%s149 + $0x5a0] sm:$0xff] %v510
                %v512 = vld [vmem:[%s148 + $0xae8] sm:$0xff]
                %513 = vst [vmem:[%s149 + $0x5a8] sm:$0xff] %v512
                %v514 = vld [vmem:[%s148 + $0xaf0] sm:$0xff]
                %515 = vst [vmem:[%s149 + $0x5b0] sm:$0xff] %v514
                %v516 = vld [vmem:[%s148 + $0xaf8] sm:$0xff]
                %517 = vst [vmem:[%s149 + $0x5b8] sm:$0xff] %v516
                %v518 = vld [vmem:[%s148 + $0xb00] sm:$0xff]
                %519 = vst [vmem:[%s149 + $0x5c0] sm:$0xff] %v518
                %v520 = vld [vmem:[%s148 + $0xb08] sm:$0xff]
                %521 = vst [vmem:[%s149 + $0x5c8] sm:$0xff] %v520
                %v522 = vld [vmem:[%s148 + $0xb10] sm:$0xff]
                %523 = vst [vmem:[%s149 + $0x5d0] sm:$0xff] %v522
                %v524 = vld [vmem:[%s148 + $0xb18] sm:$0xff]
                %525 = vst [vmem:[%s149 + $0x5d8] sm:$0xff] %v524
                %v526 = vld [vmem:[%s148 + $0xb20] sm:$0xff]
                %527 = vst [vmem:[%s149 + $0x5e0] sm:$0xff] %v526
                %v528 = vld [vmem:[%s148 + $0xb28] sm:$0xff]
                %529 = vst [vmem:[%s149 + $0x5e8] sm:$0xff] %v528
                %v530 = vld [vmem:[%s148 + $0xb30] sm:$0xff]
                %531 = vst [vmem:[%s149 + $0x5f0] sm:$0xff] %v530
                %v532 = vld [vmem:[%s148 + $0xb38] sm:$0xff]
                %533 = vst [vmem:[%s149 + $0x5f8] sm:$0xff] %v532
                %v534 = vld [vmem:[%s148 + $0xb40] sm:$0xff]
                %535 = vst [vmem:[%s149 + $0x600] sm:$0xff] %v534
                %v536 = vld [vmem:[%s148 + $0xb48] sm:$0xff]
                %537 = vst [vmem:[%s149 + $0x608] sm:$0xff] %v536
                %v538 = vld [vmem:[%s148 + $0xb50] sm:$0xff]
                %539 = vst [vmem:[%s149 + $0x610] sm:$0xff] %v538
                %v540 = vld [vmem:[%s148 + $0xb58] sm:$0xff]
                %541 = vst [vmem:[%s149 + $0x618] sm:$0xff] %v540
                %v542 = vld [vmem:[%s148 + $0xc40] sm:$0xff]
                %543 = vst [vmem:[%s149 + $0x620] sm:$0xff] %v542
                %v544 = vld [vmem:[%s148 + $0xc48] sm:$0xff]
                %545 = vst [vmem:[%s149 + $0x628] sm:$0xff] %v544
                %v546 = vld [vmem:[%s148 + $0xc50] sm:$0xff]
                %547 = vst [vmem:[%s149 + $0x630] sm:$0xff] %v546
                %v548 = vld [vmem:[%s148 + $0xc58] sm:$0xff]
                %549 = vst [vmem:[%s149 + $0x638] sm:$0xff] %v548
                %v550 = vld [vmem:[%s148 + $0xc60] sm:$0xff]
                %551 = vst [vmem:[%s149 + $0x640] sm:$0xff] %v550
                %v552 = vld [vmem:[%s148 + $0xc68] sm:$0xff]
                %553 = vst [vmem:[%s149 + $0x648] sm:$0xff] %v552
                %v554 = vld [vmem:[%s148 + $0xc70] sm:$0xff]
                %555 = vst [vmem:[%s149 + $0x650] sm:$0xff] %v554
                %v556 = vld [vmem:[%s148 + $0xc78] sm:$0xff]
                %557 = vst [vmem:[%s149 + $0x658] sm:$0xff] %v556
                %v558 = vld [vmem:[%s148 + $0xc80] sm:$0xff]
                %559 = vst [vmem:[%s149 + $0x660] sm:$0xff] %v558
                %v560 = vld [vmem:[%s148 + $0xc88] sm:$0xff]
                %561 = vst [vmem:[%s149 + $0x668] sm:$0xff] %v560
                %v562 = vld [vmem:[%s148 + $0xc90] sm:$0xff]
                %563 = vst [vmem:[%s149 + $0x670] sm:$0xff] %v562
                %v564 = vld [vmem:[%s148 + $0xc98] sm:$0xff]
                %565 = vst [vmem:[%s149 + $0x678] sm:$0xff] %v564
                %v566 = vld [vmem:[%s148 + $0xca0] sm:$0xff]
                %567 = vst [vmem:[%s149 + $0x680] sm:$0xff] %v566
                %v568 = vld [vmem:[%s148 + $0xca8] sm:$0xff]
                %569 = vst [vmem:[%s149 + $0x688] sm:$0xff] %v568
                %v570 = vld [vmem:[%s148 + $0xcb0] sm:$0xff]
                %571 = vst [vmem:[%s149 + $0x690] sm:$0xff] %v570
                %v572 = vld [vmem:[%s148 + $0xcb8] sm:$0xff]
                %573 = vst [vmem:[%s149 + $0x698] sm:$0xff] %v572
                %v574 = vld [vmem:[%s148 + $0xcc0] sm:$0xff]
                %575 = vst [vmem:[%s149 + $0x6a0] sm:$0xff] %v574
                %v576 = vld [vmem:[%s148 + $0xcc8] sm:$0xff]
                %577 = vst [vmem:[%s149 + $0x6a8] sm:$0xff] %v576
                %v578 = vld [vmem:[%s148 + $0xcd0] sm:$0xff]
                %579 = vst [vmem:[%s149 + $0x6b0] sm:$0xff] %v578
                %v580 = vld [vmem:[%s148 + $0xcd8] sm:$0xff]
                %581 = vst [vmem:[%s149 + $0x6b8] sm:$0xff] %v580
                %v582 = vld [vmem:[%s148 + $0xce0] sm:$0xff]
                %583 = vst [vmem:[%s149 + $0x6c0] sm:$0xff] %v582
                %v584 = vld [vmem:[%s148 + $0xce8] sm:$0xff]
                %585 = vst [vmem:[%s149 + $0x6c8] sm:$0xff] %v584
                %v586 = vld [vmem:[%s148 + $0xcf0] sm:$0xff]
                %587 = vst [vmem:[%s149 + $0x6d0] sm:$0xff] %v586
                %v588 = vld [vmem:[%s148 + $0xcf8] sm:$0xff]
                %589 = vst [vmem:[%s149 + $0x6d8] sm:$0xff] %v588
                %v590 = vld [vmem:[%s148 + $0xd00] sm:$0xff]
                %591 = vst [vmem:[%s149 + $0x6e0] sm:$0xff] %v590
                %v592 = vld [vmem:[%s148 + $0xd08] sm:$0xff]
                %593 = vst [vmem:[%s149 + $0x6e8] sm:$0xff] %v592
                %v594 = vld [vmem:[%s148 + $0xd10] sm:$0xff]
                %595 = vst [vmem:[%s149 + $0x6f0] sm:$0xff] %v594
                %v596 = vld [vmem:[%s148 + $0xd18] sm:$0xff]
                %597 = vst [vmem:[%s149 + $0x6f8] sm:$0xff] %v596
                %v598 = vld [vmem:[%s148 + $0xe00] sm:$0xff]
                %599 = vst [vmem:[%s149 + $0x700] sm:$0xff] %v598
                %v600 = vld [vmem:[%s148 + $0xe08] sm:$0xff]
                %601 = vst [vmem:[%s149 + $0x708] sm:$0xff] %v600
                %v602 = vld [vmem:[%s148 + $0xe10] sm:$0xff]
                %603 = vst [vmem:[%s149 + $0x710] sm:$0xff] %v602
                %v604 = vld [vmem:[%s148 + $0xe18] sm:$0xff]
                %605 = vst [vmem:[%s149 + $0x718] sm:$0xff] %v604
                %v606 = vld [vmem:[%s148 + $0xe20] sm:$0xff]
                %607 = vst [vmem:[%s149 + $0x720] sm:$0xff] %v606
                %v608 = vld [vmem:[%s148 + $0xe28] sm:$0xff]
                %609 = vst [vmem:[%s149 + $0x728] sm:$0xff] %v608
                %v610 = vld [vmem:[%s148 + $0xe30] sm:$0xff]
                %611 = vst [vmem:[%s149 + $0x730] sm:$0xff] %v610
                %v612 = vld [vmem:[%s148 + $0xe38] sm:$0xff]
                %613 = vst [vmem:[%s149 + $0x738] sm:$0xff] %v612
                %v614 = vld [vmem:[%s148 + $0xe40] sm:$0xff]
                %615 = vst [vmem:[%s149 + $0x740] sm:$0xff] %v614
                %v616 = vld [vmem:[%s148 + $0xe48] sm:$0xff]
                %617 = vst [vmem:[%s149 + $0x748] sm:$0xff] %v616
                %v618 = vld [vmem:[%s148 + $0xe50] sm:$0xff]
                %619 = vst [vmem:[%s149 + $0x750] sm:$0xff] %v618
                %v620 = vld [vmem:[%s148 + $0xe58] sm:$0xff]
                %621 = vst [vmem:[%s149 + $0x758] sm:$0xff] %v620
                %v622 = vld [vmem:[%s148 + $0xe60] sm:$0xff]
                %623 = vst [vmem:[%s149 + $0x760] sm:$0xff] %v622
                %v624 = vld [vmem:[%s148 + $0xe68] sm:$0xff]
                %625 = vst [vmem:[%s149 + $0x768] sm:$0xff] %v624
                %v626 = vld [vmem:[%s148 + $0xe70] sm:$0xff]
                %627 = vst [vmem:[%s149 + $0x770] sm:$0xff] %v626
                %v628 = vld [vmem:[%s148 + $0xe78] sm:$0xff]
                %629 = vst [vmem:[%s149 + $0x778] sm:$0xff] %v628
                %v630 = vld [vmem:[%s148 + $0xe80] sm:$0xff]
                %631 = vst [vmem:[%s149 + $0x780] sm:$0xff] %v630
                %v632 = vld [vmem:[%s148 + $0xe88] sm:$0xff]
                %633 = vst [vmem:[%s149 + $0x788] sm:$0xff] %v632
                %v634 = vld [vmem:[%s148 + $0xe90] sm:$0xff]
                %635 = vst [vmem:[%s149 + $0x790] sm:$0xff] %v634
                %v636 = vld [vmem:[%s148 + $0xe98] sm:$0xff]
                %637 = vst [vmem:[%s149 + $0x798] sm:$0xff] %v636
                %v638 = vld [vmem:[%s148 + $0xea0] sm:$0xff]
                %639 = vst [vmem:[%s149 + $0x7a0] sm:$0xff] %v638
                %v640 = vld [vmem:[%s148 + $0xea8] sm:$0xff]
                %641 = vst [vmem:[%s149 + $0x7a8] sm:$0xff] %v640
                %v642 = vld [vmem:[%s148 + $0xeb0] sm:$0xff]
                %643 = vst [vmem:[%s149 + $0x7b0] sm:$0xff] %v642
                %v644 = vld [vmem:[%s148 + $0xeb8] sm:$0xff]
                %645 = vst [vmem:[%s149 + $0x7b8] sm:$0xff] %v644
                %v646 = vld [vmem:[%s148 + $0xec0] sm:$0xff]
                %647 = vst [vmem:[%s149 + $0x7c0] sm:$0xff] %v646
                %v648 = vld [vmem:[%s148 + $0xec8] sm:$0xff]
                %649 = vst [vmem:[%s149 + $0x7c8] sm:$0xff] %v648
                %v650 = vld [vmem:[%s148 + $0xed0] sm:$0xff]
                %651 = vst [vmem:[%s149 + $0x7d0] sm:$0xff] %v650
                %v652 = vld [vmem:[%s148 + $0xed8] sm:$0xff]
                %653 = vst [vmem:[%s149 + $0x7d8] sm:$0xff] %v652
                %v654 = vld [vmem:[%s148 + $0xfc0] sm:$0xff]
                %655 = vst [vmem:[%s149 + $0x7e0] sm:$0xff] %v654
                %v656 = vld [vmem:[%s148 + $0xfc8] sm:$0xff]
                %657 = vst [vmem:[%s149 + $0x7e8] sm:$0xff] %v656
                %v658 = vld [vmem:[%s148 + $0xfd0] sm:$0xff]
                %659 = vst [vmem:[%s149 + $0x7f0] sm:$0xff] %v658
                %v660 = vld [vmem:[%s148 + $0xfd8] sm:$0xff]
                %661 = vst [vmem:[%s149 + $0x7f8] sm:$0xff] %v660
                %v662 = vld [vmem:[%s148 + $0xfe0] sm:$0xff]
                %663 = vst [vmem:[%s149 + $0x800] sm:$0xff] %v662
                %v664 = vld [vmem:[%s148 + $0xfe8] sm:$0xff]
                %665 = vst [vmem:[%s149 + $0x808] sm:$0xff] %v664
                %v666 = vld [vmem:[%s148 + $0xff0] sm:$0xff]
                %667 = vst [vmem:[%s149 + $0x810] sm:$0xff] %v666
                %v668 = vld [vmem:[%s148 + $0xff8] sm:$0xff]
                %669 = vst [vmem:[%s149 + $0x818] sm:$0xff] %v668
                %v670 = vld [vmem:[%s148 + $0x1000] sm:$0xff]
                %671 = vst [vmem:[%s149 + $0x820] sm:$0xff] %v670
                %v672 = vld [vmem:[%s148 + $0x1008] sm:$0xff]
                %673 = vst [vmem:[%s149 + $0x828] sm:$0xff] %v672
                %v674 = vld [vmem:[%s148 + $0x1010] sm:$0xff]
                %675 = vst [vmem:[%s149 + $0x830] sm:$0xff] %v674
                %v676 = vld [vmem:[%s148 + $0x1018] sm:$0xff]
                %677 = vst [vmem:[%s149 + $0x838] sm:$0xff] %v676
                %v678 = vld [vmem:[%s148 + $0x1020] sm:$0xff]
                %679 = vst [vmem:[%s149 + $0x840] sm:$0xff] %v678
                %v680 = vld [vmem:[%s148 + $0x1028] sm:$0xff]
                %681 = vst [vmem:[%s149 + $0x848] sm:$0xff] %v680
                %v682 = vld [vmem:[%s148 + $0x1030] sm:$0xff]
                %683 = vst [vmem:[%s149 + $0x850] sm:$0xff] %v682
                %v684 = vld [vmem:[%s148 + $0x1038] sm:$0xff]
                %685 = vst [vmem:[%s149 + $0x858] sm:$0xff] %v684
                %v686 = vld [vmem:[%s148 + $0x1040] sm:$0xff]
                %687 = vst [vmem:[%s149 + $0x860] sm:$0xff] %v686
                %v688 = vld [vmem:[%s148 + $0x1048] sm:$0xff]
                %689 = vst [vmem:[%s149 + $0x868] sm:$0xff] %v688
                %v690 = vld [vmem:[%s148 + $0x1050] sm:$0xff]
                %691 = vst [vmem:[%s149 + $0x870] sm:$0xff] %v690
                %v692 = vld [vmem:[%s148 + $0x1058] sm:$0xff]
                %693 = vst [vmem:[%s149 + $0x878] sm:$0xff] %v692
                %v694 = vld [vmem:[%s148 + $0x1060] sm:$0xff]
                %695 = vst [vmem:[%s149 + $0x880] sm:$0xff] %v694
                %v696 = vld [vmem:[%s148 + $0x1068] sm:$0xff]
                %697 = vst [vmem:[%s149 + $0x888] sm:$0xff] %v696
                %v698 = vld [vmem:[%s148 + $0x1070] sm:$0xff]
                %699 = vst [vmem:[%s149 + $0x890] sm:$0xff] %v698
                %v700 = vld [vmem:[%s148 + $0x1078] sm:$0xff]
                %701 = vst [vmem:[%s149 + $0x898] sm:$0xff] %v700
                %v702 = vld [vmem:[%s148 + $0x1080] sm:$0xff]
                %703 = vst [vmem:[%s149 + $0x8a0] sm:$0xff] %v702
                %v704 = vld [vmem:[%s148 + $0x1088] sm:$0xff]
                %705 = vst [vmem:[%s149 + $0x8a8] sm:$0xff] %v704
                %v706 = vld [vmem:[%s148 + $0x1090] sm:$0xff]
                %707 = vst [vmem:[%s149 + $0x8b0] sm:$0xff] %v706
                %v708 = vld [vmem:[%s148 + $0x1098] sm:$0xff]
                %709 = vst [vmem:[%s149 + $0x8b8] sm:$0xff] %v708
              $region41: #{convnet256_forward.4} parent=35 // loop_footer
                %s147 = sadd.s32 1, %s143
              $region42: #{convnet256_forward.4} parent=35 // loop_footer_branch
                %142 = sbr.rel target = $region38
              $region43: #{convnet256_forward.4} parent=35 // loop_exit
                _
            $region36: #{convnet256_forward.4} parent=31 // pred_fallthru
              _
            // Predicated region
            $region44: #{convnet256_forward.4} parent=31 // pred_check
              _
            $region45: #{convnet256_forward.4} parent=31 // pred_check_branch
              %711 = sbr.rel target = $region47
            $region46: #{convnet256_forward.4} parent=31 // pred_region
              _
            $region47: #{convnet256_forward.4} parent=31 // pred_fallthru
              _
          $region32: #{convnet256_forward.4} parent=27 // pred_fallthru
            _
          %712 = vnop
        $region28: #{convnet256_forward.4} parent=23 // pred_fallthru
          _
      $region24: #{convnet256_forward.4} parent=5 // pred_fallthru
        _
      %p713 = scmp.le.s32.totalorder 1, %s9
      %p714 = scmp.lt.s32.totalorder %s9, 3
      %p715 = pnand %p713, %p714
      %p716 = pneg %p715
      // Predicated region
      $region48: #{convnet256_forward.4} parent=5 // pred_check
        _
      $region49: #{convnet256_forward.4} parent=5 // pred_check_branch
        %718 = sbr.rel (%p715) target = $region51
      $region50: #{convnet256_forward.4} parent=5 // pred_region
        %s719 = ssub.s32 %s9, 1
        %s720 = sand.u32 %s43, 1
        %s721 = sand.u32 %s43, 1
        %s722 = smul.addr %s721, 2240
        %s723 = scalar_lea.vmem [#allocation2], %s722
        // Predicated region
        $region52: #{convnet256_forward.4} parent=50 // pred_check
          %p724 = pneg %p56
        $region53: #{convnet256_forward.4} parent=50 // pred_check_branch
          %726 = sbr.rel (%p724) target = $region55
        $region54: #{convnet256_forward.4} parent=50 // pred_region
          _
        $region55: #{convnet256_forward.4} parent=50 // pred_fallthru
          _
        %p727 = pneg %p30
        %p728 = pneg %p27
        %s729 = sand.u32 %s43, 1
        %s730 = sand.u32 %s43, 1
        %s731 = smul.addr %s730, 2240
        %s732 = scalar_lea.vmem [#allocation2], %s731
        %p733 = pneg %p56
        %p734 = pneg %p53
        %p735 = pneg %p77
        %p736 = pneg %p74
        %p737 = pneg %p103
        %p738 = pneg %p100
        %s739 = smul.u32 56, %s14
        %p740 = scmp.lt.s32.totalorder %s739, 111
        %s741 = scalar_select %p740, %s739, 111
        %s742 = smul.addr %s741, 4
        %s743 = scalar_lea.vmem %s3, %s742
        %s744 = smul.u32 56, %s14
        %s745 = smul.u32 56, %s14
        %p746 = scmp.lt.s32.totalorder %s745, 111
        %s747 = scalar_select %p746, %s745, 111
        %s748 = smul.addr %s747, 4
        %s749 = scalar_lea.vmem %s3, %s748
        %s750 = smul.u32 56, %s14
        %v751 = vld [vmem:[%s0] sm:$0xf]
        %v752 = vunpack.c.l.bf16 %v751
        %v753 = vld [vmem:[%s723] sm:$0xff]
        %v754 = vld [vmem:[%s723 + $0x8] sm:$0xff]
        %v755 = vld [vmem:[%s723 + $0x10] sm:$0xff]
        %v756 = vld [vmem:[%s723 + $0x18] sm:$0xff]
        %v757 = vld [vmem:[%s723 + $0x20] sm:$0xff]
        %v758 = vld [vmem:[%s723 + $0x28] sm:$0xff]
        %v759 = vld [vmem:[%s723 + $0x30] sm:$0xff]
        %v760 = vld [vmem:[%s723 + $0x38] sm:$0xff]
        %v761 = vld [vmem:[%s723 + $0x40] sm:$0xff]
        %v762 = vld [vmem:[%s723 + $0x48] sm:$0xff]
        %v763 = vld [vmem:[%s723 + $0x50] sm:$0xff]
        %v764 = vld [vmem:[%s723 + $0x58] sm:$0xff]
        %v765 = vld [vmem:[%s723 + $0x60] sm:$0xff]
        %v766 = vld [vmem:[%s723 + $0x68] sm:$0xff]
        %v767 = vld [vmem:[%s723 + $0x70] sm:$0xff]
        %v768 = vld [vmem:[%s723 + $0x78] sm:$0xff]
        %v769 = vld [vmem:[%s723 + $0x80] sm:$0xff]
        %v770 = vld [vmem:[%s723 + $0x88] sm:$0xff]
        %v771 = vld [vmem:[%s723 + $0x90] sm:$0xff]
        %v772 = vld [vmem:[%s723 + $0x98] sm:$0xff]
        %v773 = vld [vmem:[%s723 + $0xa0] sm:$0xff]
        %v774 = vld [vmem:[%s723 + $0xa8] sm:$0xff]
        %v775 = vld [vmem:[%s723 + $0xb0] sm:$0xff]
        %v776 = vld [vmem:[%s723 + $0xb8] sm:$0xff]
        %v777 = vld [vmem:[%s723 + $0xc0] sm:$0xff]
        %v778 = vld [vmem:[%s723 + $0xc8] sm:$0xff]
        %v779 = vld [vmem:[%s723 + $0xd0] sm:$0xff]
        %v780 = vld [vmem:[%s723 + $0xd8] sm:$0xff]
        %v781 = vld [vmem:[%s723 + $0xe0] sm:$0xff]
        %v782 = vld [vmem:[%s723 + $0xe8] sm:$0xff]
        %v783 = vld [vmem:[%s723 + $0xf0] sm:$0xff]
        %v784 = vld [vmem:[%s723 + $0xf8] sm:$0xff]
        %v785 = vld [vmem:[%s723 + $0x100] sm:$0xff]
        %v786 = vld [vmem:[%s723 + $0x108] sm:$0xff]
        %v787 = vld [vmem:[%s723 + $0x110] sm:$0xff]
        %v788 = vld [vmem:[%s723 + $0x118] sm:$0xff]
        %v789 = vld [vmem:[%s723 + $0x120] sm:$0xff]
        %v790 = vld [vmem:[%s723 + $0x128] sm:$0xff]
        %v791 = vld [vmem:[%s723 + $0x130] sm:$0xff]
        %v792 = vld [vmem:[%s723 + $0x138] sm:$0xff]
        %v793 = vld [vmem:[%s723 + $0x140] sm:$0xff]
        %v794 = vld [vmem:[%s723 + $0x148] sm:$0xff]
        %v795 = vld [vmem:[%s723 + $0x150] sm:$0xff]
        %v796 = vld [vmem:[%s723 + $0x158] sm:$0xff]
        %v797 = vld [vmem:[%s723 + $0x160] sm:$0xff]
        %v798 = vld [vmem:[%s723 + $0x168] sm:$0xff]
        %v799 = vld [vmem:[%s723 + $0x170] sm:$0xff]
        %v800 = vld [vmem:[%s723 + $0x178] sm:$0xff]
        %v801 = vld [vmem:[%s723 + $0x180] sm:$0xff]
        %v802 = vld [vmem:[%s723 + $0x188] sm:$0xff]
        %v803 = vld [vmem:[%s723 + $0x190] sm:$0xff]
        %v804 = vld [vmem:[%s723 + $0x198] sm:$0xff]
        %v805 = vld [vmem:[%s723 + $0x1a0] sm:$0xff]
        %v806 = vld [vmem:[%s723 + $0x1a8] sm:$0xff]
        %v807 = vld [vmem:[%s723 + $0x1b0] sm:$0xff]
        %v808 = vld [vmem:[%s723 + $0x1b8] sm:$0xff]
        %v809 = vld [vmem:[%s723 + $0x1c0] sm:$0xff]
        %v810 = vld [vmem:[%s723 + $0x1c8] sm:$0xff]
        %v811 = vld [vmem:[%s723 + $0x1d0] sm:$0xff]
        %v812 = vld [vmem:[%s723 + $0x1d8] sm:$0xff]
        %v813 = vld [vmem:[%s723 + $0x1e0] sm:$0xff]
        %v814 = vld [vmem:[%s723 + $0x1e8] sm:$0xff]
        %v815 = vld [vmem:[%s723 + $0x1f0] sm:$0xff]
        %v816 = vld [vmem:[%s723 + $0x1f8] sm:$0xff]
        %v817 = vld [vmem:[%s723 + $0x200] sm:$0xff]
        %v818 = vld [vmem:[%s723 + $0x208] sm:$0xff]
        %v819 = vld [vmem:[%s723 + $0x210] sm:$0xff]
        %v820 = vld [vmem:[%s723 + $0x218] sm:$0xff]
        %v821 = vld [vmem:[%s723 + $0x220] sm:$0xff]
        %v822 = vld [vmem:[%s723 + $0x228] sm:$0xff]
        %v823 = vld [vmem:[%s723 + $0x230] sm:$0xff]
        %v824 = vld [vmem:[%s723 + $0x238] sm:$0xff]
        %v825 = vld [vmem:[%s723 + $0x240] sm:$0xff]
        %v826 = vld [vmem:[%s723 + $0x248] sm:$0xff]
        %v827 = vld [vmem:[%s723 + $0x250] sm:$0xff]
        %v828 = vld [vmem:[%s723 + $0x258] sm:$0xff]
        %v829 = vld [vmem:[%s723 + $0x260] sm:$0xff]
        %v830 = vld [vmem:[%s723 + $0x268] sm:$0xff]
        %v831 = vld [vmem:[%s723 + $0x270] sm:$0xff]
        %v832 = vld [vmem:[%s723 + $0x278] sm:$0xff]
        %v833 = vld [vmem:[%s723 + $0x280] sm:$0xff]
        %v834 = vld [vmem:[%s723 + $0x288] sm:$0xff]
        %v835 = vld [vmem:[%s723 + $0x290] sm:$0xff]
        %v836 = vld [vmem:[%s723 + $0x298] sm:$0xff]
        %v837 = vld [vmem:[%s723 + $0x2a0] sm:$0xff]
        %v838 = vld [vmem:[%s723 + $0x2a8] sm:$0xff]
        %v839 = vld [vmem:[%s723 + $0x2b0] sm:$0xff]
        %v840 = vld [vmem:[%s723 + $0x2b8] sm:$0xff]
        %v841 = vld [vmem:[%s723 + $0x2c0] sm:$0xff]
        %v842 = vld [vmem:[%s723 + $0x2c8] sm:$0xff]
        %v843 = vld [vmem:[%s723 + $0x2d0] sm:$0xff]
        %v844 = vld [vmem:[%s723 + $0x2d8] sm:$0xff]
        %v845 = vld [vmem:[%s723 + $0x2e0] sm:$0xff]
        %v846 = vld [vmem:[%s723 + $0x2e8] sm:$0xff]
        %v847 = vld [vmem:[%s723 + $0x2f0] sm:$0xff]
        %v848 = vld [vmem:[%s723 + $0x2f8] sm:$0xff]
        %v849 = vld [vmem:[%s723 + $0x300] sm:$0xff]
        %v850 = vld [vmem:[%s723 + $0x308] sm:$0xff]
        %v851 = vld [vmem:[%s723 + $0x310] sm:$0xff]
        %v852 = vld [vmem:[%s723 + $0x318] sm:$0xff]
        %v853 = vld [vmem:[%s723 + $0x320] sm:$0xff]
        %v854 = vld [vmem:[%s723 + $0x328] sm:$0xff]
        %v855 = vld [vmem:[%s723 + $0x330] sm:$0xff]
        %v856 = vld [vmem:[%s723 + $0x338] sm:$0xff]
        %v857 = vld [vmem:[%s723 + $0x340] sm:$0xff]
        %v858 = vld [vmem:[%s723 + $0x348] sm:$0xff]
        %v859 = vld [vmem:[%s723 + $0x350] sm:$0xff]
        %v860 = vld [vmem:[%s723 + $0x358] sm:$0xff]
        %v861 = vld [vmem:[%s723 + $0x360] sm:$0xff]
        %v862 = vld [vmem:[%s723 + $0x368] sm:$0xff]
        %v863 = vld [vmem:[%s723 + $0x370] sm:$0xff]
        %v864 = vld [vmem:[%s723 + $0x378] sm:$0xff]
        %v865 = vld [vmem:[%s723 + $0x380] sm:$0xff]
        %v866 = vld [vmem:[%s723 + $0x388] sm:$0xff]
        %v867 = vld [vmem:[%s723 + $0x390] sm:$0xff]
        %v868 = vld [vmem:[%s723 + $0x398] sm:$0xff]
        %v869 = vld [vmem:[%s723 + $0x3a0] sm:$0xff]
        %v870 = vld [vmem:[%s723 + $0x3a8] sm:$0xff]
        %v871 = vld [vmem:[%s723 + $0x3b0] sm:$0xff]
        %v872 = vld [vmem:[%s723 + $0x3b8] sm:$0xff]
        %v873 = vld [vmem:[%s723 + $0x3c0] sm:$0xff]
        %v874 = vld [vmem:[%s723 + $0x3c8] sm:$0xff]
        %v875 = vld [vmem:[%s723 + $0x3d0] sm:$0xff]
        %v876 = vld [vmem:[%s723 + $0x3d8] sm:$0xff]
        %v877 = vld [vmem:[%s723 + $0x3e0] sm:$0xff]
        %v878 = vld [vmem:[%s723 + $0x3e8] sm:$0xff]
        %v879 = vld [vmem:[%s723 + $0x3f0] sm:$0xff]
        %v880 = vld [vmem:[%s723 + $0x3f8] sm:$0xff]
        %v881 = vld [vmem:[%s723 + $0x400] sm:$0xff]
        %v882 = vld [vmem:[%s723 + $0x408] sm:$0xff]
        %v883 = vld [vmem:[%s723 + $0x410] sm:$0xff]
        %v884 = vld [vmem:[%s723 + $0x418] sm:$0xff]
        %v885 = vld [vmem:[%s723 + $0x420] sm:$0xff]
        %v886 = vld [vmem:[%s723 + $0x428] sm:$0xff]
        %v887 = vld [vmem:[%s723 + $0x430] sm:$0xff]
        %v888 = vld [vmem:[%s723 + $0x438] sm:$0xff]
        %v889 = vld [vmem:[%s723 + $0x440] sm:$0xff]
        %v890 = vld [vmem:[%s723 + $0x448] sm:$0xff]
        %v891 = vld [vmem:[%s723 + $0x450] sm:$0xff]
        %v892 = vld [vmem:[%s723 + $0x458] sm:$0xff]
        %v893 = vld [vmem:[%s723 + $0x460] sm:$0xff]
        %v894 = vld [vmem:[%s723 + $0x468] sm:$0xff]
        %v895 = vld [vmem:[%s723 + $0x470] sm:$0xff]
        %v896 = vld [vmem:[%s723 + $0x478] sm:$0xff]
        %v897 = vld [vmem:[%s723 + $0x480] sm:$0xff]
        %v898 = vld [vmem:[%s723 + $0x488] sm:$0xff]
        %v899 = vld [vmem:[%s723 + $0x490] sm:$0xff]
        %v900 = vld [vmem:[%s723 + $0x498] sm:$0xff]
        %v901 = vld [vmem:[%s723 + $0x4a0] sm:$0xff]
        %v902 = vld [vmem:[%s723 + $0x4a8] sm:$0xff]
        %v903 = vld [vmem:[%s723 + $0x4b0] sm:$0xff]
        %v904 = vld [vmem:[%s723 + $0x4b8] sm:$0xff]
        %v905 = vld [vmem:[%s723 + $0x4c0] sm:$0xff]
        %v906 = vld [vmem:[%s723 + $0x4c8] sm:$0xff]
        %v907 = vld [vmem:[%s723 + $0x4d0] sm:$0xff]
        %v908 = vld [vmem:[%s723 + $0x4d8] sm:$0xff]
        %v909 = vld [vmem:[%s723 + $0x4e0] sm:$0xff]
        %v910 = vld [vmem:[%s723 + $0x4e8] sm:$0xff]
        %v911 = vld [vmem:[%s723 + $0x4f0] sm:$0xff]
        %v912 = vld [vmem:[%s723 + $0x4f8] sm:$0xff]
        %v913 = vld [vmem:[%s723 + $0x500] sm:$0xff]
        %v914 = vld [vmem:[%s723 + $0x508] sm:$0xff]
        %v915 = vld [vmem:[%s723 + $0x510] sm:$0xff]
        %v916 = vld [vmem:[%s723 + $0x518] sm:$0xff]
        %v917 = vld [vmem:[%s723 + $0x520] sm:$0xff]
        %v918 = vld [vmem:[%s723 + $0x528] sm:$0xff]
        %v919 = vld [vmem:[%s723 + $0x530] sm:$0xff]
        %v920 = vld [vmem:[%s723 + $0x538] sm:$0xff]
        %v921 = vld [vmem:[%s723 + $0x540] sm:$0xff]
        %v922 = vld [vmem:[%s723 + $0x548] sm:$0xff]
        %v923 = vld [vmem:[%s723 + $0x550] sm:$0xff]
        %v924 = vld [vmem:[%s723 + $0x558] sm:$0xff]
        %v925 = vld [vmem:[%s723 + $0x560] sm:$0xff]
        %v926 = vld [vmem:[%s723 + $0x568] sm:$0xff]
        %v927 = vld [vmem:[%s723 + $0x570] sm:$0xff]
        %v928 = vld [vmem:[%s723 + $0x578] sm:$0xff]
        %v929 = vld [vmem:[%s723 + $0x580] sm:$0xff]
        %v930 = vld [vmem:[%s723 + $0x588] sm:$0xff]
        %v931 = vld [vmem:[%s723 + $0x590] sm:$0xff]
        %v932 = vld [vmem:[%s723 + $0x598] sm:$0xff]
        %v933 = vld [vmem:[%s723 + $0x5a0] sm:$0xff]
        %v934 = vld [vmem:[%s723 + $0x5a8] sm:$0xff]
        %v935 = vld [vmem:[%s723 + $0x5b0] sm:$0xff]
        %v936 = vld [vmem:[%s723 + $0x5b8] sm:$0xff]
        %v937 = vld [vmem:[%s723 + $0x5c0] sm:$0xff]
        %v938 = vld [vmem:[%s723 + $0x5c8] sm:$0xff]
        %v939 = vld [vmem:[%s723 + $0x5d0] sm:$0xff]
        %v940 = vld [vmem:[%s723 + $0x5d8] sm:$0xff]
        %v941 = vld [vmem:[%s723 + $0x5e0] sm:$0xff]
        %v942 = vld [vmem:[%s723 + $0x5e8] sm:$0xff]
        %v943 = vld [vmem:[%s723 + $0x5f0] sm:$0xff]
        %v944 = vld [vmem:[%s723 + $0x5f8] sm:$0xff]
        %v945 = vld [vmem:[%s723 + $0x600] sm:$0xff]
        %v946 = vld [vmem:[%s723 + $0x608] sm:$0xff]
        %v947 = vld [vmem:[%s723 + $0x610] sm:$0xff]
        %v948 = vld [vmem:[%s723 + $0x618] sm:$0xff]
        %v949 = vld [vmem:[%s723 + $0x620] sm:$0xff]
        %v950 = vld [vmem:[%s723 + $0x628] sm:$0xff]
        %v951 = vld [vmem:[%s723 + $0x630] sm:$0xff]
        %v952 = vld [vmem:[%s723 + $0x638] sm:$0xff]
        %v953 = vld [vmem:[%s723 + $0x640] sm:$0xff]
        %v954 = vld [vmem:[%s723 + $0x648] sm:$0xff]
        %v955 = vld [vmem:[%s723 + $0x650] sm:$0xff]
        %v956 = vld [vmem:[%s723 + $0x658] sm:$0xff]
        %v957 = vld [vmem:[%s723 + $0x660] sm:$0xff]
        %v958 = vld [vmem:[%s723 + $0x668] sm:$0xff]
        %v959 = vld [vmem:[%s723 + $0x670] sm:$0xff]
        %v960 = vld [vmem:[%s723 + $0x678] sm:$0xff]
        %v961 = vld [vmem:[%s723 + $0x680] sm:$0xff]
        %v962 = vld [vmem:[%s723 + $0x688] sm:$0xff]
        %v963 = vld [vmem:[%s723 + $0x690] sm:$0xff]
        %v964 = vld [vmem:[%s723 + $0x698] sm:$0xff]
        %v965 = vld [vmem:[%s723 + $0x6a0] sm:$0xff]
        %v966 = vld [vmem:[%s723 + $0x6a8] sm:$0xff]
        %v967 = vld [vmem:[%s723 + $0x6b0] sm:$0xff]
        %v968 = vld [vmem:[%s723 + $0x6b8] sm:$0xff]
        %v969 = vld [vmem:[%s723 + $0x6c0] sm:$0xff]
        %v970 = vld [vmem:[%s723 + $0x6c8] sm:$0xff]
        %v971 = vld [vmem:[%s723 + $0x6d0] sm:$0xff]
        %v972 = vld [vmem:[%s723 + $0x6d8] sm:$0xff]
        %v973 = vld [vmem:[%s723 + $0x6e0] sm:$0xff]
        %v974 = vld [vmem:[%s723 + $0x6e8] sm:$0xff]
        %v975 = vld [vmem:[%s723 + $0x6f0] sm:$0xff]
        %v976 = vld [vmem:[%s723 + $0x6f8] sm:$0xff]
        %v977 = vld [vmem:[%s723 + $0x700] sm:$0xff]
        %v978 = vld [vmem:[%s723 + $0x708] sm:$0xff]
        %v979 = vld [vmem:[%s723 + $0x710] sm:$0xff]
        %v980 = vld [vmem:[%s723 + $0x718] sm:$0xff]
        %v981 = vld [vmem:[%s723 + $0x720] sm:$0xff]
        %v982 = vld [vmem:[%s723 + $0x728] sm:$0xff]
        %v983 = vld [vmem:[%s723 + $0x730] sm:$0xff]
        %v984 = vld [vmem:[%s723 + $0x738] sm:$0xff]
        %v985 = vld [vmem:[%s723 + $0x740] sm:$0xff]
        %v986 = vld [vmem:[%s723 + $0x748] sm:$0xff]
        %v987 = vld [vmem:[%s723 + $0x750] sm:$0xff]
        %v988 = vld [vmem:[%s723 + $0x758] sm:$0xff]
        %v989 = vld [vmem:[%s723 + $0x760] sm:$0xff]
        %v990 = vld [vmem:[%s723 + $0x768] sm:$0xff]
        %v991 = vld [vmem:[%s723 + $0x770] sm:$0xff]
        %v992 = vld [vmem:[%s723 + $0x778] sm:$0xff]
        %v993 = vld [vmem:[%s723 + $0x780] sm:$0xff]
        %v994 = vld [vmem:[%s723 + $0x788] sm:$0xff]
        %v995 = vld [vmem:[%s723 + $0x790] sm:$0xff]
        %v996 = vld [vmem:[%s723 + $0x798] sm:$0xff]
        %v997 = vld [vmem:[%s723 + $0x7a0] sm:$0xff]
        %v998 = vld [vmem:[%s723 + $0x7a8] sm:$0xff]
        %v999 = vld [vmem:[%s723 + $0x7b0] sm:$0xff]
        %v1000 = vld [vmem:[%s723 + $0x7b8] sm:$0xff]
        %v1001 = vld [vmem:[%s723 + $0x7c0] sm:$0xff]
        %v1002 = vld [vmem:[%s723 + $0x7c8] sm:$0xff]
        %v1003 = vld [vmem:[%s723 + $0x7d0] sm:$0xff]
        %v1004 = vld [vmem:[%s723 + $0x7d8] sm:$0xff]
        %v1005 = vld [vmem:[%s723 + $0x7e0] sm:$0xff]
        %v1006 = vld [vmem:[%s723 + $0x7e8] sm:$0xff]
        %v1007 = vld [vmem:[%s723 + $0x7f0] sm:$0xff]
        %v1008 = vld [vmem:[%s723 + $0x7f8] sm:$0xff]
        %v1009 = vld [vmem:[%s723 + $0x800] sm:$0xff]
        %v1010 = vld [vmem:[%s723 + $0x808] sm:$0xff]
        %v1011 = vld [vmem:[%s723 + $0x810] sm:$0xff]
        %v1012 = vld [vmem:[%s723 + $0x818] sm:$0xff]
        %v1013 = vld [vmem:[%s723 + $0x820] sm:$0xff]
        %v1014 = vld [vmem:[%s723 + $0x828] sm:$0xff]
        %v1015 = vld [vmem:[%s723 + $0x830] sm:$0xff]
        %v1016 = vld [vmem:[%s723 + $0x838] sm:$0xff]
        %v1017 = vld [vmem:[%s723 + $0x840] sm:$0xff]
        %v1018 = vld [vmem:[%s723 + $0x848] sm:$0xff]
        %v1019 = vld [vmem:[%s723 + $0x850] sm:$0xff]
        %v1020 = vld [vmem:[%s723 + $0x858] sm:$0xff]
        %v1021 = vld [vmem:[%s723 + $0x860] sm:$0xff]
        %v1022 = vld [vmem:[%s723 + $0x868] sm:$0xff]
        %v1023 = vld [vmem:[%s723 + $0x870] sm:$0xff]
        %v1024 = vld [vmem:[%s723 + $0x878] sm:$0xff]
        %v1025 = vld [vmem:[%s723 + $0x880] sm:$0xff]
        %v1026 = vld [vmem:[%s723 + $0x888] sm:$0xff]
        %v1027 = vld [vmem:[%s723 + $0x890] sm:$0xff]
        %v1028 = vld [vmem:[%s723 + $0x898] sm:$0xff]
        %v1029 = vld [vmem:[%s723 + $0x8a0] sm:$0xff]
        %v1030 = vld [vmem:[%s723 + $0x8a8] sm:$0xff]
        %v1031 = vld [vmem:[%s723 + $0x8b0] sm:$0xff]
        %v1032 = vld [vmem:[%s723 + $0x8b8] sm:$0xff]
        %v1033 = vunpack.c.l.bf16 %v753
        %v1034 = vunpack.c.h.bf16 %v753
        %v1035 = vunpack.c.l.bf16 %v754
        %v1036 = vunpack.c.h.bf16 %v754
        %v1037 = vunpack.c.l.bf16 %v755
        %v1038 = vunpack.c.h.bf16 %v755
        %v1039 = vunpack.c.l.bf16 %v756
        %v1040 = vunpack.c.h.bf16 %v756
        %v1041 = vunpack.c.l.bf16 %v757
        %v1042 = vunpack.c.h.bf16 %v757
        %v1043 = vunpack.c.l.bf16 %v758
        %v1044 = vunpack.c.h.bf16 %v758
        %v1045 = vunpack.c.l.bf16 %v759
        %v1046 = vunpack.c.h.bf16 %v759
        %v1047 = vunpack.c.l.bf16 %v760
        %v1048 = vunpack.c.h.bf16 %v760
        %v1049 = vunpack.c.l.bf16 %v761
        %v1050 = vunpack.c.h.bf16 %v761
        %v1051 = vunpack.c.l.bf16 %v762
        %v1052 = vunpack.c.h.bf16 %v762
        %v1053 = vunpack.c.l.bf16 %v763
        %v1054 = vunpack.c.h.bf16 %v763
        %v1055 = vunpack.c.l.bf16 %v764
        %v1056 = vunpack.c.h.bf16 %v764
        %v1057 = vunpack.c.l.bf16 %v765
        %v1058 = vunpack.c.h.bf16 %v765
        %v1059 = vunpack.c.l.bf16 %v766
        %v1060 = vunpack.c.h.bf16 %v766
        %v1061 = vunpack.c.l.bf16 %v767
        %v1062 = vunpack.c.h.bf16 %v767
        %v1063 = vunpack.c.l.bf16 %v768
        %v1064 = vunpack.c.h.bf16 %v768
        %v1065 = vunpack.c.l.bf16 %v769
        %v1066 = vunpack.c.h.bf16 %v769
        %v1067 = vunpack.c.l.bf16 %v770
        %v1068 = vunpack.c.h.bf16 %v770
        %v1069 = vunpack.c.l.bf16 %v771
        %v1070 = vunpack.c.h.bf16 %v771
        %v1071 = vunpack.c.l.bf16 %v772
        %v1072 = vunpack.c.h.bf16 %v772
        %v1073 = vunpack.c.l.bf16 %v773
        %v1074 = vunpack.c.h.bf16 %v773
        %v1075 = vunpack.c.l.bf16 %v774
        %v1076 = vunpack.c.h.bf16 %v774
        %v1077 = vunpack.c.l.bf16 %v775
        %v1078 = vunpack.c.h.bf16 %v775
        %v1079 = vunpack.c.l.bf16 %v776
        %v1080 = vunpack.c.h.bf16 %v776
        %v1081 = vunpack.c.l.bf16 %v777
        %v1082 = vunpack.c.h.bf16 %v777
        %v1083 = vunpack.c.l.bf16 %v778
        %v1084 = vunpack.c.h.bf16 %v778
        %v1085 = vunpack.c.l.bf16 %v779
        %v1086 = vunpack.c.h.bf16 %v779
        %v1087 = vunpack.c.l.bf16 %v780
        %v1088 = vunpack.c.h.bf16 %v780
        %v1089 = vunpack.c.l.bf16 %v781
        %v1090 = vunpack.c.h.bf16 %v781
        %v1091 = vunpack.c.l.bf16 %v782
        %v1092 = vunpack.c.h.bf16 %v782
        %v1093 = vunpack.c.l.bf16 %v783
        %v1094 = vunpack.c.h.bf16 %v783
        %v1095 = vunpack.c.l.bf16 %v784
        %v1096 = vunpack.c.h.bf16 %v784
        %v1097 = vunpack.c.l.bf16 %v785
        %v1098 = vunpack.c.h.bf16 %v785
        %v1099 = vunpack.c.l.bf16 %v786
        %v1100 = vunpack.c.h.bf16 %v786
        %v1101 = vunpack.c.l.bf16 %v787
        %v1102 = vunpack.c.h.bf16 %v787
        %v1103 = vunpack.c.l.bf16 %v788
        %v1104 = vunpack.c.h.bf16 %v788
        %v1105 = vunpack.c.l.bf16 %v789
        %v1106 = vunpack.c.h.bf16 %v789
        %v1107 = vunpack.c.l.bf16 %v790
        %v1108 = vunpack.c.h.bf16 %v790
        %v1109 = vunpack.c.l.bf16 %v791
        %v1110 = vunpack.c.h.bf16 %v791
        %v1111 = vunpack.c.l.bf16 %v792
        %v1112 = vunpack.c.h.bf16 %v792
        %v1113 = vunpack.c.l.bf16 %v793
        %v1114 = vunpack.c.h.bf16 %v793
        %v1115 = vunpack.c.l.bf16 %v794
        %v1116 = vunpack.c.h.bf16 %v794
        %v1117 = vunpack.c.l.bf16 %v795
        %v1118 = vunpack.c.h.bf16 %v795
        %v1119 = vunpack.c.l.bf16 %v796
        %v1120 = vunpack.c.h.bf16 %v796
        %v1121 = vunpack.c.l.bf16 %v797
        %v1122 = vunpack.c.h.bf16 %v797
        %v1123 = vunpack.c.l.bf16 %v798
        %v1124 = vunpack.c.h.bf16 %v798
        %v1125 = vunpack.c.l.bf16 %v799
        %v1126 = vunpack.c.h.bf16 %v799
        %v1127 = vunpack.c.l.bf16 %v800
        %v1128 = vunpack.c.h.bf16 %v800
        %v1129 = vunpack.c.l.bf16 %v801
        %v1130 = vunpack.c.h.bf16 %v801
        %v1131 = vunpack.c.l.bf16 %v802
        %v1132 = vunpack.c.h.bf16 %v802
        %v1133 = vunpack.c.l.bf16 %v803
        %v1134 = vunpack.c.h.bf16 %v803
        %v1135 = vunpack.c.l.bf16 %v804
        %v1136 = vunpack.c.h.bf16 %v804
        %v1137 = vunpack.c.l.bf16 %v805
        %v1138 = vunpack.c.h.bf16 %v805
        %v1139 = vunpack.c.l.bf16 %v806
        %v1140 = vunpack.c.h.bf16 %v806
        %v1141 = vunpack.c.l.bf16 %v807
        %v1142 = vunpack.c.h.bf16 %v807
        %v1143 = vunpack.c.l.bf16 %v808
        %v1144 = vunpack.c.h.bf16 %v808
        %v1145 = vunpack.c.l.bf16 %v809
        %v1146 = vunpack.c.h.bf16 %v809
        %v1147 = vunpack.c.l.bf16 %v810
        %v1148 = vunpack.c.h.bf16 %v810
        %v1149 = vunpack.c.l.bf16 %v811
        %v1150 = vunpack.c.h.bf16 %v811
        %v1151 = vunpack.c.l.bf16 %v812
        %v1152 = vunpack.c.h.bf16 %v812
        %v1153 = vunpack.c.l.bf16 %v813
        %v1154 = vunpack.c.h.bf16 %v813
        %v1155 = vunpack.c.l.bf16 %v814
        %v1156 = vunpack.c.h.bf16 %v814
        %v1157 = vunpack.c.l.bf16 %v815
        %v1158 = vunpack.c.h.bf16 %v815
        %v1159 = vunpack.c.l.bf16 %v816
        %v1160 = vunpack.c.h.bf16 %v816
        %v1161 = vunpack.c.l.bf16 %v817
        %v1162 = vunpack.c.h.bf16 %v817
        %v1163 = vunpack.c.l.bf16 %v818
        %v1164 = vunpack.c.h.bf16 %v818
        %v1165 = vunpack.c.l.bf16 %v819
        %v1166 = vunpack.c.h.bf16 %v819
        %v1167 = vunpack.c.l.bf16 %v820
        %v1168 = vunpack.c.h.bf16 %v820
        %v1169 = vunpack.c.l.bf16 %v821
        %v1170 = vunpack.c.h.bf16 %v821
        %v1171 = vunpack.c.l.bf16 %v822
        %v1172 = vunpack.c.h.bf16 %v822
        %v1173 = vunpack.c.l.bf16 %v823
        %v1174 = vunpack.c.h.bf16 %v823
        %v1175 = vunpack.c.l.bf16 %v824
        %v1176 = vunpack.c.h.bf16 %v824
        %v1177 = vunpack.c.l.bf16 %v825
        %v1178 = vunpack.c.h.bf16 %v825
        %v1179 = vunpack.c.l.bf16 %v826
        %v1180 = vunpack.c.h.bf16 %v826
        %v1181 = vunpack.c.l.bf16 %v827
        %v1182 = vunpack.c.h.bf16 %v827
        %v1183 = vunpack.c.l.bf16 %v828
        %v1184 = vunpack.c.h.bf16 %v828
        %v1185 = vunpack.c.l.bf16 %v829
        %v1186 = vunpack.c.h.bf16 %v829
        %v1187 = vunpack.c.l.bf16 %v830
        %v1188 = vunpack.c.h.bf16 %v830
        %v1189 = vunpack.c.l.bf16 %v831
        %v1190 = vunpack.c.h.bf16 %v831
        %v1191 = vunpack.c.l.bf16 %v832
        %v1192 = vunpack.c.h.bf16 %v832
        %v1193 = vunpack.c.l.bf16 %v833
        %v1194 = vunpack.c.h.bf16 %v833
        %v1195 = vunpack.c.l.bf16 %v834
        %v1196 = vunpack.c.h.bf16 %v834
        %v1197 = vunpack.c.l.bf16 %v835
        %v1198 = vunpack.c.h.bf16 %v835
        %v1199 = vunpack.c.l.bf16 %v836
        %v1200 = vunpack.c.h.bf16 %v836
        %v1201 = vunpack.c.l.bf16 %v837
        %v1202 = vunpack.c.h.bf16 %v837
        %v1203 = vunpack.c.l.bf16 %v838
        %v1204 = vunpack.c.h.bf16 %v838
        %v1205 = vunpack.c.l.bf16 %v839
        %v1206 = vunpack.c.h.bf16 %v839
        %v1207 = vunpack.c.l.bf16 %v840
        %v1208 = vunpack.c.h.bf16 %v840
        %v1209 = vunpack.c.l.bf16 %v841
        %v1210 = vunpack.c.h.bf16 %v841
        %v1211 = vunpack.c.l.bf16 %v842
        %v1212 = vunpack.c.h.bf16 %v842
        %v1213 = vunpack.c.l.bf16 %v843
        %v1214 = vunpack.c.h.bf16 %v843
        %v1215 = vunpack.c.l.bf16 %v844
        %v1216 = vunpack.c.h.bf16 %v844
        %v1217 = vunpack.c.l.bf16 %v845
        %v1218 = vunpack.c.h.bf16 %v845
        %v1219 = vunpack.c.l.bf16 %v846
        %v1220 = vunpack.c.h.bf16 %v846
        %v1221 = vunpack.c.l.bf16 %v847
        %v1222 = vunpack.c.h.bf16 %v847
        %v1223 = vunpack.c.l.bf16 %v848
        %v1224 = vunpack.c.h.bf16 %v848
        %v1225 = vunpack.c.l.bf16 %v849
        %v1226 = vunpack.c.h.bf16 %v849
        %v1227 = vunpack.c.l.bf16 %v850
        %v1228 = vunpack.c.h.bf16 %v850
        %v1229 = vunpack.c.l.bf16 %v851
        %v1230 = vunpack.c.h.bf16 %v851
        %v1231 = vunpack.c.l.bf16 %v852
        %v1232 = vunpack.c.h.bf16 %v852
        %v1233 = vunpack.c.l.bf16 %v853
        %v1234 = vunpack.c.h.bf16 %v853
        %v1235 = vunpack.c.l.bf16 %v854
        %v1236 = vunpack.c.h.bf16 %v854
        %v1237 = vunpack.c.l.bf16 %v855
        %v1238 = vunpack.c.h.bf16 %v855
        %v1239 = vunpack.c.l.bf16 %v856
        %v1240 = vunpack.c.h.bf16 %v856
        %v1241 = vunpack.c.l.bf16 %v857
        %v1242 = vunpack.c.h.bf16 %v857
        %v1243 = vunpack.c.l.bf16 %v858
        %v1244 = vunpack.c.h.bf16 %v858
        %v1245 = vunpack.c.l.bf16 %v859
        %v1246 = vunpack.c.h.bf16 %v859
        %v1247 = vunpack.c.l.bf16 %v860
        %v1248 = vunpack.c.h.bf16 %v860
        %v1249 = vunpack.c.l.bf16 %v861
        %v1250 = vunpack.c.h.bf16 %v861
        %v1251 = vunpack.c.l.bf16 %v862
        %v1252 = vunpack.c.h.bf16 %v862
        %v1253 = vunpack.c.l.bf16 %v863
        %v1254 = vunpack.c.h.bf16 %v863
        %v1255 = vunpack.c.l.bf16 %v864
        %v1256 = vunpack.c.h.bf16 %v864
        %v1257 = vunpack.c.l.bf16 %v865
        %v1258 = vunpack.c.h.bf16 %v865
        %v1259 = vunpack.c.l.bf16 %v866
        %v1260 = vunpack.c.h.bf16 %v866
        %v1261 = vunpack.c.l.bf16 %v867
        %v1262 = vunpack.c.h.bf16 %v867
        %v1263 = vunpack.c.l.bf16 %v868
        %v1264 = vunpack.c.h.bf16 %v868
        %v1265 = vunpack.c.l.bf16 %v869
        %v1266 = vunpack.c.h.bf16 %v869
        %v1267 = vunpack.c.l.bf16 %v870
        %v1268 = vunpack.c.h.bf16 %v870
        %v1269 = vunpack.c.l.bf16 %v871
        %v1270 = vunpack.c.h.bf16 %v871
        %v1271 = vunpack.c.l.bf16 %v872
        %v1272 = vunpack.c.h.bf16 %v872
        %v1273 = vunpack.c.l.bf16 %v873
        %v1274 = vunpack.c.h.bf16 %v873
        %v1275 = vunpack.c.l.bf16 %v874
        %v1276 = vunpack.c.h.bf16 %v874
        %v1277 = vunpack.c.l.bf16 %v875
        %v1278 = vunpack.c.h.bf16 %v875
        %v1279 = vunpack.c.l.bf16 %v876
        %v1280 = vunpack.c.h.bf16 %v876
        %v1281 = vunpack.c.l.bf16 %v877
        %v1282 = vunpack.c.h.bf16 %v877
        %v1283 = vunpack.c.l.bf16 %v878
        %v1284 = vunpack.c.h.bf16 %v878
        %v1285 = vunpack.c.l.bf16 %v879
        %v1286 = vunpack.c.h.bf16 %v879
        %v1287 = vunpack.c.l.bf16 %v880
        %v1288 = vunpack.c.h.bf16 %v880
        %v1289 = vunpack.c.l.bf16 %v881
        %v1290 = vunpack.c.h.bf16 %v881
        %v1291 = vunpack.c.l.bf16 %v882
        %v1292 = vunpack.c.h.bf16 %v882
        %v1293 = vunpack.c.l.bf16 %v883
        %v1294 = vunpack.c.h.bf16 %v883
        %v1295 = vunpack.c.l.bf16 %v884
        %v1296 = vunpack.c.h.bf16 %v884
        %v1297 = vunpack.c.l.bf16 %v885
        %v1298 = vunpack.c.h.bf16 %v885
        %v1299 = vunpack.c.l.bf16 %v886
        %v1300 = vunpack.c.h.bf16 %v886
        %v1301 = vunpack.c.l.bf16 %v887
        %v1302 = vunpack.c.h.bf16 %v887
        %v1303 = vunpack.c.l.bf16 %v888
        %v1304 = vunpack.c.h.bf16 %v888
        %v1305 = vunpack.c.l.bf16 %v889
        %v1306 = vunpack.c.h.bf16 %v889
        %v1307 = vunpack.c.l.bf16 %v890
        %v1308 = vunpack.c.h.bf16 %v890
        %v1309 = vunpack.c.l.bf16 %v891
        %v1310 = vunpack.c.h.bf16 %v891
        %v1311 = vunpack.c.l.bf16 %v892
        %v1312 = vunpack.c.h.bf16 %v892
        %v1313 = vunpack.c.l.bf16 %v893
        %v1314 = vunpack.c.h.bf16 %v893
        %v1315 = vunpack.c.l.bf16 %v894
        %v1316 = vunpack.c.h.bf16 %v894
        %v1317 = vunpack.c.l.bf16 %v895
        %v1318 = vunpack.c.h.bf16 %v895
        %v1319 = vunpack.c.l.bf16 %v896
        %v1320 = vunpack.c.h.bf16 %v896
        %v1321 = vunpack.c.l.bf16 %v897
        %v1322 = vunpack.c.h.bf16 %v897
        %v1323 = vunpack.c.l.bf16 %v898
        %v1324 = vunpack.c.h.bf16 %v898
        %v1325 = vunpack.c.l.bf16 %v899
        %v1326 = vunpack.c.h.bf16 %v899
        %v1327 = vunpack.c.l.bf16 %v900
        %v1328 = vunpack.c.h.bf16 %v900
        %v1329 = vunpack.c.l.bf16 %v901
        %v1330 = vunpack.c.h.bf16 %v901
        %v1331 = vunpack.c.l.bf16 %v902
        %v1332 = vunpack.c.h.bf16 %v902
        %v1333 = vunpack.c.l.bf16 %v903
        %v1334 = vunpack.c.h.bf16 %v903
        %v1335 = vunpack.c.l.bf16 %v904
        %v1336 = vunpack.c.h.bf16 %v904
        %v1337 = vunpack.c.l.bf16 %v905
        %v1338 = vunpack.c.h.bf16 %v905
        %v1339 = vunpack.c.l.bf16 %v906
        %v1340 = vunpack.c.h.bf16 %v906
        %v1341 = vunpack.c.l.bf16 %v907
        %v1342 = vunpack.c.h.bf16 %v907
        %v1343 = vunpack.c.l.bf16 %v908
        %v1344 = vunpack.c.h.bf16 %v908
        %v1345 = vunpack.c.l.bf16 %v909
        %v1346 = vunpack.c.h.bf16 %v909
        %v1347 = vunpack.c.l.bf16 %v910
        %v1348 = vunpack.c.h.bf16 %v910
        %v1349 = vunpack.c.l.bf16 %v911
        %v1350 = vunpack.c.h.bf16 %v911
        %v1351 = vunpack.c.l.bf16 %v912
        %v1352 = vunpack.c.h.bf16 %v912
        %v1353 = vunpack.c.l.bf16 %v913
        %v1354 = vunpack.c.h.bf16 %v913
        %v1355 = vunpack.c.l.bf16 %v914
        %v1356 = vunpack.c.h.bf16 %v914
        %v1357 = vunpack.c.l.bf16 %v915
        %v1358 = vunpack.c.h.bf16 %v915
        %v1359 = vunpack.c.l.bf16 %v916
        %v1360 = vunpack.c.h.bf16 %v916
        %v1361 = vunpack.c.l.bf16 %v917
        %v1362 = vunpack.c.h.bf16 %v917
        %v1363 = vunpack.c.l.bf16 %v918
        %v1364 = vunpack.c.h.bf16 %v918
        %v1365 = vunpack.c.l.bf16 %v919
        %v1366 = vunpack.c.h.bf16 %v919
        %v1367 = vunpack.c.l.bf16 %v920
        %v1368 = vunpack.c.h.bf16 %v920
        %v1369 = vunpack.c.l.bf16 %v921
        %v1370 = vunpack.c.h.bf16 %v921
        %v1371 = vunpack.c.l.bf16 %v922
        %v1372 = vunpack.c.h.bf16 %v922
        %v1373 = vunpack.c.l.bf16 %v923
        %v1374 = vunpack.c.h.bf16 %v923
        %v1375 = vunpack.c.l.bf16 %v924
        %v1376 = vunpack.c.h.bf16 %v924
        %v1377 = vunpack.c.l.bf16 %v925
        %v1378 = vunpack.c.h.bf16 %v925
        %v1379 = vunpack.c.l.bf16 %v926
        %v1380 = vunpack.c.h.bf16 %v926
        %v1381 = vunpack.c.l.bf16 %v927
        %v1382 = vunpack.c.h.bf16 %v927
        %v1383 = vunpack.c.l.bf16 %v928
        %v1384 = vunpack.c.h.bf16 %v928
        %v1385 = vunpack.c.l.bf16 %v929
        %v1386 = vunpack.c.h.bf16 %v929
        %v1387 = vunpack.c.l.bf16 %v930
        %v1388 = vunpack.c.h.bf16 %v930
        %v1389 = vunpack.c.l.bf16 %v931
        %v1390 = vunpack.c.h.bf16 %v931
        %v1391 = vunpack.c.l.bf16 %v932
        %v1392 = vunpack.c.h.bf16 %v932
        %v1393 = vunpack.c.l.bf16 %v933
        %v1394 = vunpack.c.h.bf16 %v933
        %v1395 = vunpack.c.l.bf16 %v934
        %v1396 = vunpack.c.h.bf16 %v934
        %v1397 = vunpack.c.l.bf16 %v935
        %v1398 = vunpack.c.h.bf16 %v935
        %v1399 = vunpack.c.l.bf16 %v936
        %v1400 = vunpack.c.h.bf16 %v936
        %v1401 = vunpack.c.l.bf16 %v937
        %v1402 = vunpack.c.h.bf16 %v937
        %v1403 = vunpack.c.l.bf16 %v938
        %v1404 = vunpack.c.h.bf16 %v938
        %v1405 = vunpack.c.l.bf16 %v939
        %v1406 = vunpack.c.h.bf16 %v939
        %v1407 = vunpack.c.l.bf16 %v940
        %v1408 = vunpack.c.h.bf16 %v940
        %v1409 = vunpack.c.l.bf16 %v941
        %v1410 = vunpack.c.h.bf16 %v941
        %v1411 = vunpack.c.l.bf16 %v942
        %v1412 = vunpack.c.h.bf16 %v942
        %v1413 = vunpack.c.l.bf16 %v943
        %v1414 = vunpack.c.h.bf16 %v943
        %v1415 = vunpack.c.l.bf16 %v944
        %v1416 = vunpack.c.h.bf16 %v944
        %v1417 = vunpack.c.l.bf16 %v945
        %v1418 = vunpack.c.h.bf16 %v945
        %v1419 = vunpack.c.l.bf16 %v946
        %v1420 = vunpack.c.h.bf16 %v946
        %v1421 = vunpack.c.l.bf16 %v947
        %v1422 = vunpack.c.h.bf16 %v947
        %v1423 = vunpack.c.l.bf16 %v948
        %v1424 = vunpack.c.h.bf16 %v948
        %v1425 = vunpack.c.l.bf16 %v949
        %v1426 = vunpack.c.h.bf16 %v949
        %v1427 = vunpack.c.l.bf16 %v950
        %v1428 = vunpack.c.h.bf16 %v950
        %v1429 = vunpack.c.l.bf16 %v951
        %v1430 = vunpack.c.h.bf16 %v951
        %v1431 = vunpack.c.l.bf16 %v952
        %v1432 = vunpack.c.h.bf16 %v952
        %v1433 = vunpack.c.l.bf16 %v953
        %v1434 = vunpack.c.h.bf16 %v953
        %v1435 = vunpack.c.l.bf16 %v954
        %v1436 = vunpack.c.h.bf16 %v954
        %v1437 = vunpack.c.l.bf16 %v955
        %v1438 = vunpack.c.h.bf16 %v955
        %v1439 = vunpack.c.l.bf16 %v956
        %v1440 = vunpack.c.h.bf16 %v956
        %v1441 = vunpack.c.l.bf16 %v957
        %v1442 = vunpack.c.h.bf16 %v957
        %v1443 = vunpack.c.l.bf16 %v958
        %v1444 = vunpack.c.h.bf16 %v958
        %v1445 = vunpack.c.l.bf16 %v959
        %v1446 = vunpack.c.h.bf16 %v959
        %v1447 = vunpack.c.l.bf16 %v960
        %v1448 = vunpack.c.h.bf16 %v960
        %v1449 = vunpack.c.l.bf16 %v961
        %v1450 = vunpack.c.h.bf16 %v961
        %v1451 = vunpack.c.l.bf16 %v962
        %v1452 = vunpack.c.h.bf16 %v962
        %v1453 = vunpack.c.l.bf16 %v963
        %v1454 = vunpack.c.h.bf16 %v963
        %v1455 = vunpack.c.l.bf16 %v964
        %v1456 = vunpack.c.h.bf16 %v964
        %v1457 = vunpack.c.l.bf16 %v965
        %v1458 = vunpack.c.h.bf16 %v965
        %v1459 = vunpack.c.l.bf16 %v966
        %v1460 = vunpack.c.h.bf16 %v966
        %v1461 = vunpack.c.l.bf16 %v967
        %v1462 = vunpack.c.h.bf16 %v967
        %v1463 = vunpack.c.l.bf16 %v968
        %v1464 = vunpack.c.h.bf16 %v968
        %v1465 = vunpack.c.l.bf16 %v969
        %v1466 = vunpack.c.h.bf16 %v969
        %v1467 = vunpack.c.l.bf16 %v970
        %v1468 = vunpack.c.h.bf16 %v970
        %v1469 = vunpack.c.l.bf16 %v971
        %v1470 = vunpack.c.h.bf16 %v971
        %v1471 = vunpack.c.l.bf16 %v972
        %v1472 = vunpack.c.h.bf16 %v972
        %v1473 = vunpack.c.l.bf16 %v973
        %v1474 = vunpack.c.h.bf16 %v973
        %v1475 = vunpack.c.l.bf16 %v974
        %v1476 = vunpack.c.h.bf16 %v974
        %v1477 = vunpack.c.l.bf16 %v975
        %v1478 = vunpack.c.h.bf16 %v975
        %v1479 = vunpack.c.l.bf16 %v976
        %v1480 = vunpack.c.h.bf16 %v976
        %v1481 = vunpack.c.l.bf16 %v977
        %v1482 = vunpack.c.h.bf16 %v977
        %v1483 = vunpack.c.l.bf16 %v978
        %v1484 = vunpack.c.h.bf16 %v978
        %v1485 = vunpack.c.l.bf16 %v979
        %v1486 = vunpack.c.h.bf16 %v979
        %v1487 = vunpack.c.l.bf16 %v980
        %v1488 = vunpack.c.h.bf16 %v980
        %v1489 = vunpack.c.l.bf16 %v981
        %v1490 = vunpack.c.h.bf16 %v981
        %v1491 = vunpack.c.l.bf16 %v982
        %v1492 = vunpack.c.h.bf16 %v982
        %v1493 = vunpack.c.l.bf16 %v983
        %v1494 = vunpack.c.h.bf16 %v983
        %v1495 = vunpack.c.l.bf16 %v984
        %v1496 = vunpack.c.h.bf16 %v984
        %v1497 = vunpack.c.l.bf16 %v985
        %v1498 = vunpack.c.h.bf16 %v985
        %v1499 = vunpack.c.l.bf16 %v986
        %v1500 = vunpack.c.h.bf16 %v986
        %v1501 = vunpack.c.l.bf16 %v987
        %v1502 = vunpack.c.h.bf16 %v987
        %v1503 = vunpack.c.l.bf16 %v988
        %v1504 = vunpack.c.h.bf16 %v988
        %v1505 = vunpack.c.l.bf16 %v989
        %v1506 = vunpack.c.h.bf16 %v989
        %v1507 = vunpack.c.l.bf16 %v990
        %v1508 = vunpack.c.h.bf16 %v990
        %v1509 = vunpack.c.l.bf16 %v991
        %v1510 = vunpack.c.h.bf16 %v991
        %v1511 = vunpack.c.l.bf16 %v992
        %v1512 = vunpack.c.h.bf16 %v992
        %v1513 = vunpack.c.l.bf16 %v993
        %v1514 = vunpack.c.h.bf16 %v993
        %v1515 = vunpack.c.l.bf16 %v994
        %v1516 = vunpack.c.h.bf16 %v994
        %v1517 = vunpack.c.l.bf16 %v995
        %v1518 = vunpack.c.h.bf16 %v995
        %v1519 = vunpack.c.l.bf16 %v996
        %v1520 = vunpack.c.h.bf16 %v996
        %v1521 = vunpack.c.l.bf16 %v997
        %v1522 = vunpack.c.h.bf16 %v997
        %v1523 = vunpack.c.l.bf16 %v998
        %v1524 = vunpack.c.h.bf16 %v998
        %v1525 = vunpack.c.l.bf16 %v999
        %v1526 = vunpack.c.h.bf16 %v999
        %v1527 = vunpack.c.l.bf16 %v1000
        %v1528 = vunpack.c.h.bf16 %v1000
        %v1529 = vunpack.c.l.bf16 %v1001
        %v1530 = vunpack.c.h.bf16 %v1001
        %v1531 = vunpack.c.l.bf16 %v1002
        %v1532 = vunpack.c.h.bf16 %v1002
        %v1533 = vunpack.c.l.bf16 %v1003
        %v1534 = vunpack.c.h.bf16 %v1003
        %v1535 = vunpack.c.l.bf16 %v1004
        %v1536 = vunpack.c.h.bf16 %v1004
        %v1537 = vunpack.c.l.bf16 %v1005
        %v1538 = vunpack.c.h.bf16 %v1005
        %v1539 = vunpack.c.l.bf16 %v1006
        %v1540 = vunpack.c.h.bf16 %v1006
        %v1541 = vunpack.c.l.bf16 %v1007
        %v1542 = vunpack.c.h.bf16 %v1007
        %v1543 = vunpack.c.l.bf16 %v1008
        %v1544 = vunpack.c.h.bf16 %v1008
        %v1545 = vunpack.c.l.bf16 %v1009
        %v1546 = vunpack.c.h.bf16 %v1009
        %v1547 = vunpack.c.l.bf16 %v1010
        %v1548 = vunpack.c.h.bf16 %v1010
        %v1549 = vunpack.c.l.bf16 %v1011
        %v1550 = vunpack.c.h.bf16 %v1011
        %v1551 = vunpack.c.l.bf16 %v1012
        %v1552 = vunpack.c.h.bf16 %v1012
        %v1553 = vunpack.c.l.bf16 %v1013
        %v1554 = vunpack.c.h.bf16 %v1013
        %v1555 = vunpack.c.l.bf16 %v1014
        %v1556 = vunpack.c.h.bf16 %v1014
        %v1557 = vunpack.c.l.bf16 %v1015
        %v1558 = vunpack.c.h.bf16 %v1015
        %v1559 = vunpack.c.l.bf16 %v1016
        %v1560 = vunpack.c.h.bf16 %v1016
        %v1561 = vunpack.c.l.bf16 %v1017
        %v1562 = vunpack.c.h.bf16 %v1017
        %v1563 = vunpack.c.l.bf16 %v1018
        %v1564 = vunpack.c.h.bf16 %v1018
        %v1565 = vunpack.c.l.bf16 %v1019
        %v1566 = vunpack.c.h.bf16 %v1019
        %v1567 = vunpack.c.l.bf16 %v1020
        %v1568 = vunpack.c.h.bf16 %v1020
        %v1569 = vunpack.c.l.bf16 %v1021
        %v1570 = vunpack.c.h.bf16 %v1021
        %v1571 = vunpack.c.l.bf16 %v1022
        %v1572 = vunpack.c.h.bf16 %v1022
        %v1573 = vunpack.c.l.bf16 %v1023
        %v1574 = vunpack.c.h.bf16 %v1023
        %v1575 = vunpack.c.l.bf16 %v1024
        %v1576 = vunpack.c.h.bf16 %v1024
        %v1577 = vunpack.c.l.bf16 %v1025
        %v1578 = vunpack.c.h.bf16 %v1025
        %v1579 = vunpack.c.l.bf16 %v1026
        %v1580 = vunpack.c.h.bf16 %v1026
        %v1581 = vunpack.c.l.bf16 %v1027
        %v1582 = vunpack.c.h.bf16 %v1027
        %v1583 = vunpack.c.l.bf16 %v1028
        %v1584 = vunpack.c.h.bf16 %v1028
        %v1585 = vunpack.c.l.bf16 %v1029
        %v1586 = vunpack.c.h.bf16 %v1029
        %v1587 = vunpack.c.l.bf16 %v1030
        %v1588 = vunpack.c.h.bf16 %v1030
        %v1589 = vunpack.c.l.bf16 %v1031
        %v1590 = vunpack.c.h.bf16 %v1031
        %v1591 = vunpack.c.l.bf16 %v1032
        %v1592 = vunpack.c.h.bf16 %v1032
        %v1593 = vld [vmem:[%s2] sm:$0xff]
        %1595 = vset.pattern.permute.xlu0 0
        %1596 = vperm.xlu0 %1595, %v1593
        %v1597 = vpop.permute.xlu0 %1596
        %vm1599 = vcmask 654336
        %v1601 = vsel %vm1599, %v752, 0
        %1603 = vmatprep.subr.mxu0 0.0
        %1604 = vmatpush1.msra.mxu0 0.0
        %1605 = vmatprep.subr.mxu0 0.0
        %1606 = vmatpush1.msra.mxu0 0.0
        %1607 = vmatprep.subr.mxu0 0.0
        %1608 = vmatpush1.msra.mxu0 0.0
        %1609 = vmatprep.subr.mxu0 0.0
        %1610 = vmatpush1.msra.mxu0 0.0
        %1611 = vmatprep.subr.mxu0 0.0
        %1612 = vmatpush1.msra.mxu0 0.0
        %1613 = vmatprep.subr.mxu0 0.0
        %1614 = vmatpush1.msra.mxu0 0.0
        %1615 = vmatprep.subr.mxu0 %v1538
        %1616 = vmatpush1.msra.mxu0 %v1537
        %1617 = vmatprep.subr.mxu0 %v1482
        %1618 = vmatpush1.msra.mxu0 %v1481
        %1619 = vmatprep.subr.mxu0 %v1426
        %1620 = vmatpush1.msra.mxu0 %v1425
        %1621 = vmatprep.subr.mxu0 %v1370
        %1622 = vmatpush1.msra.mxu0 %v1369
        %1623 = vmatprep.subr.mxu0 %v1314
        %1624 = vmatpush1.msra.mxu0 %v1313
        %1625 = vmatprep.subr.mxu0 %v1258
        %1626 = vmatpush1.msra.mxu0 %v1257
        %1627 = vmatprep.subr.mxu0 %v1202
        %1628 = vmatpush1.msra.mxu0 %v1201
        %1629 = vmatprep.subr.mxu0 %v1146
        %1630 = vmatpush1.msra.mxu0 %v1145
        %1631 = vmatprep.subr.mxu0 %v1090
        %1632 = vmatpush1.msra.mxu0 %v1089
        %1633 = vmatprep.subr.mxu0 %v1034
        %1634 = vmatpush1.msra.mxu0 %v1033
        %1635 = vmatprep.subr.mxu0 0.0
        %1636 = vmatpush2.msra.mxu0 0.0
        %1637 = vmatprep.subr.mxu0 0.0
        %1638 = vmatpush2.msra.mxu0 0.0
        %1639 = vmatprep.subr.mxu0 0.0
        %1640 = vmatpush2.msra.mxu0 0.0
        %1641 = vmatprep.subr.mxu0 0.0
        %1642 = vmatpush2.msra.mxu0 0.0
        %1643 = vmatprep.subr.mxu0 0.0
        %1644 = vmatpush2.msra.mxu0 0.0
        %1645 = vmatprep.subr.mxu0 0.0
        %1646 = vmatpush2.msra.mxu0 0.0
        %1647 = vmatprep.subr.mxu0 0.0
        %1648 = vmatpush2.msra.mxu0 0.0
        %1649 = vmatprep.subr.mxu0 0.0
        %1650 = vmatpush2.msra.mxu0 0.0
        %1651 = vmatprep.subr.mxu0 0.0
        %1652 = vmatpush2.msra.mxu0 0.0
        %1653 = vmatprep.subr.mxu0 0.0
        %1654 = vmatpush2.msra.mxu0 0.0
        %1655 = vmatprep.subr.mxu0 0.0
        %1656 = vmatpush2.msra.mxu0 0.0
        %1657 = vmatprep.subr.mxu0 0.0
        %1658 = vmatpush2.msra.mxu0 0.0
        %1659 = vmatprep.subr.mxu0 0.0
        %1660 = vmatpush2.msra.mxu0 0.0
        %1661 = vmatprep.subr.mxu0 0.0
        %1662 = vmatpush2.msra.mxu0 0.0
        %1663 = vmatprep.subr.mxu0 0.0
        %1664 = vmatpush2.msra.mxu0 0.0
        %1665 = vmatprep.subr.mxu0 0.0
        %1666 = vmatpush2.msra.mxu0 0.0
        %1667 = vmatprep.mubr.f32.mxu0 0.0
        %1668 = vmatmul.mubr.f32.gmra.mxu0 %v1601
        %v1669 = vpop.f32.mrf.mxu0
        %v1670 = vadd.f32 %v1597, %v1669
        %v1671 = vpop.f32.mrf.mxu0
        %v1672 = vadd.f32 %v1597, %v1671
        %1673 = vdwg.mxu0
        %1674 = vmatprep.subr.mxu0 0.0
        %1675 = vmatpush1.msra.mxu0 0.0
        %1676 = vmatprep.subr.mxu0 0.0
        %1677 = vmatpush1.msra.mxu0 0.0
        %1678 = vmatprep.subr.mxu0 0.0
        %1679 = vmatpush1.msra.mxu0 0.0
        %1680 = vmatprep.subr.mxu0 0.0
        %1681 = vmatpush1.msra.mxu0 0.0
        %1682 = vmatprep.subr.mxu0 0.0
        %1683 = vmatpush1.msra.mxu0 0.0
        %1684 = vmatprep.subr.mxu0 0.0
        %1685 = vmatpush1.msra.mxu0 0.0
        %1686 = vmatprep.subr.mxu0 %v1540
        %1687 = vmatpush1.msra.mxu0 %v1539
        %1688 = vmatprep.subr.mxu0 %v1484
        %1689 = vmatpush1.msra.mxu0 %v1483
        %1690 = vmatprep.subr.mxu0 %v1428
        %1691 = vmatpush1.msra.mxu0 %v1427
        %1692 = vmatprep.subr.mxu0 %v1372
        %1693 = vmatpush1.msra.mxu0 %v1371
        %1694 = vmatprep.subr.mxu0 %v1316
        %1695 = vmatpush1.msra.mxu0 %v1315
        %1696 = vmatprep.subr.mxu0 %v1260
        %1697 = vmatpush1.msra.mxu0 %v1259
        %1698 = vmatprep.subr.mxu0 %v1204
        %1699 = vmatpush1.msra.mxu0 %v1203
        %1700 = vmatprep.subr.mxu0 %v1148
        %1701 = vmatpush1.msra.mxu0 %v1147
        %1702 = vmatprep.subr.mxu0 %v1092
        %1703 = vmatpush1.msra.mxu0 %v1091
        %1704 = vmatprep.subr.mxu0 %v1036
        %1705 = vmatpush1.msra.mxu0 %v1035
        %1706 = vmatprep.subr.mxu0 0.0
        %1707 = vmatpush2.msra.mxu0 0.0
        %1708 = vmatprep.subr.mxu0 0.0
        %1709 = vmatpush2.msra.mxu0 0.0
        %1710 = vmatprep.subr.mxu0 0.0
        %1711 = vmatpush2.msra.mxu0 0.0
        %1712 = vmatprep.subr.mxu0 0.0
        %1713 = vmatpush2.msra.mxu0 0.0
        %1714 = vmatprep.subr.mxu0 0.0
        %1715 = vmatpush2.msra.mxu0 0.0
        %1716 = vmatprep.subr.mxu0 0.0
        %1717 = vmatpush2.msra.mxu0 0.0
        %1718 = vmatprep.subr.mxu0 0.0
        %1719 = vmatpush2.msra.mxu0 0.0
        %1720 = vmatprep.subr.mxu0 0.0
        %1721 = vmatpush2.msra.mxu0 0.0
        %1722 = vmatprep.subr.mxu0 0.0
        %1723 = vmatpush2.msra.mxu0 0.0
        %1724 = vmatprep.subr.mxu0 0.0
        %1725 = vmatpush2.msra.mxu0 0.0
        %1726 = vmatprep.subr.mxu0 0.0
        %1727 = vmatpush2.msra.mxu0 0.0
        %1728 = vmatprep.subr.mxu0 0.0
        %1729 = vmatpush2.msra.mxu0 0.0
        %1730 = vmatprep.subr.mxu0 0.0
        %1731 = vmatpush2.msra.mxu0 0.0
        %1732 = vmatprep.subr.mxu0 0.0
        %1733 = vmatpush2.msra.mxu0 0.0
        %1734 = vmatprep.subr.mxu0 0.0
        %1735 = vmatpush2.msra.mxu0 0.0
        %1736 = vmatprep.subr.mxu0 0.0
        %1737 = vmatpush2.msra.mxu0 0.0
        %1738 = vmatprep.mubr.f32.mxu0 0.0
        %1739 = vmatmul.mubr.f32.gmra.mxu0 %v1601
        %v1740 = vpop.f32.mrf.mxu0
        %v1741 = vadd.f32 %v1597, %v1740
        %v1742 = vpop.f32.mrf.mxu0
        %v1743 = vadd.f32 %v1597, %v1742
        %1744 = vdwg.mxu0
        %1745 = vmatprep.subr.mxu0 0.0
        %1746 = vmatpush1.msra.mxu0 0.0
        %1747 = vmatprep.subr.mxu0 0.0
        %1748 = vmatpush1.msra.mxu0 0.0
        %1749 = vmatprep.subr.mxu0 0.0
        %1750 = vmatpush1.msra.mxu0 0.0
        %1751 = vmatprep.subr.mxu0 0.0
        %1752 = vmatpush1.msra.mxu0 0.0
        %1753 = vmatprep.subr.mxu0 0.0
        %1754 = vmatpush1.msra.mxu0 0.0
        %1755 = vmatprep.subr.mxu0 0.0
        %1756 = vmatpush1.msra.mxu0 0.0
        %1757 = vmatprep.subr.mxu0 %v1542
        %1758 = vmatpush1.msra.mxu0 %v1541
        %1759 = vmatprep.subr.mxu0 %v1486
        %1760 = vmatpush1.msra.mxu0 %v1485
        %1761 = vmatprep.subr.mxu0 %v1430
        %1762 = vmatpush1.msra.mxu0 %v1429
        %1763 = vmatprep.subr.mxu0 %v1374
        %1764 = vmatpush1.msra.mxu0 %v1373
        %1765 = vmatprep.subr.mxu0 %v1318
        %1766 = vmatpush1.msra.mxu0 %v1317
        %1767 = vmatprep.subr.mxu0 %v1262
        %1768 = vmatpush1.msra.mxu0 %v1261
        %1769 = vmatprep.subr.mxu0 %v1206
        %1770 = vmatpush1.msra.mxu0 %v1205
        %1771 = vmatprep.subr.mxu0 %v1150
        %1772 = vmatpush1.msra.mxu0 %v1149
        %1773 = vmatprep.subr.mxu0 %v1094
        %1774 = vmatpush1.msra.mxu0 %v1093
        %1775 = vmatprep.subr.mxu0 %v1038
        %1776 = vmatpush1.msra.mxu0 %v1037
        %1777 = vmatprep.subr.mxu0 0.0
        %1778 = vmatpush2.msra.mxu0 0.0
        %1779 = vmatprep.subr.mxu0 0.0
        %1780 = vmatpush2.msra.mxu0 0.0
        %1781 = vmatprep.subr.mxu0 0.0
        %1782 = vmatpush2.msra.mxu0 0.0
        %1783 = vmatprep.subr.mxu0 0.0
        %1784 = vmatpush2.msra.mxu0 0.0
        %1785 = vmatprep.subr.mxu0 0.0
        %1786 = vmatpush2.msra.mxu0 0.0
        %1787 = vmatprep.subr.mxu0 0.0
        %1788 = vmatpush2.msra.mxu0 0.0
        %1789 = vmatprep.subr.mxu0 0.0
        %1790 = vmatpush2.msra.mxu0 0.0
        %1791 = vmatprep.subr.mxu0 0.0
        %1792 = vmatpush2.msra.mxu0 0.0
        %1793 = vmatprep.subr.mxu0 0.0
        %1794 = vmatpush2.msra.mxu0 0.0
        %1795 = vmatprep.subr.mxu0 0.0
        %1796 = vmatpush2.msra.mxu0 0.0
        %1797 = vmatprep.subr.mxu0 0.0
        %1798 = vmatpush2.msra.mxu0 0.0
        %1799 = vmatprep.subr.mxu0 0.0
        %1800 = vmatpush2.msra.mxu0 0.0
        %1801 = vmatprep.subr.mxu0 0.0
        %1802 = vmatpush2.msra.mxu0 0.0
        %1803 = vmatprep.subr.mxu0 0.0
        %1804 = vmatpush2.msra.mxu0 0.0
        %1805 = vmatprep.subr.mxu0 0.0
        %1806 = vmatpush2.msra.mxu0 0.0
        %1807 = vmatprep.subr.mxu0 0.0
        %1808 = vmatpush2.msra.mxu0 0.0
        %1809 = vmatprep.mubr.f32.mxu0 0.0
        %1810 = vmatmul.mubr.f32.gmra.mxu0 %v1601
        %v1811 = vpop.f32.mrf.mxu0
        %v1812 = vadd.f32 %v1597, %v1811
        %v1813 = vpop.f32.mrf.mxu0
        %v1814 = vadd.f32 %v1597, %v1813
        %1815 = vdwg.mxu0
        %1816 = vmatprep.subr.mxu0 0.0
        %1817 = vmatpush1.msra.mxu0 0.0
        %1818 = vmatprep.subr.mxu0 0.0
        %1819 = vmatpush1.msra.mxu0 0.0
        %1820 = vmatprep.subr.mxu0 0.0
        %1821 = vmatpush1.msra.mxu0 0.0
        %1822 = vmatprep.subr.mxu0 0.0
        %1823 = vmatpush1.msra.mxu0 0.0
        %1824 = vmatprep.subr.mxu0 0.0
        %1825 = vmatpush1.msra.mxu0 0.0
        %1826 = vmatprep.subr.mxu0 0.0
        %1827 = vmatpush1.msra.mxu0 0.0
        %1828 = vmatprep.subr.mxu0 %v1544
        %1829 = vmatpush1.msra.mxu0 %v1543
        %1830 = vmatprep.subr.mxu0 %v1488
        %1831 = vmatpush1.msra.mxu0 %v1487
        %1832 = vmatprep.subr.mxu0 %v1432
        %1833 = vmatpush1.msra.mxu0 %v1431
        %1834 = vmatprep.subr.mxu0 %v1376
        %1835 = vmatpush1.msra.mxu0 %v1375
        %1836 = vmatprep.subr.mxu0 %v1320
        %1837 = vmatpush1.msra.mxu0 %v1319
        %1838 = vmatprep.subr.mxu0 %v1264
        %1839 = vmatpush1.msra.mxu0 %v1263
        %1840 = vmatprep.subr.mxu0 %v1208
        %1841 = vmatpush1.msra.mxu0 %v1207
        %1842 = vmatprep.subr.mxu0 %v1152
        %1843 = vmatpush1.msra.mxu0 %v1151
        %1844 = vmatprep.subr.mxu0 %v1096
        %1845 = vmatpush1.msra.mxu0 %v1095
        %1846 = vmatprep.subr.mxu0 %v1040
        %1847 = vmatpush1.msra.mxu0 %v1039
        %1848 = vmatprep.subr.mxu0 0.0
        %1849 = vmatpush2.msra.mxu0 0.0
        %1850 = vmatprep.subr.mxu0 0.0
        %1851 = vmatpush2.msra.mxu0 0.0
        %1852 = vmatprep.subr.mxu0 0.0
        %1853 = vmatpush2.msra.mxu0 0.0
        %1854 = vmatprep.subr.mxu0 0.0
        %1855 = vmatpush2.msra.mxu0 0.0
        %1856 = vmatprep.subr.mxu0 0.0
        %1857 = vmatpush2.msra.mxu0 0.0
        %1858 = vmatprep.subr.mxu0 0.0
        %1859 = vmatpush2.msra.mxu0 0.0
        %1860 = vmatprep.subr.mxu0 0.0
        %1861 = vmatpush2.msra.mxu0 0.0
        %1862 = vmatprep.subr.mxu0 0.0
        %1863 = vmatpush2.msra.mxu0 0.0
        %1864 = vmatprep.subr.mxu0 0.0
        %1865 = vmatpush2.msra.mxu0 0.0
        %1866 = vmatprep.subr.mxu0 0.0
        %1867 = vmatpush2.msra.mxu0 0.0
        %1868 = vmatprep.subr.mxu0 0.0
        %1869 = vmatpush2.msra.mxu0 0.0
        %1870 = vmatprep.subr.mxu0 0.0
        %1871 = vmatpush2.msra.mxu0 0.0
        %1872 = vmatprep.subr.mxu0 0.0
        %1873 = vmatpush2.msra.mxu0 0.0
        %1874 = vmatprep.subr.mxu0 0.0
        %1875 = vmatpush2.msra.mxu0 0.0
        %1876 = vmatprep.subr.mxu0 0.0
        %1877 = vmatpush2.msra.mxu0 0.0
        %1878 = vmatprep.subr.mxu0 0.0
        %1879 = vmatpush2.msra.mxu0 0.0
        %1880 = vmatprep.mubr.f32.mxu0 0.0
        %1881 = vmatmul.mubr.f32.gmra.mxu0 %v1601
        %v1882 = vpop.f32.mrf.mxu0
        %v1883 = vadd.f32 %v1597, %v1882
        %v1884 = vpop.f32.mrf.mxu0
        %v1885 = vadd.f32 %v1597, %v1884
        %1886 = vdwg.mxu0
        %1887 = vmatprep.subr.mxu0 0.0
        %1888 = vmatpush1.msra.mxu0 0.0
        %1889 = vmatprep.subr.mxu0 0.0
        %1890 = vmatpush1.msra.mxu0 0.0
        %1891 = vmatprep.subr.mxu0 0.0
        %1892 = vmatpush1.msra.mxu0 0.0
        %1893 = vmatprep.subr.mxu0 0.0
        %1894 = vmatpush1.msra.mxu0 0.0
        %1895 = vmatprep.subr.mxu0 0.0
        %1896 = vmatpush1.msra.mxu0 0.0
        %1897 = vmatprep.subr.mxu0 0.0
        %1898 = vmatpush1.msra.mxu0 0.0
        %1899 = vmatprep.subr.mxu0 %v1546
        %1900 = vmatpush1.msra.mxu0 %v1545
        %1901 = vmatprep.subr.mxu0 %v1490
        %1902 = vmatpush1.msra.mxu0 %v1489
        %1903 = vmatprep.subr.mxu0 %v1434
        %1904 = vmatpush1.msra.mxu0 %v1433
        %1905 = vmatprep.subr.mxu0 %v1378
        %1906 = vmatpush1.msra.mxu0 %v1377
        %1907 = vmatprep.subr.mxu0 %v1322
        %1908 = vmatpush1.msra.mxu0 %v1321
        %1909 = vmatprep.subr.mxu0 %v1266
        %1910 = vmatpush1.msra.mxu0 %v1265
        %1911 = vmatprep.subr.mxu0 %v1210
        %1912 = vmatpush1.msra.mxu0 %v1209
        %1913 = vmatprep.subr.mxu0 %v1154
        %1914 = vmatpush1.msra.mxu0 %v1153
        %1915 = vmatprep.subr.mxu0 %v1098
        %1916 = vmatpush1.msra.mxu0 %v1097
        %1917 = vmatprep.subr.mxu0 %v1042
        %1918 = vmatpush1.msra.mxu0 %v1041
        %1919 = vmatprep.subr.mxu0 0.0
        %1920 = vmatpush2.msra.mxu0 0.0
        %1921 = vmatprep.subr.mxu0 0.0
        %1922 = vmatpush2.msra.mxu0 0.0
        %1923 = vmatprep.subr.mxu0 0.0
        %1924 = vmatpush2.msra.mxu0 0.0
        %1925 = vmatprep.subr.mxu0 0.0
        %1926 = vmatpush2.msra.mxu0 0.0
        %1927 = vmatprep.subr.mxu0 0.0
        %1928 = vmatpush2.msra.mxu0 0.0
        %1929 = vmatprep.subr.mxu0 0.0
        %1930 = vmatpush2.msra.mxu0 0.0
        %1931 = vmatprep.subr.mxu0 0.0
        %1932 = vmatpush2.msra.mxu0 0.0
        %1933 = vmatprep.subr.mxu0 0.0
        %1934 = vmatpush2.msra.mxu0 0.0
        %1935 = vmatprep.subr.mxu0 0.0
        %1936 = vmatpush2.msra.mxu0 0.0
        %1937 = vmatprep.subr.mxu0 0.0
        %1938 = vmatpush2.msra.mxu0 0.0
        %1939 = vmatprep.subr.mxu0 0.0
        %1940 = vmatpush2.msra.mxu0 0.0
        %1941 = vmatprep.subr.mxu0 0.0
        %1942 = vmatpush2.msra.mxu0 0.0
        %1943 = vmatprep.subr.mxu0 0.0
        %1944 = vmatpush2.msra.mxu0 0.0
        %1945 = vmatprep.subr.mxu0 0.0
        %1946 = vmatpush2.msra.mxu0 0.0
        %1947 = vmatprep.subr.mxu0 0.0
        %1948 = vmatpush2.msra.mxu0 0.0
        %1949 = vmatprep.subr.mxu0 0.0
        %1950 = vmatpush2.msra.mxu0 0.0
        %1951 = vmatprep.mubr.f32.mxu0 0.0
        %1952 = vmatmul.mubr.f32.gmra.mxu0 %v1601
        %v1953 = vpop.f32.mrf.mxu0
        %v1954 = vadd.f32 %v1597, %v1953
        %v1955 = vpop.f32.mrf.mxu0
        %v1956 = vadd.f32 %v1597, %v1955
        %1957 = vdwg.mxu0
        %1958 = vmatprep.subr.mxu0 0.0
        %1959 = vmatpush1.msra.mxu0 0.0
        %1960 = vmatprep.subr.mxu0 0.0
        %1961 = vmatpush1.msra.mxu0 0.0
        %1962 = vmatprep.subr.mxu0 0.0
        %1963 = vmatpush1.msra.mxu0 0.0
        %1964 = vmatprep.subr.mxu0 0.0
        %1965 = vmatpush1.msra.mxu0 0.0
        %1966 = vmatprep.subr.mxu0 0.0
        %1967 = vmatpush1.msra.mxu0 0.0
        %1968 = vmatprep.subr.mxu0 0.0
        %1969 = vmatpush1.msra.mxu0 0.0
        %1970 = vmatprep.subr.mxu0 %v1548
        %1971 = vmatpush1.msra.mxu0 %v1547
        %1972 = vmatprep.subr.mxu0 %v1492
        %1973 = vmatpush1.msra.mxu0 %v1491
        %1974 = vmatprep.subr.mxu0 %v1436
        %1975 = vmatpush1.msra.mxu0 %v1435
        %1976 = vmatprep.subr.mxu0 %v1380
        %1977 = vmatpush1.msra.mxu0 %v1379
        %1978 = vmatprep.subr.mxu0 %v1324
        %1979 = vmatpush1.msra.mxu0 %v1323
        %1980 = vmatprep.subr.mxu0 %v1268
        %1981 = vmatpush1.msra.mxu0 %v1267
        %1982 = vmatprep.subr.mxu0 %v1212
        %1983 = vmatpush1.msra.mxu0 %v1211
        %1984 = vmatprep.subr.mxu0 %v1156
        %1985 = vmatpush1.msra.mxu0 %v1155
        %1986 = vmatprep.subr.mxu0 %v1100
        %1987 = vmatpush1.msra.mxu0 %v1099
        %1988 = vmatprep.subr.mxu0 %v1044
        %1989 = vmatpush1.msra.mxu0 %v1043
        %1990 = vmatprep.subr.mxu0 0.0
        %1991 = vmatpush2.msra.mxu0 0.0
        %1992 = vmatprep.subr.mxu0 0.0
        %1993 = vmatpush2.msra.mxu0 0.0
        %1994 = vmatprep.subr.mxu0 0.0
        %1995 = vmatpush2.msra.mxu0 0.0
        %1996 = vmatprep.subr.mxu0 0.0
        %1997 = vmatpush2.msra.mxu0 0.0
        %1998 = vmatprep.subr.mxu0 0.0
        %1999 = vmatpush2.msra.mxu0 0.0
        %2000 = vmatprep.subr.mxu0 0.0
        %2001 = vmatpush2.msra.mxu0 0.0
        %2002 = vmatprep.subr.mxu0 0.0
        %2003 = vmatpush2.msra.mxu0 0.0
        %2004 = vmatprep.subr.mxu0 0.0
        %2005 = vmatpush2.msra.mxu0 0.0
        %2006 = vmatprep.subr.mxu0 0.0
        %2007 = vmatpush2.msra.mxu0 0.0
        %2008 = vmatprep.subr.mxu0 0.0
        %2009 = vmatpush2.msra.mxu0 0.0
        %2010 = vmatprep.subr.mxu0 0.0
        %2011 = vmatpush2.msra.mxu0 0.0
        %2012 = vmatprep.subr.mxu0 0.0
        %2013 = vmatpush2.msra.mxu0 0.0
        %2014 = vmatprep.subr.mxu0 0.0
        %2015 = vmatpush2.msra.mxu0 0.0
        %2016 = vmatprep.subr.mxu0 0.0
        %2017 = vmatpush2.msra.mxu0 0.0
        %2018 = vmatprep.subr.mxu0 0.0
        %2019 = vmatpush2.msra.mxu0 0.0
        %2020 = vmatprep.subr.mxu0 0.0
        %2021 = vmatpush2.msra.mxu0 0.0
        %2022 = vmatprep.mubr.f32.mxu0 0.0
        %2023 = vmatmul.mubr.f32.gmra.mxu0 %v1601
        %v2024 = vpop.f32.mrf.mxu0
        %v2025 = vadd.f32 %v1597, %v2024
        %v2026 = vpop.f32.mrf.mxu0
        %v2027 = vadd.f32 %v1597, %v2026
        %2028 = vdwg.mxu0
        %2029 = vmatprep.subr.mxu0 0.0
        %2030 = vmatpush1.msra.mxu0 0.0
        %2031 = vmatprep.subr.mxu0 0.0
        %2032 = vmatpush1.msra.mxu0 0.0
        %2033 = vmatprep.subr.mxu0 0.0
        %2034 = vmatpush1.msra.mxu0 0.0
        %2035 = vmatprep.subr.mxu0 0.0
        %2036 = vmatpush1.msra.mxu0 0.0
        %2037 = vmatprep.subr.mxu0 0.0
        %2038 = vmatpush1.msra.mxu0 0.0
        %2039 = vmatprep.subr.mxu0 0.0
        %2040 = vmatpush1.msra.mxu0 0.0
        %2041 = vmatprep.subr.mxu0 %v1550
        %2042 = vmatpush1.msra.mxu0 %v1549
        %2043 = vmatprep.subr.mxu0 %v1494
        %2044 = vmatpush1.msra.mxu0 %v1493
        %2045 = vmatprep.subr.mxu0 %v1438
        %2046 = vmatpush1.msra.mxu0 %v1437
        %2047 = vmatprep.subr.mxu0 %v1382
        %2048 = vmatpush1.msra.mxu0 %v1381
        %2049 = vmatprep.subr.mxu0 %v1326
        %2050 = vmatpush1.msra.mxu0 %v1325
        %2051 = vmatprep.subr.mxu0 %v1270
        %2052 = vmatpush1.msra.mxu0 %v1269
        %2053 = vmatprep.subr.mxu0 %v1214
        %2054 = vmatpush1.msra.mxu0 %v1213
        %2055 = vmatprep.subr.mxu0 %v1158
        %2056 = vmatpush1.msra.mxu0 %v1157
        %2057 = vmatprep.subr.mxu0 %v1102
        %2058 = vmatpush1.msra.mxu0 %v1101
        %2059 = vmatprep.subr.mxu0 %v1046
        %2060 = vmatpush1.msra.mxu0 %v1045
        %2061 = vmatprep.subr.mxu0 0.0
        %2062 = vmatpush2.msra.mxu0 0.0
        %2063 = vmatprep.subr.mxu0 0.0
        %2064 = vmatpush2.msra.mxu0 0.0
        %2065 = vmatprep.subr.mxu0 0.0
        %2066 = vmatpush2.msra.mxu0 0.0
        %2067 = vmatprep.subr.mxu0 0.0
        %2068 = vmatpush2.msra.mxu0 0.0
        %2069 = vmatprep.subr.mxu0 0.0
        %2070 = vmatpush2.msra.mxu0 0.0
        %2071 = vmatprep.subr.mxu0 0.0
        %2072 = vmatpush2.msra.mxu0 0.0
        %2073 = vmatprep.subr.mxu0 0.0
        %2074 = vmatpush2.msra.mxu0 0.0
        %2075 = vmatprep.subr.mxu0 0.0
        %2076 = vmatpush2.msra.mxu0 0.0
        %2077 = vmatprep.subr.mxu0 0.0
        %2078 = vmatpush2.msra.mxu0 0.0
        %2079 = vmatprep.subr.mxu0 0.0
        %2080 = vmatpush2.msra.mxu0 0.0
        %2081 = vmatprep.subr.mxu0 0.0
        %2082 = vmatpush2.msra.mxu0 0.0
        %2083 = vmatprep.subr.mxu0 0.0
        %2084 = vmatpush2.msra.mxu0 0.0
        %2085 = vmatprep.subr.mxu0 0.0
        %2086 = vmatpush2.msra.mxu0 0.0
        %2087 = vmatprep.subr.mxu0 0.0
        %2088 = vmatpush2.msra.mxu0 0.0
        %2089 = vmatprep.subr.mxu0 0.0
        %2090 = vmatpush2.msra.mxu0 0.0
        %2091 = vmatprep.subr.mxu0 0.0
        %2092 = vmatpush2.msra.mxu0 0.0
        %2093 = vmatprep.mubr.f32.mxu0 0.0
        %2094 = vmatmul.mubr.f32.gmra.mxu0 %v1601
        %v2095 = vpop.f32.mrf.mxu0
        %v2096 = vadd.f32 %v1597, %v2095
        %v2097 = vpop.f32.mrf.mxu0
        %v2098 = vadd.f32 %v1597, %v2097
        %2099 = vdwg.mxu0
        %2100 = vmatprep.subr.mxu0 0.0
        %2101 = vmatpush1.msra.mxu0 0.0
        %2102 = vmatprep.subr.mxu0 0.0
        %2103 = vmatpush1.msra.mxu0 0.0
        %2104 = vmatprep.subr.mxu0 0.0
        %2105 = vmatpush1.msra.mxu0 0.0
        %2106 = vmatprep.subr.mxu0 0.0
        %2107 = vmatpush1.msra.mxu0 0.0
        %2108 = vmatprep.subr.mxu0 0.0
        %2109 = vmatpush1.msra.mxu0 0.0
        %2110 = vmatprep.subr.mxu0 0.0
        %2111 = vmatpush1.msra.mxu0 0.0
        %2112 = vmatprep.subr.mxu0 %v1552
        %2113 = vmatpush1.msra.mxu0 %v1551
        %2114 = vmatprep.subr.mxu0 %v1496
        %2115 = vmatpush1.msra.mxu0 %v1495
        %2116 = vmatprep.subr.mxu0 %v1440
        %2117 = vmatpush1.msra.mxu0 %v1439
        %2118 = vmatprep.subr.mxu0 %v1384
        %2119 = vmatpush1.msra.mxu0 %v1383
        %2120 = vmatprep.subr.mxu0 %v1328
        %2121 = vmatpush1.msra.mxu0 %v1327
        %2122 = vmatprep.subr.mxu0 %v1272
        %2123 = vmatpush1.msra.mxu0 %v1271
        %2124 = vmatprep.subr.mxu0 %v1216
        %2125 = vmatpush1.msra.mxu0 %v1215
        %2126 = vmatprep.subr.mxu0 %v1160
        %2127 = vmatpush1.msra.mxu0 %v1159
        %2128 = vmatprep.subr.mxu0 %v1104
        %2129 = vmatpush1.msra.mxu0 %v1103
        %2130 = vmatprep.subr.mxu0 %v1048
        %2131 = vmatpush1.msra.mxu0 %v1047
        %2132 = vmatprep.subr.mxu0 0.0
        %2133 = vmatpush2.msra.mxu0 0.0
        %2134 = vmatprep.subr.mxu0 0.0
        %2135 = vmatpush2.msra.mxu0 0.0
        %2136 = vmatprep.subr.mxu0 0.0
        %2137 = vmatpush2.msra.mxu0 0.0
        %2138 = vmatprep.subr.mxu0 0.0
        %2139 = vmatpush2.msra.mxu0 0.0
        %2140 = vmatprep.subr.mxu0 0.0
        %2141 = vmatpush2.msra.mxu0 0.0
        %2142 = vmatprep.subr.mxu0 0.0
        %2143 = vmatpush2.msra.mxu0 0.0
        %2144 = vmatprep.subr.mxu0 0.0
        %2145 = vmatpush2.msra.mxu0 0.0
        %2146 = vmatprep.subr.mxu0 0.0
        %2147 = vmatpush2.msra.mxu0 0.0
        %2148 = vmatprep.subr.mxu0 0.0
        %2149 = vmatpush2.msra.mxu0 0.0
        %2150 = vmatprep.subr.mxu0 0.0
        %2151 = vmatpush2.msra.mxu0 0.0
        %2152 = vmatprep.subr.mxu0 0.0
        %2153 = vmatpush2.msra.mxu0 0.0
        %2154 = vmatprep.subr.mxu0 0.0
        %2155 = vmatpush2.msra.mxu0 0.0
        %2156 = vmatprep.subr.mxu0 0.0
        %2157 = vmatpush2.msra.mxu0 0.0
        %2158 = vmatprep.subr.mxu0 0.0
        %2159 = vmatpush2.msra.mxu0 0.0
        %2160 = vmatprep.subr.mxu0 0.0
        %2161 = vmatpush2.msra.mxu0 0.0
        %2162 = vmatprep.subr.mxu0 0.0
        %2163 = vmatpush2.msra.mxu0 0.0
        %2164 = vmatprep.mubr.f32.mxu0 0.0
        %2165 = vmatmul.mubr.f32.gmra.mxu0 %v1601
        %v2166 = vpop.f32.mrf.mxu0
        %v2167 = vadd.f32 %v1597, %v2166
        %v2168 = vpop.f32.mrf.mxu0
        %v2169 = vadd.f32 %v1597, %v2168
        %2170 = vdwg.mxu0
        %2171 = vmatprep.subr.mxu0 0.0
        %2172 = vmatpush1.msra.mxu0 0.0
        %2173 = vmatprep.subr.mxu0 0.0
        %2174 = vmatpush1.msra.mxu0 0.0
        %2175 = vmatprep.subr.mxu0 0.0
        %2176 = vmatpush1.msra.mxu0 0.0
        %2177 = vmatprep.subr.mxu0 0.0
        %2178 = vmatpush1.msra.mxu0 0.0
        %2179 = vmatprep.subr.mxu0 0.0
        %2180 = vmatpush1.msra.mxu0 0.0
        %2181 = vmatprep.subr.mxu0 0.0
        %2182 = vmatpush1.msra.mxu0 0.0
        %2183 = vmatprep.subr.mxu0 %v1554
        %2184 = vmatpush1.msra.mxu0 %v1553
        %2185 = vmatprep.subr.mxu0 %v1498
        %2186 = vmatpush1.msra.mxu0 %v1497
        %2187 = vmatprep.subr.mxu0 %v1442
        %2188 = vmatpush1.msra.mxu0 %v1441
        %2189 = vmatprep.subr.mxu0 %v1386
        %2190 = vmatpush1.msra.mxu0 %v1385
        %2191 = vmatprep.subr.mxu0 %v1330
        %2192 = vmatpush1.msra.mxu0 %v1329
        %2193 = vmatprep.subr.mxu0 %v1274
        %2194 = vmatpush1.msra.mxu0 %v1273
        %2195 = vmatprep.subr.mxu0 %v1218
        %2196 = vmatpush1.msra.mxu0 %v1217
        %2197 = vmatprep.subr.mxu0 %v1162
        %2198 = vmatpush1.msra.mxu0 %v1161
        %2199 = vmatprep.subr.mxu0 %v1106
        %2200 = vmatpush1.msra.mxu0 %v1105
        %2201 = vmatprep.subr.mxu0 %v1050
        %2202 = vmatpush1.msra.mxu0 %v1049
        %2203 = vmatprep.subr.mxu0 0.0
        %2204 = vmatpush2.msra.mxu0 0.0
        %2205 = vmatprep.subr.mxu0 0.0
        %2206 = vmatpush2.msra.mxu0 0.0
        %2207 = vmatprep.subr.mxu0 0.0
        %2208 = vmatpush2.msra.mxu0 0.0
        %2209 = vmatprep.subr.mxu0 0.0
        %2210 = vmatpush2.msra.mxu0 0.0
        %2211 = vmatprep.subr.mxu0 0.0
        %2212 = vmatpush2.msra.mxu0 0.0
        %2213 = vmatprep.subr.mxu0 0.0
        %2214 = vmatpush2.msra.mxu0 0.0
        %2215 = vmatprep.subr.mxu0 0.0
        %2216 = vmatpush2.msra.mxu0 0.0
        %2217 = vmatprep.subr.mxu0 0.0
        %2218 = vmatpush2.msra.mxu0 0.0
        %2219 = vmatprep.subr.mxu0 0.0
        %2220 = vmatpush2.msra.mxu0 0.0
        %2221 = vmatprep.subr.mxu0 0.0
        %2222 = vmatpush2.msra.mxu0 0.0
        %2223 = vmatprep.subr.mxu0 0.0
        %2224 = vmatpush2.msra.mxu0 0.0
        %2225 = vmatprep.subr.mxu0 0.0
        %2226 = vmatpush2.msra.mxu0 0.0
        %2227 = vmatprep.subr.mxu0 0.0
        %2228 = vmatpush2.msra.mxu0 0.0
        %2229 = vmatprep.subr.mxu0 0.0
        %2230 = vmatpush2.msra.mxu0 0.0
        %2231 = vmatprep.subr.mxu0 0.0
        %2232 = vmatpush2.msra.mxu0 0.0
        %2233 = vmatprep.subr.mxu0 0.0
        %2234 = vmatpush2.msra.mxu0 0.0
        %2235 = vmatprep.mubr.f32.mxu0 0.0
        %2236 = vmatmul.mubr.f32.gmra.mxu0 %v1601
        %v2237 = vpop.f32.mrf.mxu0
        %v2238 = vadd.f32 %v1597, %v2237
        %v2239 = vpop.f32.mrf.mxu0
        %v2240 = vadd.f32 %v1597, %v2239
        %2241 = vdwg.mxu0
        %2242 = vmatprep.subr.mxu0 0.0
        %2243 = vmatpush1.msra.mxu0 0.0
        %2244 = vmatprep.subr.mxu0 0.0
        %2245 = vmatpush1.msra.mxu0 0.0
        %2246 = vmatprep.subr.mxu0 0.0
        %2247 = vmatpush1.msra.mxu0 0.0
        %2248 = vmatprep.subr.mxu0 0.0
        %2249 = vmatpush1.msra.mxu0 0.0
        %2250 = vmatprep.subr.mxu0 0.0
        %2251 = vmatpush1.msra.mxu0 0.0
        %2252 = vmatprep.subr.mxu0 0.0
        %2253 = vmatpush1.msra.mxu0 0.0
        %2254 = vmatprep.subr.mxu0 %v1556
        %2255 = vmatpush1.msra.mxu0 %v1555
        %2256 = vmatprep.subr.mxu0 %v1500
        %2257 = vmatpush1.msra.mxu0 %v1499
        %2258 = vmatprep.subr.mxu0 %v1444
        %2259 = vmatpush1.msra.mxu0 %v1443
        %2260 = vmatprep.subr.mxu0 %v1388
        %2261 = vmatpush1.msra.mxu0 %v1387
        %2262 = vmatprep.subr.mxu0 %v1332
        %2263 = vmatpush1.msra.mxu0 %v1331
        %2264 = vmatprep.subr.mxu0 %v1276
        %2265 = vmatpush1.msra.mxu0 %v1275
        %2266 = vmatprep.subr.mxu0 %v1220
        %2267 = vmatpush1.msra.mxu0 %v1219
        %2268 = vmatprep.subr.mxu0 %v1164
        %2269 = vmatpush1.msra.mxu0 %v1163
        %2270 = vmatprep.subr.mxu0 %v1108
        %2271 = vmatpush1.msra.mxu0 %v1107
        %2272 = vmatprep.subr.mxu0 %v1052
        %2273 = vmatpush1.msra.mxu0 %v1051
        %2274 = vmatprep.subr.mxu0 0.0
        %2275 = vmatpush2.msra.mxu0 0.0
        %2276 = vmatprep.subr.mxu0 0.0
        %2277 = vmatpush2.msra.mxu0 0.0
        %2278 = vmatprep.subr.mxu0 0.0
        %2279 = vmatpush2.msra.mxu0 0.0
        %2280 = vmatprep.subr.mxu0 0.0
        %2281 = vmatpush2.msra.mxu0 0.0
        %2282 = vmatprep.subr.mxu0 0.0
        %2283 = vmatpush2.msra.mxu0 0.0
        %2284 = vmatprep.subr.mxu0 0.0
        %2285 = vmatpush2.msra.mxu0 0.0
        %2286 = vmatprep.subr.mxu0 0.0
        %2287 = vmatpush2.msra.mxu0 0.0
        %2288 = vmatprep.subr.mxu0 0.0
        %2289 = vmatpush2.msra.mxu0 0.0
        %2290 = vmatprep.subr.mxu0 0.0
        %2291 = vmatpush2.msra.mxu0 0.0
        %2292 = vmatprep.subr.mxu0 0.0
        %2293 = vmatpush2.msra.mxu0 0.0
        %2294 = vmatprep.subr.mxu0 0.0
        %2295 = vmatpush2.msra.mxu0 0.0
        %2296 = vmatprep.subr.mxu0 0.0
        %2297 = vmatpush2.msra.mxu0 0.0
        %2298 = vmatprep.subr.mxu0 0.0
        %2299 = vmatpush2.msra.mxu0 0.0
        %2300 = vmatprep.subr.mxu0 0.0
        %2301 = vmatpush2.msra.mxu0 0.0
        %2302 = vmatprep.subr.mxu0 0.0
        %2303 = vmatpush2.msra.mxu0 0.0
        %2304 = vmatprep.subr.mxu0 0.0
        %2305 = vmatpush2.msra.mxu0 0.0
        %2306 = vmatprep.mubr.f32.mxu0 0.0
        %2307 = vmatmul.mubr.f32.gmra.mxu0 %v1601
        %v2308 = vpop.f32.mrf.mxu0
        %v2309 = vadd.f32 %v1597, %v2308
        %v2310 = vpop.f32.mrf.mxu0
        %v2311 = vadd.f32 %v1597, %v2310
        %2312 = vdwg.mxu0
        %2313 = vmatprep.subr.mxu0 0.0
        %2314 = vmatpush1.msra.mxu0 0.0
        %2315 = vmatprep.subr.mxu0 0.0
        %2316 = vmatpush1.msra.mxu0 0.0
        %2317 = vmatprep.subr.mxu0 0.0
        %2318 = vmatpush1.msra.mxu0 0.0
        %2319 = vmatprep.subr.mxu0 0.0
        %2320 = vmatpush1.msra.mxu0 0.0
        %2321 = vmatprep.subr.mxu0 0.0
        %2322 = vmatpush1.msra.mxu0 0.0
        %2323 = vmatprep.subr.mxu0 0.0
        %2324 = vmatpush1.msra.mxu0 0.0
        %2325 = vmatprep.subr.mxu0 %v1558
        %2326 = vmatpush1.msra.mxu0 %v1557
        %2327 = vmatprep.subr.mxu0 %v1502
        %2328 = vmatpush1.msra.mxu0 %v1501
        %2329 = vmatprep.subr.mxu0 %v1446
        %2330 = vmatpush1.msra.mxu0 %v1445
        %2331 = vmatprep.subr.mxu0 %v1390
        %2332 = vmatpush1.msra.mxu0 %v1389
        %2333 = vmatprep.subr.mxu0 %v1334
        %2334 = vmatpush1.msra.mxu0 %v1333
        %2335 = vmatprep.subr.mxu0 %v1278
        %2336 = vmatpush1.msra.mxu0 %v1277
        %2337 = vmatprep.subr.mxu0 %v1222
        %2338 = vmatpush1.msra.mxu0 %v1221
        %2339 = vmatprep.subr.mxu0 %v1166
        %2340 = vmatpush1.msra.mxu0 %v1165
        %2341 = vmatprep.subr.mxu0 %v1110
        %2342 = vmatpush1.msra.mxu0 %v1109
        %2343 = vmatprep.subr.mxu0 %v1054
        %2344 = vmatpush1.msra.mxu0 %v1053
        %2345 = vmatprep.subr.mxu0 0.0
        %2346 = vmatpush2.msra.mxu0 0.0
        %2347 = vmatprep.subr.mxu0 0.0
        %2348 = vmatpush2.msra.mxu0 0.0
        %2349 = vmatprep.subr.mxu0 0.0
        %2350 = vmatpush2.msra.mxu0 0.0
        %2351 = vmatprep.subr.mxu0 0.0
        %2352 = vmatpush2.msra.mxu0 0.0
        %2353 = vmatprep.subr.mxu0 0.0
        %2354 = vmatpush2.msra.mxu0 0.0
        %2355 = vmatprep.subr.mxu0 0.0
        %2356 = vmatpush2.msra.mxu0 0.0
        %2357 = vmatprep.subr.mxu0 0.0
        %2358 = vmatpush2.msra.mxu0 0.0
        %2359 = vmatprep.subr.mxu0 0.0
        %2360 = vmatpush2.msra.mxu0 0.0
        %2361 = vmatprep.subr.mxu0 0.0
        %2362 = vmatpush2.msra.mxu0 0.0
        %2363 = vmatprep.subr.mxu0 0.0
        %2364 = vmatpush2.msra.mxu0 0.0
        %2365 = vmatprep.subr.mxu0 0.0
        %2366 = vmatpush2.msra.mxu0 0.0
        %2367 = vmatprep.subr.mxu0 0.0
        %2368 = vmatpush2.msra.mxu0 0.0
        %2369 = vmatprep.subr.mxu0 0.0
        %2370 = vmatpush2.msra.mxu0 0.0
        %2371 = vmatprep.subr.mxu0 0.0
        %2372 = vmatpush2.msra.mxu0 0.0
        %2373 = vmatprep.subr.mxu0 0.0
        %2374 = vmatpush2.msra.mxu0 0.0
        %2375 = vmatprep.subr.mxu0 0.0
        %2376 = vmatpush2.msra.mxu0 0.0
        %2377 = vmatprep.mubr.f32.mxu0 0.0
        %2378 = vmatmul.mubr.f32.gmra.mxu0 %v1601
        %v2379 = vpop.f32.mrf.mxu0
        %v2380 = vadd.f32 %v1597, %v2379
        %v2381 = vpop.f32.mrf.mxu0
        %v2382 = vadd.f32 %v1597, %v2381
        %2383 = vdwg.mxu0
        %2384 = vmatprep.subr.mxu0 0.0
        %2385 = vmatpush1.msra.mxu0 0.0
        %2386 = vmatprep.subr.mxu0 0.0
        %2387 = vmatpush1.msra.mxu0 0.0
        %2388 = vmatprep.subr.mxu0 0.0
        %2389 = vmatpush1.msra.mxu0 0.0
        %2390 = vmatprep.subr.mxu0 0.0
        %2391 = vmatpush1.msra.mxu0 0.0
        %2392 = vmatprep.subr.mxu0 0.0
        %2393 = vmatpush1.msra.mxu0 0.0
        %2394 = vmatprep.subr.mxu0 0.0
        %2395 = vmatpush1.msra.mxu0 0.0
        %2396 = vmatprep.subr.mxu0 %v1560
        %2397 = vmatpush1.msra.mxu0 %v1559
        %2398 = vmatprep.subr.mxu0 %v1504
        %2399 = vmatpush1.msra.mxu0 %v1503
        %2400 = vmatprep.subr.mxu0 %v1448
        %2401 = vmatpush1.msra.mxu0 %v1447
        %2402 = vmatprep.subr.mxu0 %v1392
        %2403 = vmatpush1.msra.mxu0 %v1391
        %2404 = vmatprep.subr.mxu0 %v1336
        %2405 = vmatpush1.msra.mxu0 %v1335
        %2406 = vmatprep.subr.mxu0 %v1280
        %2407 = vmatpush1.msra.mxu0 %v1279
        %2408 = vmatprep.subr.mxu0 %v1224
        %2409 = vmatpush1.msra.mxu0 %v1223
        %2410 = vmatprep.subr.mxu0 %v1168
        %2411 = vmatpush1.msra.mxu0 %v1167
        %2412 = vmatprep.subr.mxu0 %v1112
        %2413 = vmatpush1.msra.mxu0 %v1111
        %2414 = vmatprep.subr.mxu0 %v1056
        %2415 = vmatpush1.msra.mxu0 %v1055
        %2416 = vmatprep.subr.mxu0 0.0
        %2417 = vmatpush2.msra.mxu0 0.0
        %2418 = vmatprep.subr.mxu0 0.0
        %2419 = vmatpush2.msra.mxu0 0.0
        %2420 = vmatprep.subr.mxu0 0.0
        %2421 = vmatpush2.msra.mxu0 0.0
        %2422 = vmatprep.subr.mxu0 0.0
        %2423 = vmatpush2.msra.mxu0 0.0
        %2424 = vmatprep.subr.mxu0 0.0
        %2425 = vmatpush2.msra.mxu0 0.0
        %2426 = vmatprep.subr.mxu0 0.0
        %2427 = vmatpush2.msra.mxu0 0.0
        %2428 = vmatprep.subr.mxu0 0.0
        %2429 = vmatpush2.msra.mxu0 0.0
        %2430 = vmatprep.subr.mxu0 0.0
        %2431 = vmatpush2.msra.mxu0 0.0
        %2432 = vmatprep.subr.mxu0 0.0
        %2433 = vmatpush2.msra.mxu0 0.0
        %2434 = vmatprep.subr.mxu0 0.0
        %2435 = vmatpush2.msra.mxu0 0.0
        %2436 = vmatprep.subr.mxu0 0.0
        %2437 = vmatpush2.msra.mxu0 0.0
        %2438 = vmatprep.subr.mxu0 0.0
        %2439 = vmatpush2.msra.mxu0 0.0
        %2440 = vmatprep.subr.mxu0 0.0
        %2441 = vmatpush2.msra.mxu0 0.0
        %2442 = vmatprep.subr.mxu0 0.0
        %2443 = vmatpush2.msra.mxu0 0.0
        %2444 = vmatprep.subr.mxu0 0.0
        %2445 = vmatpush2.msra.mxu0 0.0
        %2446 = vmatprep.subr.mxu0 0.0
        %2447 = vmatpush2.msra.mxu0 0.0
        %2448 = vmatprep.mubr.f32.mxu0 0.0
        %2449 = vmatmul.mubr.f32.gmra.mxu0 %v1601
        %v2450 = vpop.f32.mrf.mxu0
        %v2451 = vadd.f32 %v1597, %v2450
        %v2452 = vpop.f32.mrf.mxu0
        %v2453 = vadd.f32 %v1597, %v2452
        %2454 = vdwg.mxu0
        %2455 = vmatprep.subr.mxu0 0.0
        %2456 = vmatpush1.msra.mxu0 0.0
        %2457 = vmatprep.subr.mxu0 0.0
        %2458 = vmatpush1.msra.mxu0 0.0
        %2459 = vmatprep.subr.mxu0 0.0
        %2460 = vmatpush1.msra.mxu0 0.0
        %2461 = vmatprep.subr.mxu0 0.0
        %2462 = vmatpush1.msra.mxu0 0.0
        %2463 = vmatprep.subr.mxu0 0.0
        %2464 = vmatpush1.msra.mxu0 0.0
        %2465 = vmatprep.subr.mxu0 0.0
        %2466 = vmatpush1.msra.mxu0 0.0
        %2467 = vmatprep.subr.mxu0 %v1562
        %2468 = vmatpush1.msra.mxu0 %v1561
        %2469 = vmatprep.subr.mxu0 %v1506
        %2470 = vmatpush1.msra.mxu0 %v1505
        %2471 = vmatprep.subr.mxu0 %v1450
        %2472 = vmatpush1.msra.mxu0 %v1449
        %2473 = vmatprep.subr.mxu0 %v1394
        %2474 = vmatpush1.msra.mxu0 %v1393
        %2475 = vmatprep.subr.mxu0 %v1338
        %2476 = vmatpush1.msra.mxu0 %v1337
        %2477 = vmatprep.subr.mxu0 %v1282
        %2478 = vmatpush1.msra.mxu0 %v1281
        %2479 = vmatprep.subr.mxu0 %v1226
        %2480 = vmatpush1.msra.mxu0 %v1225
        %2481 = vmatprep.subr.mxu0 %v1170
        %2482 = vmatpush1.msra.mxu0 %v1169
        %2483 = vmatprep.subr.mxu0 %v1114
        %2484 = vmatpush1.msra.mxu0 %v1113
        %2485 = vmatprep.subr.mxu0 %v1058
        %2486 = vmatpush1.msra.mxu0 %v1057
        %2487 = vmatprep.subr.mxu0 0.0
        %2488 = vmatpush2.msra.mxu0 0.0
        %2489 = vmatprep.subr.mxu0 0.0
        %2490 = vmatpush2.msra.mxu0 0.0
        %2491 = vmatprep.subr.mxu0 0.0
        %2492 = vmatpush2.msra.mxu0 0.0
        %2493 = vmatprep.subr.mxu0 0.0
        %2494 = vmatpush2.msra.mxu0 0.0
        %2495 = vmatprep.subr.mxu0 0.0
        %2496 = vmatpush2.msra.mxu0 0.0
        %2497 = vmatprep.subr.mxu0 0.0
        %2498 = vmatpush2.msra.mxu0 0.0
        %2499 = vmatprep.subr.mxu0 0.0
        %2500 = vmatpush2.msra.mxu0 0.0
        %2501 = vmatprep.subr.mxu0 0.0
        %2502 = vmatpush2.msra.mxu0 0.0
        %2503 = vmatprep.subr.mxu0 0.0
        %2504 = vmatpush2.msra.mxu0 0.0
        %2505 = vmatprep.subr.mxu0 0.0
        %2506 = vmatpush2.msra.mxu0 0.0
        %2507 = vmatprep.subr.mxu0 0.0
        %2508 = vmatpush2.msra.mxu0 0.0
        %2509 = vmatprep.subr.mxu0 0.0
        %2510 = vmatpush2.msra.mxu0 0.0
        %2511 = vmatprep.subr.mxu0 0.0
        %2512 = vmatpush2.msra.mxu0 0.0
        %2513 = vmatprep.subr.mxu0 0.0
        %2514 = vmatpush2.msra.mxu0 0.0
        %2515 = vmatprep.subr.mxu0 0.0
        %2516 = vmatpush2.msra.mxu0 0.0
        %2517 = vmatprep.subr.mxu0 0.0
        %2518 = vmatpush2.msra.mxu0 0.0
        %2519 = vmatprep.mubr.f32.mxu0 0.0
        %2520 = vmatmul.mubr.f32.gmra.mxu0 %v1601
        %v2521 = vpop.f32.mrf.mxu0
        %v2522 = vadd.f32 %v1597, %v2521
        %v2523 = vpop.f32.mrf.mxu0
        %v2524 = vadd.f32 %v1597, %v2523
        %2525 = vdwg.mxu0
        %2526 = vmatprep.subr.mxu0 0.0
        %2527 = vmatpush1.msra.mxu0 0.0
        %2528 = vmatprep.subr.mxu0 0.0
        %2529 = vmatpush1.msra.mxu0 0.0
        %2530 = vmatprep.subr.mxu0 0.0
        %2531 = vmatpush1.msra.mxu0 0.0
        %2532 = vmatprep.subr.mxu0 0.0
        %2533 = vmatpush1.msra.mxu0 0.0
        %2534 = vmatprep.subr.mxu0 0.0
        %2535 = vmatpush1.msra.mxu0 0.0
        %2536 = vmatprep.subr.mxu0 0.0
        %2537 = vmatpush1.msra.mxu0 0.0
        %2538 = vmatprep.subr.mxu0 %v1564
        %2539 = vmatpush1.msra.mxu0 %v1563
        %2540 = vmatprep.subr.mxu0 %v1508
        %2541 = vmatpush1.msra.mxu0 %v1507
        %2542 = vmatprep.subr.mxu0 %v1452
        %2543 = vmatpush1.msra.mxu0 %v1451
        %2544 = vmatprep.subr.mxu0 %v1396
        %2545 = vmatpush1.msra.mxu0 %v1395
        %2546 = vmatprep.subr.mxu0 %v1340
        %2547 = vmatpush1.msra.mxu0 %v1339
        %2548 = vmatprep.subr.mxu0 %v1284
        %2549 = vmatpush1.msra.mxu0 %v1283
        %2550 = vmatprep.subr.mxu0 %v1228
        %2551 = vmatpush1.msra.mxu0 %v1227
        %2552 = vmatprep.subr.mxu0 %v1172
        %2553 = vmatpush1.msra.mxu0 %v1171
        %2554 = vmatprep.subr.mxu0 %v1116
        %2555 = vmatpush1.msra.mxu0 %v1115
        %2556 = vmatprep.subr.mxu0 %v1060
        %2557 = vmatpush1.msra.mxu0 %v1059
        %2558 = vmatprep.subr.mxu0 0.0
        %2559 = vmatpush2.msra.mxu0 0.0
        %2560 = vmatprep.subr.mxu0 0.0
        %2561 = vmatpush2.msra.mxu0 0.0
        %2562 = vmatprep.subr.mxu0 0.0
        %2563 = vmatpush2.msra.mxu0 0.0
        %2564 = vmatprep.subr.mxu0 0.0
        %2565 = vmatpush2.msra.mxu0 0.0
        %2566 = vmatprep.subr.mxu0 0.0
        %2567 = vmatpush2.msra.mxu0 0.0
        %2568 = vmatprep.subr.mxu0 0.0
        %2569 = vmatpush2.msra.mxu0 0.0
        %2570 = vmatprep.subr.mxu0 0.0
        %2571 = vmatpush2.msra.mxu0 0.0
        %2572 = vmatprep.subr.mxu0 0.0
        %2573 = vmatpush2.msra.mxu0 0.0
        %2574 = vmatprep.subr.mxu0 0.0
        %2575 = vmatpush2.msra.mxu0 0.0
        %2576 = vmatprep.subr.mxu0 0.0
        %2577 = vmatpush2.msra.mxu0 0.0
        %2578 = vmatprep.subr.mxu0 0.0
        %2579 = vmatpush2.msra.mxu0 0.0
        %2580 = vmatprep.subr.mxu0 0.0
        %2581 = vmatpush2.msra.mxu0 0.0
        %2582 = vmatprep.subr.mxu0 0.0
        %2583 = vmatpush2.msra.mxu0 0.0
        %2584 = vmatprep.subr.mxu0 0.0
        %2585 = vmatpush2.msra.mxu0 0.0
        %2586 = vmatprep.subr.mxu0 0.0
        %2587 = vmatpush2.msra.mxu0 0.0
        %2588 = vmatprep.subr.mxu0 0.0
        %2589 = vmatpush2.msra.mxu0 0.0
        %2590 = vmatprep.mubr.f32.mxu0 0.0
        %2591 = vmatmul.mubr.f32.gmra.mxu0 %v1601
        %v2592 = vpop.f32.mrf.mxu0
        %v2593 = vadd.f32 %v1597, %v2592
        %v2594 = vpop.f32.mrf.mxu0
        %v2595 = vadd.f32 %v1597, %v2594
        %2596 = vdwg.mxu0
        %2597 = vmatprep.subr.mxu0 0.0
        %2598 = vmatpush1.msra.mxu0 0.0
        %2599 = vmatprep.subr.mxu0 0.0
        %2600 = vmatpush1.msra.mxu0 0.0
        %2601 = vmatprep.subr.mxu0 0.0
        %2602 = vmatpush1.msra.mxu0 0.0
        %2603 = vmatprep.subr.mxu0 0.0
        %2604 = vmatpush1.msra.mxu0 0.0
        %2605 = vmatprep.subr.mxu0 0.0
        %2606 = vmatpush1.msra.mxu0 0.0
        %2607 = vmatprep.subr.mxu0 0.0
        %2608 = vmatpush1.msra.mxu0 0.0
        %2609 = vmatprep.subr.mxu0 %v1566
        %2610 = vmatpush1.msra.mxu0 %v1565
        %2611 = vmatprep.subr.mxu0 %v1510
        %2612 = vmatpush1.msra.mxu0 %v1509
        %2613 = vmatprep.subr.mxu0 %v1454
        %2614 = vmatpush1.msra.mxu0 %v1453
        %2615 = vmatprep.subr.mxu0 %v1398
        %2616 = vmatpush1.msra.mxu0 %v1397
        %2617 = vmatprep.subr.mxu0 %v1342
        %2618 = vmatpush1.msra.mxu0 %v1341
        %2619 = vmatprep.subr.mxu0 %v1286
        %2620 = vmatpush1.msra.mxu0 %v1285
        %2621 = vmatprep.subr.mxu0 %v1230
        %2622 = vmatpush1.msra.mxu0 %v1229
        %2623 = vmatprep.subr.mxu0 %v1174
        %2624 = vmatpush1.msra.mxu0 %v1173
        %2625 = vmatprep.subr.mxu0 %v1118
        %2626 = vmatpush1.msra.mxu0 %v1117
        %2627 = vmatprep.subr.mxu0 %v1062
        %2628 = vmatpush1.msra.mxu0 %v1061
        %2629 = vmatprep.subr.mxu0 0.0
        %2630 = vmatpush2.msra.mxu0 0.0
        %2631 = vmatprep.subr.mxu0 0.0
        %2632 = vmatpush2.msra.mxu0 0.0
        %2633 = vmatprep.subr.mxu0 0.0
        %2634 = vmatpush2.msra.mxu0 0.0
        %2635 = vmatprep.subr.mxu0 0.0
        %2636 = vmatpush2.msra.mxu0 0.0
        %2637 = vmatprep.subr.mxu0 0.0
        %2638 = vmatpush2.msra.mxu0 0.0
        %2639 = vmatprep.subr.mxu0 0.0
        %2640 = vmatpush2.msra.mxu0 0.0
        %2641 = vmatprep.subr.mxu0 0.0
        %2642 = vmatpush2.msra.mxu0 0.0
        %2643 = vmatprep.subr.mxu0 0.0
        %2644 = vmatpush2.msra.mxu0 0.0
        %2645 = vmatprep.subr.mxu0 0.0
        %2646 = vmatpush2.msra.mxu0 0.0
        %2647 = vmatprep.subr.mxu0 0.0
        %2648 = vmatpush2.msra.mxu0 0.0
        %2649 = vmatprep.subr.mxu0 0.0
        %2650 = vmatpush2.msra.mxu0 0.0
        %2651 = vmatprep.subr.mxu0 0.0
        %2652 = vmatpush2.msra.mxu0 0.0
        %2653 = vmatprep.subr.mxu0 0.0
        %2654 = vmatpush2.msra.mxu0 0.0
        %2655 = vmatprep.subr.mxu0 0.0
        %2656 = vmatpush2.msra.mxu0 0.0
        %2657 = vmatprep.subr.mxu0 0.0
        %2658 = vmatpush2.msra.mxu0 0.0
        %2659 = vmatprep.subr.mxu0 0.0
        %2660 = vmatpush2.msra.mxu0 0.0
        %2661 = vmatprep.mubr.f32.mxu0 0.0
        %2662 = vmatmul.mubr.f32.gmra.mxu0 %v1601
        %v2663 = vpop.f32.mrf.mxu0
        %v2664 = vadd.f32 %v1597, %v2663
        %v2665 = vpop.f32.mrf.mxu0
        %v2666 = vadd.f32 %v1597, %v2665
        %2667 = vdwg.mxu0
        %2668 = vmatprep.subr.mxu0 0.0
        %2669 = vmatpush1.msra.mxu0 0.0
        %2670 = vmatprep.subr.mxu0 0.0
        %2671 = vmatpush1.msra.mxu0 0.0
        %2672 = vmatprep.subr.mxu0 0.0
        %2673 = vmatpush1.msra.mxu0 0.0
        %2674 = vmatprep.subr.mxu0 0.0
        %2675 = vmatpush1.msra.mxu0 0.0
        %2676 = vmatprep.subr.mxu0 0.0
        %2677 = vmatpush1.msra.mxu0 0.0
        %2678 = vmatprep.subr.mxu0 0.0
        %2679 = vmatpush1.msra.mxu0 0.0
        %2680 = vmatprep.subr.mxu0 %v1568
        %2681 = vmatpush1.msra.mxu0 %v1567
        %2682 = vmatprep.subr.mxu0 %v1512
        %2683 = vmatpush1.msra.mxu0 %v1511
        %2684 = vmatprep.subr.mxu0 %v1456
        %2685 = vmatpush1.msra.mxu0 %v1455
        %2686 = vmatprep.subr.mxu0 %v1400
        %2687 = vmatpush1.msra.mxu0 %v1399
        %2688 = vmatprep.subr.mxu0 %v1344
        %2689 = vmatpush1.msra.mxu0 %v1343
        %2690 = vmatprep.subr.mxu0 %v1288
        %2691 = vmatpush1.msra.mxu0 %v1287
        %2692 = vmatprep.subr.mxu0 %v1232
        %2693 = vmatpush1.msra.mxu0 %v1231
        %2694 = vmatprep.subr.mxu0 %v1176
        %2695 = vmatpush1.msra.mxu0 %v1175
        %2696 = vmatprep.subr.mxu0 %v1120
        %2697 = vmatpush1.msra.mxu0 %v1119
        %2698 = vmatprep.subr.mxu0 %v1064
        %2699 = vmatpush1.msra.mxu0 %v1063
        %2700 = vmatprep.subr.mxu0 0.0
        %2701 = vmatpush2.msra.mxu0 0.0
        %2702 = vmatprep.subr.mxu0 0.0
        %2703 = vmatpush2.msra.mxu0 0.0
        %2704 = vmatprep.subr.mxu0 0.0
        %2705 = vmatpush2.msra.mxu0 0.0
        %2706 = vmatprep.subr.mxu0 0.0
        %2707 = vmatpush2.msra.mxu0 0.0
        %2708 = vmatprep.subr.mxu0 0.0
        %2709 = vmatpush2.msra.mxu0 0.0
        %2710 = vmatprep.subr.mxu0 0.0
        %2711 = vmatpush2.msra.mxu0 0.0
        %2712 = vmatprep.subr.mxu0 0.0
        %2713 = vmatpush2.msra.mxu0 0.0
        %2714 = vmatprep.subr.mxu0 0.0
        %2715 = vmatpush2.msra.mxu0 0.0
        %2716 = vmatprep.subr.mxu0 0.0
        %2717 = vmatpush2.msra.mxu0 0.0
        %2718 = vmatprep.subr.mxu0 0.0
        %2719 = vmatpush2.msra.mxu0 0.0
        %2720 = vmatprep.subr.mxu0 0.0
        %2721 = vmatpush2.msra.mxu0 0.0
        %2722 = vmatprep.subr.mxu0 0.0
        %2723 = vmatpush2.msra.mxu0 0.0
        %2724 = vmatprep.subr.mxu0 0.0
        %2725 = vmatpush2.msra.mxu0 0.0
        %2726 = vmatprep.subr.mxu0 0.0
        %2727 = vmatpush2.msra.mxu0 0.0
        %2728 = vmatprep.subr.mxu0 0.0
        %2729 = vmatpush2.msra.mxu0 0.0
        %2730 = vmatprep.subr.mxu0 0.0
        %2731 = vmatpush2.msra.mxu0 0.0
        %2732 = vmatprep.mubr.f32.mxu0 0.0
        %2733 = vmatmul.mubr.f32.gmra.mxu0 %v1601
        %v2734 = vpop.f32.mrf.mxu0
        %v2735 = vadd.f32 %v1597, %v2734
        %v2736 = vpop.f32.mrf.mxu0
        %v2737 = vadd.f32 %v1597, %v2736
        %2738 = vdwg.mxu0
        %2739 = vmatprep.subr.mxu0 0.0
        %2740 = vmatpush1.msra.mxu0 0.0
        %2741 = vmatprep.subr.mxu0 0.0
        %2742 = vmatpush1.msra.mxu0 0.0
        %2743 = vmatprep.subr.mxu0 0.0
        %2744 = vmatpush1.msra.mxu0 0.0
        %2745 = vmatprep.subr.mxu0 0.0
        %2746 = vmatpush1.msra.mxu0 0.0
        %2747 = vmatprep.subr.mxu0 0.0
        %2748 = vmatpush1.msra.mxu0 0.0
        %2749 = vmatprep.subr.mxu0 0.0
        %2750 = vmatpush1.msra.mxu0 0.0
        %2751 = vmatprep.subr.mxu0 %v1570
        %2752 = vmatpush1.msra.mxu0 %v1569
        %2753 = vmatprep.subr.mxu0 %v1514
        %2754 = vmatpush1.msra.mxu0 %v1513
        %2755 = vmatprep.subr.mxu0 %v1458
        %2756 = vmatpush1.msra.mxu0 %v1457
        %2757 = vmatprep.subr.mxu0 %v1402
        %2758 = vmatpush1.msra.mxu0 %v1401
        %2759 = vmatprep.subr.mxu0 %v1346
        %2760 = vmatpush1.msra.mxu0 %v1345
        %2761 = vmatprep.subr.mxu0 %v1290
        %2762 = vmatpush1.msra.mxu0 %v1289
        %2763 = vmatprep.subr.mxu0 %v1234
        %2764 = vmatpush1.msra.mxu0 %v1233
        %2765 = vmatprep.subr.mxu0 %v1178
        %2766 = vmatpush1.msra.mxu0 %v1177
        %2767 = vmatprep.subr.mxu0 %v1122
        %2768 = vmatpush1.msra.mxu0 %v1121
        %2769 = vmatprep.subr.mxu0 %v1066
        %2770 = vmatpush1.msra.mxu0 %v1065
        %2771 = vmatprep.subr.mxu0 0.0
        %2772 = vmatpush2.msra.mxu0 0.0
        %2773 = vmatprep.subr.mxu0 0.0
        %2774 = vmatpush2.msra.mxu0 0.0
        %2775 = vmatprep.subr.mxu0 0.0
        %2776 = vmatpush2.msra.mxu0 0.0
        %2777 = vmatprep.subr.mxu0 0.0
        %2778 = vmatpush2.msra.mxu0 0.0
        %2779 = vmatprep.subr.mxu0 0.0
        %2780 = vmatpush2.msra.mxu0 0.0
        %2781 = vmatprep.subr.mxu0 0.0
        %2782 = vmatpush2.msra.mxu0 0.0
        %2783 = vmatprep.subr.mxu0 0.0
        %2784 = vmatpush2.msra.mxu0 0.0
        %2785 = vmatprep.subr.mxu0 0.0
        %2786 = vmatpush2.msra.mxu0 0.0
        %2787 = vmatprep.subr.mxu0 0.0
        %2788 = vmatpush2.msra.mxu0 0.0
        %2789 = vmatprep.subr.mxu0 0.0
        %2790 = vmatpush2.msra.mxu0 0.0
        %2791 = vmatprep.subr.mxu0 0.0
        %2792 = vmatpush2.msra.mxu0 0.0
        %2793 = vmatprep.subr.mxu0 0.0
        %2794 = vmatpush2.msra.mxu0 0.0
        %2795 = vmatprep.subr.mxu0 0.0
        %2796 = vmatpush2.msra.mxu0 0.0
        %2797 = vmatprep.subr.mxu0 0.0
        %2798 = vmatpush2.msra.mxu0 0.0
        %2799 = vmatprep.subr.mxu0 0.0
        %2800 = vmatpush2.msra.mxu0 0.0
        %2801 = vmatprep.subr.mxu0 0.0
        %2802 = vmatpush2.msra.mxu0 0.0
        %2803 = vmatprep.mubr.f32.mxu0 0.0
        %2804 = vmatmul.mubr.f32.gmra.mxu0 %v1601
        %v2805 = vpop.f32.mrf.mxu0
        %v2806 = vadd.f32 %v1597, %v2805
        %v2807 = vpop.f32.mrf.mxu0
        %v2808 = vadd.f32 %v1597, %v2807
        %2809 = vdwg.mxu0
        %2810 = vmatprep.subr.mxu0 0.0
        %2811 = vmatpush1.msra.mxu0 0.0
        %2812 = vmatprep.subr.mxu0 0.0
        %2813 = vmatpush1.msra.mxu0 0.0
        %2814 = vmatprep.subr.mxu0 0.0
        %2815 = vmatpush1.msra.mxu0 0.0
        %2816 = vmatprep.subr.mxu0 0.0
        %2817 = vmatpush1.msra.mxu0 0.0
        %2818 = vmatprep.subr.mxu0 0.0
        %2819 = vmatpush1.msra.mxu0 0.0
        %2820 = vmatprep.subr.mxu0 0.0
        %2821 = vmatpush1.msra.mxu0 0.0
        %2822 = vmatprep.subr.mxu0 %v1572
        %2823 = vmatpush1.msra.mxu0 %v1571
        %2824 = vmatprep.subr.mxu0 %v1516
        %2825 = vmatpush1.msra.mxu0 %v1515
        %2826 = vmatprep.subr.mxu0 %v1460
        %2827 = vmatpush1.msra.mxu0 %v1459
        %2828 = vmatprep.subr.mxu0 %v1404
        %2829 = vmatpush1.msra.mxu0 %v1403
        %2830 = vmatprep.subr.mxu0 %v1348
        %2831 = vmatpush1.msra.mxu0 %v1347
        %2832 = vmatprep.subr.mxu0 %v1292
        %2833 = vmatpush1.msra.mxu0 %v1291
        %2834 = vmatprep.subr.mxu0 %v1236
        %2835 = vmatpush1.msra.mxu0 %v1235
        %2836 = vmatprep.subr.mxu0 %v1180
        %2837 = vmatpush1.msra.mxu0 %v1179
        %2838 = vmatprep.subr.mxu0 %v1124
        %2839 = vmatpush1.msra.mxu0 %v1123
        %2840 = vmatprep.subr.mxu0 %v1068
        %2841 = vmatpush1.msra.mxu0 %v1067
        %2842 = vmatprep.subr.mxu0 0.0
        %2843 = vmatpush2.msra.mxu0 0.0
        %2844 = vmatprep.subr.mxu0 0.0
        %2845 = vmatpush2.msra.mxu0 0.0
        %2846 = vmatprep.subr.mxu0 0.0
        %2847 = vmatpush2.msra.mxu0 0.0
        %2848 = vmatprep.subr.mxu0 0.0
        %2849 = vmatpush2.msra.mxu0 0.0
        %2850 = vmatprep.subr.mxu0 0.0
        %2851 = vmatpush2.msra.mxu0 0.0
        %2852 = vmatprep.subr.mxu0 0.0
        %2853 = vmatpush2.msra.mxu0 0.0
        %2854 = vmatprep.subr.mxu0 0.0
        %2855 = vmatpush2.msra.mxu0 0.0
        %2856 = vmatprep.subr.mxu0 0.0
        %2857 = vmatpush2.msra.mxu0 0.0
        %2858 = vmatprep.subr.mxu0 0.0
        %2859 = vmatpush2.msra.mxu0 0.0
        %2860 = vmatprep.subr.mxu0 0.0
        %2861 = vmatpush2.msra.mxu0 0.0
        %2862 = vmatprep.subr.mxu0 0.0
        %2863 = vmatpush2.msra.mxu0 0.0
        %2864 = vmatprep.subr.mxu0 0.0
        %2865 = vmatpush2.msra.mxu0 0.0
        %2866 = vmatprep.subr.mxu0 0.0
        %2867 = vmatpush2.msra.mxu0 0.0
        %2868 = vmatprep.subr.mxu0 0.0
        %2869 = vmatpush2.msra.mxu0 0.0
        %2870 = vmatprep.subr.mxu0 0.0
        %2871 = vmatpush2.msra.mxu0 0.0
        %2872 = vmatprep.subr.mxu0 0.0
        %2873 = vmatpush2.msra.mxu0 0.0
        %2874 = vmatprep.mubr.f32.mxu0 0.0
        %2875 = vmatmul.mubr.f32.gmra.mxu0 %v1601
        %v2876 = vpop.f32.mrf.mxu0
        %v2877 = vadd.f32 %v1597, %v2876
        %v2878 = vpop.f32.mrf.mxu0
        %v2879 = vadd.f32 %v1597, %v2878
        %2880 = vdwg.mxu0
        %2881 = vmatprep.subr.mxu0 0.0
        %2882 = vmatpush1.msra.mxu0 0.0
        %2883 = vmatprep.subr.mxu0 0.0
        %2884 = vmatpush1.msra.mxu0 0.0
        %2885 = vmatprep.subr.mxu0 0.0
        %2886 = vmatpush1.msra.mxu0 0.0
        %2887 = vmatprep.subr.mxu0 0.0
        %2888 = vmatpush1.msra.mxu0 0.0
        %2889 = vmatprep.subr.mxu0 0.0
        %2890 = vmatpush1.msra.mxu0 0.0
        %2891 = vmatprep.subr.mxu0 0.0
        %2892 = vmatpush1.msra.mxu0 0.0
        %2893 = vmatprep.subr.mxu0 %v1574
        %2894 = vmatpush1.msra.mxu0 %v1573
        %2895 = vmatprep.subr.mxu0 %v1518
        %2896 = vmatpush1.msra.mxu0 %v1517
        %2897 = vmatprep.subr.mxu0 %v1462
        %2898 = vmatpush1.msra.mxu0 %v1461
        %2899 = vmatprep.subr.mxu0 %v1406
        %2900 = vmatpush1.msra.mxu0 %v1405
        %2901 = vmatprep.subr.mxu0 %v1350
        %2902 = vmatpush1.msra.mxu0 %v1349
        %2903 = vmatprep.subr.mxu0 %v1294
        %2904 = vmatpush1.msra.mxu0 %v1293
        %2905 = vmatprep.subr.mxu0 %v1238
        %2906 = vmatpush1.msra.mxu0 %v1237
        %2907 = vmatprep.subr.mxu0 %v1182
        %2908 = vmatpush1.msra.mxu0 %v1181
        %2909 = vmatprep.subr.mxu0 %v1126
        %2910 = vmatpush1.msra.mxu0 %v1125
        %2911 = vmatprep.subr.mxu0 %v1070
        %2912 = vmatpush1.msra.mxu0 %v1069
        %2913 = vmatprep.subr.mxu0 0.0
        %2914 = vmatpush2.msra.mxu0 0.0
        %2915 = vmatprep.subr.mxu0 0.0
        %2916 = vmatpush2.msra.mxu0 0.0
        %2917 = vmatprep.subr.mxu0 0.0
        %2918 = vmatpush2.msra.mxu0 0.0
        %2919 = vmatprep.subr.mxu0 0.0
        %2920 = vmatpush2.msra.mxu0 0.0
        %2921 = vmatprep.subr.mxu0 0.0
        %2922 = vmatpush2.msra.mxu0 0.0
        %2923 = vmatprep.subr.mxu0 0.0
        %2924 = vmatpush2.msra.mxu0 0.0
        %2925 = vmatprep.subr.mxu0 0.0
        %2926 = vmatpush2.msra.mxu0 0.0
        %2927 = vmatprep.subr.mxu0 0.0
        %2928 = vmatpush2.msra.mxu0 0.0
        %2929 = vmatprep.subr.mxu0 0.0
        %2930 = vmatpush2.msra.mxu0 0.0
        %2931 = vmatprep.subr.mxu0 0.0
        %2932 = vmatpush2.msra.mxu0 0.0
        %2933 = vmatprep.subr.mxu0 0.0
        %2934 = vmatpush2.msra.mxu0 0.0
        %2935 = vmatprep.subr.mxu0 0.0
        %2936 = vmatpush2.msra.mxu0 0.0
        %2937 = vmatprep.subr.mxu0 0.0
        %2938 = vmatpush2.msra.mxu0 0.0
        %2939 = vmatprep.subr.mxu0 0.0
        %2940 = vmatpush2.msra.mxu0 0.0
        %2941 = vmatprep.subr.mxu0 0.0
        %2942 = vmatpush2.msra.mxu0 0.0
        %2943 = vmatprep.subr.mxu0 0.0
        %2944 = vmatpush2.msra.mxu0 0.0
        %2945 = vmatprep.mubr.f32.mxu0 0.0
        %2946 = vmatmul.mubr.f32.gmra.mxu0 %v1601
        %v2947 = vpop.f32.mrf.mxu0
        %v2948 = vadd.f32 %v1597, %v2947
        %v2949 = vpop.f32.mrf.mxu0
        %v2950 = vadd.f32 %v1597, %v2949
        %2951 = vdwg.mxu0
        %2952 = vmatprep.subr.mxu0 0.0
        %2953 = vmatpush1.msra.mxu0 0.0
        %2954 = vmatprep.subr.mxu0 0.0
        %2955 = vmatpush1.msra.mxu0 0.0
        %2956 = vmatprep.subr.mxu0 0.0
        %2957 = vmatpush1.msra.mxu0 0.0
        %2958 = vmatprep.subr.mxu0 0.0
        %2959 = vmatpush1.msra.mxu0 0.0
        %2960 = vmatprep.subr.mxu0 0.0
        %2961 = vmatpush1.msra.mxu0 0.0
        %2962 = vmatprep.subr.mxu0 0.0
        %2963 = vmatpush1.msra.mxu0 0.0
        %2964 = vmatprep.subr.mxu0 %v1576
        %2965 = vmatpush1.msra.mxu0 %v1575
        %2966 = vmatprep.subr.mxu0 %v1520
        %2967 = vmatpush1.msra.mxu0 %v1519
        %2968 = vmatprep.subr.mxu0 %v1464
        %2969 = vmatpush1.msra.mxu0 %v1463
        %2970 = vmatprep.subr.mxu0 %v1408
        %2971 = vmatpush1.msra.mxu0 %v1407
        %2972 = vmatprep.subr.mxu0 %v1352
        %2973 = vmatpush1.msra.mxu0 %v1351
        %2974 = vmatprep.subr.mxu0 %v1296
        %2975 = vmatpush1.msra.mxu0 %v1295
        %2976 = vmatprep.subr.mxu0 %v1240
        %2977 = vmatpush1.msra.mxu0 %v1239
        %2978 = vmatprep.subr.mxu0 %v1184
        %2979 = vmatpush1.msra.mxu0 %v1183
        %2980 = vmatprep.subr.mxu0 %v1128
        %2981 = vmatpush1.msra.mxu0 %v1127
        %2982 = vmatprep.subr.mxu0 %v1072
        %2983 = vmatpush1.msra.mxu0 %v1071
        %2984 = vmatprep.subr.mxu0 0.0
        %2985 = vmatpush2.msra.mxu0 0.0
        %2986 = vmatprep.subr.mxu0 0.0
        %2987 = vmatpush2.msra.mxu0 0.0
        %2988 = vmatprep.subr.mxu0 0.0
        %2989 = vmatpush2.msra.mxu0 0.0
        %2990 = vmatprep.subr.mxu0 0.0
        %2991 = vmatpush2.msra.mxu0 0.0
        %2992 = vmatprep.subr.mxu0 0.0
        %2993 = vmatpush2.msra.mxu0 0.0
        %2994 = vmatprep.subr.mxu0 0.0
        %2995 = vmatpush2.msra.mxu0 0.0
        %2996 = vmatprep.subr.mxu0 0.0
        %2997 = vmatpush2.msra.mxu0 0.0
        %2998 = vmatprep.subr.mxu0 0.0
        %2999 = vmatpush2.msra.mxu0 0.0
        %3000 = vmatprep.subr.mxu0 0.0
        %3001 = vmatpush2.msra.mxu0 0.0
        %3002 = vmatprep.subr.mxu0 0.0
        %3003 = vmatpush2.msra.mxu0 0.0
        %3004 = vmatprep.subr.mxu0 0.0
        %3005 = vmatpush2.msra.mxu0 0.0
        %3006 = vmatprep.subr.mxu0 0.0
        %3007 = vmatpush2.msra.mxu0 0.0
        %3008 = vmatprep.subr.mxu0 0.0
        %3009 = vmatpush2.msra.mxu0 0.0
        %3010 = vmatprep.subr.mxu0 0.0
        %3011 = vmatpush2.msra.mxu0 0.0
        %3012 = vmatprep.subr.mxu0 0.0
        %3013 = vmatpush2.msra.mxu0 0.0
        %3014 = vmatprep.subr.mxu0 0.0
        %3015 = vmatpush2.msra.mxu0 0.0
        %3016 = vmatprep.mubr.f32.mxu0 0.0
        %3017 = vmatmul.mubr.f32.gmra.mxu0 %v1601
        %v3018 = vpop.f32.mrf.mxu0
        %v3019 = vadd.f32 %v1597, %v3018
        %v3020 = vpop.f32.mrf.mxu0
        %v3021 = vadd.f32 %v1597, %v3020
        %3022 = vdwg.mxu0
        %3023 = vmatprep.subr.mxu0 0.0
        %3024 = vmatpush1.msra.mxu0 0.0
        %3025 = vmatprep.subr.mxu0 0.0
        %3026 = vmatpush1.msra.mxu0 0.0
        %3027 = vmatprep.subr.mxu0 0.0
        %3028 = vmatpush1.msra.mxu0 0.0
        %3029 = vmatprep.subr.mxu0 0.0
        %3030 = vmatpush1.msra.mxu0 0.0
        %3031 = vmatprep.subr.mxu0 0.0
        %3032 = vmatpush1.msra.mxu0 0.0
        %3033 = vmatprep.subr.mxu0 0.0
        %3034 = vmatpush1.msra.mxu0 0.0
        %3035 = vmatprep.subr.mxu0 %v1578
        %3036 = vmatpush1.msra.mxu0 %v1577
        %3037 = vmatprep.subr.mxu0 %v1522
        %3038 = vmatpush1.msra.mxu0 %v1521
        %3039 = vmatprep.subr.mxu0 %v1466
        %3040 = vmatpush1.msra.mxu0 %v1465
        %3041 = vmatprep.subr.mxu0 %v1410
        %3042 = vmatpush1.msra.mxu0 %v1409
        %3043 = vmatprep.subr.mxu0 %v1354
        %3044 = vmatpush1.msra.mxu0 %v1353
        %3045 = vmatprep.subr.mxu0 %v1298
        %3046 = vmatpush1.msra.mxu0 %v1297
        %3047 = vmatprep.subr.mxu0 %v1242
        %3048 = vmatpush1.msra.mxu0 %v1241
        %3049 = vmatprep.subr.mxu0 %v1186
        %3050 = vmatpush1.msra.mxu0 %v1185
        %3051 = vmatprep.subr.mxu0 %v1130
        %3052 = vmatpush1.msra.mxu0 %v1129
        %3053 = vmatprep.subr.mxu0 %v1074
        %3054 = vmatpush1.msra.mxu0 %v1073
        %3055 = vmatprep.subr.mxu0 0.0
        %3056 = vmatpush2.msra.mxu0 0.0
        %3057 = vmatprep.subr.mxu0 0.0
        %3058 = vmatpush2.msra.mxu0 0.0
        %3059 = vmatprep.subr.mxu0 0.0
        %3060 = vmatpush2.msra.mxu0 0.0
        %3061 = vmatprep.subr.mxu0 0.0
        %3062 = vmatpush2.msra.mxu0 0.0
        %3063 = vmatprep.subr.mxu0 0.0
        %3064 = vmatpush2.msra.mxu0 0.0
        %3065 = vmatprep.subr.mxu0 0.0
        %3066 = vmatpush2.msra.mxu0 0.0
        %3067 = vmatprep.subr.mxu0 0.0
        %3068 = vmatpush2.msra.mxu0 0.0
        %3069 = vmatprep.subr.mxu0 0.0
        %3070 = vmatpush2.msra.mxu0 0.0
        %3071 = vmatprep.subr.mxu0 0.0
        %3072 = vmatpush2.msra.mxu0 0.0
        %3073 = vmatprep.subr.mxu0 0.0
        %3074 = vmatpush2.msra.mxu0 0.0
        %3075 = vmatprep.subr.mxu0 0.0
        %3076 = vmatpush2.msra.mxu0 0.0
        %3077 = vmatprep.subr.mxu0 0.0
        %3078 = vmatpush2.msra.mxu0 0.0
        %3079 = vmatprep.subr.mxu0 0.0
        %3080 = vmatpush2.msra.mxu0 0.0
        %3081 = vmatprep.subr.mxu0 0.0
        %3082 = vmatpush2.msra.mxu0 0.0
        %3083 = vmatprep.subr.mxu0 0.0
        %3084 = vmatpush2.msra.mxu0 0.0
        %3085 = vmatprep.subr.mxu0 0.0
        %3086 = vmatpush2.msra.mxu0 0.0
        %3087 = vmatprep.mubr.f32.mxu0 0.0
        %3088 = vmatmul.mubr.f32.gmra.mxu0 %v1601
        %v3089 = vpop.f32.mrf.mxu0
        %v3090 = vadd.f32 %v1597, %v3089
        %v3091 = vpop.f32.mrf.mxu0
        %v3092 = vadd.f32 %v1597, %v3091
        %3093 = vdwg.mxu0
        %3094 = vmatprep.subr.mxu0 0.0
        %3095 = vmatpush1.msra.mxu0 0.0
        %3096 = vmatprep.subr.mxu0 0.0
        %3097 = vmatpush1.msra.mxu0 0.0
        %3098 = vmatprep.subr.mxu0 0.0
        %3099 = vmatpush1.msra.mxu0 0.0
        %3100 = vmatprep.subr.mxu0 0.0
        %3101 = vmatpush1.msra.mxu0 0.0
        %3102 = vmatprep.subr.mxu0 0.0
        %3103 = vmatpush1.msra.mxu0 0.0
        %3104 = vmatprep.subr.mxu0 0.0
        %3105 = vmatpush1.msra.mxu0 0.0
        %3106 = vmatprep.subr.mxu0 %v1580
        %3107 = vmatpush1.msra.mxu0 %v1579
        %3108 = vmatprep.subr.mxu0 %v1524
        %3109 = vmatpush1.msra.mxu0 %v1523
        %3110 = vmatprep.subr.mxu0 %v1468
        %3111 = vmatpush1.msra.mxu0 %v1467
        %3112 = vmatprep.subr.mxu0 %v1412
        %3113 = vmatpush1.msra.mxu0 %v1411
        %3114 = vmatprep.subr.mxu0 %v1356
        %3115 = vmatpush1.msra.mxu0 %v1355
        %3116 = vmatprep.subr.mxu0 %v1300
        %3117 = vmatpush1.msra.mxu0 %v1299
        %3118 = vmatprep.subr.mxu0 %v1244
        %3119 = vmatpush1.msra.mxu0 %v1243
        %3120 = vmatprep.subr.mxu0 %v1188
        %3121 = vmatpush1.msra.mxu0 %v1187
        %3122 = vmatprep.subr.mxu0 %v1132
        %3123 = vmatpush1.msra.mxu0 %v1131
        %3124 = vmatprep.subr.mxu0 %v1076
        %3125 = vmatpush1.msra.mxu0 %v1075
        %3126 = vmatprep.subr.mxu0 0.0
        %3127 = vmatpush2.msra.mxu0 0.0
        %3128 = vmatprep.subr.mxu0 0.0
        %3129 = vmatpush2.msra.mxu0 0.0
        %3130 = vmatprep.subr.mxu0 0.0
        %3131 = vmatpush2.msra.mxu0 0.0
        %3132 = vmatprep.subr.mxu0 0.0
        %3133 = vmatpush2.msra.mxu0 0.0
        %3134 = vmatprep.subr.mxu0 0.0
        %3135 = vmatpush2.msra.mxu0 0.0
        %3136 = vmatprep.subr.mxu0 0.0
        %3137 = vmatpush2.msra.mxu0 0.0
        %3138 = vmatprep.subr.mxu0 0.0
        %3139 = vmatpush2.msra.mxu0 0.0
        %3140 = vmatprep.subr.mxu0 0.0
        %3141 = vmatpush2.msra.mxu0 0.0
        %3142 = vmatprep.subr.mxu0 0.0
        %3143 = vmatpush2.msra.mxu0 0.0
        %3144 = vmatprep.subr.mxu0 0.0
        %3145 = vmatpush2.msra.mxu0 0.0
        %3146 = vmatprep.subr.mxu0 0.0
        %3147 = vmatpush2.msra.mxu0 0.0
        %3148 = vmatprep.subr.mxu0 0.0
        %3149 = vmatpush2.msra.mxu0 0.0
        %3150 = vmatprep.subr.mxu0 0.0
        %3151 = vmatpush2.msra.mxu0 0.0
        %3152 = vmatprep.subr.mxu0 0.0
        %3153 = vmatpush2.msra.mxu0 0.0
        %3154 = vmatprep.subr.mxu0 0.0
        %3155 = vmatpush2.msra.mxu0 0.0
        %3156 = vmatprep.subr.mxu0 0.0
        %3157 = vmatpush2.msra.mxu0 0.0
        %3158 = vmatprep.mubr.f32.mxu0 0.0
        %3159 = vmatmul.mubr.f32.gmra.mxu0 %v1601
        %v3160 = vpop.f32.mrf.mxu0
        %v3161 = vadd.f32 %v1597, %v3160
        %v3162 = vpop.f32.mrf.mxu0
        %v3163 = vadd.f32 %v1597, %v3162
        %3164 = vdwg.mxu0
        %3165 = vmatprep.subr.mxu0 0.0
        %3166 = vmatpush1.msra.mxu0 0.0
        %3167 = vmatprep.subr.mxu0 0.0
        %3168 = vmatpush1.msra.mxu0 0.0
        %3169 = vmatprep.subr.mxu0 0.0
        %3170 = vmatpush1.msra.mxu0 0.0
        %3171 = vmatprep.subr.mxu0 0.0
        %3172 = vmatpush1.msra.mxu0 0.0
        %3173 = vmatprep.subr.mxu0 0.0
        %3174 = vmatpush1.msra.mxu0 0.0
        %3175 = vmatprep.subr.mxu0 0.0
        %3176 = vmatpush1.msra.mxu0 0.0
        %3177 = vmatprep.subr.mxu0 %v1582
        %3178 = vmatpush1.msra.mxu0 %v1581
        %3179 = vmatprep.subr.mxu0 %v1526
        %3180 = vmatpush1.msra.mxu0 %v1525
        %3181 = vmatprep.subr.mxu0 %v1470
        %3182 = vmatpush1.msra.mxu0 %v1469
        %3183 = vmatprep.subr.mxu0 %v1414
        %3184 = vmatpush1.msra.mxu0 %v1413
        %3185 = vmatprep.subr.mxu0 %v1358
        %3186 = vmatpush1.msra.mxu0 %v1357
        %3187 = vmatprep.subr.mxu0 %v1302
        %3188 = vmatpush1.msra.mxu0 %v1301
        %3189 = vmatprep.subr.mxu0 %v1246
        %3190 = vmatpush1.msra.mxu0 %v1245
        %3191 = vmatprep.subr.mxu0 %v1190
        %3192 = vmatpush1.msra.mxu0 %v1189
        %3193 = vmatprep.subr.mxu0 %v1134
        %3194 = vmatpush1.msra.mxu0 %v1133
        %3195 = vmatprep.subr.mxu0 %v1078
        %3196 = vmatpush1.msra.mxu0 %v1077
        %3197 = vmatprep.subr.mxu0 0.0
        %3198 = vmatpush2.msra.mxu0 0.0
        %3199 = vmatprep.subr.mxu0 0.0
        %3200 = vmatpush2.msra.mxu0 0.0
        %3201 = vmatprep.subr.mxu0 0.0
        %3202 = vmatpush2.msra.mxu0 0.0
        %3203 = vmatprep.subr.mxu0 0.0
        %3204 = vmatpush2.msra.mxu0 0.0
        %3205 = vmatprep.subr.mxu0 0.0
        %3206 = vmatpush2.msra.mxu0 0.0
        %3207 = vmatprep.subr.mxu0 0.0
        %3208 = vmatpush2.msra.mxu0 0.0
        %3209 = vmatprep.subr.mxu0 0.0
        %3210 = vmatpush2.msra.mxu0 0.0
        %3211 = vmatprep.subr.mxu0 0.0
        %3212 = vmatpush2.msra.mxu0 0.0
        %3213 = vmatprep.subr.mxu0 0.0
        %3214 = vmatpush2.msra.mxu0 0.0
        %3215 = vmatprep.subr.mxu0 0.0
        %3216 = vmatpush2.msra.mxu0 0.0
        %3217 = vmatprep.subr.mxu0 0.0
        %3218 = vmatpush2.msra.mxu0 0.0
        %3219 = vmatprep.subr.mxu0 0.0
        %3220 = vmatpush2.msra.mxu0 0.0
        %3221 = vmatprep.subr.mxu0 0.0
        %3222 = vmatpush2.msra.mxu0 0.0
        %3223 = vmatprep.subr.mxu0 0.0
        %3224 = vmatpush2.msra.mxu0 0.0
        %3225 = vmatprep.subr.mxu0 0.0
        %3226 = vmatpush2.msra.mxu0 0.0
        %3227 = vmatprep.subr.mxu0 0.0
        %3228 = vmatpush2.msra.mxu0 0.0
        %3229 = vmatprep.mubr.f32.mxu0 0.0
        %3230 = vmatmul.mubr.f32.gmra.mxu0 %v1601
        %v3231 = vpop.f32.mrf.mxu0
        %v3232 = vadd.f32 %v1597, %v3231
        %v3233 = vpop.f32.mrf.mxu0
        %v3234 = vadd.f32 %v1597, %v3233
        %3235 = vdwg.mxu0
        %3236 = vmatprep.subr.mxu0 0.0
        %3237 = vmatpush1.msra.mxu0 0.0
        %3238 = vmatprep.subr.mxu0 0.0
        %3239 = vmatpush1.msra.mxu0 0.0
        %3240 = vmatprep.subr.mxu0 0.0
        %3241 = vmatpush1.msra.mxu0 0.0
        %3242 = vmatprep.subr.mxu0 0.0
        %3243 = vmatpush1.msra.mxu0 0.0
        %3244 = vmatprep.subr.mxu0 0.0
        %3245 = vmatpush1.msra.mxu0 0.0
        %3246 = vmatprep.subr.mxu0 0.0
        %3247 = vmatpush1.msra.mxu0 0.0
        %3248 = vmatprep.subr.mxu0 %v1584
        %3249 = vmatpush1.msra.mxu0 %v1583
        %3250 = vmatprep.subr.mxu0 %v1528
        %3251 = vmatpush1.msra.mxu0 %v1527
        %3252 = vmatprep.subr.mxu0 %v1472
        %3253 = vmatpush1.msra.mxu0 %v1471
        %3254 = vmatprep.subr.mxu0 %v1416
        %3255 = vmatpush1.msra.mxu0 %v1415
        %3256 = vmatprep.subr.mxu0 %v1360
        %3257 = vmatpush1.msra.mxu0 %v1359
        %3258 = vmatprep.subr.mxu0 %v1304
        %3259 = vmatpush1.msra.mxu0 %v1303
        %3260 = vmatprep.subr.mxu0 %v1248
        %3261 = vmatpush1.msra.mxu0 %v1247
        %3262 = vmatprep.subr.mxu0 %v1192
        %3263 = vmatpush1.msra.mxu0 %v1191
        %3264 = vmatprep.subr.mxu0 %v1136
        %3265 = vmatpush1.msra.mxu0 %v1135
        %3266 = vmatprep.subr.mxu0 %v1080
        %3267 = vmatpush1.msra.mxu0 %v1079
        %3268 = vmatprep.subr.mxu0 0.0
        %3269 = vmatpush2.msra.mxu0 0.0
        %3270 = vmatprep.subr.mxu0 0.0
        %3271 = vmatpush2.msra.mxu0 0.0
        %3272 = vmatprep.subr.mxu0 0.0
        %3273 = vmatpush2.msra.mxu0 0.0
        %3274 = vmatprep.subr.mxu0 0.0
        %3275 = vmatpush2.msra.mxu0 0.0
        %3276 = vmatprep.subr.mxu0 0.0
        %3277 = vmatpush2.msra.mxu0 0.0
        %3278 = vmatprep.subr.mxu0 0.0
        %3279 = vmatpush2.msra.mxu0 0.0
        %3280 = vmatprep.subr.mxu0 0.0
        %3281 = vmatpush2.msra.mxu0 0.0
        %3282 = vmatprep.subr.mxu0 0.0
        %3283 = vmatpush2.msra.mxu0 0.0
        %3284 = vmatprep.subr.mxu0 0.0
        %3285 = vmatpush2.msra.mxu0 0.0
        %3286 = vmatprep.subr.mxu0 0.0
        %3287 = vmatpush2.msra.mxu0 0.0
        %3288 = vmatprep.subr.mxu0 0.0
        %3289 = vmatpush2.msra.mxu0 0.0
        %3290 = vmatprep.subr.mxu0 0.0
        %3291 = vmatpush2.msra.mxu0 0.0
        %3292 = vmatprep.subr.mxu0 0.0
        %3293 = vmatpush2.msra.mxu0 0.0
        %3294 = vmatprep.subr.mxu0 0.0
        %3295 = vmatpush2.msra.mxu0 0.0
        %3296 = vmatprep.subr.mxu0 0.0
        %3297 = vmatpush2.msra.mxu0 0.0
        %3298 = vmatprep.subr.mxu0 0.0
        %3299 = vmatpush2.msra.mxu0 0.0
        %3300 = vmatprep.mubr.f32.mxu0 0.0
        %3301 = vmatmul.mubr.f32.gmra.mxu0 %v1601
        %v3302 = vpop.f32.mrf.mxu0
        %v3303 = vadd.f32 %v1597, %v3302
        %v3304 = vpop.f32.mrf.mxu0
        %v3305 = vadd.f32 %v1597, %v3304
        %3306 = vdwg.mxu0
        %3307 = vmatprep.subr.mxu0 0.0
        %3308 = vmatpush1.msra.mxu0 0.0
        %3309 = vmatprep.subr.mxu0 0.0
        %3310 = vmatpush1.msra.mxu0 0.0
        %3311 = vmatprep.subr.mxu0 0.0
        %3312 = vmatpush1.msra.mxu0 0.0
        %3313 = vmatprep.subr.mxu0 0.0
        %3314 = vmatpush1.msra.mxu0 0.0
        %3315 = vmatprep.subr.mxu0 0.0
        %3316 = vmatpush1.msra.mxu0 0.0
        %3317 = vmatprep.subr.mxu0 0.0
        %3318 = vmatpush1.msra.mxu0 0.0
        %3319 = vmatprep.subr.mxu0 %v1586
        %3320 = vmatpush1.msra.mxu0 %v1585
        %3321 = vmatprep.subr.mxu0 %v1530
        %3322 = vmatpush1.msra.mxu0 %v1529
        %3323 = vmatprep.subr.mxu0 %v1474
        %3324 = vmatpush1.msra.mxu0 %v1473
        %3325 = vmatprep.subr.mxu0 %v1418
        %3326 = vmatpush1.msra.mxu0 %v1417
        %3327 = vmatprep.subr.mxu0 %v1362
        %3328 = vmatpush1.msra.mxu0 %v1361
        %3329 = vmatprep.subr.mxu0 %v1306
        %3330 = vmatpush1.msra.mxu0 %v1305
        %3331 = vmatprep.subr.mxu0 %v1250
        %3332 = vmatpush1.msra.mxu0 %v1249
        %3333 = vmatprep.subr.mxu0 %v1194
        %3334 = vmatpush1.msra.mxu0 %v1193
        %3335 = vmatprep.subr.mxu0 %v1138
        %3336 = vmatpush1.msra.mxu0 %v1137
        %3337 = vmatprep.subr.mxu0 %v1082
        %3338 = vmatpush1.msra.mxu0 %v1081
        %3339 = vmatprep.subr.mxu0 0.0
        %3340 = vmatpush2.msra.mxu0 0.0
        %3341 = vmatprep.subr.mxu0 0.0
        %3342 = vmatpush2.msra.mxu0 0.0
        %3343 = vmatprep.subr.mxu0 0.0
        %3344 = vmatpush2.msra.mxu0 0.0
        %3345 = vmatprep.subr.mxu0 0.0
        %3346 = vmatpush2.msra.mxu0 0.0
        %3347 = vmatprep.subr.mxu0 0.0
        %3348 = vmatpush2.msra.mxu0 0.0
        %3349 = vmatprep.subr.mxu0 0.0
        %3350 = vmatpush2.msra.mxu0 0.0
        %3351 = vmatprep.subr.mxu0 0.0
        %3352 = vmatpush2.msra.mxu0 0.0
        %3353 = vmatprep.subr.mxu0 0.0
        %3354 = vmatpush2.msra.mxu0 0.0
        %3355 = vmatprep.subr.mxu0 0.0
        %3356 = vmatpush2.msra.mxu0 0.0
        %3357 = vmatprep.subr.mxu0 0.0
        %3358 = vmatpush2.msra.mxu0 0.0
        %3359 = vmatprep.subr.mxu0 0.0
        %3360 = vmatpush2.msra.mxu0 0.0
        %3361 = vmatprep.subr.mxu0 0.0
        %3362 = vmatpush2.msra.mxu0 0.0
        %3363 = vmatprep.subr.mxu0 0.0
        %3364 = vmatpush2.msra.mxu0 0.0
        %3365 = vmatprep.subr.mxu0 0.0
        %3366 = vmatpush2.msra.mxu0 0.0
        %3367 = vmatprep.subr.mxu0 0.0
        %3368 = vmatpush2.msra.mxu0 0.0
        %3369 = vmatprep.subr.mxu0 0.0
        %3370 = vmatpush2.msra.mxu0 0.0
        %3371 = vmatprep.mubr.f32.mxu0 0.0
        %3372 = vmatmul.mubr.f32.gmra.mxu0 %v1601
        %v3373 = vpop.f32.mrf.mxu0
        %v3374 = vadd.f32 %v1597, %v3373
        %v3375 = vpop.f32.mrf.mxu0
        %v3376 = vadd.f32 %v1597, %v3375
        %3377 = vdwg.mxu0
        %3378 = vmatprep.subr.mxu0 0.0
        %3379 = vmatpush1.msra.mxu0 0.0
        %3380 = vmatprep.subr.mxu0 0.0
        %3381 = vmatpush1.msra.mxu0 0.0
        %3382 = vmatprep.subr.mxu0 0.0
        %3383 = vmatpush1.msra.mxu0 0.0
        %3384 = vmatprep.subr.mxu0 0.0
        %3385 = vmatpush1.msra.mxu0 0.0
        %3386 = vmatprep.subr.mxu0 0.0
        %3387 = vmatpush1.msra.mxu0 0.0
        %3388 = vmatprep.subr.mxu0 0.0
        %3389 = vmatpush1.msra.mxu0 0.0
        %3390 = vmatprep.subr.mxu0 %v1588
        %3391 = vmatpush1.msra.mxu0 %v1587
        %3392 = vmatprep.subr.mxu0 %v1532
        %3393 = vmatpush1.msra.mxu0 %v1531
        %3394 = vmatprep.subr.mxu0 %v1476
        %3395 = vmatpush1.msra.mxu0 %v1475
        %3396 = vmatprep.subr.mxu0 %v1420
        %3397 = vmatpush1.msra.mxu0 %v1419
        %3398 = vmatprep.subr.mxu0 %v1364
        %3399 = vmatpush1.msra.mxu0 %v1363
        %3400 = vmatprep.subr.mxu0 %v1308
        %3401 = vmatpush1.msra.mxu0 %v1307
        %3402 = vmatprep.subr.mxu0 %v1252
        %3403 = vmatpush1.msra.mxu0 %v1251
        %3404 = vmatprep.subr.mxu0 %v1196
        %3405 = vmatpush1.msra.mxu0 %v1195
        %3406 = vmatprep.subr.mxu0 %v1140
        %3407 = vmatpush1.msra.mxu0 %v1139
        %3408 = vmatprep.subr.mxu0 %v1084
        %3409 = vmatpush1.msra.mxu0 %v1083
        %3410 = vmatprep.subr.mxu0 0.0
        %3411 = vmatpush2.msra.mxu0 0.0
        %3412 = vmatprep.subr.mxu0 0.0
        %3413 = vmatpush2.msra.mxu0 0.0
        %3414 = vmatprep.subr.mxu0 0.0
        %3415 = vmatpush2.msra.mxu0 0.0
        %3416 = vmatprep.subr.mxu0 0.0
        %3417 = vmatpush2.msra.mxu0 0.0
        %3418 = vmatprep.subr.mxu0 0.0
        %3419 = vmatpush2.msra.mxu0 0.0
        %3420 = vmatprep.subr.mxu0 0.0
        %3421 = vmatpush2.msra.mxu0 0.0
        %3422 = vmatprep.subr.mxu0 0.0
        %3423 = vmatpush2.msra.mxu0 0.0
        %3424 = vmatprep.subr.mxu0 0.0
        %3425 = vmatpush2.msra.mxu0 0.0
        %3426 = vmatprep.subr.mxu0 0.0
        %3427 = vmatpush2.msra.mxu0 0.0
        %3428 = vmatprep.subr.mxu0 0.0
        %3429 = vmatpush2.msra.mxu0 0.0
        %3430 = vmatprep.subr.mxu0 0.0
        %3431 = vmatpush2.msra.mxu0 0.0
        %3432 = vmatprep.subr.mxu0 0.0
        %3433 = vmatpush2.msra.mxu0 0.0
        %3434 = vmatprep.subr.mxu0 0.0
        %3435 = vmatpush2.msra.mxu0 0.0
        %3436 = vmatprep.subr.mxu0 0.0
        %3437 = vmatpush2.msra.mxu0 0.0
        %3438 = vmatprep.subr.mxu0 0.0
        %3439 = vmatpush2.msra.mxu0 0.0
        %3440 = vmatprep.subr.mxu0 0.0
        %3441 = vmatpush2.msra.mxu0 0.0
        %3442 = vmatprep.mubr.f32.mxu0 0.0
        %3443 = vmatmul.mubr.f32.gmra.mxu0 %v1601
        %v3444 = vpop.f32.mrf.mxu0
        %v3445 = vadd.f32 %v1597, %v3444
        %v3446 = vpop.f32.mrf.mxu0
        %v3447 = vadd.f32 %v1597, %v3446
        %3448 = vdwg.mxu0
        %3449 = vmatprep.subr.mxu0 0.0
        %3450 = vmatpush1.msra.mxu0 0.0
        %3451 = vmatprep.subr.mxu0 0.0
        %3452 = vmatpush1.msra.mxu0 0.0
        %3453 = vmatprep.subr.mxu0 0.0
        %3454 = vmatpush1.msra.mxu0 0.0
        %3455 = vmatprep.subr.mxu0 0.0
        %3456 = vmatpush1.msra.mxu0 0.0
        %3457 = vmatprep.subr.mxu0 0.0
        %3458 = vmatpush1.msra.mxu0 0.0
        %3459 = vmatprep.subr.mxu0 0.0
        %3460 = vmatpush1.msra.mxu0 0.0
        %3461 = vmatprep.subr.mxu0 %v1590
        %3462 = vmatpush1.msra.mxu0 %v1589
        %3463 = vmatprep.subr.mxu0 %v1534
        %3464 = vmatpush1.msra.mxu0 %v1533
        %3465 = vmatprep.subr.mxu0 %v1478
        %3466 = vmatpush1.msra.mxu0 %v1477
        %3467 = vmatprep.subr.mxu0 %v1422
        %3468 = vmatpush1.msra.mxu0 %v1421
        %3469 = vmatprep.subr.mxu0 %v1366
        %3470 = vmatpush1.msra.mxu0 %v1365
        %3471 = vmatprep.subr.mxu0 %v1310
        %3472 = vmatpush1.msra.mxu0 %v1309
        %3473 = vmatprep.subr.mxu0 %v1254
        %3474 = vmatpush1.msra.mxu0 %v1253
        %3475 = vmatprep.subr.mxu0 %v1198
        %3476 = vmatpush1.msra.mxu0 %v1197
        %3477 = vmatprep.subr.mxu0 %v1142
        %3478 = vmatpush1.msra.mxu0 %v1141
        %3479 = vmatprep.subr.mxu0 %v1086
        %3480 = vmatpush1.msra.mxu0 %v1085
        %3481 = vmatprep.subr.mxu0 0.0
        %3482 = vmatpush2.msra.mxu0 0.0
        %3483 = vmatprep.subr.mxu0 0.0
        %3484 = vmatpush2.msra.mxu0 0.0
        %3485 = vmatprep.subr.mxu0 0.0
        %3486 = vmatpush2.msra.mxu0 0.0
        %3487 = vmatprep.subr.mxu0 0.0
        %3488 = vmatpush2.msra.mxu0 0.0
        %3489 = vmatprep.subr.mxu0 0.0
        %3490 = vmatpush2.msra.mxu0 0.0
        %3491 = vmatprep.subr.mxu0 0.0
        %3492 = vmatpush2.msra.mxu0 0.0
        %3493 = vmatprep.subr.mxu0 0.0
        %3494 = vmatpush2.msra.mxu0 0.0
        %3495 = vmatprep.subr.mxu0 0.0
        %3496 = vmatpush2.msra.mxu0 0.0
        %3497 = vmatprep.subr.mxu0 0.0
        %3498 = vmatpush2.msra.mxu0 0.0
        %3499 = vmatprep.subr.mxu0 0.0
        %3500 = vmatpush2.msra.mxu0 0.0
        %3501 = vmatprep.subr.mxu0 0.0
        %3502 = vmatpush2.msra.mxu0 0.0
        %3503 = vmatprep.subr.mxu0 0.0
        %3504 = vmatpush2.msra.mxu0 0.0
        %3505 = vmatprep.subr.mxu0 0.0
        %3506 = vmatpush2.msra.mxu0 0.0
        %3507 = vmatprep.subr.mxu0 0.0
        %3508 = vmatpush2.msra.mxu0 0.0
        %3509 = vmatprep.subr.mxu0 0.0
        %3510 = vmatpush2.msra.mxu0 0.0
        %3511 = vmatprep.subr.mxu0 0.0
        %3512 = vmatpush2.msra.mxu0 0.0
        %3513 = vmatprep.mubr.f32.mxu0 0.0
        %3514 = vmatmul.mubr.f32.gmra.mxu0 %v1601
        %v3515 = vpop.f32.mrf.mxu0
        %v3516 = vadd.f32 %v1597, %v3515
        %v3517 = vpop.f32.mrf.mxu0
        %v3518 = vadd.f32 %v1597, %v3517
        %3519 = vdwg.mxu0
        %3520 = vmatprep.subr.mxu0 0.0
        %3521 = vmatpush1.msra.mxu0 0.0
        %3522 = vmatprep.subr.mxu0 0.0
        %3523 = vmatpush1.msra.mxu0 0.0
        %3524 = vmatprep.subr.mxu0 0.0
        %3525 = vmatpush1.msra.mxu0 0.0
        %3526 = vmatprep.subr.mxu0 0.0
        %3527 = vmatpush1.msra.mxu0 0.0
        %3528 = vmatprep.subr.mxu0 0.0
        %3529 = vmatpush1.msra.mxu0 0.0
        %3530 = vmatprep.subr.mxu0 0.0
        %3531 = vmatpush1.msra.mxu0 0.0
        %3532 = vmatprep.subr.mxu0 %v1592
        %3533 = vmatpush1.msra.mxu0 %v1591
        %3534 = vmatprep.subr.mxu0 %v1536
        %3535 = vmatpush1.msra.mxu0 %v1535
        %3536 = vmatprep.subr.mxu0 %v1480
        %3537 = vmatpush1.msra.mxu0 %v1479
        %3538 = vmatprep.subr.mxu0 %v1424
        %3539 = vmatpush1.msra.mxu0 %v1423
        %3540 = vmatprep.subr.mxu0 %v1368
        %3541 = vmatpush1.msra.mxu0 %v1367
        %3542 = vmatprep.subr.mxu0 %v1312
        %3543 = vmatpush1.msra.mxu0 %v1311
        %3544 = vmatprep.subr.mxu0 %v1256
        %3545 = vmatpush1.msra.mxu0 %v1255
        %3546 = vmatprep.subr.mxu0 %v1200
        %3547 = vmatpush1.msra.mxu0 %v1199
        %3548 = vmatprep.subr.mxu0 %v1144
        %3549 = vmatpush1.msra.mxu0 %v1143
        %3550 = vmatprep.subr.mxu0 %v1088
        %3551 = vmatpush1.msra.mxu0 %v1087
        %3552 = vmatprep.subr.mxu0 0.0
        %3553 = vmatpush2.msra.mxu0 0.0
        %3554 = vmatprep.subr.mxu0 0.0
        %3555 = vmatpush2.msra.mxu0 0.0
        %3556 = vmatprep.subr.mxu0 0.0
        %3557 = vmatpush2.msra.mxu0 0.0
        %3558 = vmatprep.subr.mxu0 0.0
        %3559 = vmatpush2.msra.mxu0 0.0
        %3560 = vmatprep.subr.mxu0 0.0
        %3561 = vmatpush2.msra.mxu0 0.0
        %3562 = vmatprep.subr.mxu0 0.0
        %3563 = vmatpush2.msra.mxu0 0.0
        %3564 = vmatprep.subr.mxu0 0.0
        %3565 = vmatpush2.msra.mxu0 0.0
        %3566 = vmatprep.subr.mxu0 0.0
        %3567 = vmatpush2.msra.mxu0 0.0
        %3568 = vmatprep.subr.mxu0 0.0
        %3569 = vmatpush2.msra.mxu0 0.0
        %3570 = vmatprep.subr.mxu0 0.0
        %3571 = vmatpush2.msra.mxu0 0.0
        %3572 = vmatprep.subr.mxu0 0.0
        %3573 = vmatpush2.msra.mxu0 0.0
        %3574 = vmatprep.subr.mxu0 0.0
        %3575 = vmatpush2.msra.mxu0 0.0
        %3576 = vmatprep.subr.mxu0 0.0
        %3577 = vmatpush2.msra.mxu0 0.0
        %3578 = vmatprep.subr.mxu0 0.0
        %3579 = vmatpush2.msra.mxu0 0.0
        %3580 = vmatprep.subr.mxu0 0.0
        %3581 = vmatpush2.msra.mxu0 0.0
        %3582 = vmatprep.subr.mxu0 0.0
        %3583 = vmatpush2.msra.mxu0 0.0
        %3584 = vmatprep.mubr.f32.mxu0 0.0
        %3585 = vmatmul.mubr.f32.gmra.mxu0 %v1601
        %v3586 = vpop.f32.mrf.mxu0
        %v3587 = vadd.f32 %v1597, %v3586
        %v3588 = vpop.f32.mrf.mxu0
        %v3589 = vadd.f32 %v1597, %v3588
        %3590 = vdwg.mxu0
        %v3591 = vmax.f32 %v1670, 0.0
        %v3592 = vmax.f32 %v1672, 0.0
        %v3593 = vmax.f32 %v1741, 0.0
        %v3594 = vmax.f32 %v1743, 0.0
        %v3595 = vmax.f32 %v1812, 0.0
        %v3596 = vmax.f32 %v1814, 0.0
        %v3597 = vmax.f32 %v1883, 0.0
        %v3598 = vmax.f32 %v1885, 0.0
        %v3599 = vmax.f32 %v1954, 0.0
        %v3600 = vmax.f32 %v1956, 0.0
        %v3601 = vmax.f32 %v2025, 0.0
        %v3602 = vmax.f32 %v2027, 0.0
        %v3603 = vmax.f32 %v2096, 0.0
        %v3604 = vmax.f32 %v2098, 0.0
        %v3605 = vmax.f32 %v2167, 0.0
        %v3606 = vmax.f32 %v2169, 0.0
        %v3607 = vmax.f32 %v2238, 0.0
        %v3608 = vmax.f32 %v2240, 0.0
        %v3609 = vmax.f32 %v2309, 0.0
        %v3610 = vmax.f32 %v2311, 0.0
        %v3611 = vmax.f32 %v2380, 0.0
        %v3612 = vmax.f32 %v2382, 0.0
        %v3613 = vmax.f32 %v2451, 0.0
        %v3614 = vmax.f32 %v2453, 0.0
        %v3615 = vmax.f32 %v2522, 0.0
        %v3616 = vmax.f32 %v2524, 0.0
        %v3617 = vmax.f32 %v2593, 0.0
        %v3618 = vmax.f32 %v2595, 0.0
        %v3619 = vmax.f32 %v2664, 0.0
        %v3620 = vmax.f32 %v2666, 0.0
        %v3621 = vmax.f32 %v2735, 0.0
        %v3622 = vmax.f32 %v2737, 0.0
        %v3623 = vmax.f32 %v2806, 0.0
        %v3624 = vmax.f32 %v2808, 0.0
        %v3625 = vmax.f32 %v2877, 0.0
        %v3626 = vmax.f32 %v2879, 0.0
        %v3627 = vmax.f32 %v2948, 0.0
        %v3628 = vmax.f32 %v2950, 0.0
        %v3629 = vmax.f32 %v3019, 0.0
        %v3630 = vmax.f32 %v3021, 0.0
        %v3631 = vmax.f32 %v3090, 0.0
        %v3632 = vmax.f32 %v3092, 0.0
        %v3633 = vmax.f32 %v3161, 0.0
        %v3634 = vmax.f32 %v3163, 0.0
        %v3635 = vmax.f32 %v3232, 0.0
        %v3636 = vmax.f32 %v3234, 0.0
        %v3637 = vmax.f32 %v3303, 0.0
        %v3638 = vmax.f32 %v3305, 0.0
        %v3639 = vmax.f32 %v3374, 0.0
        %v3640 = vmax.f32 %v3376, 0.0
        %v3641 = vmax.f32 %v3445, 0.0
        %v3642 = vmax.f32 %v3447, 0.0
        %v3643 = vmax.f32 %v3516, 0.0
        %v3644 = vmax.f32 %v3518, 0.0
        %v3645 = vmax.f32 %v3587, 0.0
        %v3646 = vmax.f32 %v3589, 0.0
        %v3647 = vpack.c.bf16 %v3591, %v3591
        %v3648 = vpack.c.bf16 %v3592, %v3592
        %v3649 = vpack.c.bf16 %v3593, %v3593
        %v3650 = vpack.c.bf16 %v3594, %v3594
        %v3651 = vpack.c.bf16 %v3595, %v3595
        %v3652 = vpack.c.bf16 %v3596, %v3596
        %v3653 = vpack.c.bf16 %v3597, %v3597
        %v3654 = vpack.c.bf16 %v3598, %v3598
        %v3655 = vpack.c.bf16 %v3599, %v3599
        %v3656 = vpack.c.bf16 %v3600, %v3600
        %v3657 = vpack.c.bf16 %v3601, %v3601
        %v3658 = vpack.c.bf16 %v3602, %v3602
        %v3659 = vpack.c.bf16 %v3603, %v3603
        %v3660 = vpack.c.bf16 %v3604, %v3604
        %v3661 = vpack.c.bf16 %v3605, %v3605
        %v3662 = vpack.c.bf16 %v3606, %v3606
        %v3663 = vpack.c.bf16 %v3607, %v3607
        %v3664 = vpack.c.bf16 %v3608, %v3608
        %v3665 = vpack.c.bf16 %v3609, %v3609
        %v3666 = vpack.c.bf16 %v3610, %v3610
        %v3667 = vpack.c.bf16 %v3611, %v3611
        %v3668 = vpack.c.bf16 %v3612, %v3612
        %v3669 = vpack.c.bf16 %v3613, %v3613
        %v3670 = vpack.c.bf16 %v3614, %v3614
        %v3671 = vpack.c.bf16 %v3615, %v3615
        %v3672 = vpack.c.bf16 %v3616, %v3616
        %v3673 = vpack.c.bf16 %v3617, %v3617
        %v3674 = vpack.c.bf16 %v3618, %v3618
        %v3675 = vpack.c.bf16 %v3619, %v3619
        %v3676 = vpack.c.bf16 %v3620, %v3620
        %v3677 = vpack.c.bf16 %v3621, %v3621
        %v3678 = vpack.c.bf16 %v3622, %v3622
        %v3679 = vpack.c.bf16 %v3623, %v3623
        %v3680 = vpack.c.bf16 %v3624, %v3624
        %v3681 = vpack.c.bf16 %v3625, %v3625
        %v3682 = vpack.c.bf16 %v3626, %v3626
        %v3683 = vpack.c.bf16 %v3627, %v3627
        %v3684 = vpack.c.bf16 %v3628, %v3628
        %v3685 = vpack.c.bf16 %v3629, %v3629
        %v3686 = vpack.c.bf16 %v3630, %v3630
        %v3687 = vpack.c.bf16 %v3631, %v3631
        %v3688 = vpack.c.bf16 %v3632, %v3632
        %v3689 = vpack.c.bf16 %v3633, %v3633
        %v3690 = vpack.c.bf16 %v3634, %v3634
        %v3691 = vpack.c.bf16 %v3635, %v3635
        %v3692 = vpack.c.bf16 %v3636, %v3636
        %v3693 = vpack.c.bf16 %v3637, %v3637
        %v3694 = vpack.c.bf16 %v3638, %v3638
        %v3695 = vpack.c.bf16 %v3639, %v3639
        %v3696 = vpack.c.bf16 %v3640, %v3640
        %v3697 = vpack.c.bf16 %v3641, %v3641
        %v3698 = vpack.c.bf16 %v3642, %v3642
        %v3699 = vpack.c.bf16 %v3643, %v3643
        %v3700 = vpack.c.bf16 %v3644, %v3644
        %v3701 = vpack.c.bf16 %v3645, %v3645
        %v3702 = vpack.c.bf16 %v3646, %v3646
        %v3759 = vunpack.c.l.b16 %v3647
        %v3760 = vunpack.c.l.b16 %v3648
        %v3761 = vunpack.c.l.b16 %v3649
        %v3762 = vunpack.c.l.b16 %v3650
        %v3763 = vunpack.c.l.b16 %v3651
        %v3764 = vunpack.c.l.b16 %v3652
        %v3765 = vunpack.c.l.b16 %v3653
        %v3766 = vunpack.c.l.b16 %v3654
        %v3767 = vunpack.c.l.b16 %v3655
        %v3768 = vunpack.c.l.b16 %v3656
        %v3769 = vunpack.c.l.b16 %v3657
        %v3770 = vunpack.c.l.b16 %v3658
        %v3771 = vunpack.c.l.b16 %v3659
        %v3772 = vunpack.c.l.b16 %v3660
        %v3773 = vunpack.c.l.b16 %v3661
        %v3774 = vunpack.c.l.b16 %v3662
        %v3775 = vunpack.c.l.b16 %v3663
        %v3776 = vunpack.c.l.b16 %v3664
        %v3777 = vunpack.c.l.b16 %v3665
        %v3778 = vunpack.c.l.b16 %v3666
        %v3779 = vunpack.c.l.b16 %v3667
        %v3780 = vunpack.c.l.b16 %v3668
        %v3781 = vunpack.c.l.b16 %v3669
        %v3782 = vunpack.c.l.b16 %v3670
        %v3783 = vunpack.c.l.b16 %v3671
        %v3784 = vunpack.c.l.b16 %v3672
        %v3785 = vunpack.c.l.b16 %v3673
        %v3786 = vunpack.c.l.b16 %v3674
        %v3787 = vunpack.c.l.b16 %v3675
        %v3788 = vunpack.c.l.b16 %v3676
        %v3789 = vunpack.c.l.b16 %v3677
        %v3790 = vunpack.c.l.b16 %v3678
        %v3791 = vunpack.c.l.b16 %v3679
        %v3792 = vunpack.c.l.b16 %v3680
        %v3793 = vunpack.c.l.b16 %v3681
        %v3794 = vunpack.c.l.b16 %v3682
        %v3795 = vunpack.c.l.b16 %v3683
        %v3796 = vunpack.c.l.b16 %v3684
        %v3797 = vunpack.c.l.b16 %v3685
        %v3798 = vunpack.c.l.b16 %v3686
        %v3799 = vunpack.c.l.b16 %v3687
        %v3800 = vunpack.c.l.b16 %v3688
        %v3801 = vunpack.c.l.b16 %v3689
        %v3802 = vunpack.c.l.b16 %v3690
        %v3803 = vunpack.c.l.b16 %v3691
        %v3804 = vunpack.c.l.b16 %v3692
        %v3805 = vunpack.c.l.b16 %v3693
        %v3806 = vunpack.c.l.b16 %v3694
        %v3807 = vunpack.c.l.b16 %v3695
        %v3808 = vunpack.c.l.b16 %v3696
        %v3809 = vunpack.c.l.b16 %v3697
        %v3810 = vunpack.c.l.b16 %v3698
        %v3811 = vunpack.c.l.b16 %v3699
        %v3812 = vunpack.c.l.b16 %v3700
        %v3813 = vunpack.c.l.b16 %v3701
        %v3814 = vunpack.c.l.b16 %v3702
        %v3815 = vpack.c.b16 %v3760, %v3759
        %v3816 = vpack.c.b16 %v3762, %v3761
        %v3817 = vpack.c.b16 %v3764, %v3763
        %v3818 = vpack.c.b16 %v3766, %v3765
        %v3819 = vpack.c.b16 %v3768, %v3767
        %v3820 = vpack.c.b16 %v3770, %v3769
        %v3821 = vpack.c.b16 %v3772, %v3771
        %v3822 = vpack.c.b16 %v3774, %v3773
        %v3823 = vpack.c.b16 %v3776, %v3775
        %v3824 = vpack.c.b16 %v3778, %v3777
        %v3825 = vpack.c.b16 %v3780, %v3779
        %v3826 = vpack.c.b16 %v3782, %v3781
        %v3827 = vpack.c.b16 %v3784, %v3783
        %v3828 = vpack.c.b16 %v3786, %v3785
        %v3829 = vpack.c.b16 %v3788, %v3787
        %v3830 = vpack.c.b16 %v3790, %v3789
        %v3831 = vpack.c.b16 %v3792, %v3791
        %v3832 = vpack.c.b16 %v3794, %v3793
        %v3833 = vpack.c.b16 %v3796, %v3795
        %v3834 = vpack.c.b16 %v3798, %v3797
        %v3835 = vpack.c.b16 %v3800, %v3799
        %v3836 = vpack.c.b16 %v3802, %v3801
        %v3837 = vpack.c.b16 %v3804, %v3803
        %v3838 = vpack.c.b16 %v3806, %v3805
        %v3839 = vpack.c.b16 %v3808, %v3807
        %v3840 = vpack.c.b16 %v3810, %v3809
        %v3841 = vpack.c.b16 %v3812, %v3811
        %v3842 = vpack.c.b16 %v3814, %v3813
        %3871 = vst [vmem:[%s749] sm:$0xff] %v3815
        %3872 = vst [vmem:[%s749 + $0x8] sm:$0xff] %v3816
        %3873 = vst [vmem:[%s749 + $0x10] sm:$0xff] %v3817
        %3874 = vst [vmem:[%s749 + $0x18] sm:$0xff] %v3818
        %3875 = vst [vmem:[%s749 + $0x20] sm:$0xff] %v3819
        %3876 = vst [vmem:[%s749 + $0x28] sm:$0xff] %v3820
        %3877 = vst [vmem:[%s749 + $0x30] sm:$0xff] %v3821
        %3878 = vst [vmem:[%s749 + $0x38] sm:$0xff] %v3822
        %3879 = vst [vmem:[%s749 + $0x40] sm:$0xff] %v3823
        %3880 = vst [vmem:[%s749 + $0x48] sm:$0xff] %v3824
        %3881 = vst [vmem:[%s749 + $0x50] sm:$0xff] %v3825
        %3882 = vst [vmem:[%s749 + $0x58] sm:$0xff] %v3826
        %3883 = vst [vmem:[%s749 + $0x60] sm:$0xff] %v3827
        %3884 = vst [vmem:[%s749 + $0x68] sm:$0xff] %v3828
        %3885 = vst [vmem:[%s749 + $0x70] sm:$0xff] %v3829
        %3886 = vst [vmem:[%s749 + $0x78] sm:$0xff] %v3830
        %3887 = vst [vmem:[%s749 + $0x80] sm:$0xff] %v3831
        %3888 = vst [vmem:[%s749 + $0x88] sm:$0xff] %v3832
        %3889 = vst [vmem:[%s749 + $0x90] sm:$0xff] %v3833
        %3890 = vst [vmem:[%s749 + $0x98] sm:$0xff] %v3834
        %3891 = vst [vmem:[%s749 + $0xa0] sm:$0xff] %v3835
        %3892 = vst [vmem:[%s749 + $0xa8] sm:$0xff] %v3836
        %3893 = vst [vmem:[%s749 + $0xb0] sm:$0xff] %v3837
        %3894 = vst [vmem:[%s749 + $0xb8] sm:$0xff] %v3838
        %3895 = vst [vmem:[%s749 + $0xc0] sm:$0xff] %v3839
        %3896 = vst [vmem:[%s749 + $0xc8] sm:$0xff] %v3840
        %3897 = vst [vmem:[%s749 + $0xd0] sm:$0xff] %v3841
        %3898 = vst [vmem:[%s749 + $0xd8] sm:$0xff] %v3842
        %s3899 = smul.u32 56, %s14
        %p3900 = scmp.lt.s32.totalorder %s3899, 111
        %s3901 = scalar_select %p3900, %s3899, 111
        %s3902 = smul.addr %s3901, 4
        %s3903 = scalar_lea.vmem %s3, %s3902
        // Predicated region
        $region56: #{convnet256_forward.4} parent=50 // pred_check
          %p3904 = pneg %p100
        $region57: #{convnet256_forward.4} parent=50 // pred_check_branch
          %3906 = sbr.rel (%p3904) target = $region59
        $region58: #{convnet256_forward.4} parent=50 // pred_region
          %s3907 = smul.u32 56, %s14
        $region59: #{convnet256_forward.4} parent=50 // pred_fallthru
          _
      $region51: #{convnet256_forward.4} parent=5 // pred_fallthru
        _
      %p3908 = scmp.le.s32.totalorder 2, %s9
      // Predicated region
      $region60: #{convnet256_forward.4} parent=5 // pred_check
        %p3909 = pneg %p3908
      $region61: #{convnet256_forward.4} parent=5 // pred_check_branch
        %3911 = sbr.rel (%p3909) target = $region63
      $region62: #{convnet256_forward.4} parent=5 // pred_region
        %s3912 = ssub.s32 %s9, 2
        // Predicated region
        $region64: #{convnet256_forward.4} parent=62 // pred_check
          %p3913 = pneg %p106
        $region65: #{convnet256_forward.4} parent=62 // pred_check_branch
          %3915 = sbr.rel (%p3913) target = $region67
        $region66: #{convnet256_forward.4} parent=62 // pred_region
          %s3916 = smul.u32 56, %s15
          %p3917 = scmp.lt.s32.totalorder %s3916, 111
          %s3918 = scalar_select %p3917, %s3916, 111
          %s3919 = smul.addr %s3918, 4
          %s3920 = scalar_lea.vmem %s3, %s3919
        $region67: #{convnet256_forward.4} parent=62 // pred_fallthru
          _
      $region63: #{convnet256_forward.4} parent=5 // pred_fallthru
        _
    $region6: #{convnet256_forward.4} parent=1 // loop_footer
      %s13 = sadd.s32 1, %s9
    $region7: #{convnet256_forward.4} parent=1 // loop_footer_branch
      %8 = sbr.rel target = $region3
    $region8: #{convnet256_forward.4} parent=1 // loop_exit
      _

// kernel: convnet256_forward.5
$region0: #{convnet256_forward.5}
  #allocation0 [shape = 'u32[]', space=smem, size = 0x4, offset = 0x4, fixed_abs, tag = 'smem constant byte address 0x4 - core index']
  #allocation1 [shape = 'u32[144,128]{1,0:T(1,128)}', space=vmem, size = 0x12000, scoped, tag = 'internal scratch']
  %s0 = inlined_call_operand.vmem [shape: bf16[16,160], index: 0, kind: input, shape index: {}]
  %s1 = inlined_call_operand.vmem [shape: bf16[160,1536], index: 1, kind: input, shape index: {}]
  %s2 = inlined_call_operand.vmem [shape: f32[16,1], index: 2, kind: input, shape index: {}]
  %s3 = inlined_call_operand.vmem [shape: bf16[16,1536], index: 3, kind: output, shape index: {}]
  %s4 = sld [smem:[#allocation0]]
  $region22: #{convnet256_forward.5} parent=0
    _
  %s6 = ssub.s32 1, %s4
  %s7 = scalar_select 0, %s6, %s4
  // Predicated region
  $region2: #{convnet256_forward.5} parent=0 // pred_check
    _
  $region3: #{convnet256_forward.5} parent=0 // pred_check_branch
    %9 = sbr.rel (0) target = $region5
  $region4: #{convnet256_forward.5} parent=0 // pred_region
    _
  $region5: #{convnet256_forward.5} parent=0 // pred_fallthru
    _
  // Predicated region
  $region6: #{convnet256_forward.5} parent=0 // pred_check
    _
  $region7: #{convnet256_forward.5} parent=0 // pred_check_branch
    %11 = sbr.rel (0) target = $region9
  $region8: #{convnet256_forward.5} parent=0 // pred_region
    _
  $region9: #{convnet256_forward.5} parent=0 // pred_fallthru
    _
  // Predicated region
  $region10: #{convnet256_forward.5} parent=0 // pred_check
    _
  $region11: #{convnet256_forward.5} parent=0 // pred_check_branch
    %13 = sbr.rel (0) target = $region13
  $region12: #{convnet256_forward.5} parent=0 // pred_region
    _
  $region13: #{convnet256_forward.5} parent=0 // pred_fallthru
    _
  %v14 = vld [vmem:[%s0] sm:$0xff]
  %v15 = vld [vmem:[%s0 + $0x8] sm:$0xff]
  %v16 = vunpack.c.l.bf16 %v14
  %v17 = vunpack.c.h.bf16 %v14
  %v18 = vunpack.c.l.bf16 %v15
  %v19 = vunpack.c.h.bf16 %v15
  %v20 = vld [vmem:[%s1] sm:$0xff]
  %v21 = vld [vmem:[%s1 + $0x8] sm:$0xff]
  %v22 = vld [vmem:[%s1 + $0x10] sm:$0xff]
  %v23 = vld [vmem:[%s1 + $0x18] sm:$0xff]
  %v24 = vld [vmem:[%s1 + $0x20] sm:$0xff]
  %v25 = vld [vmem:[%s1 + $0x28] sm:$0xff]
  %v26 = vld [vmem:[%s1 + $0x30] sm:$0xff]
  %v27 = vld [vmem:[%s1 + $0x38] sm:$0xff]
  %v28 = vld [vmem:[%s1 + $0x40] sm:$0xff]
  %v29 = vld [vmem:[%s1 + $0x48] sm:$0xff]
  %v30 = vld [vmem:[%s1 + $0x50] sm:$0xff]
  %v31 = vld [vmem:[%s1 + $0x58] sm:$0xff]
  %v32 = vld [vmem:[%s1 + $0x60] sm:$0xff]
  %v33 = vld [vmem:[%s1 + $0x68] sm:$0xff]
  %v34 = vld [vmem:[%s1 + $0x70] sm:$0xff]
  %v35 = vld [vmem:[%s1 + $0x78] sm:$0xff]
  %v36 = vld [vmem:[%s1 + $0x80] sm:$0xff]
  %v37 = vld [vmem:[%s1 + $0x88] sm:$0xff]
  %v38 = vld [vmem:[%s1 + $0x90] sm:$0xff]
  %v39 = vld [vmem:[%s1 + $0x98] sm:$0xff]
  %v40 = vld [vmem:[%s1 + $0xa0] sm:$0xff]
  %v41 = vld [vmem:[%s1 + $0xa8] sm:$0xff]
  %v42 = vld [vmem:[%s1 + $0xb0] sm:$0xff]
  %v43 = vld [vmem:[%s1 + $0xb8] sm:$0xff]
  %v44 = vld [vmem:[%s1 + $0xc0] sm:$0xff]
  %v45 = vld [vmem:[%s1 + $0xc8] sm:$0xff]
  %v46 = vld [vmem:[%s1 + $0xd0] sm:$0xff]
  %v47 = vld [vmem:[%s1 + $0xd8] sm:$0xff]
  %v48 = vld [vmem:[%s1 + $0xe0] sm:$0xff]
  %v49 = vld [vmem:[%s1 + $0xe8] sm:$0xff]
  %v50 = vld [vmem:[%s1 + $0xf0] sm:$0xff]
  %v51 = vld [vmem:[%s1 + $0xf8] sm:$0xff]
  %v52 = vld [vmem:[%s1 + $0x100] sm:$0xff]
  %v53 = vld [vmem:[%s1 + $0x108] sm:$0xff]
  %v54 = vld [vmem:[%s1 + $0x110] sm:$0xff]
  %v55 = vld [vmem:[%s1 + $0x118] sm:$0xff]
  %v56 = vld [vmem:[%s1 + $0x120] sm:$0xff]
  %v57 = vld [vmem:[%s1 + $0x128] sm:$0xff]
  %v58 = vld [vmem:[%s1 + $0x130] sm:$0xff]
  %v59 = vld [vmem:[%s1 + $0x138] sm:$0xff]
  %v60 = vld [vmem:[%s1 + $0x140] sm:$0xff]
  %v61 = vld [vmem:[%s1 + $0x148] sm:$0xff]
  %v62 = vld [vmem:[%s1 + $0x150] sm:$0xff]
  %v63 = vld [vmem:[%s1 + $0x158] sm:$0xff]
  %v64 = vld [vmem:[%s1 + $0x160] sm:$0xff]
  %v65 = vld [vmem:[%s1 + $0x168] sm:$0xff]
  %v66 = vld [vmem:[%s1 + $0x170] sm:$0xff]
  %v67 = vld [vmem:[%s1 + $0x178] sm:$0xff]
  %v68 = vld [vmem:[%s1 + $0x180] sm:$0xff]
  %v69 = vld [vmem:[%s1 + $0x188] sm:$0xff]
  %v70 = vld [vmem:[%s1 + $0x190] sm:$0xff]
  %v71 = vld [vmem:[%s1 + $0x198] sm:$0xff]
  %v72 = vld [vmem:[%s1 + $0x1a0] sm:$0xff]
  %v73 = vld [vmem:[%s1 + $0x1a8] sm:$0xff]
  %v74 = vld [vmem:[%s1 + $0x1b0] sm:$0xff]
  %v75 = vld [vmem:[%s1 + $0x1b8] sm:$0xff]
  %v76 = vld [vmem:[%s1 + $0x1c0] sm:$0xff]
  %v77 = vld [vmem:[%s1 + $0x1c8] sm:$0xff]
  %v78 = vld [vmem:[%s1 + $0x1d0] sm:$0xff]
  %v79 = vld [vmem:[%s1 + $0x1d8] sm:$0xff]
  %v80 = vld [vmem:[%s1 + $0x1e0] sm:$0xff]
  %v81 = vld [vmem:[%s1 + $0x1e8] sm:$0xff]
  %v82 = vld [vmem:[%s1 + $0x1f0] sm:$0xff]
  %v83 = vld [vmem:[%s1 + $0x1f8] sm:$0xff]
  %v84 = vld [vmem:[%s1 + $0x200] sm:$0xff]
  %v85 = vld [vmem:[%s1 + $0x208] sm:$0xff]
  %v86 = vld [vmem:[%s1 + $0x210] sm:$0xff]
  %v87 = vld [vmem:[%s1 + $0x218] sm:$0xff]
  %v88 = vld [vmem:[%s1 + $0x220] sm:$0xff]
  %v89 = vld [vmem:[%s1 + $0x228] sm:$0xff]
  %v90 = vld [vmem:[%s1 + $0x230] sm:$0xff]
  %v91 = vld [vmem:[%s1 + $0x238] sm:$0xff]
  %v92 = vld [vmem:[%s1 + $0x240] sm:$0xff]
  %v93 = vld [vmem:[%s1 + $0x248] sm:$0xff]
  %v94 = vld [vmem:[%s1 + $0x250] sm:$0xff]
  %v95 = vld [vmem:[%s1 + $0x258] sm:$0xff]
  %v96 = vld [vmem:[%s1 + $0x260] sm:$0xff]
  %v97 = vld [vmem:[%s1 + $0x268] sm:$0xff]
  %v98 = vld [vmem:[%s1 + $0x270] sm:$0xff]
  %v99 = vld [vmem:[%s1 + $0x278] sm:$0xff]
  %v100 = vld [vmem:[%s1 + $0x280] sm:$0xff]
  %v101 = vld [vmem:[%s1 + $0x288] sm:$0xff]
  %v102 = vld [vmem:[%s1 + $0x290] sm:$0xff]
  %v103 = vld [vmem:[%s1 + $0x298] sm:$0xff]
  %v104 = vld [vmem:[%s1 + $0x2a0] sm:$0xff]
  %v105 = vld [vmem:[%s1 + $0x2a8] sm:$0xff]
  %v106 = vld [vmem:[%s1 + $0x2b0] sm:$0xff]
  %v107 = vld [vmem:[%s1 + $0x2b8] sm:$0xff]
  %v108 = vld [vmem:[%s1 + $0x2c0] sm:$0xff]
  %v109 = vld [vmem:[%s1 + $0x2c8] sm:$0xff]
  %v110 = vld [vmem:[%s1 + $0x2d0] sm:$0xff]
  %v111 = vld [vmem:[%s1 + $0x2d8] sm:$0xff]
  %v112 = vld [vmem:[%s1 + $0x2e0] sm:$0xff]
  %v113 = vld [vmem:[%s1 + $0x2e8] sm:$0xff]
  %v114 = vld [vmem:[%s1 + $0x2f0] sm:$0xff]
  %v115 = vld [vmem:[%s1 + $0x2f8] sm:$0xff]
  %v116 = vld [vmem:[%s1 + $0x300] sm:$0xff]
  %v117 = vld [vmem:[%s1 + $0x308] sm:$0xff]
  %v118 = vld [vmem:[%s1 + $0x310] sm:$0xff]
  %v119 = vld [vmem:[%s1 + $0x318] sm:$0xff]
  %v120 = vld [vmem:[%s1 + $0x320] sm:$0xff]
  %v121 = vld [vmem:[%s1 + $0x328] sm:$0xff]
  %v122 = vld [vmem:[%s1 + $0x330] sm:$0xff]
  %v123 = vld [vmem:[%s1 + $0x338] sm:$0xff]
  %v124 = vld [vmem:[%s1 + $0x340] sm:$0xff]
  %v125 = vld [vmem:[%s1 + $0x348] sm:$0xff]
  %v126 = vld [vmem:[%s1 + $0x350] sm:$0xff]
  %v127 = vld [vmem:[%s1 + $0x358] sm:$0xff]
  %v128 = vld [vmem:[%s1 + $0x360] sm:$0xff]
  %v129 = vld [vmem:[%s1 + $0x368] sm:$0xff]
  %v130 = vld [vmem:[%s1 + $0x370] sm:$0xff]
  %v131 = vld [vmem:[%s1 + $0x378] sm:$0xff]
  %v132 = vld [vmem:[%s1 + $0x380] sm:$0xff]
  %v133 = vld [vmem:[%s1 + $0x388] sm:$0xff]
  %v134 = vld [vmem:[%s1 + $0x390] sm:$0xff]
  %v135 = vld [vmem:[%s1 + $0x398] sm:$0xff]
  %v136 = vld [vmem:[%s1 + $0x3a0] sm:$0xff]
  %v137 = vld [vmem:[%s1 + $0x3a8] sm:$0xff]
  %v138 = vld [vmem:[%s1 + $0x3b0] sm:$0xff]
  %v139 = vld [vmem:[%s1 + $0x3b8] sm:$0xff]
  %v140 = vunpack.c.l.bf16 %v20
  %v141 = vunpack.c.h.bf16 %v20
  %v142 = vunpack.c.l.bf16 %v21
  %v143 = vunpack.c.h.bf16 %v21
  %v144 = vunpack.c.l.bf16 %v22
  %v145 = vunpack.c.h.bf16 %v22
  %v146 = vunpack.c.l.bf16 %v23
  %v147 = vunpack.c.h.bf16 %v23
  %v148 = vunpack.c.l.bf16 %v24
  %v149 = vunpack.c.h.bf16 %v24
  %v150 = vunpack.c.l.bf16 %v25
  %v151 = vunpack.c.h.bf16 %v25
  %v152 = vunpack.c.l.bf16 %v26
  %v153 = vunpack.c.h.bf16 %v26
  %v154 = vunpack.c.l.bf16 %v27
  %v155 = vunpack.c.h.bf16 %v27
  %v156 = vunpack.c.l.bf16 %v28
  %v157 = vunpack.c.h.bf16 %v28
  %v158 = vunpack.c.l.bf16 %v29
  %v159 = vunpack.c.h.bf16 %v29
  %v160 = vunpack.c.l.bf16 %v30
  %v161 = vunpack.c.h.bf16 %v30
  %v162 = vunpack.c.l.bf16 %v31
  %v163 = vunpack.c.h.bf16 %v31
  %v164 = vunpack.c.l.bf16 %v32
  %v165 = vunpack.c.h.bf16 %v32
  %v166 = vunpack.c.l.bf16 %v33
  %v167 = vunpack.c.h.bf16 %v33
  %v168 = vunpack.c.l.bf16 %v34
  %v169 = vunpack.c.h.bf16 %v34
  %v170 = vunpack.c.l.bf16 %v35
  %v171 = vunpack.c.h.bf16 %v35
  %v172 = vunpack.c.l.bf16 %v36
  %v173 = vunpack.c.h.bf16 %v36
  %v174 = vunpack.c.l.bf16 %v37
  %v175 = vunpack.c.h.bf16 %v37
  %v176 = vunpack.c.l.bf16 %v38
  %v177 = vunpack.c.h.bf16 %v38
  %v178 = vunpack.c.l.bf16 %v39
  %v179 = vunpack.c.h.bf16 %v39
  %v180 = vunpack.c.l.bf16 %v40
  %v181 = vunpack.c.h.bf16 %v40
  %v182 = vunpack.c.l.bf16 %v41
  %v183 = vunpack.c.h.bf16 %v41
  %v184 = vunpack.c.l.bf16 %v42
  %v185 = vunpack.c.h.bf16 %v42
  %v186 = vunpack.c.l.bf16 %v43
  %v187 = vunpack.c.h.bf16 %v43
  %v188 = vunpack.c.l.bf16 %v44
  %v189 = vunpack.c.h.bf16 %v44
  %v190 = vunpack.c.l.bf16 %v45
  %v191 = vunpack.c.h.bf16 %v45
  %v192 = vunpack.c.l.bf16 %v46
  %v193 = vunpack.c.h.bf16 %v46
  %v194 = vunpack.c.l.bf16 %v47
  %v195 = vunpack.c.h.bf16 %v47
  %v196 = vunpack.c.l.bf16 %v48
  %v197 = vunpack.c.h.bf16 %v48
  %v198 = vunpack.c.l.bf16 %v49
  %v199 = vunpack.c.h.bf16 %v49
  %v200 = vunpack.c.l.bf16 %v50
  %v201 = vunpack.c.h.bf16 %v50
  %v202 = vunpack.c.l.bf16 %v51
  %v203 = vunpack.c.h.bf16 %v51
  %v204 = vunpack.c.l.bf16 %v52
  %v205 = vunpack.c.h.bf16 %v52
  %v206 = vunpack.c.l.bf16 %v53
  %v207 = vunpack.c.h.bf16 %v53
  %v208 = vunpack.c.l.bf16 %v54
  %v209 = vunpack.c.h.bf16 %v54
  %v210 = vunpack.c.l.bf16 %v55
  %v211 = vunpack.c.h.bf16 %v55
  %v212 = vunpack.c.l.bf16 %v56
  %v213 = vunpack.c.h.bf16 %v56
  %v214 = vunpack.c.l.bf16 %v57
  %v215 = vunpack.c.h.bf16 %v57
  %v216 = vunpack.c.l.bf16 %v58
  %v217 = vunpack.c.h.bf16 %v58
  %v218 = vunpack.c.l.bf16 %v59
  %v219 = vunpack.c.h.bf16 %v59
  %v220 = vunpack.c.l.bf16 %v60
  %v221 = vunpack.c.h.bf16 %v60
  %v222 = vunpack.c.l.bf16 %v61
  %v223 = vunpack.c.h.bf16 %v61
  %v224 = vunpack.c.l.bf16 %v62
  %v225 = vunpack.c.h.bf16 %v62
  %v226 = vunpack.c.l.bf16 %v63
  %v227 = vunpack.c.h.bf16 %v63
  %v228 = vunpack.c.l.bf16 %v64
  %v229 = vunpack.c.h.bf16 %v64
  %v230 = vunpack.c.l.bf16 %v65
  %v231 = vunpack.c.h.bf16 %v65
  %v232 = vunpack.c.l.bf16 %v66
  %v233 = vunpack.c.h.bf16 %v66
  %v234 = vunpack.c.l.bf16 %v67
  %v235 = vunpack.c.h.bf16 %v67
  %v236 = vunpack.c.l.bf16 %v68
  %v237 = vunpack.c.h.bf16 %v68
  %v238 = vunpack.c.l.bf16 %v69
  %v239 = vunpack.c.h.bf16 %v69
  %v240 = vunpack.c.l.bf16 %v70
  %v241 = vunpack.c.h.bf16 %v70
  %v242 = vunpack.c.l.bf16 %v71
  %v243 = vunpack.c.h.bf16 %v71
  %v244 = vunpack.c.l.bf16 %v72
  %v245 = vunpack.c.h.bf16 %v72
  %v246 = vunpack.c.l.bf16 %v73
  %v247 = vunpack.c.h.bf16 %v73
  %v248 = vunpack.c.l.bf16 %v74
  %v249 = vunpack.c.h.bf16 %v74
  %v250 = vunpack.c.l.bf16 %v75
  %v251 = vunpack.c.h.bf16 %v75
  %v252 = vunpack.c.l.bf16 %v76
  %v253 = vunpack.c.h.bf16 %v76
  %v254 = vunpack.c.l.bf16 %v77
  %v255 = vunpack.c.h.bf16 %v77
  %v256 = vunpack.c.l.bf16 %v78
  %v257 = vunpack.c.h.bf16 %v78
  %v258 = vunpack.c.l.bf16 %v79
  %v259 = vunpack.c.h.bf16 %v79
  %v260 = vunpack.c.l.bf16 %v80
  %v261 = vunpack.c.h.bf16 %v80
  %v262 = vunpack.c.l.bf16 %v81
  %v263 = vunpack.c.h.bf16 %v81
  %v264 = vunpack.c.l.bf16 %v82
  %v265 = vunpack.c.h.bf16 %v82
  %v266 = vunpack.c.l.bf16 %v83
  %v267 = vunpack.c.h.bf16 %v83
  %v268 = vunpack.c.l.bf16 %v84
  %v269 = vunpack.c.h.bf16 %v84
  %v270 = vunpack.c.l.bf16 %v85
  %v271 = vunpack.c.h.bf16 %v85
  %v272 = vunpack.c.l.bf16 %v86
  %v273 = vunpack.c.h.bf16 %v86
  %v274 = vunpack.c.l.bf16 %v87
  %v275 = vunpack.c.h.bf16 %v87
  %v276 = vunpack.c.l.bf16 %v88
  %v277 = vunpack.c.h.bf16 %v88
  %v278 = vunpack.c.l.bf16 %v89
  %v279 = vunpack.c.h.bf16 %v89
  %v280 = vunpack.c.l.bf16 %v90
  %v281 = vunpack.c.h.bf16 %v90
  %v282 = vunpack.c.l.bf16 %v91
  %v283 = vunpack.c.h.bf16 %v91
  %v284 = vunpack.c.l.bf16 %v92
  %v285 = vunpack.c.h.bf16 %v92
  %v286 = vunpack.c.l.bf16 %v93
  %v287 = vunpack.c.h.bf16 %v93
  %v288 = vunpack.c.l.bf16 %v94
  %v289 = vunpack.c.h.bf16 %v94
  %v290 = vunpack.c.l.bf16 %v95
  %v291 = vunpack.c.h.bf16 %v95
  %v292 = vunpack.c.l.bf16 %v96
  %v293 = vunpack.c.h.bf16 %v96
  %v294 = vunpack.c.l.bf16 %v97
  %v295 = vunpack.c.h.bf16 %v97
  %v296 = vunpack.c.l.bf16 %v98
  %v297 = vunpack.c.h.bf16 %v98
  %v298 = vunpack.c.l.bf16 %v99
  %v299 = vunpack.c.h.bf16 %v99
  %v300 = vunpack.c.l.bf16 %v100
  %v301 = vunpack.c.h.bf16 %v100
  %v302 = vunpack.c.l.bf16 %v101
  %v303 = vunpack.c.h.bf16 %v101
  %v304 = vunpack.c.l.bf16 %v102
  %v305 = vunpack.c.h.bf16 %v102
  %v306 = vunpack.c.l.bf16 %v103
  %v307 = vunpack.c.h.bf16 %v103
  %v308 = vunpack.c.l.bf16 %v104
  %v309 = vunpack.c.h.bf16 %v104
  %v310 = vunpack.c.l.bf16 %v105
  %v311 = vunpack.c.h.bf16 %v105
  %v312 = vunpack.c.l.bf16 %v106
  %v313 = vunpack.c.h.bf16 %v106
  %v314 = vunpack.c.l.bf16 %v107
  %v315 = vunpack.c.h.bf16 %v107
  %v316 = vunpack.c.l.bf16 %v108
  %v317 = vunpack.c.h.bf16 %v108
  %v318 = vunpack.c.l.bf16 %v109
  %v319 = vunpack.c.h.bf16 %v109
  %v320 = vunpack.c.l.bf16 %v110
  %v321 = vunpack.c.h.bf16 %v110
  %v322 = vunpack.c.l.bf16 %v111
  %v323 = vunpack.c.h.bf16 %v111
  %v324 = vunpack.c.l.bf16 %v112
  %v325 = vunpack.c.h.bf16 %v112
  %v326 = vunpack.c.l.bf16 %v113
  %v327 = vunpack.c.h.bf16 %v113
  %v328 = vunpack.c.l.bf16 %v114
  %v329 = vunpack.c.h.bf16 %v114
  %v330 = vunpack.c.l.bf16 %v115
  %v331 = vunpack.c.h.bf16 %v115
  %v332 = vunpack.c.l.bf16 %v116
  %v333 = vunpack.c.h.bf16 %v116
  %v334 = vunpack.c.l.bf16 %v117
  %v335 = vunpack.c.h.bf16 %v117
  %v336 = vunpack.c.l.bf16 %v118
  %v337 = vunpack.c.h.bf16 %v118
  %v338 = vunpack.c.l.bf16 %v119
  %v339 = vunpack.c.h.bf16 %v119
  %v340 = vunpack.c.l.bf16 %v120
  %v341 = vunpack.c.h.bf16 %v120
  %v342 = vunpack.c.l.bf16 %v121
  %v343 = vunpack.c.h.bf16 %v121
  %v344 = vunpack.c.l.bf16 %v122
  %v345 = vunpack.c.h.bf16 %v122
  %v346 = vunpack.c.l.bf16 %v123
  %v347 = vunpack.c.h.bf16 %v123
  %v348 = vunpack.c.l.bf16 %v124
  %v349 = vunpack.c.h.bf16 %v124
  %v350 = vunpack.c.l.bf16 %v125
  %v351 = vunpack.c.h.bf16 %v125
  %v352 = vunpack.c.l.bf16 %v126
  %v353 = vunpack.c.h.bf16 %v126
  %v354 = vunpack.c.l.bf16 %v127
  %v355 = vunpack.c.h.bf16 %v127
  %v356 = vunpack.c.l.bf16 %v128
  %v357 = vunpack.c.h.bf16 %v128
  %v358 = vunpack.c.l.bf16 %v129
  %v359 = vunpack.c.h.bf16 %v129
  %v360 = vunpack.c.l.bf16 %v130
  %v361 = vunpack.c.h.bf16 %v130
  %v362 = vunpack.c.l.bf16 %v131
  %v363 = vunpack.c.h.bf16 %v131
  %v364 = vunpack.c.l.bf16 %v132
  %v365 = vunpack.c.h.bf16 %v132
  %v366 = vunpack.c.l.bf16 %v133
  %v367 = vunpack.c.h.bf16 %v133
  %v368 = vunpack.c.l.bf16 %v134
  %v369 = vunpack.c.h.bf16 %v134
  %v370 = vunpack.c.l.bf16 %v135
  %v371 = vunpack.c.h.bf16 %v135
  %v372 = vunpack.c.l.bf16 %v136
  %v373 = vunpack.c.h.bf16 %v136
  %v374 = vunpack.c.l.bf16 %v137
  %v375 = vunpack.c.h.bf16 %v137
  %v376 = vunpack.c.l.bf16 %v138
  %v377 = vunpack.c.h.bf16 %v138
  %v378 = vunpack.c.l.bf16 %v139
  %v379 = vunpack.c.h.bf16 %v139
  %v380 = vld [vmem:[%s2] sm:$0xff]
  %v381 = vld [vmem:[%s2 + $0x8] sm:$0xff]
  %383 = vset.pattern.permute.xlu0 0
  %384 = vperm.xlu0 %383, %v380
  %v385 = vpop.permute.xlu0 %384
  %388 = vset.pattern.permute.xlu0 0
  %389 = vperm.xlu0 %388, %v381
  %v390 = vpop.permute.xlu0 %389
  %vm392 = vcmask 261120
  %v394 = vsel %vm392, %v17, 0
  %v397 = vsel %vm392, %v19, 0
  %399 = vmatprep.subr.mxu0 %v321
  %400 = vmatpush1.msra.mxu0 %v320
  %401 = vmatprep.subr.mxu0 %v309
  %402 = vmatpush1.msra.mxu0 %v308
  %403 = vmatprep.subr.mxu0 %v297
  %404 = vmatpush1.msra.mxu0 %v296
  %405 = vmatprep.subr.mxu0 %v285
  %406 = vmatpush1.msra.mxu0 %v284
  %407 = vmatprep.subr.mxu0 %v273
  %408 = vmatpush1.msra.mxu0 %v272
  %409 = vmatprep.subr.mxu0 %v261
  %410 = vmatpush1.msra.mxu0 %v260
  %411 = vmatprep.subr.mxu0 %v249
  %412 = vmatpush1.msra.mxu0 %v248
  %413 = vmatprep.subr.mxu0 %v237
  %414 = vmatpush1.msra.mxu0 %v236
  %415 = vmatprep.subr.mxu0 %v225
  %416 = vmatpush1.msra.mxu0 %v224
  %417 = vmatprep.subr.mxu0 %v213
  %418 = vmatpush1.msra.mxu0 %v212
  %419 = vmatprep.subr.mxu0 %v201
  %420 = vmatpush1.msra.mxu0 %v200
  %421 = vmatprep.subr.mxu0 %v189
  %422 = vmatpush1.msra.mxu0 %v188
  %423 = vmatprep.subr.mxu0 %v177
  %424 = vmatpush1.msra.mxu0 %v176
  %425 = vmatprep.subr.mxu0 %v165
  %426 = vmatpush1.msra.mxu0 %v164
  %427 = vmatprep.subr.mxu0 %v153
  %428 = vmatpush1.msra.mxu0 %v152
  %429 = vmatprep.subr.mxu0 %v141
  %430 = vmatpush1.msra.mxu0 %v140
  %431 = vmatprep.subr.mxu0 0.0
  %432 = vmatpush2.msra.mxu0 0.0
  %433 = vmatprep.subr.mxu0 0.0
  %434 = vmatpush2.msra.mxu0 0.0
  %435 = vmatprep.subr.mxu0 0.0
  %436 = vmatpush2.msra.mxu0 0.0
  %437 = vmatprep.subr.mxu0 0.0
  %438 = vmatpush2.msra.mxu0 0.0
  %439 = vmatprep.subr.mxu0 0.0
  %440 = vmatpush2.msra.mxu0 0.0
  %441 = vmatprep.subr.mxu0 0.0
  %442 = vmatpush2.msra.mxu0 0.0
  %443 = vmatprep.subr.mxu0 0.0
  %444 = vmatpush2.msra.mxu0 0.0
  %445 = vmatprep.subr.mxu0 0.0
  %446 = vmatpush2.msra.mxu0 0.0
  %447 = vmatprep.subr.mxu0 0.0
  %448 = vmatpush2.msra.mxu0 0.0
  %449 = vmatprep.subr.mxu0 0.0
  %450 = vmatpush2.msra.mxu0 0.0
  %451 = vmatprep.subr.mxu0 0.0
  %452 = vmatpush2.msra.mxu0 0.0
  %453 = vmatprep.subr.mxu0 0.0
  %454 = vmatpush2.msra.mxu0 0.0
  %455 = vmatprep.subr.mxu0 %v369
  %456 = vmatpush2.msra.mxu0 %v368
  %457 = vmatprep.subr.mxu0 %v357
  %458 = vmatpush2.msra.mxu0 %v356
  %459 = vmatprep.subr.mxu0 %v345
  %460 = vmatpush2.msra.mxu0 %v344
  %461 = vmatprep.subr.mxu0 %v333
  %462 = vmatpush2.msra.mxu0 %v332
  %463 = vmatprep.mubr.f32.mxu0 %v394
  %464 = vmatmul.mubr.f32.gmra.mxu0 %v16
  %v465 = vpop.f32.mrf.mxu0
  %v466 = vadd.f32 %v385, %v465
  %v467 = vpop.f32.mrf.mxu0
  %v468 = vadd.f32 %v385, %v467
  %469 = vmatprep.mubr.f32.mxu0 %v397
  %470 = vmatmul.mubr.f32.gmra.mxu0 %v18
  %v471 = vpop.f32.mrf.mxu0
  %v472 = vadd.f32 %v390, %v471
  %v473 = vpop.f32.mrf.mxu0
  %v474 = vadd.f32 %v390, %v473
  %475 = vdwg.mxu0
  %476 = vmatprep.subr.mxu0 %v323
  %477 = vmatpush1.msra.mxu0 %v322
  %478 = vmatprep.subr.mxu0 %v311
  %479 = vmatpush1.msra.mxu0 %v310
  %480 = vmatprep.subr.mxu0 %v299
  %481 = vmatpush1.msra.mxu0 %v298
  %482 = vmatprep.subr.mxu0 %v287
  %483 = vmatpush1.msra.mxu0 %v286
  %484 = vmatprep.subr.mxu0 %v275
  %485 = vmatpush1.msra.mxu0 %v274
  %486 = vmatprep.subr.mxu0 %v263
  %487 = vmatpush1.msra.mxu0 %v262
  %488 = vmatprep.subr.mxu0 %v251
  %489 = vmatpush1.msra.mxu0 %v250
  %490 = vmatprep.subr.mxu0 %v239
  %491 = vmatpush1.msra.mxu0 %v238
  %492 = vmatprep.subr.mxu0 %v227
  %493 = vmatpush1.msra.mxu0 %v226
  %494 = vmatprep.subr.mxu0 %v215
  %495 = vmatpush1.msra.mxu0 %v214
  %496 = vmatprep.subr.mxu0 %v203
  %497 = vmatpush1.msra.mxu0 %v202
  %498 = vmatprep.subr.mxu0 %v191
  %499 = vmatpush1.msra.mxu0 %v190
  %500 = vmatprep.subr.mxu0 %v179
  %501 = vmatpush1.msra.mxu0 %v178
  %502 = vmatprep.subr.mxu0 %v167
  %503 = vmatpush1.msra.mxu0 %v166
  %504 = vmatprep.subr.mxu0 %v155
  %505 = vmatpush1.msra.mxu0 %v154
  %506 = vmatprep.subr.mxu0 %v143
  %507 = vmatpush1.msra.mxu0 %v142
  %508 = vmatprep.subr.mxu0 0.0
  %509 = vmatpush2.msra.mxu0 0.0
  %510 = vmatprep.subr.mxu0 0.0
  %511 = vmatpush2.msra.mxu0 0.0
  %512 = vmatprep.subr.mxu0 0.0
  %513 = vmatpush2.msra.mxu0 0.0
  %514 = vmatprep.subr.mxu0 0.0
  %515 = vmatpush2.msra.mxu0 0.0
  %516 = vmatprep.subr.mxu0 0.0
  %517 = vmatpush2.msra.mxu0 0.0
  %518 = vmatprep.subr.mxu0 0.0
  %519 = vmatpush2.msra.mxu0 0.0
  %520 = vmatprep.subr.mxu0 0.0
  %521 = vmatpush2.msra.mxu0 0.0
  %522 = vmatprep.subr.mxu0 0.0
  %523 = vmatpush2.msra.mxu0 0.0
  %524 = vmatprep.subr.mxu0 0.0
  %525 = vmatpush2.msra.mxu0 0.0
  %526 = vmatprep.subr.mxu0 0.0
  %527 = vmatpush2.msra.mxu0 0.0
  %528 = vmatprep.subr.mxu0 0.0
  %529 = vmatpush2.msra.mxu0 0.0
  %530 = vmatprep.subr.mxu0 0.0
  %531 = vmatpush2.msra.mxu0 0.0
  %532 = vmatprep.subr.mxu0 %v371
  %533 = vmatpush2.msra.mxu0 %v370
  %534 = vmatprep.subr.mxu0 %v359
  %535 = vmatpush2.msra.mxu0 %v358
  %536 = vmatprep.subr.mxu0 %v347
  %537 = vmatpush2.msra.mxu0 %v346
  %538 = vmatprep.subr.mxu0 %v335
  %539 = vmatpush2.msra.mxu0 %v334
  %540 = vmatprep.mubr.f32.mxu0 %v394
  %541 = vmatmul.mubr.f32.gmra.mxu0 %v16
  %v542 = vpop.f32.mrf.mxu0
  %v543 = vadd.f32 %v385, %v542
  %v544 = vpop.f32.mrf.mxu0
  %v545 = vadd.f32 %v385, %v544
  %546 = vmatprep.mubr.f32.mxu0 %v397
  %547 = vmatmul.mubr.f32.gmra.mxu0 %v18
  %v548 = vpop.f32.mrf.mxu0
  %v549 = vadd.f32 %v390, %v548
  %v550 = vpop.f32.mrf.mxu0
  %v551 = vadd.f32 %v390, %v550
  %552 = vdwg.mxu0
  %553 = vmatprep.subr.mxu0 %v325
  %554 = vmatpush1.msra.mxu0 %v324
  %555 = vmatprep.subr.mxu0 %v313
  %556 = vmatpush1.msra.mxu0 %v312
  %557 = vmatprep.subr.mxu0 %v301
  %558 = vmatpush1.msra.mxu0 %v300
  %559 = vmatprep.subr.mxu0 %v289
  %560 = vmatpush1.msra.mxu0 %v288
  %561 = vmatprep.subr.mxu0 %v277
  %562 = vmatpush1.msra.mxu0 %v276
  %563 = vmatprep.subr.mxu0 %v265
  %564 = vmatpush1.msra.mxu0 %v264
  %565 = vmatprep.subr.mxu0 %v253
  %566 = vmatpush1.msra.mxu0 %v252
  %567 = vmatprep.subr.mxu0 %v241
  %568 = vmatpush1.msra.mxu0 %v240
  %569 = vmatprep.subr.mxu0 %v229
  %570 = vmatpush1.msra.mxu0 %v228
  %571 = vmatprep.subr.mxu0 %v217
  %572 = vmatpush1.msra.mxu0 %v216
  %573 = vmatprep.subr.mxu0 %v205
  %574 = vmatpush1.msra.mxu0 %v204
  %575 = vmatprep.subr.mxu0 %v193
  %576 = vmatpush1.msra.mxu0 %v192
  %577 = vmatprep.subr.mxu0 %v181
  %578 = vmatpush1.msra.mxu0 %v180
  %579 = vmatprep.subr.mxu0 %v169
  %580 = vmatpush1.msra.mxu0 %v168
  %581 = vmatprep.subr.mxu0 %v157
  %582 = vmatpush1.msra.mxu0 %v156
  %583 = vmatprep.subr.mxu0 %v145
  %584 = vmatpush1.msra.mxu0 %v144
  %585 = vmatprep.subr.mxu0 0.0
  %586 = vmatpush2.msra.mxu0 0.0
  %587 = vmatprep.subr.mxu0 0.0
  %588 = vmatpush2.msra.mxu0 0.0
  %589 = vmatprep.subr.mxu0 0.0
  %590 = vmatpush2.msra.mxu0 0.0
  %591 = vmatprep.subr.mxu0 0.0
  %592 = vmatpush2.msra.mxu0 0.0
  %593 = vmatprep.subr.mxu0 0.0
  %594 = vmatpush2.msra.mxu0 0.0
  %595 = vmatprep.subr.mxu0 0.0
  %596 = vmatpush2.msra.mxu0 0.0
  %597 = vmatprep.subr.mxu0 0.0
  %598 = vmatpush2.msra.mxu0 0.0
  %599 = vmatprep.subr.mxu0 0.0
  %600 = vmatpush2.msra.mxu0 0.0
  %601 = vmatprep.subr.mxu0 0.0
  %602 = vmatpush2.msra.mxu0 0.0
  %603 = vmatprep.subr.mxu0 0.0
  %604 = vmatpush2.msra.mxu0 0.0
  %605 = vmatprep.subr.mxu0 0.0
  %606 = vmatpush2.msra.mxu0 0.0
  %607 = vmatprep.subr.mxu0 0.0
  %608 = vmatpush2.msra.mxu0 0.0
  %609 = vmatprep.subr.mxu0 %v373
  %610 = vmatpush2.msra.mxu0 %v372
  %611 = vmatprep.subr.mxu0 %v361
  %612 = vmatpush2.msra.mxu0 %v360
  %613 = vmatprep.subr.mxu0 %v349
  %614 = vmatpush2.msra.mxu0 %v348
  %615 = vmatprep.subr.mxu0 %v337
  %616 = vmatpush2.msra.mxu0 %v336
  %617 = vmatprep.mubr.f32.mxu0 %v394
  %618 = vmatmul.mubr.f32.gmra.mxu0 %v16
  %v619 = vpop.f32.mrf.mxu0
  %v620 = vadd.f32 %v385, %v619
  %v621 = vpop.f32.mrf.mxu0
  %v622 = vadd.f32 %v385, %v621
  %623 = vmatprep.mubr.f32.mxu0 %v397
  %624 = vmatmul.mubr.f32.gmra.mxu0 %v18
  %v625 = vpop.f32.mrf.mxu0
  %v626 = vadd.f32 %v390, %v625
  %v627 = vpop.f32.mrf.mxu0
  %v628 = vadd.f32 %v390, %v627
  %629 = vdwg.mxu0
  %630 = vmatprep.subr.mxu0 %v327
  %631 = vmatpush1.msra.mxu0 %v326
  %632 = vmatprep.subr.mxu0 %v315
  %633 = vmatpush1.msra.mxu0 %v314
  %634 = vmatprep.subr.mxu0 %v303
  %635 = vmatpush1.msra.mxu0 %v302
  %636 = vmatprep.subr.mxu0 %v291
  %637 = vmatpush1.msra.mxu0 %v290
  %638 = vmatprep.subr.mxu0 %v279
  %639 = vmatpush1.msra.mxu0 %v278
  %640 = vmatprep.subr.mxu0 %v267
  %641 = vmatpush1.msra.mxu0 %v266
  %642 = vmatprep.subr.mxu0 %v255
  %643 = vmatpush1.msra.mxu0 %v254
  %644 = vmatprep.subr.mxu0 %v243
  %645 = vmatpush1.msra.mxu0 %v242
  %646 = vmatprep.subr.mxu0 %v231
  %647 = vmatpush1.msra.mxu0 %v230
  %648 = vmatprep.subr.mxu0 %v219
  %649 = vmatpush1.msra.mxu0 %v218
  %650 = vmatprep.subr.mxu0 %v207
  %651 = vmatpush1.msra.mxu0 %v206
  %652 = vmatprep.subr.mxu0 %v195
  %653 = vmatpush1.msra.mxu0 %v194
  %654 = vmatprep.subr.mxu0 %v183
  %655 = vmatpush1.msra.mxu0 %v182
  %656 = vmatprep.subr.mxu0 %v171
  %657 = vmatpush1.msra.mxu0 %v170
  %658 = vmatprep.subr.mxu0 %v159
  %659 = vmatpush1.msra.mxu0 %v158
  %660 = vmatprep.subr.mxu0 %v147
  %661 = vmatpush1.msra.mxu0 %v146
  %662 = vmatprep.subr.mxu0 0.0
  %663 = vmatpush2.msra.mxu0 0.0
  %664 = vmatprep.subr.mxu0 0.0
  %665 = vmatpush2.msra.mxu0 0.0
  %666 = vmatprep.subr.mxu0 0.0
  %667 = vmatpush2.msra.mxu0 0.0
  %668 = vmatprep.subr.mxu0 0.0
  %669 = vmatpush2.msra.mxu0 0.0
  %670 = vmatprep.subr.mxu0 0.0
  %671 = vmatpush2.msra.mxu0 0.0
  %672 = vmatprep.subr.mxu0 0.0
  %673 = vmatpush2.msra.mxu0 0.0
  %674 = vmatprep.subr.mxu0 0.0
  %675 = vmatpush2.msra.mxu0 0.0
  %676 = vmatprep.subr.mxu0 0.0
  %677 = vmatpush2.msra.mxu0 0.0
  %678 = vmatprep.subr.mxu0 0.0
  %679 = vmatpush2.msra.mxu0 0.0
  %680 = vmatprep.subr.mxu0 0.0
  %681 = vmatpush2.msra.mxu0 0.0
  %682 = vmatprep.subr.mxu0 0.0
  %683 = vmatpush2.msra.mxu0 0.0
  %684 = vmatprep.subr.mxu0 0.0
  %685 = vmatpush2.msra.mxu0 0.0
  %686 = vmatprep.subr.mxu0 %v375
  %687 = vmatpush2.msra.mxu0 %v374
  %688 = vmatprep.subr.mxu0 %v363
  %689 = vmatpush2.msra.mxu0 %v362
  %690 = vmatprep.subr.mxu0 %v351
  %691 = vmatpush2.msra.mxu0 %v350
  %692 = vmatprep.subr.mxu0 %v339
  %693 = vmatpush2.msra.mxu0 %v338
  %694 = vmatprep.mubr.f32.mxu0 %v394
  %695 = vmatmul.mubr.f32.gmra.mxu0 %v16
  %v696 = vpop.f32.mrf.mxu0
  %v697 = vadd.f32 %v385, %v696
  %v698 = vpop.f32.mrf.mxu0
  %v699 = vadd.f32 %v385, %v698
  %700 = vmatprep.mubr.f32.mxu0 %v397
  %701 = vmatmul.mubr.f32.gmra.mxu0 %v18
  %v702 = vpop.f32.mrf.mxu0
  %v703 = vadd.f32 %v390, %v702
  %v704 = vpop.f32.mrf.mxu0
  %v705 = vadd.f32 %v390, %v704
  %706 = vdwg.mxu0
  %707 = vmatprep.subr.mxu0 %v329
  %708 = vmatpush1.msra.mxu0 %v328
  %709 = vmatprep.subr.mxu0 %v317
  %710 = vmatpush1.msra.mxu0 %v316
  %711 = vmatprep.subr.mxu0 %v305
  %712 = vmatpush1.msra.mxu0 %v304
  %713 = vmatprep.subr.mxu0 %v293
  %714 = vmatpush1.msra.mxu0 %v292
  %715 = vmatprep.subr.mxu0 %v281
  %716 = vmatpush1.msra.mxu0 %v280
  %717 = vmatprep.subr.mxu0 %v269
  %718 = vmatpush1.msra.mxu0 %v268
  %719 = vmatprep.subr.mxu0 %v257
  %720 = vmatpush1.msra.mxu0 %v256
  %721 = vmatprep.subr.mxu0 %v245
  %722 = vmatpush1.msra.mxu0 %v244
  %723 = vmatprep.subr.mxu0 %v233
  %724 = vmatpush1.msra.mxu0 %v232
  %725 = vmatprep.subr.mxu0 %v221
  %726 = vmatpush1.msra.mxu0 %v220
  %727 = vmatprep.subr.mxu0 %v209
  %728 = vmatpush1.msra.mxu0 %v208
  %729 = vmatprep.subr.mxu0 %v197
  %730 = vmatpush1.msra.mxu0 %v196
  %731 = vmatprep.subr.mxu0 %v185
  %732 = vmatpush1.msra.mxu0 %v184
  %733 = vmatprep.subr.mxu0 %v173
  %734 = vmatpush1.msra.mxu0 %v172
  %735 = vmatprep.subr.mxu0 %v161
  %736 = vmatpush1.msra.mxu0 %v160
  %737 = vmatprep.subr.mxu0 %v149
  %738 = vmatpush1.msra.mxu0 %v148
  %739 = vmatprep.subr.mxu0 0.0
  %740 = vmatpush2.msra.mxu0 0.0
  %741 = vmatprep.subr.mxu0 0.0
  %742 = vmatpush2.msra.mxu0 0.0
  %743 = vmatprep.subr.mxu0 0.0
  %744 = vmatpush2.msra.mxu0 0.0
  %745 = vmatprep.subr.mxu0 0.0
  %746 = vmatpush2.msra.mxu0 0.0
  %747 = vmatprep.subr.mxu0 0.0
  %748 = vmatpush2.msra.mxu0 0.0
  %749 = vmatprep.subr.mxu0 0.0
  %750 = vmatpush2.msra.mxu0 0.0
  %751 = vmatprep.subr.mxu0 0.0
  %752 = vmatpush2.msra.mxu0 0.0
  %753 = vmatprep.subr.mxu0 0.0
  %754 = vmatpush2.msra.mxu0 0.0
  %755 = vmatprep.subr.mxu0 0.0
  %756 = vmatpush2.msra.mxu0 0.0
  %757 = vmatprep.subr.mxu0 0.0
  %758 = vmatpush2.msra.mxu0 0.0
  %759 = vmatprep.subr.mxu0 0.0
  %760 = vmatpush2.msra.mxu0 0.0
  %761 = vmatprep.subr.mxu0 0.0
  %762 = vmatpush2.msra.mxu0 0.0
  %763 = vmatprep.subr.mxu0 %v377
  %764 = vmatpush2.msra.mxu0 %v376
  %765 = vmatprep.subr.mxu0 %v365
  %766 = vmatpush2.msra.mxu0 %v364
  %767 = vmatprep.subr.mxu0 %v353
  %768 = vmatpush2.msra.mxu0 %v352
  %769 = vmatprep.subr.mxu0 %v341
  %770 = vmatpush2.msra.mxu0 %v340
  %771 = vmatprep.mubr.f32.mxu0 %v394
  %772 = vmatmul.mubr.f32.gmra.mxu0 %v16
  %v773 = vpop.f32.mrf.mxu0
  %v774 = vadd.f32 %v385, %v773
  %v775 = vpop.f32.mrf.mxu0
  %v776 = vadd.f32 %v385, %v775
  %777 = vmatprep.mubr.f32.mxu0 %v397
  %778 = vmatmul.mubr.f32.gmra.mxu0 %v18
  %v779 = vpop.f32.mrf.mxu0
  %v780 = vadd.f32 %v390, %v779
  %v781 = vpop.f32.mrf.mxu0
  %v782 = vadd.f32 %v390, %v781
  %783 = vdwg.mxu0
  %784 = vmatprep.subr.mxu0 %v331
  %785 = vmatpush1.msra.mxu0 %v330
  %786 = vmatprep.subr.mxu0 %v319
  %787 = vmatpush1.msra.mxu0 %v318
  %788 = vmatprep.subr.mxu0 %v307
  %789 = vmatpush1.msra.mxu0 %v306
  %790 = vmatprep.subr.mxu0 %v295
  %791 = vmatpush1.msra.mxu0 %v294
  %792 = vmatprep.subr.mxu0 %v283
  %793 = vmatpush1.msra.mxu0 %v282
  %794 = vmatprep.subr.mxu0 %v271
  %795 = vmatpush1.msra.mxu0 %v270
  %796 = vmatprep.subr.mxu0 %v259
  %797 = vmatpush1.msra.mxu0 %v258
  %798 = vmatprep.subr.mxu0 %v247
  %799 = vmatpush1.msra.mxu0 %v246
  %800 = vmatprep.subr.mxu0 %v235
  %801 = vmatpush1.msra.mxu0 %v234
  %802 = vmatprep.subr.mxu0 %v223
  %803 = vmatpush1.msra.mxu0 %v222
  %804 = vmatprep.subr.mxu0 %v211
  %805 = vmatpush1.msra.mxu0 %v210
  %806 = vmatprep.subr.mxu0 %v199
  %807 = vmatpush1.msra.mxu0 %v198
  %808 = vmatprep.subr.mxu0 %v187
  %809 = vmatpush1.msra.mxu0 %v186
  %810 = vmatprep.subr.mxu0 %v175
  %811 = vmatpush1.msra.mxu0 %v174
  %812 = vmatprep.subr.mxu0 %v163
  %813 = vmatpush1.msra.mxu0 %v162
  %814 = vmatprep.subr.mxu0 %v151
  %815 = vmatpush1.msra.mxu0 %v150
  %816 = vmatprep.subr.mxu0 0.0
  %817 = vmatpush2.msra.mxu0 0.0
  %818 = vmatprep.subr.mxu0 0.0
  %819 = vmatpush2.msra.mxu0 0.0
  %820 = vmatprep.subr.mxu0 0.0
  %821 = vmatpush2.msra.mxu0 0.0
  %822 = vmatprep.subr.mxu0 0.0
  %823 = vmatpush2.msra.mxu0 0.0
  %824 = vmatprep.subr.mxu0 0.0
  %825 = vmatpush2.msra.mxu0 0.0
  %826 = vmatprep.subr.mxu0 0.0
  %827 = vmatpush2.msra.mxu0 0.0
  %828 = vmatprep.subr.mxu0 0.0
  %829 = vmatpush2.msra.mxu0 0.0
  %830 = vmatprep.subr.mxu0 0.0
  %831 = vmatpush2.msra.mxu0 0.0
  %832 = vmatprep.subr.mxu0 0.0
  %833 = vmatpush2.msra.mxu0 0.0
  %834 = vmatprep.subr.mxu0 0.0
  %835 = vmatpush2.msra.mxu0 0.0
  %836 = vmatprep.subr.mxu0 0.0
  %837 = vmatpush2.msra.mxu0 0.0
  %838 = vmatprep.subr.mxu0 0.0
  %839 = vmatpush2.msra.mxu0 0.0
  %840 = vmatprep.subr.mxu0 %v379
  %841 = vmatpush2.msra.mxu0 %v378
  %842 = vmatprep.subr.mxu0 %v367
  %843 = vmatpush2.msra.mxu0 %v366
  %844 = vmatprep.subr.mxu0 %v355
  %845 = vmatpush2.msra.mxu0 %v354
  %846 = vmatprep.subr.mxu0 %v343
  %847 = vmatpush2.msra.mxu0 %v342
  %848 = vmatprep.mubr.f32.mxu0 %v394
  %849 = vmatmul.mubr.f32.gmra.mxu0 %v16
  %v850 = vpop.f32.mrf.mxu0
  %v851 = vadd.f32 %v385, %v850
  %v852 = vpop.f32.mrf.mxu0
  %v853 = vadd.f32 %v385, %v852
  %854 = vmatprep.mubr.f32.mxu0 %v397
  %855 = vmatmul.mubr.f32.gmra.mxu0 %v18
  %v856 = vpop.f32.mrf.mxu0
  %v857 = vadd.f32 %v390, %v856
  %v858 = vpop.f32.mrf.mxu0
  %v859 = vadd.f32 %v390, %v858
  %860 = vdwg.mxu0
  %v861 = vmax.f32 %v466, 0.0
  %v862 = vmax.f32 %v468, 0.0
  %v863 = vmax.f32 %v543, 0.0
  %v864 = vmax.f32 %v545, 0.0
  %v865 = vmax.f32 %v620, 0.0
  %v866 = vmax.f32 %v622, 0.0
  %v867 = vmax.f32 %v697, 0.0
  %v868 = vmax.f32 %v699, 0.0
  %v869 = vmax.f32 %v774, 0.0
  %v870 = vmax.f32 %v776, 0.0
  %v871 = vmax.f32 %v851, 0.0
  %v872 = vmax.f32 %v853, 0.0
  %v873 = vmax.f32 %v472, 0.0
  %v874 = vmax.f32 %v474, 0.0
  %v875 = vmax.f32 %v549, 0.0
  %v876 = vmax.f32 %v551, 0.0
  %v877 = vmax.f32 %v626, 0.0
  %v878 = vmax.f32 %v628, 0.0
  %v879 = vmax.f32 %v703, 0.0
  %v880 = vmax.f32 %v705, 0.0
  %v881 = vmax.f32 %v780, 0.0
  %v882 = vmax.f32 %v782, 0.0
  %v883 = vmax.f32 %v857, 0.0
  %v884 = vmax.f32 %v859, 0.0
  %v885 = vpack.c.bf16 %v873, %v861
  %v886 = vpack.c.bf16 %v874, %v862
  %v887 = vpack.c.bf16 %v875, %v863
  %v888 = vpack.c.bf16 %v876, %v864
  %v889 = vpack.c.bf16 %v877, %v865
  %v890 = vpack.c.bf16 %v878, %v866
  %v891 = vpack.c.bf16 %v879, %v867
  %v892 = vpack.c.bf16 %v880, %v868
  %v893 = vpack.c.bf16 %v881, %v869
  %v894 = vpack.c.bf16 %v882, %v870
  %v895 = vpack.c.bf16 %v883, %v871
  %v896 = vpack.c.bf16 %v884, %v872
  %v909 = vunpack.c.l.b16 %v885
  %v910 = vunpack.c.l.b16 %v886
  %v911 = vunpack.c.l.b16 %v887
  %v912 = vunpack.c.l.b16 %v888
  %v913 = vunpack.c.l.b16 %v889
  %v914 = vunpack.c.l.b16 %v890
  %v915 = vunpack.c.l.b16 %v891
  %v916 = vunpack.c.l.b16 %v892
  %v917 = vunpack.c.l.b16 %v893
  %v918 = vunpack.c.l.b16 %v894
  %v919 = vunpack.c.l.b16 %v895
  %v920 = vunpack.c.l.b16 %v896
  %v921 = vunpack.c.h.b16 %v885
  %v922 = vunpack.c.h.b16 %v886
  %v923 = vunpack.c.h.b16 %v887
  %v924 = vunpack.c.h.b16 %v888
  %v925 = vunpack.c.h.b16 %v889
  %v926 = vunpack.c.h.b16 %v890
  %v927 = vunpack.c.h.b16 %v891
  %v928 = vunpack.c.h.b16 %v892
  %v929 = vunpack.c.h.b16 %v893
  %v930 = vunpack.c.h.b16 %v894
  %v931 = vunpack.c.h.b16 %v895
  %v932 = vunpack.c.h.b16 %v896
  %v933 = vpack.c.b16 %v910, %v909
  %v934 = vpack.c.b16 %v912, %v911
  %v935 = vpack.c.b16 %v914, %v913
  %v936 = vpack.c.b16 %v916, %v915
  %v937 = vpack.c.b16 %v918, %v917
  %v938 = vpack.c.b16 %v920, %v919
  %v939 = vpack.c.b16 %v922, %v921
  %v940 = vpack.c.b16 %v924, %v923
  %v941 = vpack.c.b16 %v926, %v925
  %v942 = vpack.c.b16 %v928, %v927
  %v943 = vpack.c.b16 %v930, %v929
  %v944 = vpack.c.b16 %v932, %v931
  %957 = vst [vmem:[%s3] sm:$0xff] %v933
  %958 = vst [vmem:[%s3 + $0x8] sm:$0xff] %v934
  %959 = vst [vmem:[%s3 + $0x10] sm:$0xff] %v935
  %960 = vst [vmem:[%s3 + $0x18] sm:$0xff] %v936
  %961 = vst [vmem:[%s3 + $0x20] sm:$0xff] %v937
  %962 = vst [vmem:[%s3 + $0x28] sm:$0xff] %v938
  %963 = vst [vmem:[%s3 + $0x30] sm:$0xff] %v939
  %964 = vst [vmem:[%s3 + $0x38] sm:$0xff] %v940
  %965 = vst [vmem:[%s3 + $0x40] sm:$0xff] %v941
  %966 = vst [vmem:[%s3 + $0x48] sm:$0xff] %v942
  %967 = vst [vmem:[%s3 + $0x50] sm:$0xff] %v943
  %968 = vst [vmem:[%s3 + $0x58] sm:$0xff] %v944
  // Predicated region
  $region14: #{convnet256_forward.5} parent=0 // pred_check
    _
  $region15: #{convnet256_forward.5} parent=0 // pred_check_branch
    %970 = sbr.rel (0) target = $region17
  $region16: #{convnet256_forward.5} parent=0 // pred_region
    _
  $region17: #{convnet256_forward.5} parent=0 // pred_fallthru
    _
  // Predicated region
  $region18: #{convnet256_forward.5} parent=0 // pred_check
    _
  $region19: #{convnet256_forward.5} parent=0 // pred_check_branch
    %972 = sbr.rel (0) target = $region21
  $region20: #{convnet256_forward.5} parent=0 // pred_region
    _
  $region21: #{convnet256_forward.5} parent=0 // pred_fallthru
    _

// kernel: convnet256_forward.6
$region0: #{convnet256_forward.6}
  #allocation0 [shape = 'u32[]', space=smem, size = 0x4, offset = 0x4, fixed_abs, tag = 'smem constant byte address 0x4 - core index']
  #allocation1 [shape = 'u32[144,128]{1,0:T(1,128)}', space=vmem, size = 0x12000, scoped, tag = 'internal scratch']
  %s0 = inlined_call_operand.vmem [shape: bf16[24,304], index: 0, kind: input, shape index: {}]
  %s1 = inlined_call_operand.vmem [shape: bf16[304,128], index: 1, kind: input, shape index: {}]
  %s2 = inlined_call_operand.vmem [shape: f32[24,1], index: 2, kind: input, shape index: {}]
  %s3 = inlined_call_operand.vmem [shape: bf16[24,128], index: 3, kind: output, shape index: {}]
  %s4 = sld [smem:[#allocation0]]
  $region22: #{convnet256_forward.6} parent=0
    _
  %s6 = ssub.s32 1, %s4
  %s7 = scalar_select 0, %s6, %s4
  // Predicated region
  $region2: #{convnet256_forward.6} parent=0 // pred_check
    _
  $region3: #{convnet256_forward.6} parent=0 // pred_check_branch
    %9 = sbr.rel (0) target = $region5
  $region4: #{convnet256_forward.6} parent=0 // pred_region
    _
  $region5: #{convnet256_forward.6} parent=0 // pred_fallthru
    _
  // Predicated region
  $region6: #{convnet256_forward.6} parent=0 // pred_check
    _
  $region7: #{convnet256_forward.6} parent=0 // pred_check_branch
    %11 = sbr.rel (0) target = $region9
  $region8: #{convnet256_forward.6} parent=0 // pred_region
    _
  $region9: #{convnet256_forward.6} parent=0 // pred_fallthru
    _
  // Predicated region
  $region10: #{convnet256_forward.6} parent=0 // pred_check
    _
  $region11: #{convnet256_forward.6} parent=0 // pred_check_branch
    %13 = sbr.rel (0) target = $region13
  $region12: #{convnet256_forward.6} parent=0 // pred_region
    _
  $region13: #{convnet256_forward.6} parent=0 // pred_fallthru
    _
  %v14 = vld [vmem:[%s0] sm:$0xff]
  %v15 = vld [vmem:[%s0 + $0x8] sm:$0xf]
  %v16 = vld [vmem:[%s0 + $0xc] sm:$0xff]
  %v17 = vld [vmem:[%s0 + $0x14] sm:$0xf]
  %v18 = vld [vmem:[%s0 + $0x18] sm:$0xff]
  %v19 = vld [vmem:[%s0 + $0x20] sm:$0xf]
  %v20 = vunpack.c.l.bf16 %v14
  %v21 = vunpack.c.h.bf16 %v14
  %v22 = vunpack.c.l.bf16 %v15
  %v23 = vunpack.c.l.bf16 %v16
  %v24 = vunpack.c.h.bf16 %v16
  %v25 = vunpack.c.l.bf16 %v17
  %v26 = vunpack.c.l.bf16 %v18
  %v27 = vunpack.c.h.bf16 %v18
  %v28 = vunpack.c.l.bf16 %v19
  %v29 = vld [vmem:[%s1] sm:$0xf]
  %v30 = vld [vmem:[%s1 + $0x4] sm:$0xf]
  %v31 = vld [vmem:[%s1 + $0x8] sm:$0xf]
  %v32 = vld [vmem:[%s1 + $0xc] sm:$0xf]
  %v33 = vld [vmem:[%s1 + $0x10] sm:$0xf]
  %v34 = vld [vmem:[%s1 + $0x14] sm:$0xf]
  %v35 = vld [vmem:[%s1 + $0x18] sm:$0xf]
  %v36 = vld [vmem:[%s1 + $0x1c] sm:$0xf]
  %v37 = vld [vmem:[%s1 + $0x20] sm:$0xf]
  %v38 = vld [vmem:[%s1 + $0x24] sm:$0xf]
  %v39 = vld [vmem:[%s1 + $0x28] sm:$0xf]
  %v40 = vld [vmem:[%s1 + $0x2c] sm:$0xf]
  %v41 = vld [vmem:[%s1 + $0x30] sm:$0xf]
  %v42 = vld [vmem:[%s1 + $0x34] sm:$0xf]
  %v43 = vld [vmem:[%s1 + $0x38] sm:$0xf]
  %v44 = vld [vmem:[%s1 + $0x3c] sm:$0xf]
  %v45 = vld [vmem:[%s1 + $0x40] sm:$0xf]
  %v46 = vld [vmem:[%s1 + $0x44] sm:$0xf]
  %v47 = vld [vmem:[%s1 + $0x48] sm:$0xf]
  %v48 = vld [vmem:[%s1 + $0x4c] sm:$0xf]
  %v49 = vld [vmem:[%s1 + $0x50] sm:$0xf]
  %v50 = vld [vmem:[%s1 + $0x54] sm:$0xf]
  %v51 = vld [vmem:[%s1 + $0x58] sm:$0xf]
  %v52 = vld [vmem:[%s1 + $0x5c] sm:$0xf]
  %v53 = vld [vmem:[%s1 + $0x60] sm:$0xf]
  %v54 = vld [vmem:[%s1 + $0x64] sm:$0xf]
  %v55 = vld [vmem:[%s1 + $0x68] sm:$0xf]
  %v56 = vld [vmem:[%s1 + $0x6c] sm:$0xf]
  %v57 = vld [vmem:[%s1 + $0x70] sm:$0xf]
  %v58 = vld [vmem:[%s1 + $0x74] sm:$0xf]
  %v59 = vld [vmem:[%s1 + $0x78] sm:$0xf]
  %v60 = vld [vmem:[%s1 + $0x7c] sm:$0xf]
  %v61 = vld [vmem:[%s1 + $0x80] sm:$0xf]
  %v62 = vld [vmem:[%s1 + $0x84] sm:$0xf]
  %v63 = vld [vmem:[%s1 + $0x88] sm:$0xf]
  %v64 = vld [vmem:[%s1 + $0x8c] sm:$0xf]
  %v65 = vld [vmem:[%s1 + $0x90] sm:$0xf]
  %v66 = vld [vmem:[%s1 + $0x94] sm:$0xf]
  %v67 = vunpack.c.l.bf16 %v29
  %v68 = vunpack.c.l.bf16 %v30
  %v69 = vunpack.c.l.bf16 %v31
  %v70 = vunpack.c.l.bf16 %v32
  %v71 = vunpack.c.l.bf16 %v33
  %v72 = vunpack.c.l.bf16 %v34
  %v73 = vunpack.c.l.bf16 %v35
  %v74 = vunpack.c.l.bf16 %v36
  %v75 = vunpack.c.l.bf16 %v37
  %v76 = vunpack.c.l.bf16 %v38
  %v77 = vunpack.c.l.bf16 %v39
  %v78 = vunpack.c.l.bf16 %v40
  %v79 = vunpack.c.l.bf16 %v41
  %v80 = vunpack.c.l.bf16 %v42
  %v81 = vunpack.c.l.bf16 %v43
  %v82 = vunpack.c.l.bf16 %v44
  %v83 = vunpack.c.l.bf16 %v45
  %v84 = vunpack.c.l.bf16 %v46
  %v85 = vunpack.c.l.bf16 %v47
  %v86 = vunpack.c.l.bf16 %v48
  %v87 = vunpack.c.l.bf16 %v49
  %v88 = vunpack.c.l.bf16 %v50
  %v89 = vunpack.c.l.bf16 %v51
  %v90 = vunpack.c.l.bf16 %v52
  %v91 = vunpack.c.l.bf16 %v53
  %v92 = vunpack.c.l.bf16 %v54
  %v93 = vunpack.c.l.bf16 %v55
  %v94 = vunpack.c.l.bf16 %v56
  %v95 = vunpack.c.l.bf16 %v57
  %v96 = vunpack.c.l.bf16 %v58
  %v97 = vunpack.c.l.bf16 %v59
  %v98 = vunpack.c.l.bf16 %v60
  %v99 = vunpack.c.l.bf16 %v61
  %v100 = vunpack.c.l.bf16 %v62
  %v101 = vunpack.c.l.bf16 %v63
  %v102 = vunpack.c.l.bf16 %v64
  %v103 = vunpack.c.l.bf16 %v65
  %v104 = vunpack.c.l.bf16 %v66
  %v105 = vld [vmem:[%s2] sm:$0xff]
  %v106 = vld [vmem:[%s2 + $0x8] sm:$0xff]
  %v107 = vld [vmem:[%s2 + $0x10] sm:$0xff]
  %109 = vset.pattern.permute.xlu0 0
  %110 = vperm.xlu0 %109, %v105
  %v111 = vpop.permute.xlu0 %110
  %114 = vset.pattern.permute.xlu0 0
  %115 = vperm.xlu0 %114, %v106
  %v116 = vpop.permute.xlu0 %115
  %119 = vset.pattern.permute.xlu0 0
  %120 = vperm.xlu0 %119, %v107
  %v121 = vpop.permute.xlu0 %120
  %vm123 = vcmask 392192
  %v125 = vsel %vm123, %v22, 0
  %v128 = vsel %vm123, %v25, 0
  %v131 = vsel %vm123, %v28, 0
  %133 = vmatprep.subr.mxu0 0.0
  %134 = vmatpush1.msra.mxu0 %v82
  %135 = vmatprep.subr.mxu0 0.0
  %136 = vmatpush1.msra.mxu0 %v81
  %137 = vmatprep.subr.mxu0 0.0
  %138 = vmatpush1.msra.mxu0 %v80
  %139 = vmatprep.subr.mxu0 0.0
  %140 = vmatpush1.msra.mxu0 %v79
  %141 = vmatprep.subr.mxu0 0.0
  %142 = vmatpush1.msra.mxu0 %v78
  %143 = vmatprep.subr.mxu0 0.0
  %144 = vmatpush1.msra.mxu0 %v77
  %145 = vmatprep.subr.mxu0 0.0
  %146 = vmatpush1.msra.mxu0 %v76
  %147 = vmatprep.subr.mxu0 0.0
  %148 = vmatpush1.msra.mxu0 %v75
  %149 = vmatprep.subr.mxu0 0.0
  %150 = vmatpush1.msra.mxu0 %v74
  %151 = vmatprep.subr.mxu0 0.0
  %152 = vmatpush1.msra.mxu0 %v73
  %153 = vmatprep.subr.mxu0 0.0
  %154 = vmatpush1.msra.mxu0 %v72
  %155 = vmatprep.subr.mxu0 0.0
  %156 = vmatpush1.msra.mxu0 %v71
  %157 = vmatprep.subr.mxu0 0.0
  %158 = vmatpush1.msra.mxu0 %v70
  %159 = vmatprep.subr.mxu0 0.0
  %160 = vmatpush1.msra.mxu0 %v69
  %161 = vmatprep.subr.mxu0 0.0
  %162 = vmatpush1.msra.mxu0 %v68
  %163 = vmatprep.subr.mxu0 0.0
  %164 = vmatpush1.msra.mxu0 %v67
  %165 = vmatprep.subr.mxu0 0.0
  %166 = vmatpush2.msra.mxu0 %v98
  %167 = vmatprep.subr.mxu0 0.0
  %168 = vmatpush2.msra.mxu0 %v97
  %169 = vmatprep.subr.mxu0 0.0
  %170 = vmatpush2.msra.mxu0 %v96
  %171 = vmatprep.subr.mxu0 0.0
  %172 = vmatpush2.msra.mxu0 %v95
  %173 = vmatprep.subr.mxu0 0.0
  %174 = vmatpush2.msra.mxu0 %v94
  %175 = vmatprep.subr.mxu0 0.0
  %176 = vmatpush2.msra.mxu0 %v93
  %177 = vmatprep.subr.mxu0 0.0
  %178 = vmatpush2.msra.mxu0 %v92
  %179 = vmatprep.subr.mxu0 0.0
  %180 = vmatpush2.msra.mxu0 %v91
  %181 = vmatprep.subr.mxu0 0.0
  %182 = vmatpush2.msra.mxu0 %v90
  %183 = vmatprep.subr.mxu0 0.0
  %184 = vmatpush2.msra.mxu0 %v89
  %185 = vmatprep.subr.mxu0 0.0
  %186 = vmatpush2.msra.mxu0 %v88
  %187 = vmatprep.subr.mxu0 0.0
  %188 = vmatpush2.msra.mxu0 %v87
  %189 = vmatprep.subr.mxu0 0.0
  %190 = vmatpush2.msra.mxu0 %v86
  %191 = vmatprep.subr.mxu0 0.0
  %192 = vmatpush2.msra.mxu0 %v85
  %193 = vmatprep.subr.mxu0 0.0
  %194 = vmatpush2.msra.mxu0 %v84
  %195 = vmatprep.subr.mxu0 0.0
  %196 = vmatpush2.msra.mxu0 %v83
  %197 = vmatprep.mubr.f32.mxu0 %v21
  %198 = vmatmul.mubr.f32.gmra.mxu0 %v20
  %v199 = vpop.f32.mrf.mxu0
  %v200 = vadd.f32 %v111, %v199
  %v201 = vpop.f32.mrf.mxu0
  %202 = vmatprep.mubr.f32.mxu0 %v24
  %203 = vmatmul.mubr.f32.gmra.mxu0 %v23
  %v204 = vpop.f32.mrf.mxu0
  %v205 = vadd.f32 %v116, %v204
  %v206 = vpop.f32.mrf.mxu0
  %207 = vmatprep.mubr.f32.mxu0 %v27
  %208 = vmatmul.mubr.f32.gmra.mxu0 %v26
  %v209 = vpop.f32.mrf.mxu0
  %v210 = vadd.f32 %v121, %v209
  %v211 = vpop.f32.mrf.mxu0
  %212 = vdwg.mxu0
  %213 = vmatprep.subr.mxu0 0.0
  %214 = vmatpush1.msra.mxu0 0.0
  %215 = vmatprep.subr.mxu0 0.0
  %216 = vmatpush1.msra.mxu0 0.0
  %217 = vmatprep.subr.mxu0 0.0
  %218 = vmatpush1.msra.mxu0 0.0
  %219 = vmatprep.subr.mxu0 0.0
  %220 = vmatpush1.msra.mxu0 0.0
  %221 = vmatprep.subr.mxu0 0.0
  %222 = vmatpush1.msra.mxu0 0.0
  %223 = vmatprep.subr.mxu0 0.0
  %224 = vmatpush1.msra.mxu0 0.0
  %225 = vmatprep.subr.mxu0 0.0
  %226 = vmatpush1.msra.mxu0 0.0
  %227 = vmatprep.subr.mxu0 0.0
  %228 = vmatpush1.msra.mxu0 0.0
  %229 = vmatprep.subr.mxu0 0.0
  %230 = vmatpush1.msra.mxu0 0.0
  %231 = vmatprep.subr.mxu0 0.0
  %232 = vmatpush1.msra.mxu0 0.0
  %233 = vmatprep.subr.mxu0 0.0
  %234 = vmatpush1.msra.mxu0 %v104
  %235 = vmatprep.subr.mxu0 0.0
  %236 = vmatpush1.msra.mxu0 %v103
  %237 = vmatprep.subr.mxu0 0.0
  %238 = vmatpush1.msra.mxu0 %v102
  %239 = vmatprep.subr.mxu0 0.0
  %240 = vmatpush1.msra.mxu0 %v101
  %241 = vmatprep.subr.mxu0 0.0
  %242 = vmatpush1.msra.mxu0 %v100
  %243 = vmatprep.subr.mxu0 0.0
  %244 = vmatpush1.msra.mxu0 %v99
  %245 = vmatprep.subr.mxu0 0.0
  %246 = vmatpush2.msra.mxu0 0.0
  %247 = vmatprep.subr.mxu0 0.0
  %248 = vmatpush2.msra.mxu0 0.0
  %249 = vmatprep.subr.mxu0 0.0
  %250 = vmatpush2.msra.mxu0 0.0
  %251 = vmatprep.subr.mxu0 0.0
  %252 = vmatpush2.msra.mxu0 0.0
  %253 = vmatprep.subr.mxu0 0.0
  %254 = vmatpush2.msra.mxu0 0.0
  %255 = vmatprep.subr.mxu0 0.0
  %256 = vmatpush2.msra.mxu0 0.0
  %257 = vmatprep.subr.mxu0 0.0
  %258 = vmatpush2.msra.mxu0 0.0
  %259 = vmatprep.subr.mxu0 0.0
  %260 = vmatpush2.msra.mxu0 0.0
  %261 = vmatprep.subr.mxu0 0.0
  %262 = vmatpush2.msra.mxu0 0.0
  %263 = vmatprep.subr.mxu0 0.0
  %264 = vmatpush2.msra.mxu0 0.0
  %265 = vmatprep.subr.mxu0 0.0
  %266 = vmatpush2.msra.mxu0 0.0
  %267 = vmatprep.subr.mxu0 0.0
  %268 = vmatpush2.msra.mxu0 0.0
  %269 = vmatprep.subr.mxu0 0.0
  %270 = vmatpush2.msra.mxu0 0.0
  %271 = vmatprep.subr.mxu0 0.0
  %272 = vmatpush2.msra.mxu0 0.0
  %273 = vmatprep.subr.mxu0 0.0
  %274 = vmatpush2.msra.mxu0 0.0
  %275 = vmatprep.subr.mxu0 0.0
  %276 = vmatpush2.msra.mxu0 0.0
  %277 = vmatprep.mubr.f32.mxu0 0.0
  %278 = vmatmul.mubr.f32.gmra.mxu0 %v125
  %v279 = vpop.f32.mrf.mxu0
  %v280 = vadd.f32 %v200, %v279
  %v281 = vpop.f32.mrf.mxu0
  %282 = vmatprep.mubr.f32.mxu0 0.0
  %283 = vmatmul.mubr.f32.gmra.mxu0 %v128
  %v284 = vpop.f32.mrf.mxu0
  %v285 = vadd.f32 %v205, %v284
  %v286 = vpop.f32.mrf.mxu0
  %287 = vmatprep.mubr.f32.mxu0 0.0
  %288 = vmatmul.mubr.f32.gmra.mxu0 %v131
  %v289 = vpop.f32.mrf.mxu0
  %v290 = vadd.f32 %v210, %v289
  %v291 = vpop.f32.mrf.mxu0
  %292 = vdwg.mxu0
  %v293 = vmax.f32 %v280, 0.0
  %v294 = vmax.f32 %v285, 0.0
  %v295 = vmax.f32 %v290, 0.0
  %v296 = vpack.c.bf16 %v294, %v293
  %v297 = vpack.c.bf16 %v295, %v295
  %v300 = vunpack.c.l.b16 %v296
  %v301 = vunpack.c.h.b16 %v296
  %v302 = vunpack.c.l.b16 %v297
  %v303 = vpack.c.b16 %v300, %v300
  %v304 = vpack.c.b16 %v301, %v301
  %v305 = vpack.c.b16 %v302, %v302
  %309 = vst [vmem:[%s3] sm:$0xf] %v303
  %310 = vst [vmem:[%s3 + $0x4] sm:$0xf] %v304
  %311 = vst [vmem:[%s3 + $0x8] sm:$0xf] %v305
  // Predicated region
  $region14: #{convnet256_forward.6} parent=0 // pred_check
    _
  $region15: #{convnet256_forward.6} parent=0 // pred_check_branch
    %313 = sbr.rel (0) target = $region17
  $region16: #{convnet256_forward.6} parent=0 // pred_region
    _
  $region17: #{convnet256_forward.6} parent=0 // pred_fallthru
    _
  // Predicated region
  $region18: #{convnet256_forward.6} parent=0 // pred_check
    _
  $region19: #{convnet256_forward.6} parent=0 // pred_check_branch
    %315 = sbr.rel (0) target = $region21
  $region20: #{convnet256_forward.6} parent=0 // pred_region
    _
  $region21: #{convnet256_forward.6} parent=0 // pred_fallthru
    _

// kernel: convnet256_forward.7
$region0: #{convnet256_forward.7}
  #allocation0 [shape = 'u32[]', space=smem, size = 0x4, offset = 0x4, fixed_abs, tag = 'smem constant byte address 0x4 - core index']
  #allocation1 [shape = 'u32[144,128]{1,0:T(1,128)}', space=vmem, size = 0x12000, scoped, tag = 'internal scratch']
  %s0 = inlined_call_operand.vmem [shape: bf16[2,1536], index: 0, kind: input, shape index: {}]
  %s1 = inlined_call_operand.vmem [shape: bf16[1536,480], index: 1, kind: input, shape index: {}]
  %s2 = inlined_call_operand.vmem [shape: f32[1,480], index: 2, kind: input, shape index: {}]
  %s3 = inlined_call_operand.vmem [shape: bf16[480,120], index: 3, kind: input, shape index: {}]
  %s4 = inlined_call_operand.vmem [shape: f32[1,120], index: 4, kind: input, shape index: {}]
  %s5 = inlined_call_operand.vmem [shape: bf16[120,30], index: 5, kind: input, shape index: {}]
  %s6 = inlined_call_operand.vmem [shape: f32[1,30], index: 6, kind: input, shape index: {}]
  %s7 = inlined_call_operand.vmem [shape: bf16[30,2], index: 7, kind: input, shape index: {}]
  %s8 = inlined_call_operand.vmem [shape: f32[1,2], index: 8, kind: input, shape index: {}]
  %s9 = inlined_call_operand.hbm [shape: f32[2,2], index: 9, kind: output, shape index: {}]
  %s10 = sld [smem:[#allocation0]]
  $region46: #{convnet256_forward.7} parent=0
    _
  %s12 = ssub.s32 1, %s10
  %s13 = scalar_select 0, %s12, %s10
  $region1: #{convnet256_forward.7} parent=0
    #allocation2 [shape = 'u8[1024]{0}', space=vmem, size = 0x400, scoped, tag = 'output window, operand 0, single buffered']
    #allocation3 [shape = 's32[1]{0}', space=sflag, size = 0x4, scoped, tag = 'scoped memory for convnet256_forward.7']
    %14 = vsyncpa [#allocation3], 0
    // Predicated region
    $region2: #{convnet256_forward.7} parent=1 // pred_check
      _
    $region3: #{convnet256_forward.7} parent=1 // pred_check_branch
      %16 = sbr.rel (0) target = $region5
    $region4: #{convnet256_forward.7} parent=1 // pred_region
      _
    $region5: #{convnet256_forward.7} parent=1 // pred_fallthru
      _
    // Predicated region
    $region6: #{convnet256_forward.7} parent=1 // pred_check
      _
    $region7: #{convnet256_forward.7} parent=1 // pred_check_branch
      %18 = sbr.rel (0) target = $region9
    $region8: #{convnet256_forward.7} parent=1 // pred_region
      _
    $region9: #{convnet256_forward.7} parent=1 // pred_fallthru
      _
    // Predicated region
    $region10: #{convnet256_forward.7} parent=1 // pred_check
      _
    $region11: #{convnet256_forward.7} parent=1 // pred_check_branch
      %20 = sbr.rel (0) target = $region13
    $region12: #{convnet256_forward.7} parent=1 // pred_region
      _
    $region13: #{convnet256_forward.7} parent=1 // pred_fallthru
      _
    // Predicated region
    $region14: #{convnet256_forward.7} parent=1 // pred_check
      _
    $region15: #{convnet256_forward.7} parent=1 // pred_check_branch
      %22 = sbr.rel (0) target = $region17
    $region16: #{convnet256_forward.7} parent=1 // pred_region
      _
    $region17: #{convnet256_forward.7} parent=1 // pred_fallthru
      _
    // Predicated region
    $region18: #{convnet256_forward.7} parent=1 // pred_check
      _
    $region19: #{convnet256_forward.7} parent=1 // pred_check_branch
      %24 = sbr.rel (0) target = $region21
    $region20: #{convnet256_forward.7} parent=1 // pred_region
      _
    $region21: #{convnet256_forward.7} parent=1 // pred_fallthru
      _
    // Predicated region
    $region22: #{convnet256_forward.7} parent=1 // pred_check
      _
    $region23: #{convnet256_forward.7} parent=1 // pred_check_branch
      %26 = sbr.rel (0) target = $region25
    $region24: #{convnet256_forward.7} parent=1 // pred_region
      _
    $region25: #{convnet256_forward.7} parent=1 // pred_fallthru
      _
    // Predicated region
    $region26: #{convnet256_forward.7} parent=1 // pred_check
      _
    $region27: #{convnet256_forward.7} parent=1 // pred_check_branch
      %28 = sbr.rel (0) target = $region29
    $region28: #{convnet256_forward.7} parent=1 // pred_region
      _
    $region29: #{convnet256_forward.7} parent=1 // pred_fallthru
      _
    // Predicated region
    $region30: #{convnet256_forward.7} parent=1 // pred_check
      _
    $region31: #{convnet256_forward.7} parent=1 // pred_check_branch
      %30 = sbr.rel (0) target = $region33
    $region32: #{convnet256_forward.7} parent=1 // pred_region
      _
    $region33: #{convnet256_forward.7} parent=1 // pred_fallthru
      _
    // Predicated region
    $region34: #{convnet256_forward.7} parent=1 // pred_check
      _
    $region35: #{convnet256_forward.7} parent=1 // pred_check_branch
      %32 = sbr.rel (0) target = $region37
    $region36: #{convnet256_forward.7} parent=1 // pred_region
      _
    $region37: #{convnet256_forward.7} parent=1 // pred_fallthru
      _
    %v33 = vld [vmem:[%s0] sm:$0xff]
    %v34 = vld [vmem:[%s0 + $0x8] sm:$0xf]
    %v35 = vunpack.c.l.bf16 %v33
    %v36 = vunpack.c.h.bf16 %v33
    %v37 = vunpack.c.l.bf16 %v34
    %v38 = vld [vmem:[%s1] sm:$0xff]
    %v39 = vld [vmem:[%s1 + $0x8] sm:$0xff]
    %v40 = vld [vmem:[%s1 + $0x10] sm:$0xff]
    %v41 = vld [vmem:[%s1 + $0x18] sm:$0xff]
    %v42 = vld [vmem:[%s1 + $0x20] sm:$0xff]
    %v43 = vld [vmem:[%s1 + $0x28] sm:$0xff]
    %v44 = vld [vmem:[%s1 + $0x30] sm:$0xff]
    %v45 = vld [vmem:[%s1 + $0x38] sm:$0xff]
    %v46 = vld [vmem:[%s1 + $0x40] sm:$0xff]
    %v47 = vld [vmem:[%s1 + $0x48] sm:$0xff]
    %v48 = vld [vmem:[%s1 + $0x50] sm:$0xff]
    %v49 = vld [vmem:[%s1 + $0x58] sm:$0xff]
    %v50 = vld [vmem:[%s1 + $0x60] sm:$0xff]
    %v51 = vld [vmem:[%s1 + $0x68] sm:$0xff]
    %v52 = vld [vmem:[%s1 + $0x70] sm:$0xff]
    %v53 = vld [vmem:[%s1 + $0x78] sm:$0xff]
    %v54 = vld [vmem:[%s1 + $0x80] sm:$0xff]
    %v55 = vld [vmem:[%s1 + $0x88] sm:$0xff]
    %v56 = vld [vmem:[%s1 + $0x90] sm:$0xff]
    %v57 = vld [vmem:[%s1 + $0x98] sm:$0xff]
    %v58 = vld [vmem:[%s1 + $0xa0] sm:$0xff]
    %v59 = vld [vmem:[%s1 + $0xa8] sm:$0xff]
    %v60 = vld [vmem:[%s1 + $0xb0] sm:$0xff]
    %v61 = vld [vmem:[%s1 + $0xb8] sm:$0xff]
    %v62 = vld [vmem:[%s1 + $0xc0] sm:$0xff]
    %v63 = vld [vmem:[%s1 + $0xc8] sm:$0xff]
    %v64 = vld [vmem:[%s1 + $0xd0] sm:$0xff]
    %v65 = vld [vmem:[%s1 + $0xd8] sm:$0xff]
    %v66 = vld [vmem:[%s1 + $0xe0] sm:$0xff]
    %v67 = vld [vmem:[%s1 + $0xe8] sm:$0xff]
    %v68 = vld [vmem:[%s1 + $0xf0] sm:$0xff]
    %v69 = vld [vmem:[%s1 + $0xf8] sm:$0xff]
    %v70 = vld [vmem:[%s1 + $0x100] sm:$0xff]
    %v71 = vld [vmem:[%s1 + $0x108] sm:$0xff]
    %v72 = vld [vmem:[%s1 + $0x110] sm:$0xff]
    %v73 = vld [vmem:[%s1 + $0x118] sm:$0xff]
    %v74 = vld [vmem:[%s1 + $0x120] sm:$0xff]
    %v75 = vld [vmem:[%s1 + $0x128] sm:$0xff]
    %v76 = vld [vmem:[%s1 + $0x130] sm:$0xff]
    %v77 = vld [vmem:[%s1 + $0x138] sm:$0xff]
    %v78 = vld [vmem:[%s1 + $0x140] sm:$0xff]
    %v79 = vld [vmem:[%s1 + $0x148] sm:$0xff]
    %v80 = vld [vmem:[%s1 + $0x150] sm:$0xff]
    %v81 = vld [vmem:[%s1 + $0x158] sm:$0xff]
    %v82 = vld [vmem:[%s1 + $0x160] sm:$0xff]
    %v83 = vld [vmem:[%s1 + $0x168] sm:$0xff]
    %v84 = vld [vmem:[%s1 + $0x170] sm:$0xff]
    %v85 = vld [vmem:[%s1 + $0x178] sm:$0xff]
    %v86 = vld [vmem:[%s1 + $0x180] sm:$0xff]
    %v87 = vld [vmem:[%s1 + $0x188] sm:$0xff]
    %v88 = vld [vmem:[%s1 + $0x190] sm:$0xff]
    %v89 = vld [vmem:[%s1 + $0x198] sm:$0xff]
    %v90 = vld [vmem:[%s1 + $0x1a0] sm:$0xff]
    %v91 = vld [vmem:[%s1 + $0x1a8] sm:$0xff]
    %v92 = vld [vmem:[%s1 + $0x1b0] sm:$0xff]
    %v93 = vld [vmem:[%s1 + $0x1b8] sm:$0xff]
    %v94 = vld [vmem:[%s1 + $0x1c0] sm:$0xff]
    %v95 = vld [vmem:[%s1 + $0x1c8] sm:$0xff]
    %v96 = vld [vmem:[%s1 + $0x1d0] sm:$0xff]
    %v97 = vld [vmem:[%s1 + $0x1d8] sm:$0xff]
    %v98 = vld [vmem:[%s1 + $0x1e0] sm:$0xff]
    %v99 = vld [vmem:[%s1 + $0x1e8] sm:$0xff]
    %v100 = vld [vmem:[%s1 + $0x1f0] sm:$0xff]
    %v101 = vld [vmem:[%s1 + $0x1f8] sm:$0xff]
    %v102 = vld [vmem:[%s1 + $0x200] sm:$0xff]
    %v103 = vld [vmem:[%s1 + $0x208] sm:$0xff]
    %v104 = vld [vmem:[%s1 + $0x210] sm:$0xff]
    %v105 = vld [vmem:[%s1 + $0x218] sm:$0xff]
    %v106 = vld [vmem:[%s1 + $0x220] sm:$0xff]
    %v107 = vld [vmem:[%s1 + $0x228] sm:$0xff]
    %v108 = vld [vmem:[%s1 + $0x230] sm:$0xff]
    %v109 = vld [vmem:[%s1 + $0x238] sm:$0xff]
    %v110 = vld [vmem:[%s1 + $0x240] sm:$0xff]
    %v111 = vld [vmem:[%s1 + $0x248] sm:$0xff]
    %v112 = vld [vmem:[%s1 + $0x250] sm:$0xff]
    %v113 = vld [vmem:[%s1 + $0x258] sm:$0xff]
    %v114 = vld [vmem:[%s1 + $0x260] sm:$0xff]
    %v115 = vld [vmem:[%s1 + $0x268] sm:$0xff]
    %v116 = vld [vmem:[%s1 + $0x270] sm:$0xff]
    %v117 = vld [vmem:[%s1 + $0x278] sm:$0xff]
    %v118 = vld [vmem:[%s1 + $0x280] sm:$0xff]
    %v119 = vld [vmem:[%s1 + $0x288] sm:$0xff]
    %v120 = vld [vmem:[%s1 + $0x290] sm:$0xff]
    %v121 = vld [vmem:[%s1 + $0x298] sm:$0xff]
    %v122 = vld [vmem:[%s1 + $0x2a0] sm:$0xff]
    %v123 = vld [vmem:[%s1 + $0x2a8] sm:$0xff]
    %v124 = vld [vmem:[%s1 + $0x2b0] sm:$0xff]
    %v125 = vld [vmem:[%s1 + $0x2b8] sm:$0xff]
    %v126 = vld [vmem:[%s1 + $0x2c0] sm:$0xff]
    %v127 = vld [vmem:[%s1 + $0x2c8] sm:$0xff]
    %v128 = vld [vmem:[%s1 + $0x2d0] sm:$0xff]
    %v129 = vld [vmem:[%s1 + $0x2d8] sm:$0xff]
    %v130 = vld [vmem:[%s1 + $0x2e0] sm:$0xff]
    %v131 = vld [vmem:[%s1 + $0x2e8] sm:$0xff]
    %v132 = vld [vmem:[%s1 + $0x2f0] sm:$0xff]
    %v133 = vld [vmem:[%s1 + $0x2f8] sm:$0xff]
    %v134 = vld [vmem:[%s1 + $0x300] sm:$0xff]
    %v135 = vld [vmem:[%s1 + $0x308] sm:$0xff]
    %v136 = vld [vmem:[%s1 + $0x310] sm:$0xff]
    %v137 = vld [vmem:[%s1 + $0x318] sm:$0xff]
    %v138 = vld [vmem:[%s1 + $0x320] sm:$0xff]
    %v139 = vld [vmem:[%s1 + $0x328] sm:$0xff]
    %v140 = vld [vmem:[%s1 + $0x330] sm:$0xff]
    %v141 = vld [vmem:[%s1 + $0x338] sm:$0xff]
    %v142 = vld [vmem:[%s1 + $0x340] sm:$0xff]
    %v143 = vld [vmem:[%s1 + $0x348] sm:$0xff]
    %v144 = vld [vmem:[%s1 + $0x350] sm:$0xff]
    %v145 = vld [vmem:[%s1 + $0x358] sm:$0xff]
    %v146 = vld [vmem:[%s1 + $0x360] sm:$0xff]
    %v147 = vld [vmem:[%s1 + $0x368] sm:$0xff]
    %v148 = vld [vmem:[%s1 + $0x370] sm:$0xff]
    %v149 = vld [vmem:[%s1 + $0x378] sm:$0xff]
    %v150 = vld [vmem:[%s1 + $0x380] sm:$0xff]
    %v151 = vld [vmem:[%s1 + $0x388] sm:$0xff]
    %v152 = vld [vmem:[%s1 + $0x390] sm:$0xff]
    %v153 = vld [vmem:[%s1 + $0x398] sm:$0xff]
    %v154 = vld [vmem:[%s1 + $0x3a0] sm:$0xff]
    %v155 = vld [vmem:[%s1 + $0x3a8] sm:$0xff]
    %v156 = vld [vmem:[%s1 + $0x3b0] sm:$0xff]
    %v157 = vld [vmem:[%s1 + $0x3b8] sm:$0xff]
    %v158 = vld [vmem:[%s1 + $0x3c0] sm:$0xff]
    %v159 = vld [vmem:[%s1 + $0x3c8] sm:$0xff]
    %v160 = vld [vmem:[%s1 + $0x3d0] sm:$0xff]
    %v161 = vld [vmem:[%s1 + $0x3d8] sm:$0xff]
    %v162 = vld [vmem:[%s1 + $0x3e0] sm:$0xff]
    %v163 = vld [vmem:[%s1 + $0x3e8] sm:$0xff]
    %v164 = vld [vmem:[%s1 + $0x3f0] sm:$0xff]
    %v165 = vld [vmem:[%s1 + $0x3f8] sm:$0xff]
    %v166 = vld [vmem:[%s1 + $0x400] sm:$0xff]
    %v167 = vld [vmem:[%s1 + $0x408] sm:$0xff]
    %v168 = vld [vmem:[%s1 + $0x410] sm:$0xff]
    %v169 = vld [vmem:[%s1 + $0x418] sm:$0xff]
    %v170 = vld [vmem:[%s1 + $0x420] sm:$0xff]
    %v171 = vld [vmem:[%s1 + $0x428] sm:$0xff]
    %v172 = vld [vmem:[%s1 + $0x430] sm:$0xff]
    %v173 = vld [vmem:[%s1 + $0x438] sm:$0xff]
    %v174 = vld [vmem:[%s1 + $0x440] sm:$0xff]
    %v175 = vld [vmem:[%s1 + $0x448] sm:$0xff]
    %v176 = vld [vmem:[%s1 + $0x450] sm:$0xff]
    %v177 = vld [vmem:[%s1 + $0x458] sm:$0xff]
    %v178 = vld [vmem:[%s1 + $0x460] sm:$0xff]
    %v179 = vld [vmem:[%s1 + $0x468] sm:$0xff]
    %v180 = vld [vmem:[%s1 + $0x470] sm:$0xff]
    %v181 = vld [vmem:[%s1 + $0x478] sm:$0xff]
    %v182 = vld [vmem:[%s1 + $0x480] sm:$0xff]
    %v183 = vld [vmem:[%s1 + $0x488] sm:$0xff]
    %v184 = vld [vmem:[%s1 + $0x490] sm:$0xff]
    %v185 = vld [vmem:[%s1 + $0x498] sm:$0xff]
    %v186 = vld [vmem:[%s1 + $0x4a0] sm:$0xff]
    %v187 = vld [vmem:[%s1 + $0x4a8] sm:$0xff]
    %v188 = vld [vmem:[%s1 + $0x4b0] sm:$0xff]
    %v189 = vld [vmem:[%s1 + $0x4b8] sm:$0xff]
    %v190 = vld [vmem:[%s1 + $0x4c0] sm:$0xff]
    %v191 = vld [vmem:[%s1 + $0x4c8] sm:$0xff]
    %v192 = vld [vmem:[%s1 + $0x4d0] sm:$0xff]
    %v193 = vld [vmem:[%s1 + $0x4d8] sm:$0xff]
    %v194 = vld [vmem:[%s1 + $0x4e0] sm:$0xff]
    %v195 = vld [vmem:[%s1 + $0x4e8] sm:$0xff]
    %v196 = vld [vmem:[%s1 + $0x4f0] sm:$0xff]
    %v197 = vld [vmem:[%s1 + $0x4f8] sm:$0xff]
    %v198 = vld [vmem:[%s1 + $0x500] sm:$0xff]
    %v199 = vld [vmem:[%s1 + $0x508] sm:$0xff]
    %v200 = vld [vmem:[%s1 + $0x510] sm:$0xff]
    %v201 = vld [vmem:[%s1 + $0x518] sm:$0xff]
    %v202 = vld [vmem:[%s1 + $0x520] sm:$0xff]
    %v203 = vld [vmem:[%s1 + $0x528] sm:$0xff]
    %v204 = vld [vmem:[%s1 + $0x530] sm:$0xff]
    %v205 = vld [vmem:[%s1 + $0x538] sm:$0xff]
    %v206 = vld [vmem:[%s1 + $0x540] sm:$0xff]
    %v207 = vld [vmem:[%s1 + $0x548] sm:$0xff]
    %v208 = vld [vmem:[%s1 + $0x550] sm:$0xff]
    %v209 = vld [vmem:[%s1 + $0x558] sm:$0xff]
    %v210 = vld [vmem:[%s1 + $0x560] sm:$0xff]
    %v211 = vld [vmem:[%s1 + $0x568] sm:$0xff]
    %v212 = vld [vmem:[%s1 + $0x570] sm:$0xff]
    %v213 = vld [vmem:[%s1 + $0x578] sm:$0xff]
    %v214 = vld [vmem:[%s1 + $0x580] sm:$0xff]
    %v215 = vld [vmem:[%s1 + $0x588] sm:$0xff]
    %v216 = vld [vmem:[%s1 + $0x590] sm:$0xff]
    %v217 = vld [vmem:[%s1 + $0x598] sm:$0xff]
    %v218 = vld [vmem:[%s1 + $0x5a0] sm:$0xff]
    %v219 = vld [vmem:[%s1 + $0x5a8] sm:$0xff]
    %v220 = vld [vmem:[%s1 + $0x5b0] sm:$0xff]
    %v221 = vld [vmem:[%s1 + $0x5b8] sm:$0xff]
    %v222 = vld [vmem:[%s1 + $0x5c0] sm:$0xff]
    %v223 = vld [vmem:[%s1 + $0x5c8] sm:$0xff]
    %v224 = vld [vmem:[%s1 + $0x5d0] sm:$0xff]
    %v225 = vld [vmem:[%s1 + $0x5d8] sm:$0xff]
    %v226 = vld [vmem:[%s1 + $0x5e0] sm:$0xff]
    %v227 = vld [vmem:[%s1 + $0x5e8] sm:$0xff]
    %v228 = vld [vmem:[%s1 + $0x5f0] sm:$0xff]
    %v229 = vld [vmem:[%s1 + $0x5f8] sm:$0xff]
    %v230 = vld [vmem:[%s1 + $0x600] sm:$0xff]
    %v231 = vld [vmem:[%s1 + $0x608] sm:$0xff]
    %v232 = vld [vmem:[%s1 + $0x610] sm:$0xff]
    %v233 = vld [vmem:[%s1 + $0x618] sm:$0xff]
    %v234 = vld [vmem:[%s1 + $0x620] sm:$0xff]
    %v235 = vld [vmem:[%s1 + $0x628] sm:$0xff]
    %v236 = vld [vmem:[%s1 + $0x630] sm:$0xff]
    %v237 = vld [vmem:[%s1 + $0x638] sm:$0xff]
    %v238 = vld [vmem:[%s1 + $0x640] sm:$0xff]
    %v239 = vld [vmem:[%s1 + $0x648] sm:$0xff]
    %v240 = vld [vmem:[%s1 + $0x650] sm:$0xff]
    %v241 = vld [vmem:[%s1 + $0x658] sm:$0xff]
    %v242 = vld [vmem:[%s1 + $0x660] sm:$0xff]
    %v243 = vld [vmem:[%s1 + $0x668] sm:$0xff]
    %v244 = vld [vmem:[%s1 + $0x670] sm:$0xff]
    %v245 = vld [vmem:[%s1 + $0x678] sm:$0xff]
    %v246 = vld [vmem:[%s1 + $0x680] sm:$0xff]
    %v247 = vld [vmem:[%s1 + $0x688] sm:$0xff]
    %v248 = vld [vmem:[%s1 + $0x690] sm:$0xff]
    %v249 = vld [vmem:[%s1 + $0x698] sm:$0xff]
    %v250 = vld [vmem:[%s1 + $0x6a0] sm:$0xff]
    %v251 = vld [vmem:[%s1 + $0x6a8] sm:$0xff]
    %v252 = vld [vmem:[%s1 + $0x6b0] sm:$0xff]
    %v253 = vld [vmem:[%s1 + $0x6b8] sm:$0xff]
    %v254 = vld [vmem:[%s1 + $0x6c0] sm:$0xff]
    %v255 = vld [vmem:[%s1 + $0x6c8] sm:$0xff]
    %v256 = vld [vmem:[%s1 + $0x6d0] sm:$0xff]
    %v257 = vld [vmem:[%s1 + $0x6d8] sm:$0xff]
    %v258 = vld [vmem:[%s1 + $0x6e0] sm:$0xff]
    %v259 = vld [vmem:[%s1 + $0x6e8] sm:$0xff]
    %v260 = vld [vmem:[%s1 + $0x6f0] sm:$0xff]
    %v261 = vld [vmem:[%s1 + $0x6f8] sm:$0xff]
    %v262 = vld [vmem:[%s1 + $0x700] sm:$0xff]
    %v263 = vld [vmem:[%s1 + $0x708] sm:$0xff]
    %v264 = vld [vmem:[%s1 + $0x710] sm:$0xff]
    %v265 = vld [vmem:[%s1 + $0x718] sm:$0xff]
    %v266 = vld [vmem:[%s1 + $0x720] sm:$0xff]
    %v267 = vld [vmem:[%s1 + $0x728] sm:$0xff]
    %v268 = vld [vmem:[%s1 + $0x730] sm:$0xff]
    %v269 = vld [vmem:[%s1 + $0x738] sm:$0xff]
    %v270 = vld [vmem:[%s1 + $0x740] sm:$0xff]
    %v271 = vld [vmem:[%s1 + $0x748] sm:$0xff]
    %v272 = vld [vmem:[%s1 + $0x750] sm:$0xff]
    %v273 = vld [vmem:[%s1 + $0x758] sm:$0xff]
    %v274 = vld [vmem:[%s1 + $0x760] sm:$0xff]
    %v275 = vld [vmem:[%s1 + $0x768] sm:$0xff]
    %v276 = vld [vmem:[%s1 + $0x770] sm:$0xff]
    %v277 = vld [vmem:[%s1 + $0x778] sm:$0xff]
    %v278 = vld [vmem:[%s1 + $0x780] sm:$0xff]
    %v279 = vld [vmem:[%s1 + $0x788] sm:$0xff]
    %v280 = vld [vmem:[%s1 + $0x790] sm:$0xff]
    %v281 = vld [vmem:[%s1 + $0x798] sm:$0xff]
    %v282 = vld [vmem:[%s1 + $0x7a0] sm:$0xff]
    %v283 = vld [vmem:[%s1 + $0x7a8] sm:$0xff]
    %v284 = vld [vmem:[%s1 + $0x7b0] sm:$0xff]
    %v285 = vld [vmem:[%s1 + $0x7b8] sm:$0xff]
    %v286 = vld [vmem:[%s1 + $0x7c0] sm:$0xff]
    %v287 = vld [vmem:[%s1 + $0x7c8] sm:$0xff]
    %v288 = vld [vmem:[%s1 + $0x7d0] sm:$0xff]
    %v289 = vld [vmem:[%s1 + $0x7d8] sm:$0xff]
    %v290 = vld [vmem:[%s1 + $0x7e0] sm:$0xff]
    %v291 = vld [vmem:[%s1 + $0x7e8] sm:$0xff]
    %v292 = vld [vmem:[%s1 + $0x7f0] sm:$0xff]
    %v293 = vld [vmem:[%s1 + $0x7f8] sm:$0xff]
    %v294 = vld [vmem:[%s1 + $0x800] sm:$0xff]
    %v295 = vld [vmem:[%s1 + $0x808] sm:$0xff]
    %v296 = vld [vmem:[%s1 + $0x810] sm:$0xff]
    %v297 = vld [vmem:[%s1 + $0x818] sm:$0xff]
    %v298 = vld [vmem:[%s1 + $0x820] sm:$0xff]
    %v299 = vld [vmem:[%s1 + $0x828] sm:$0xff]
    %v300 = vld [vmem:[%s1 + $0x830] sm:$0xff]
    %v301 = vld [vmem:[%s1 + $0x838] sm:$0xff]
    %v302 = vld [vmem:[%s1 + $0x840] sm:$0xff]
    %v303 = vld [vmem:[%s1 + $0x848] sm:$0xff]
    %v304 = vld [vmem:[%s1 + $0x850] sm:$0xff]
    %v305 = vld [vmem:[%s1 + $0x858] sm:$0xff]
    %v306 = vld [vmem:[%s1 + $0x860] sm:$0xff]
    %v307 = vld [vmem:[%s1 + $0x868] sm:$0xff]
    %v308 = vld [vmem:[%s1 + $0x870] sm:$0xff]
    %v309 = vld [vmem:[%s1 + $0x878] sm:$0xff]
    %v310 = vld [vmem:[%s1 + $0x880] sm:$0xff]
    %v311 = vld [vmem:[%s1 + $0x888] sm:$0xff]
    %v312 = vld [vmem:[%s1 + $0x890] sm:$0xff]
    %v313 = vld [vmem:[%s1 + $0x898] sm:$0xff]
    %v314 = vld [vmem:[%s1 + $0x8a0] sm:$0xff]
    %v315 = vld [vmem:[%s1 + $0x8a8] sm:$0xff]
    %v316 = vld [vmem:[%s1 + $0x8b0] sm:$0xff]
    %v317 = vld [vmem:[%s1 + $0x8b8] sm:$0xff]
    %v318 = vld [vmem:[%s1 + $0x8c0] sm:$0xff]
    %v319 = vld [vmem:[%s1 + $0x8c8] sm:$0xff]
    %v320 = vld [vmem:[%s1 + $0x8d0] sm:$0xff]
    %v321 = vld [vmem:[%s1 + $0x8d8] sm:$0xff]
    %v322 = vld [vmem:[%s1 + $0x8e0] sm:$0xff]
    %v323 = vld [vmem:[%s1 + $0x8e8] sm:$0xff]
    %v324 = vld [vmem:[%s1 + $0x8f0] sm:$0xff]
    %v325 = vld [vmem:[%s1 + $0x8f8] sm:$0xff]
    %v326 = vld [vmem:[%s1 + $0x900] sm:$0xff]
    %v327 = vld [vmem:[%s1 + $0x908] sm:$0xff]
    %v328 = vld [vmem:[%s1 + $0x910] sm:$0xff]
    %v329 = vld [vmem:[%s1 + $0x918] sm:$0xff]
    %v330 = vld [vmem:[%s1 + $0x920] sm:$0xff]
    %v331 = vld [vmem:[%s1 + $0x928] sm:$0xff]
    %v332 = vld [vmem:[%s1 + $0x930] sm:$0xff]
    %v333 = vld [vmem:[%s1 + $0x938] sm:$0xff]
    %v334 = vld [vmem:[%s1 + $0x940] sm:$0xff]
    %v335 = vld [vmem:[%s1 + $0x948] sm:$0xff]
    %v336 = vld [vmem:[%s1 + $0x950] sm:$0xff]
    %v337 = vld [vmem:[%s1 + $0x958] sm:$0xff]
    %v338 = vld [vmem:[%s1 + $0x960] sm:$0xff]
    %v339 = vld [vmem:[%s1 + $0x968] sm:$0xff]
    %v340 = vld [vmem:[%s1 + $0x970] sm:$0xff]
    %v341 = vld [vmem:[%s1 + $0x978] sm:$0xff]
    %v342 = vld [vmem:[%s1 + $0x980] sm:$0xff]
    %v343 = vld [vmem:[%s1 + $0x988] sm:$0xff]
    %v344 = vld [vmem:[%s1 + $0x990] sm:$0xff]
    %v345 = vld [vmem:[%s1 + $0x998] sm:$0xff]
    %v346 = vld [vmem:[%s1 + $0x9a0] sm:$0xff]
    %v347 = vld [vmem:[%s1 + $0x9a8] sm:$0xff]
    %v348 = vld [vmem:[%s1 + $0x9b0] sm:$0xff]
    %v349 = vld [vmem:[%s1 + $0x9b8] sm:$0xff]
    %v350 = vld [vmem:[%s1 + $0x9c0] sm:$0xff]
    %v351 = vld [vmem:[%s1 + $0x9c8] sm:$0xff]
    %v352 = vld [vmem:[%s1 + $0x9d0] sm:$0xff]
    %v353 = vld [vmem:[%s1 + $0x9d8] sm:$0xff]
    %v354 = vld [vmem:[%s1 + $0x9e0] sm:$0xff]
    %v355 = vld [vmem:[%s1 + $0x9e8] sm:$0xff]
    %v356 = vld [vmem:[%s1 + $0x9f0] sm:$0xff]
    %v357 = vld [vmem:[%s1 + $0x9f8] sm:$0xff]
    %v358 = vld [vmem:[%s1 + $0xa00] sm:$0xff]
    %v359 = vld [vmem:[%s1 + $0xa08] sm:$0xff]
    %v360 = vld [vmem:[%s1 + $0xa10] sm:$0xff]
    %v361 = vld [vmem:[%s1 + $0xa18] sm:$0xff]
    %v362 = vld [vmem:[%s1 + $0xa20] sm:$0xff]
    %v363 = vld [vmem:[%s1 + $0xa28] sm:$0xff]
    %v364 = vld [vmem:[%s1 + $0xa30] sm:$0xff]
    %v365 = vld [vmem:[%s1 + $0xa38] sm:$0xff]
    %v366 = vld [vmem:[%s1 + $0xa40] sm:$0xff]
    %v367 = vld [vmem:[%s1 + $0xa48] sm:$0xff]
    %v368 = vld [vmem:[%s1 + $0xa50] sm:$0xff]
    %v369 = vld [vmem:[%s1 + $0xa58] sm:$0xff]
    %v370 = vld [vmem:[%s1 + $0xa60] sm:$0xff]
    %v371 = vld [vmem:[%s1 + $0xa68] sm:$0xff]
    %v372 = vld [vmem:[%s1 + $0xa70] sm:$0xff]
    %v373 = vld [vmem:[%s1 + $0xa78] sm:$0xff]
    %v374 = vld [vmem:[%s1 + $0xa80] sm:$0xff]
    %v375 = vld [vmem:[%s1 + $0xa88] sm:$0xff]
    %v376 = vld [vmem:[%s1 + $0xa90] sm:$0xff]
    %v377 = vld [vmem:[%s1 + $0xa98] sm:$0xff]
    %v378 = vld [vmem:[%s1 + $0xaa0] sm:$0xff]
    %v379 = vld [vmem:[%s1 + $0xaa8] sm:$0xff]
    %v380 = vld [vmem:[%s1 + $0xab0] sm:$0xff]
    %v381 = vld [vmem:[%s1 + $0xab8] sm:$0xff]
    %v382 = vld [vmem:[%s1 + $0xac0] sm:$0xff]
    %v383 = vld [vmem:[%s1 + $0xac8] sm:$0xff]
    %v384 = vld [vmem:[%s1 + $0xad0] sm:$0xff]
    %v385 = vld [vmem:[%s1 + $0xad8] sm:$0xff]
    %v386 = vld [vmem:[%s1 + $0xae0] sm:$0xff]
    %v387 = vld [vmem:[%s1 + $0xae8] sm:$0xff]
    %v388 = vld [vmem:[%s1 + $0xaf0] sm:$0xff]
    %v389 = vld [vmem:[%s1 + $0xaf8] sm:$0xff]
    %v390 = vld [vmem:[%s1 + $0xb00] sm:$0xff]
    %v391 = vld [vmem:[%s1 + $0xb08] sm:$0xff]
    %v392 = vld [vmem:[%s1 + $0xb10] sm:$0xff]
    %v393 = vld [vmem:[%s1 + $0xb18] sm:$0xff]
    %v394 = vld [vmem:[%s1 + $0xb20] sm:$0xff]
    %v395 = vld [vmem:[%s1 + $0xb28] sm:$0xff]
    %v396 = vld [vmem:[%s1 + $0xb30] sm:$0xff]
    %v397 = vld [vmem:[%s1 + $0xb38] sm:$0xff]
    %v398 = vld [vmem:[%s1 + $0xb40] sm:$0xff]
    %v399 = vld [vmem:[%s1 + $0xb48] sm:$0xff]
    %v400 = vld [vmem:[%s1 + $0xb50] sm:$0xff]
    %v401 = vld [vmem:[%s1 + $0xb58] sm:$0xff]
    %v402 = vld [vmem:[%s1 + $0xb60] sm:$0xff]
    %v403 = vld [vmem:[%s1 + $0xb68] sm:$0xff]
    %v404 = vld [vmem:[%s1 + $0xb70] sm:$0xff]
    %v405 = vld [vmem:[%s1 + $0xb78] sm:$0xff]
    %v406 = vld [vmem:[%s1 + $0xb80] sm:$0xff]
    %v407 = vld [vmem:[%s1 + $0xb88] sm:$0xff]
    %v408 = vld [vmem:[%s1 + $0xb90] sm:$0xff]
    %v409 = vld [vmem:[%s1 + $0xb98] sm:$0xff]
    %v410 = vld [vmem:[%s1 + $0xba0] sm:$0xff]
    %v411 = vld [vmem:[%s1 + $0xba8] sm:$0xff]
    %v412 = vld [vmem:[%s1 + $0xbb0] sm:$0xff]
    %v413 = vld [vmem:[%s1 + $0xbb8] sm:$0xff]
    %v414 = vld [vmem:[%s1 + $0xbc0] sm:$0xff]
    %v415 = vld [vmem:[%s1 + $0xbc8] sm:$0xff]
    %v416 = vld [vmem:[%s1 + $0xbd0] sm:$0xff]
    %v417 = vld [vmem:[%s1 + $0xbd8] sm:$0xff]
    %v418 = vld [vmem:[%s1 + $0xbe0] sm:$0xff]
    %v419 = vld [vmem:[%s1 + $0xbe8] sm:$0xff]
    %v420 = vld [vmem:[%s1 + $0xbf0] sm:$0xff]
    %v421 = vld [vmem:[%s1 + $0xbf8] sm:$0xff]
    %v422 = vunpack.c.l.bf16 %v38
    %v423 = vunpack.c.h.bf16 %v38
    %v424 = vunpack.c.l.bf16 %v39
    %v425 = vunpack.c.h.bf16 %v39
    %v426 = vunpack.c.l.bf16 %v40
    %v427 = vunpack.c.h.bf16 %v40
    %v428 = vunpack.c.l.bf16 %v41
    %v429 = vunpack.c.h.bf16 %v41
    %v430 = vunpack.c.l.bf16 %v42
    %v431 = vunpack.c.h.bf16 %v42
    %v432 = vunpack.c.l.bf16 %v43
    %v433 = vunpack.c.h.bf16 %v43
    %v434 = vunpack.c.l.bf16 %v44
    %v435 = vunpack.c.h.bf16 %v44
    %v436 = vunpack.c.l.bf16 %v45
    %v437 = vunpack.c.h.bf16 %v45
    %v438 = vunpack.c.l.bf16 %v46
    %v439 = vunpack.c.h.bf16 %v46
    %v440 = vunpack.c.l.bf16 %v47
    %v441 = vunpack.c.h.bf16 %v47
    %v442 = vunpack.c.l.bf16 %v48
    %v443 = vunpack.c.h.bf16 %v48
    %v444 = vunpack.c.l.bf16 %v49
    %v445 = vunpack.c.h.bf16 %v49
    %v446 = vunpack.c.l.bf16 %v50
    %v447 = vunpack.c.h.bf16 %v50
    %v448 = vunpack.c.l.bf16 %v51
    %v449 = vunpack.c.h.bf16 %v51
    %v450 = vunpack.c.l.bf16 %v52
    %v451 = vunpack.c.h.bf16 %v52
    %v452 = vunpack.c.l.bf16 %v53
    %v453 = vunpack.c.h.bf16 %v53
    %v454 = vunpack.c.l.bf16 %v54
    %v455 = vunpack.c.h.bf16 %v54
    %v456 = vunpack.c.l.bf16 %v55
    %v457 = vunpack.c.h.bf16 %v55
    %v458 = vunpack.c.l.bf16 %v56
    %v459 = vunpack.c.h.bf16 %v56
    %v460 = vunpack.c.l.bf16 %v57
    %v461 = vunpack.c.h.bf16 %v57
    %v462 = vunpack.c.l.bf16 %v58
    %v463 = vunpack.c.h.bf16 %v58
    %v464 = vunpack.c.l.bf16 %v59
    %v465 = vunpack.c.h.bf16 %v59
    %v466 = vunpack.c.l.bf16 %v60
    %v467 = vunpack.c.h.bf16 %v60
    %v468 = vunpack.c.l.bf16 %v61
    %v469 = vunpack.c.h.bf16 %v61
    %v470 = vunpack.c.l.bf16 %v62
    %v471 = vunpack.c.h.bf16 %v62
    %v472 = vunpack.c.l.bf16 %v63
    %v473 = vunpack.c.h.bf16 %v63
    %v474 = vunpack.c.l.bf16 %v64
    %v475 = vunpack.c.h.bf16 %v64
    %v476 = vunpack.c.l.bf16 %v65
    %v477 = vunpack.c.h.bf16 %v65
    %v478 = vunpack.c.l.bf16 %v66
    %v479 = vunpack.c.h.bf16 %v66
    %v480 = vunpack.c.l.bf16 %v67
    %v481 = vunpack.c.h.bf16 %v67
    %v482 = vunpack.c.l.bf16 %v68
    %v483 = vunpack.c.h.bf16 %v68
    %v484 = vunpack.c.l.bf16 %v69
    %v485 = vunpack.c.h.bf16 %v69
    %v486 = vunpack.c.l.bf16 %v70
    %v487 = vunpack.c.h.bf16 %v70
    %v488 = vunpack.c.l.bf16 %v71
    %v489 = vunpack.c.h.bf16 %v71
    %v490 = vunpack.c.l.bf16 %v72
    %v491 = vunpack.c.h.bf16 %v72
    %v492 = vunpack.c.l.bf16 %v73
    %v493 = vunpack.c.h.bf16 %v73
    %v494 = vunpack.c.l.bf16 %v74
    %v495 = vunpack.c.h.bf16 %v74
    %v496 = vunpack.c.l.bf16 %v75
    %v497 = vunpack.c.h.bf16 %v75
    %v498 = vunpack.c.l.bf16 %v76
    %v499 = vunpack.c.h.bf16 %v76
    %v500 = vunpack.c.l.bf16 %v77
    %v501 = vunpack.c.h.bf16 %v77
    %v502 = vunpack.c.l.bf16 %v78
    %v503 = vunpack.c.h.bf16 %v78
    %v504 = vunpack.c.l.bf16 %v79
    %v505 = vunpack.c.h.bf16 %v79
    %v506 = vunpack.c.l.bf16 %v80
    %v507 = vunpack.c.h.bf16 %v80
    %v508 = vunpack.c.l.bf16 %v81
    %v509 = vunpack.c.h.bf16 %v81
    %v510 = vunpack.c.l.bf16 %v82
    %v511 = vunpack.c.h.bf16 %v82
    %v512 = vunpack.c.l.bf16 %v83
    %v513 = vunpack.c.h.bf16 %v83
    %v514 = vunpack.c.l.bf16 %v84
    %v515 = vunpack.c.h.bf16 %v84
    %v516 = vunpack.c.l.bf16 %v85
    %v517 = vunpack.c.h.bf16 %v85
    %v518 = vunpack.c.l.bf16 %v86
    %v519 = vunpack.c.h.bf16 %v86
    %v520 = vunpack.c.l.bf16 %v87
    %v521 = vunpack.c.h.bf16 %v87
    %v522 = vunpack.c.l.bf16 %v88
    %v523 = vunpack.c.h.bf16 %v88
    %v524 = vunpack.c.l.bf16 %v89
    %v525 = vunpack.c.h.bf16 %v89
    %v526 = vunpack.c.l.bf16 %v90
    %v527 = vunpack.c.h.bf16 %v90
    %v528 = vunpack.c.l.bf16 %v91
    %v529 = vunpack.c.h.bf16 %v91
    %v530 = vunpack.c.l.bf16 %v92
    %v531 = vunpack.c.h.bf16 %v92
    %v532 = vunpack.c.l.bf16 %v93
    %v533 = vunpack.c.h.bf16 %v93
    %v534 = vunpack.c.l.bf16 %v94
    %v535 = vunpack.c.h.bf16 %v94
    %v536 = vunpack.c.l.bf16 %v95
    %v537 = vunpack.c.h.bf16 %v95
    %v538 = vunpack.c.l.bf16 %v96
    %v539 = vunpack.c.h.bf16 %v96
    %v540 = vunpack.c.l.bf16 %v97
    %v541 = vunpack.c.h.bf16 %v97
    %v542 = vunpack.c.l.bf16 %v98
    %v543 = vunpack.c.h.bf16 %v98
    %v544 = vunpack.c.l.bf16 %v99
    %v545 = vunpack.c.h.bf16 %v99
    %v546 = vunpack.c.l.bf16 %v100
    %v547 = vunpack.c.h.bf16 %v100
    %v548 = vunpack.c.l.bf16 %v101
    %v549 = vunpack.c.h.bf16 %v101
    %v550 = vunpack.c.l.bf16 %v102
    %v551 = vunpack.c.h.bf16 %v102
    %v552 = vunpack.c.l.bf16 %v103
    %v553 = vunpack.c.h.bf16 %v103
    %v554 = vunpack.c.l.bf16 %v104
    %v555 = vunpack.c.h.bf16 %v104
    %v556 = vunpack.c.l.bf16 %v105
    %v557 = vunpack.c.h.bf16 %v105
    %v558 = vunpack.c.l.bf16 %v106
    %v559 = vunpack.c.h.bf16 %v106
    %v560 = vunpack.c.l.bf16 %v107
    %v561 = vunpack.c.h.bf16 %v107
    %v562 = vunpack.c.l.bf16 %v108
    %v563 = vunpack.c.h.bf16 %v108
    %v564 = vunpack.c.l.bf16 %v109
    %v565 = vunpack.c.h.bf16 %v109
    %v566 = vunpack.c.l.bf16 %v110
    %v567 = vunpack.c.h.bf16 %v110
    %v568 = vunpack.c.l.bf16 %v111
    %v569 = vunpack.c.h.bf16 %v111
    %v570 = vunpack.c.l.bf16 %v112
    %v571 = vunpack.c.h.bf16 %v112
    %v572 = vunpack.c.l.bf16 %v113
    %v573 = vunpack.c.h.bf16 %v113
    %v574 = vunpack.c.l.bf16 %v114
    %v575 = vunpack.c.h.bf16 %v114
    %v576 = vunpack.c.l.bf16 %v115
    %v577 = vunpack.c.h.bf16 %v115
    %v578 = vunpack.c.l.bf16 %v116
    %v579 = vunpack.c.h.bf16 %v116
    %v580 = vunpack.c.l.bf16 %v117
    %v581 = vunpack.c.h.bf16 %v117
    %v582 = vunpack.c.l.bf16 %v118
    %v583 = vunpack.c.h.bf16 %v118
    %v584 = vunpack.c.l.bf16 %v119
    %v585 = vunpack.c.h.bf16 %v119
    %v586 = vunpack.c.l.bf16 %v120
    %v587 = vunpack.c.h.bf16 %v120
    %v588 = vunpack.c.l.bf16 %v121
    %v589 = vunpack.c.h.bf16 %v121
    %v590 = vunpack.c.l.bf16 %v122
    %v591 = vunpack.c.h.bf16 %v122
    %v592 = vunpack.c.l.bf16 %v123
    %v593 = vunpack.c.h.bf16 %v123
    %v594 = vunpack.c.l.bf16 %v124
    %v595 = vunpack.c.h.bf16 %v124
    %v596 = vunpack.c.l.bf16 %v125
    %v597 = vunpack.c.h.bf16 %v125
    %v598 = vunpack.c.l.bf16 %v126
    %v599 = vunpack.c.h.bf16 %v126
    %v600 = vunpack.c.l.bf16 %v127
    %v601 = vunpack.c.h.bf16 %v127
    %v602 = vunpack.c.l.bf16 %v128
    %v603 = vunpack.c.h.bf16 %v128
    %v604 = vunpack.c.l.bf16 %v129
    %v605 = vunpack.c.h.bf16 %v129
    %v606 = vunpack.c.l.bf16 %v130
    %v607 = vunpack.c.h.bf16 %v130
    %v608 = vunpack.c.l.bf16 %v131
    %v609 = vunpack.c.h.bf16 %v131
    %v610 = vunpack.c.l.bf16 %v132
    %v611 = vunpack.c.h.bf16 %v132
    %v612 = vunpack.c.l.bf16 %v133
    %v613 = vunpack.c.h.bf16 %v133
    %v614 = vunpack.c.l.bf16 %v134
    %v615 = vunpack.c.h.bf16 %v134
    %v616 = vunpack.c.l.bf16 %v135
    %v617 = vunpack.c.h.bf16 %v135
    %v618 = vunpack.c.l.bf16 %v136
    %v619 = vunpack.c.h.bf16 %v136
    %v620 = vunpack.c.l.bf16 %v137
    %v621 = vunpack.c.h.bf16 %v137
    %v622 = vunpack.c.l.bf16 %v138
    %v623 = vunpack.c.h.bf16 %v138
    %v624 = vunpack.c.l.bf16 %v139
    %v625 = vunpack.c.h.bf16 %v139
    %v626 = vunpack.c.l.bf16 %v140
    %v627 = vunpack.c.h.bf16 %v140
    %v628 = vunpack.c.l.bf16 %v141
    %v629 = vunpack.c.h.bf16 %v141
    %v630 = vunpack.c.l.bf16 %v142
    %v631 = vunpack.c.h.bf16 %v142
    %v632 = vunpack.c.l.bf16 %v143
    %v633 = vunpack.c.h.bf16 %v143
    %v634 = vunpack.c.l.bf16 %v144
    %v635 = vunpack.c.h.bf16 %v144
    %v636 = vunpack.c.l.bf16 %v145
    %v637 = vunpack.c.h.bf16 %v145
    %v638 = vunpack.c.l.bf16 %v146
    %v639 = vunpack.c.h.bf16 %v146
    %v640 = vunpack.c.l.bf16 %v147
    %v641 = vunpack.c.h.bf16 %v147
    %v642 = vunpack.c.l.bf16 %v148
    %v643 = vunpack.c.h.bf16 %v148
    %v644 = vunpack.c.l.bf16 %v149
    %v645 = vunpack.c.h.bf16 %v149
    %v646 = vunpack.c.l.bf16 %v150
    %v647 = vunpack.c.h.bf16 %v150
    %v648 = vunpack.c.l.bf16 %v151
    %v649 = vunpack.c.h.bf16 %v151
    %v650 = vunpack.c.l.bf16 %v152
    %v651 = vunpack.c.h.bf16 %v152
    %v652 = vunpack.c.l.bf16 %v153
    %v653 = vunpack.c.h.bf16 %v153
    %v654 = vunpack.c.l.bf16 %v154
    %v655 = vunpack.c.h.bf16 %v154
    %v656 = vunpack.c.l.bf16 %v155
    %v657 = vunpack.c.h.bf16 %v155
    %v658 = vunpack.c.l.bf16 %v156
    %v659 = vunpack.c.h.bf16 %v156
    %v660 = vunpack.c.l.bf16 %v157
    %v661 = vunpack.c.h.bf16 %v157
    %v662 = vunpack.c.l.bf16 %v158
    %v663 = vunpack.c.h.bf16 %v158
    %v664 = vunpack.c.l.bf16 %v159
    %v665 = vunpack.c.h.bf16 %v159
    %v666 = vunpack.c.l.bf16 %v160
    %v667 = vunpack.c.h.bf16 %v160
    %v668 = vunpack.c.l.bf16 %v161
    %v669 = vunpack.c.h.bf16 %v161
    %v670 = vunpack.c.l.bf16 %v162
    %v671 = vunpack.c.h.bf16 %v162
    %v672 = vunpack.c.l.bf16 %v163
    %v673 = vunpack.c.h.bf16 %v163
    %v674 = vunpack.c.l.bf16 %v164
    %v675 = vunpack.c.h.bf16 %v164
    %v676 = vunpack.c.l.bf16 %v165
    %v677 = vunpack.c.h.bf16 %v165
    %v678 = vunpack.c.l.bf16 %v166
    %v679 = vunpack.c.h.bf16 %v166
    %v680 = vunpack.c.l.bf16 %v167
    %v681 = vunpack.c.h.bf16 %v167
    %v682 = vunpack.c.l.bf16 %v168
    %v683 = vunpack.c.h.bf16 %v168
    %v684 = vunpack.c.l.bf16 %v169
    %v685 = vunpack.c.h.bf16 %v169
    %v686 = vunpack.c.l.bf16 %v170
    %v687 = vunpack.c.h.bf16 %v170
    %v688 = vunpack.c.l.bf16 %v171
    %v689 = vunpack.c.h.bf16 %v171
    %v690 = vunpack.c.l.bf16 %v172
    %v691 = vunpack.c.h.bf16 %v172
    %v692 = vunpack.c.l.bf16 %v173
    %v693 = vunpack.c.h.bf16 %v173
    %v694 = vunpack.c.l.bf16 %v174
    %v695 = vunpack.c.h.bf16 %v174
    %v696 = vunpack.c.l.bf16 %v175
    %v697 = vunpack.c.h.bf16 %v175
    %v698 = vunpack.c.l.bf16 %v176
    %v699 = vunpack.c.h.bf16 %v176
    %v700 = vunpack.c.l.bf16 %v177
    %v701 = vunpack.c.h.bf16 %v177
    %v702 = vunpack.c.l.bf16 %v178
    %v703 = vunpack.c.h.bf16 %v178
    %v704 = vunpack.c.l.bf16 %v179
    %v705 = vunpack.c.h.bf16 %v179
    %v706 = vunpack.c.l.bf16 %v180
    %v707 = vunpack.c.h.bf16 %v180
    %v708 = vunpack.c.l.bf16 %v181
    %v709 = vunpack.c.h.bf16 %v181
    %v710 = vunpack.c.l.bf16 %v182
    %v711 = vunpack.c.h.bf16 %v182
    %v712 = vunpack.c.l.bf16 %v183
    %v713 = vunpack.c.h.bf16 %v183
    %v714 = vunpack.c.l.bf16 %v184
    %v715 = vunpack.c.h.bf16 %v184
    %v716 = vunpack.c.l.bf16 %v185
    %v717 = vunpack.c.h.bf16 %v185
    %v718 = vunpack.c.l.bf16 %v186
    %v719 = vunpack.c.h.bf16 %v186
    %v720 = vunpack.c.l.bf16 %v187
    %v721 = vunpack.c.h.bf16 %v187
    %v722 = vunpack.c.l.bf16 %v188
    %v723 = vunpack.c.h.bf16 %v188
    %v724 = vunpack.c.l.bf16 %v189
    %v725 = vunpack.c.h.bf16 %v189
    %v726 = vunpack.c.l.bf16 %v190
    %v727 = vunpack.c.h.bf16 %v190
    %v728 = vunpack.c.l.bf16 %v191
    %v729 = vunpack.c.h.bf16 %v191
    %v730 = vunpack.c.l.bf16 %v192
    %v731 = vunpack.c.h.bf16 %v192
    %v732 = vunpack.c.l.bf16 %v193
    %v733 = vunpack.c.h.bf16 %v193
    %v734 = vunpack.c.l.bf16 %v194
    %v735 = vunpack.c.h.bf16 %v194
    %v736 = vunpack.c.l.bf16 %v195
    %v737 = vunpack.c.h.bf16 %v195
    %v738 = vunpack.c.l.bf16 %v196
    %v739 = vunpack.c.h.bf16 %v196
    %v740 = vunpack.c.l.bf16 %v197
    %v741 = vunpack.c.h.bf16 %v197
    %v742 = vunpack.c.l.bf16 %v198
    %v743 = vunpack.c.h.bf16 %v198
    %v744 = vunpack.c.l.bf16 %v199
    %v745 = vunpack.c.h.bf16 %v199
    %v746 = vunpack.c.l.bf16 %v200
    %v747 = vunpack.c.h.bf16 %v200
    %v748 = vunpack.c.l.bf16 %v201
    %v749 = vunpack.c.h.bf16 %v201
    %v750 = vunpack.c.l.bf16 %v202
    %v751 = vunpack.c.h.bf16 %v202
    %v752 = vunpack.c.l.bf16 %v203
    %v753 = vunpack.c.h.bf16 %v203
    %v754 = vunpack.c.l.bf16 %v204
    %v755 = vunpack.c.h.bf16 %v204
    %v756 = vunpack.c.l.bf16 %v205
    %v757 = vunpack.c.h.bf16 %v205
    %v758 = vunpack.c.l.bf16 %v206
    %v759 = vunpack.c.h.bf16 %v206
    %v760 = vunpack.c.l.bf16 %v207
    %v761 = vunpack.c.h.bf16 %v207
    %v762 = vunpack.c.l.bf16 %v208
    %v763 = vunpack.c.h.bf16 %v208
    %v764 = vunpack.c.l.bf16 %v209
    %v765 = vunpack.c.h.bf16 %v209
    %v766 = vunpack.c.l.bf16 %v210
    %v767 = vunpack.c.h.bf16 %v210
    %v768 = vunpack.c.l.bf16 %v211
    %v769 = vunpack.c.h.bf16 %v211
    %v770 = vunpack.c.l.bf16 %v212
    %v771 = vunpack.c.h.bf16 %v212
    %v772 = vunpack.c.l.bf16 %v213
    %v773 = vunpack.c.h.bf16 %v213
    %v774 = vunpack.c.l.bf16 %v214
    %v775 = vunpack.c.h.bf16 %v214
    %v776 = vunpack.c.l.bf16 %v215
    %v777 = vunpack.c.h.bf16 %v215
    %v778 = vunpack.c.l.bf16 %v216
    %v779 = vunpack.c.h.bf16 %v216
    %v780 = vunpack.c.l.bf16 %v217
    %v781 = vunpack.c.h.bf16 %v217
    %v782 = vunpack.c.l.bf16 %v218
    %v783 = vunpack.c.h.bf16 %v218
    %v784 = vunpack.c.l.bf16 %v219
    %v785 = vunpack.c.h.bf16 %v219
    %v786 = vunpack.c.l.bf16 %v220
    %v787 = vunpack.c.h.bf16 %v220
    %v788 = vunpack.c.l.bf16 %v221
    %v789 = vunpack.c.h.bf16 %v221
    %v790 = vunpack.c.l.bf16 %v222
    %v791 = vunpack.c.h.bf16 %v222
    %v792 = vunpack.c.l.bf16 %v223
    %v793 = vunpack.c.h.bf16 %v223
    %v794 = vunpack.c.l.bf16 %v224
    %v795 = vunpack.c.h.bf16 %v224
    %v796 = vunpack.c.l.bf16 %v225
    %v797 = vunpack.c.h.bf16 %v225
    %v798 = vunpack.c.l.bf16 %v226
    %v799 = vunpack.c.h.bf16 %v226
    %v800 = vunpack.c.l.bf16 %v227
    %v801 = vunpack.c.h.bf16 %v227
    %v802 = vunpack.c.l.bf16 %v228
    %v803 = vunpack.c.h.bf16 %v228
    %v804 = vunpack.c.l.bf16 %v229
    %v805 = vunpack.c.h.bf16 %v229
    %v806 = vunpack.c.l.bf16 %v230
    %v807 = vunpack.c.h.bf16 %v230
    %v808 = vunpack.c.l.bf16 %v231
    %v809 = vunpack.c.h.bf16 %v231
    %v810 = vunpack.c.l.bf16 %v232
    %v811 = vunpack.c.h.bf16 %v232
    %v812 = vunpack.c.l.bf16 %v233
    %v813 = vunpack.c.h.bf16 %v233
    %v814 = vunpack.c.l.bf16 %v234
    %v815 = vunpack.c.h.bf16 %v234
    %v816 = vunpack.c.l.bf16 %v235
    %v817 = vunpack.c.h.bf16 %v235
    %v818 = vunpack.c.l.bf16 %v236
    %v819 = vunpack.c.h.bf16 %v236
    %v820 = vunpack.c.l.bf16 %v237
    %v821 = vunpack.c.h.bf16 %v237
    %v822 = vunpack.c.l.bf16 %v238
    %v823 = vunpack.c.h.bf16 %v238
    %v824 = vunpack.c.l.bf16 %v239
    %v825 = vunpack.c.h.bf16 %v239
    %v826 = vunpack.c.l.bf16 %v240
    %v827 = vunpack.c.h.bf16 %v240
    %v828 = vunpack.c.l.bf16 %v241
    %v829 = vunpack.c.h.bf16 %v241
    %v830 = vunpack.c.l.bf16 %v242
    %v831 = vunpack.c.h.bf16 %v242
    %v832 = vunpack.c.l.bf16 %v243
    %v833 = vunpack.c.h.bf16 %v243
    %v834 = vunpack.c.l.bf16 %v244
    %v835 = vunpack.c.h.bf16 %v244
    %v836 = vunpack.c.l.bf16 %v245
    %v837 = vunpack.c.h.bf16 %v245
    %v838 = vunpack.c.l.bf16 %v246
    %v839 = vunpack.c.h.bf16 %v246
    %v840 = vunpack.c.l.bf16 %v247
    %v841 = vunpack.c.h.bf16 %v247
    %v842 = vunpack.c.l.bf16 %v248
    %v843 = vunpack.c.h.bf16 %v248
    %v844 = vunpack.c.l.bf16 %v249
    %v845 = vunpack.c.h.bf16 %v249
    %v846 = vunpack.c.l.bf16 %v250
    %v847 = vunpack.c.h.bf16 %v250
    %v848 = vunpack.c.l.bf16 %v251
    %v849 = vunpack.c.h.bf16 %v251
    %v850 = vunpack.c.l.bf16 %v252
    %v851 = vunpack.c.h.bf16 %v252
    %v852 = vunpack.c.l.bf16 %v253
    %v853 = vunpack.c.h.bf16 %v253
    %v854 = vunpack.c.l.bf16 %v254
    %v855 = vunpack.c.h.bf16 %v254
    %v856 = vunpack.c.l.bf16 %v255
    %v857 = vunpack.c.h.bf16 %v255
    %v858 = vunpack.c.l.bf16 %v256
    %v859 = vunpack.c.h.bf16 %v256
    %v860 = vunpack.c.l.bf16 %v257
    %v861 = vunpack.c.h.bf16 %v257
    %v862 = vunpack.c.l.bf16 %v258
    %v863 = vunpack.c.h.bf16 %v258
    %v864 = vunpack.c.l.bf16 %v259
    %v865 = vunpack.c.h.bf16 %v259
    %v866 = vunpack.c.l.bf16 %v260
    %v867 = vunpack.c.h.bf16 %v260
    %v868 = vunpack.c.l.bf16 %v261
    %v869 = vunpack.c.h.bf16 %v261
    %v870 = vunpack.c.l.bf16 %v262
    %v871 = vunpack.c.h.bf16 %v262
    %v872 = vunpack.c.l.bf16 %v263
    %v873 = vunpack.c.h.bf16 %v263
    %v874 = vunpack.c.l.bf16 %v264
    %v875 = vunpack.c.h.bf16 %v264
    %v876 = vunpack.c.l.bf16 %v265
    %v877 = vunpack.c.h.bf16 %v265
    %v878 = vunpack.c.l.bf16 %v266
    %v879 = vunpack.c.h.bf16 %v266
    %v880 = vunpack.c.l.bf16 %v267
    %v881 = vunpack.c.h.bf16 %v267
    %v882 = vunpack.c.l.bf16 %v268
    %v883 = vunpack.c.h.bf16 %v268
    %v884 = vunpack.c.l.bf16 %v269
    %v885 = vunpack.c.h.bf16 %v269
    %v886 = vunpack.c.l.bf16 %v270
    %v887 = vunpack.c.h.bf16 %v270
    %v888 = vunpack.c.l.bf16 %v271
    %v889 = vunpack.c.h.bf16 %v271
    %v890 = vunpack.c.l.bf16 %v272
    %v891 = vunpack.c.h.bf16 %v272
    %v892 = vunpack.c.l.bf16 %v273
    %v893 = vunpack.c.h.bf16 %v273
    %v894 = vunpack.c.l.bf16 %v274
    %v895 = vunpack.c.h.bf16 %v274
    %v896 = vunpack.c.l.bf16 %v275
    %v897 = vunpack.c.h.bf16 %v275
    %v898 = vunpack.c.l.bf16 %v276
    %v899 = vunpack.c.h.bf16 %v276
    %v900 = vunpack.c.l.bf16 %v277
    %v901 = vunpack.c.h.bf16 %v277
    %v902 = vunpack.c.l.bf16 %v278
    %v903 = vunpack.c.h.bf16 %v278
    %v904 = vunpack.c.l.bf16 %v279
    %v905 = vunpack.c.h.bf16 %v279
    %v906 = vunpack.c.l.bf16 %v280
    %v907 = vunpack.c.h.bf16 %v280
    %v908 = vunpack.c.l.bf16 %v281
    %v909 = vunpack.c.h.bf16 %v281
    %v910 = vunpack.c.l.bf16 %v282
    %v911 = vunpack.c.h.bf16 %v282
    %v912 = vunpack.c.l.bf16 %v283
    %v913 = vunpack.c.h.bf16 %v283
    %v914 = vunpack.c.l.bf16 %v284
    %v915 = vunpack.c.h.bf16 %v284
    %v916 = vunpack.c.l.bf16 %v285
    %v917 = vunpack.c.h.bf16 %v285
    %v918 = vunpack.c.l.bf16 %v286
    %v919 = vunpack.c.h.bf16 %v286
    %v920 = vunpack.c.l.bf16 %v287
    %v921 = vunpack.c.h.bf16 %v287
    %v922 = vunpack.c.l.bf16 %v288
    %v923 = vunpack.c.h.bf16 %v288
    %v924 = vunpack.c.l.bf16 %v289
    %v925 = vunpack.c.h.bf16 %v289
    %v926 = vunpack.c.l.bf16 %v290
    %v927 = vunpack.c.h.bf16 %v290
    %v928 = vunpack.c.l.bf16 %v291
    %v929 = vunpack.c.h.bf16 %v291
    %v930 = vunpack.c.l.bf16 %v292
    %v931 = vunpack.c.h.bf16 %v292
    %v932 = vunpack.c.l.bf16 %v293
    %v933 = vunpack.c.h.bf16 %v293
    %v934 = vunpack.c.l.bf16 %v294
    %v935 = vunpack.c.h.bf16 %v294
    %v936 = vunpack.c.l.bf16 %v295
    %v937 = vunpack.c.h.bf16 %v295
    %v938 = vunpack.c.l.bf16 %v296
    %v939 = vunpack.c.h.bf16 %v296
    %v940 = vunpack.c.l.bf16 %v297
    %v941 = vunpack.c.h.bf16 %v297
    %v942 = vunpack.c.l.bf16 %v298
    %v943 = vunpack.c.h.bf16 %v298
    %v944 = vunpack.c.l.bf16 %v299
    %v945 = vunpack.c.h.bf16 %v299
    %v946 = vunpack.c.l.bf16 %v300
    %v947 = vunpack.c.h.bf16 %v300
    %v948 = vunpack.c.l.bf16 %v301
    %v949 = vunpack.c.h.bf16 %v301
    %v950 = vunpack.c.l.bf16 %v302
    %v951 = vunpack.c.h.bf16 %v302
    %v952 = vunpack.c.l.bf16 %v303
    %v953 = vunpack.c.h.bf16 %v303
    %v954 = vunpack.c.l.bf16 %v304
    %v955 = vunpack.c.h.bf16 %v304
    %v956 = vunpack.c.l.bf16 %v305
    %v957 = vunpack.c.h.bf16 %v305
    %v958 = vunpack.c.l.bf16 %v306
    %v959 = vunpack.c.h.bf16 %v306
    %v960 = vunpack.c.l.bf16 %v307
    %v961 = vunpack.c.h.bf16 %v307
    %v962 = vunpack.c.l.bf16 %v308
    %v963 = vunpack.c.h.bf16 %v308
    %v964 = vunpack.c.l.bf16 %v309
    %v965 = vunpack.c.h.bf16 %v309
    %v966 = vunpack.c.l.bf16 %v310
    %v967 = vunpack.c.h.bf16 %v310
    %v968 = vunpack.c.l.bf16 %v311
    %v969 = vunpack.c.h.bf16 %v311
    %v970 = vunpack.c.l.bf16 %v312
    %v971 = vunpack.c.h.bf16 %v312
    %v972 = vunpack.c.l.bf16 %v313
    %v973 = vunpack.c.h.bf16 %v313
    %v974 = vunpack.c.l.bf16 %v314
    %v975 = vunpack.c.h.bf16 %v314
    %v976 = vunpack.c.l.bf16 %v315
    %v977 = vunpack.c.h.bf16 %v315
    %v978 = vunpack.c.l.bf16 %v316
    %v979 = vunpack.c.h.bf16 %v316
    %v980 = vunpack.c.l.bf16 %v317
    %v981 = vunpack.c.h.bf16 %v317
    %v982 = vunpack.c.l.bf16 %v318
    %v983 = vunpack.c.h.bf16 %v318
    %v984 = vunpack.c.l.bf16 %v319
    %v985 = vunpack.c.h.bf16 %v319
    %v986 = vunpack.c.l.bf16 %v320
    %v987 = vunpack.c.h.bf16 %v320
    %v988 = vunpack.c.l.bf16 %v321
    %v989 = vunpack.c.h.bf16 %v321
    %v990 = vunpack.c.l.bf16 %v322
    %v991 = vunpack.c.h.bf16 %v322
    %v992 = vunpack.c.l.bf16 %v323
    %v993 = vunpack.c.h.bf16 %v323
    %v994 = vunpack.c.l.bf16 %v324
    %v995 = vunpack.c.h.bf16 %v324
    %v996 = vunpack.c.l.bf16 %v325
    %v997 = vunpack.c.h.bf16 %v325
    %v998 = vunpack.c.l.bf16 %v326
    %v999 = vunpack.c.h.bf16 %v326
    %v1000 = vunpack.c.l.bf16 %v327
    %v1001 = vunpack.c.h.bf16 %v327
    %v1002 = vunpack.c.l.bf16 %v328
    %v1003 = vunpack.c.h.bf16 %v328
    %v1004 = vunpack.c.l.bf16 %v329
    %v1005 = vunpack.c.h.bf16 %v329
    %v1006 = vunpack.c.l.bf16 %v330
    %v1007 = vunpack.c.h.bf16 %v330
    %v1008 = vunpack.c.l.bf16 %v331
    %v1009 = vunpack.c.h.bf16 %v331
    %v1010 = vunpack.c.l.bf16 %v332
    %v1011 = vunpack.c.h.bf16 %v332
    %v1012 = vunpack.c.l.bf16 %v333
    %v1013 = vunpack.c.h.bf16 %v333
    %v1014 = vunpack.c.l.bf16 %v334
    %v1015 = vunpack.c.h.bf16 %v334
    %v1016 = vunpack.c.l.bf16 %v335
    %v1017 = vunpack.c.h.bf16 %v335
    %v1018 = vunpack.c.l.bf16 %v336
    %v1019 = vunpack.c.h.bf16 %v336
    %v1020 = vunpack.c.l.bf16 %v337
    %v1021 = vunpack.c.h.bf16 %v337
    %v1022 = vunpack.c.l.bf16 %v338
    %v1023 = vunpack.c.h.bf16 %v338
    %v1024 = vunpack.c.l.bf16 %v339
    %v1025 = vunpack.c.h.bf16 %v339
    %v1026 = vunpack.c.l.bf16 %v340
    %v1027 = vunpack.c.h.bf16 %v340
    %v1028 = vunpack.c.l.bf16 %v341
    %v1029 = vunpack.c.h.bf16 %v341
    %v1030 = vunpack.c.l.bf16 %v342
    %v1031 = vunpack.c.h.bf16 %v342
    %v1032 = vunpack.c.l.bf16 %v343
    %v1033 = vunpack.c.h.bf16 %v343
    %v1034 = vunpack.c.l.bf16 %v344
    %v1035 = vunpack.c.h.bf16 %v344
    %v1036 = vunpack.c.l.bf16 %v345
    %v1037 = vunpack.c.h.bf16 %v345
    %v1038 = vunpack.c.l.bf16 %v346
    %v1039 = vunpack.c.h.bf16 %v346
    %v1040 = vunpack.c.l.bf16 %v347
    %v1041 = vunpack.c.h.bf16 %v347
    %v1042 = vunpack.c.l.bf16 %v348
    %v1043 = vunpack.c.h.bf16 %v348
    %v1044 = vunpack.c.l.bf16 %v349
    %v1045 = vunpack.c.h.bf16 %v349
    %v1046 = vunpack.c.l.bf16 %v350
    %v1047 = vunpack.c.h.bf16 %v350
    %v1048 = vunpack.c.l.bf16 %v351
    %v1049 = vunpack.c.h.bf16 %v351
    %v1050 = vunpack.c.l.bf16 %v352
    %v1051 = vunpack.c.h.bf16 %v352
    %v1052 = vunpack.c.l.bf16 %v353
    %v1053 = vunpack.c.h.bf16 %v353
    %v1054 = vunpack.c.l.bf16 %v354
    %v1055 = vunpack.c.h.bf16 %v354
    %v1056 = vunpack.c.l.bf16 %v355
    %v1057 = vunpack.c.h.bf16 %v355
    %v1058 = vunpack.c.l.bf16 %v356
    %v1059 = vunpack.c.h.bf16 %v356
    %v1060 = vunpack.c.l.bf16 %v357
    %v1061 = vunpack.c.h.bf16 %v357
    %v1062 = vunpack.c.l.bf16 %v358
    %v1063 = vunpack.c.h.bf16 %v358
    %v1064 = vunpack.c.l.bf16 %v359
    %v1065 = vunpack.c.h.bf16 %v359
    %v1066 = vunpack.c.l.bf16 %v360
    %v1067 = vunpack.c.h.bf16 %v360
    %v1068 = vunpack.c.l.bf16 %v361
    %v1069 = vunpack.c.h.bf16 %v361
    %v1070 = vunpack.c.l.bf16 %v362
    %v1071 = vunpack.c.h.bf16 %v362
    %v1072 = vunpack.c.l.bf16 %v363
    %v1073 = vunpack.c.h.bf16 %v363
    %v1074 = vunpack.c.l.bf16 %v364
    %v1075 = vunpack.c.h.bf16 %v364
    %v1076 = vunpack.c.l.bf16 %v365
    %v1077 = vunpack.c.h.bf16 %v365
    %v1078 = vunpack.c.l.bf16 %v366
    %v1079 = vunpack.c.h.bf16 %v366
    %v1080 = vunpack.c.l.bf16 %v367
    %v1081 = vunpack.c.h.bf16 %v367
    %v1082 = vunpack.c.l.bf16 %v368
    %v1083 = vunpack.c.h.bf16 %v368
    %v1084 = vunpack.c.l.bf16 %v369
    %v1085 = vunpack.c.h.bf16 %v369
    %v1086 = vunpack.c.l.bf16 %v370
    %v1087 = vunpack.c.h.bf16 %v370
    %v1088 = vunpack.c.l.bf16 %v371
    %v1089 = vunpack.c.h.bf16 %v371
    %v1090 = vunpack.c.l.bf16 %v372
    %v1091 = vunpack.c.h.bf16 %v372
    %v1092 = vunpack.c.l.bf16 %v373
    %v1093 = vunpack.c.h.bf16 %v373
    %v1094 = vunpack.c.l.bf16 %v374
    %v1095 = vunpack.c.h.bf16 %v374
    %v1096 = vunpack.c.l.bf16 %v375
    %v1097 = vunpack.c.h.bf16 %v375
    %v1098 = vunpack.c.l.bf16 %v376
    %v1099 = vunpack.c.h.bf16 %v376
    %v1100 = vunpack.c.l.bf16 %v377
    %v1101 = vunpack.c.h.bf16 %v377
    %v1102 = vunpack.c.l.bf16 %v378
    %v1103 = vunpack.c.h.bf16 %v378
    %v1104 = vunpack.c.l.bf16 %v379
    %v1105 = vunpack.c.h.bf16 %v379
    %v1106 = vunpack.c.l.bf16 %v380
    %v1107 = vunpack.c.h.bf16 %v380
    %v1108 = vunpack.c.l.bf16 %v381
    %v1109 = vunpack.c.h.bf16 %v381
    %v1110 = vunpack.c.l.bf16 %v382
    %v1111 = vunpack.c.h.bf16 %v382
    %v1112 = vunpack.c.l.bf16 %v383
    %v1113 = vunpack.c.h.bf16 %v383
    %v1114 = vunpack.c.l.bf16 %v384
    %v1115 = vunpack.c.h.bf16 %v384
    %v1116 = vunpack.c.l.bf16 %v385
    %v1117 = vunpack.c.h.bf16 %v385
    %v1118 = vunpack.c.l.bf16 %v386
    %v1119 = vunpack.c.h.bf16 %v386
    %v1120 = vunpack.c.l.bf16 %v387
    %v1121 = vunpack.c.h.bf16 %v387
    %v1122 = vunpack.c.l.bf16 %v388
    %v1123 = vunpack.c.h.bf16 %v388
    %v1124 = vunpack.c.l.bf16 %v389
    %v1125 = vunpack.c.h.bf16 %v389
    %v1126 = vunpack.c.l.bf16 %v390
    %v1127 = vunpack.c.h.bf16 %v390
    %v1128 = vunpack.c.l.bf16 %v391
    %v1129 = vunpack.c.h.bf16 %v391
    %v1130 = vunpack.c.l.bf16 %v392
    %v1131 = vunpack.c.h.bf16 %v392
    %v1132 = vunpack.c.l.bf16 %v393
    %v1133 = vunpack.c.h.bf16 %v393
    %v1134 = vunpack.c.l.bf16 %v394
    %v1135 = vunpack.c.h.bf16 %v394
    %v1136 = vunpack.c.l.bf16 %v395
    %v1137 = vunpack.c.h.bf16 %v395
    %v1138 = vunpack.c.l.bf16 %v396
    %v1139 = vunpack.c.h.bf16 %v396
    %v1140 = vunpack.c.l.bf16 %v397
    %v1141 = vunpack.c.h.bf16 %v397
    %v1142 = vunpack.c.l.bf16 %v398
    %v1143 = vunpack.c.h.bf16 %v398
    %v1144 = vunpack.c.l.bf16 %v399
    %v1145 = vunpack.c.h.bf16 %v399
    %v1146 = vunpack.c.l.bf16 %v400
    %v1147 = vunpack.c.h.bf16 %v400
    %v1148 = vunpack.c.l.bf16 %v401
    %v1149 = vunpack.c.h.bf16 %v401
    %v1150 = vunpack.c.l.bf16 %v402
    %v1151 = vunpack.c.h.bf16 %v402
    %v1152 = vunpack.c.l.bf16 %v403
    %v1153 = vunpack.c.h.bf16 %v403
    %v1154 = vunpack.c.l.bf16 %v404
    %v1155 = vunpack.c.h.bf16 %v404
    %v1156 = vunpack.c.l.bf16 %v405
    %v1157 = vunpack.c.h.bf16 %v405
    %v1158 = vunpack.c.l.bf16 %v406
    %v1159 = vunpack.c.h.bf16 %v406
    %v1160 = vunpack.c.l.bf16 %v407
    %v1161 = vunpack.c.h.bf16 %v407
    %v1162 = vunpack.c.l.bf16 %v408
    %v1163 = vunpack.c.h.bf16 %v408
    %v1164 = vunpack.c.l.bf16 %v409
    %v1165 = vunpack.c.h.bf16 %v409
    %v1166 = vunpack.c.l.bf16 %v410
    %v1167 = vunpack.c.h.bf16 %v410
    %v1168 = vunpack.c.l.bf16 %v411
    %v1169 = vunpack.c.h.bf16 %v411
    %v1170 = vunpack.c.l.bf16 %v412
    %v1171 = vunpack.c.h.bf16 %v412
    %v1172 = vunpack.c.l.bf16 %v413
    %v1173 = vunpack.c.h.bf16 %v413
    %v1174 = vunpack.c.l.bf16 %v414
    %v1175 = vunpack.c.h.bf16 %v414
    %v1176 = vunpack.c.l.bf16 %v415
    %v1177 = vunpack.c.h.bf16 %v415
    %v1178 = vunpack.c.l.bf16 %v416
    %v1179 = vunpack.c.h.bf16 %v416
    %v1180 = vunpack.c.l.bf16 %v417
    %v1181 = vunpack.c.h.bf16 %v417
    %v1182 = vunpack.c.l.bf16 %v418
    %v1183 = vunpack.c.h.bf16 %v418
    %v1184 = vunpack.c.l.bf16 %v419
    %v1185 = vunpack.c.h.bf16 %v419
    %v1186 = vunpack.c.l.bf16 %v420
    %v1187 = vunpack.c.h.bf16 %v420
    %v1188 = vunpack.c.l.bf16 %v421
    %v1189 = vunpack.c.h.bf16 %v421
    %v1190 = vld [vmem:[%s2] sm:$0xf]
    %v1192 = vlaneseq
    %v1193 = vshrl.u32 %v1192, 7
    %v1194 = vsub.s32 0, %v1193
    %v1195 = vrot.slane %v1190, %v1194
    %v1196 = vlaneseq
    %v1197 = vshrl.u32 %v1196, 7
    %v1198 = vsub.s32 1, %v1197
    %v1199 = vrot.slane %v1190, %v1198
    %v1200 = vlaneseq
    %v1201 = vshrl.u32 %v1200, 7
    %v1202 = vsub.s32 2, %v1201
    %v1203 = vrot.slane %v1190, %v1202
    %v1204 = vlaneseq
    %v1205 = vshrl.u32 %v1204, 7
    %v1206 = vsub.s32 3, %v1205
    %v1207 = vrot.slane %v1190, %v1206
    %v1215 = vcombine.high %v35, %v35
    %v1217 = vunpack.c.l.s4 1983009808
    %v1218 = vunpack.c.0.s8 %v1217
    %v1219 = vlaneseq
    %v1220 = vshrl.u32 %v1219, 7
    %v1221 = vsub.s32 %v1218, %v1220
    %v1222 = vrot.slane %v35, %v1221
    %v1224 = vunpack.c.l.s4 1983009808
    %v1225 = vunpack.c.0.s8 %v1224
    %v1226 = vlaneseq
    %v1227 = vshrl.u32 %v1226, 7
    %v1228 = vsub.s32 %v1225, %v1227
    %v1229 = vrot.slane %v1215, %v1228
    %v1230 = vcombine.high %v1222, %v1222
    %v1231 = vcombine.high %v1229, %v1229
    %v1232 = vcombine.high %v36, %v36
    %v1234 = vunpack.c.l.s4 1983009808
    %v1235 = vunpack.c.0.s8 %v1234
    %v1236 = vlaneseq
    %v1237 = vshrl.u32 %v1236, 7
    %v1238 = vsub.s32 %v1235, %v1237
    %v1239 = vrot.slane %v36, %v1238
    %v1241 = vunpack.c.l.s4 1983009808
    %v1242 = vunpack.c.0.s8 %v1241
    %v1243 = vlaneseq
    %v1244 = vshrl.u32 %v1243, 7
    %v1245 = vsub.s32 %v1242, %v1244
    %v1246 = vrot.slane %v1232, %v1245
    %v1247 = vcombine.high %v1239, %v1239
    %v1248 = vcombine.high %v1246, %v1246
    %v1249 = vcombine.high %v37, %v37
    %v1251 = vunpack.c.l.s4 1983009808
    %v1252 = vunpack.c.0.s8 %v1251
    %v1253 = vlaneseq
    %v1254 = vshrl.u32 %v1253, 7
    %v1255 = vsub.s32 %v1252, %v1254
    %v1256 = vrot.slane %v37, %v1255
    %v1258 = vunpack.c.l.s4 1983009808
    %v1259 = vunpack.c.0.s8 %v1258
    %v1260 = vlaneseq
    %v1261 = vshrl.u32 %v1260, 7
    %v1262 = vsub.s32 %v1259, %v1261
    %v1263 = vrot.slane %v1249, %v1262
    %v1264 = vcombine.high %v1256, %v1256
    %v1265 = vcombine.high %v1263, %v1263
    %1278 = vmatprep.subr.mxu0 %v483
    %1279 = vmatpush1.msra.mxu0 %v482
    %1280 = vmatprep.subr.mxu0 %v479
    %1281 = vmatpush1.msra.mxu0 %v478
    %1282 = vmatprep.subr.mxu0 %v475
    %1283 = vmatpush1.msra.mxu0 %v474
    %1284 = vmatprep.subr.mxu0 %v471
    %1285 = vmatpush1.msra.mxu0 %v470
    %1286 = vmatprep.subr.mxu0 %v467
    %1287 = vmatpush1.msra.mxu0 %v466
    %1288 = vmatprep.subr.mxu0 %v463
    %1289 = vmatpush1.msra.mxu0 %v462
    %1290 = vmatprep.subr.mxu0 %v459
    %1291 = vmatpush1.msra.mxu0 %v458
    %1292 = vmatprep.subr.mxu0 %v455
    %1293 = vmatpush1.msra.mxu0 %v454
    %1294 = vmatprep.subr.mxu0 %v451
    %1295 = vmatpush1.msra.mxu0 %v450
    %1296 = vmatprep.subr.mxu0 %v447
    %1297 = vmatpush1.msra.mxu0 %v446
    %1298 = vmatprep.subr.mxu0 %v443
    %1299 = vmatpush1.msra.mxu0 %v442
    %1300 = vmatprep.subr.mxu0 %v439
    %1301 = vmatpush1.msra.mxu0 %v438
    %1302 = vmatprep.subr.mxu0 %v435
    %1303 = vmatpush1.msra.mxu0 %v434
    %1304 = vmatprep.subr.mxu0 %v431
    %1305 = vmatpush1.msra.mxu0 %v430
    %1306 = vmatprep.subr.mxu0 %v427
    %1307 = vmatpush1.msra.mxu0 %v426
    %1308 = vmatprep.subr.mxu0 %v423
    %1309 = vmatpush1.msra.mxu0 %v422
    %1310 = vmatprep.subr.mxu0 %v547
    %1311 = vmatpush2.msra.mxu0 %v546
    %1312 = vmatprep.subr.mxu0 %v543
    %1313 = vmatpush2.msra.mxu0 %v542
    %1314 = vmatprep.subr.mxu0 %v539
    %1315 = vmatpush2.msra.mxu0 %v538
    %1316 = vmatprep.subr.mxu0 %v535
    %1317 = vmatpush2.msra.mxu0 %v534
    %1318 = vmatprep.subr.mxu0 %v531
    %1319 = vmatpush2.msra.mxu0 %v530
    %1320 = vmatprep.subr.mxu0 %v527
    %1321 = vmatpush2.msra.mxu0 %v526
    %1322 = vmatprep.subr.mxu0 %v523
    %1323 = vmatpush2.msra.mxu0 %v522
    %1324 = vmatprep.subr.mxu0 %v519
    %1325 = vmatpush2.msra.mxu0 %v518
    %1326 = vmatprep.subr.mxu0 %v515
    %1327 = vmatpush2.msra.mxu0 %v514
    %1328 = vmatprep.subr.mxu0 %v511
    %1329 = vmatpush2.msra.mxu0 %v510
    %1330 = vmatprep.subr.mxu0 %v507
    %1331 = vmatpush2.msra.mxu0 %v506
    %1332 = vmatprep.subr.mxu0 %v503
    %1333 = vmatpush2.msra.mxu0 %v502
    %1334 = vmatprep.subr.mxu0 %v499
    %1335 = vmatpush2.msra.mxu0 %v498
    %1336 = vmatprep.subr.mxu0 %v495
    %1337 = vmatpush2.msra.mxu0 %v494
    %1338 = vmatprep.subr.mxu0 %v491
    %1339 = vmatpush2.msra.mxu0 %v490
    %1340 = vmatprep.subr.mxu0 %v487
    %1341 = vmatpush2.msra.mxu0 %v486
    %1342 = vmatprep.mubr.f32.mxu0 %v1230
    %1343 = vmatmul.mubr.f32.gmra.mxu0 %v1222
    %v1344 = vpop.f32.mrf.mxu0
    %v1345 = vadd.f32 %v1195, %v1344
    %v1346 = vpop.f32.mrf.mxu0
    %v1347 = vadd.f32 %v1199, %v1346
    %1348 = vdwg.mxu0
    %1349 = vmatprep.subr.mxu0 %v611
    %1350 = vmatpush1.msra.mxu0 %v610
    %1351 = vmatprep.subr.mxu0 %v607
    %1352 = vmatpush1.msra.mxu0 %v606
    %1353 = vmatprep.subr.mxu0 %v603
    %1354 = vmatpush1.msra.mxu0 %v602
    %1355 = vmatprep.subr.mxu0 %v599
    %1356 = vmatpush1.msra.mxu0 %v598
    %1357 = vmatprep.subr.mxu0 %v595
    %1358 = vmatpush1.msra.mxu0 %v594
    %1359 = vmatprep.subr.mxu0 %v591
    %1360 = vmatpush1.msra.mxu0 %v590
    %1361 = vmatprep.subr.mxu0 %v587
    %1362 = vmatpush1.msra.mxu0 %v586
    %1363 = vmatprep.subr.mxu0 %v583
    %1364 = vmatpush1.msra.mxu0 %v582
    %1365 = vmatprep.subr.mxu0 %v579
    %1366 = vmatpush1.msra.mxu0 %v578
    %1367 = vmatprep.subr.mxu0 %v575
    %1368 = vmatpush1.msra.mxu0 %v574
    %1369 = vmatprep.subr.mxu0 %v571
    %1370 = vmatpush1.msra.mxu0 %v570
    %1371 = vmatprep.subr.mxu0 %v567
    %1372 = vmatpush1.msra.mxu0 %v566
    %1373 = vmatprep.subr.mxu0 %v563
    %1374 = vmatpush1.msra.mxu0 %v562
    %1375 = vmatprep.subr.mxu0 %v559
    %1376 = vmatpush1.msra.mxu0 %v558
    %1377 = vmatprep.subr.mxu0 %v555
    %1378 = vmatpush1.msra.mxu0 %v554
    %1379 = vmatprep.subr.mxu0 %v551
    %1380 = vmatpush1.msra.mxu0 %v550
    %1381 = vmatprep.subr.mxu0 %v675
    %1382 = vmatpush2.msra.mxu0 %v674
    %1383 = vmatprep.subr.mxu0 %v671
    %1384 = vmatpush2.msra.mxu0 %v670
    %1385 = vmatprep.subr.mxu0 %v667
    %1386 = vmatpush2.msra.mxu0 %v666
    %1387 = vmatprep.subr.mxu0 %v663
    %1388 = vmatpush2.msra.mxu0 %v662
    %1389 = vmatprep.subr.mxu0 %v659
    %1390 = vmatpush2.msra.mxu0 %v658
    %1391 = vmatprep.subr.mxu0 %v655
    %1392 = vmatpush2.msra.mxu0 %v654
    %1393 = vmatprep.subr.mxu0 %v651
    %1394 = vmatpush2.msra.mxu0 %v650
    %1395 = vmatprep.subr.mxu0 %v647
    %1396 = vmatpush2.msra.mxu0 %v646
    %1397 = vmatprep.subr.mxu0 %v643
    %1398 = vmatpush2.msra.mxu0 %v642
    %1399 = vmatprep.subr.mxu0 %v639
    %1400 = vmatpush2.msra.mxu0 %v638
    %1401 = vmatprep.subr.mxu0 %v635
    %1402 = vmatpush2.msra.mxu0 %v634
    %1403 = vmatprep.subr.mxu0 %v631
    %1404 = vmatpush2.msra.mxu0 %v630
    %1405 = vmatprep.subr.mxu0 %v627
    %1406 = vmatpush2.msra.mxu0 %v626
    %1407 = vmatprep.subr.mxu0 %v623
    %1408 = vmatpush2.msra.mxu0 %v622
    %1409 = vmatprep.subr.mxu0 %v619
    %1410 = vmatpush2.msra.mxu0 %v618
    %1411 = vmatprep.subr.mxu0 %v615
    %1412 = vmatpush2.msra.mxu0 %v614
    %1413 = vmatprep.mubr.f32.mxu0 %v1231
    %1414 = vmatmul.mubr.f32.gmra.mxu0 %v1229
    %v1415 = vpop.f32.mrf.mxu0
    %v1416 = vadd.f32 %v1345, %v1415
    %v1417 = vpop.f32.mrf.mxu0
    %v1418 = vadd.f32 %v1347, %v1417
    %1419 = vdwg.mxu0
    %1420 = vmatprep.subr.mxu0 %v739
    %1421 = vmatpush1.msra.mxu0 %v738
    %1422 = vmatprep.subr.mxu0 %v735
    %1423 = vmatpush1.msra.mxu0 %v734
    %1424 = vmatprep.subr.mxu0 %v731
    %1425 = vmatpush1.msra.mxu0 %v730
    %1426 = vmatprep.subr.mxu0 %v727
    %1427 = vmatpush1.msra.mxu0 %v726
    %1428 = vmatprep.subr.mxu0 %v723
    %1429 = vmatpush1.msra.mxu0 %v722
    %1430 = vmatprep.subr.mxu0 %v719
    %1431 = vmatpush1.msra.mxu0 %v718
    %1432 = vmatprep.subr.mxu0 %v715
    %1433 = vmatpush1.msra.mxu0 %v714
    %1434 = vmatprep.subr.mxu0 %v711
    %1435 = vmatpush1.msra.mxu0 %v710
    %1436 = vmatprep.subr.mxu0 %v707
    %1437 = vmatpush1.msra.mxu0 %v706
    %1438 = vmatprep.subr.mxu0 %v703
    %1439 = vmatpush1.msra.mxu0 %v702
    %1440 = vmatprep.subr.mxu0 %v699
    %1441 = vmatpush1.msra.mxu0 %v698
    %1442 = vmatprep.subr.mxu0 %v695
    %1443 = vmatpush1.msra.mxu0 %v694
    %1444 = vmatprep.subr.mxu0 %v691
    %1445 = vmatpush1.msra.mxu0 %v690
    %1446 = vmatprep.subr.mxu0 %v687
    %1447 = vmatpush1.msra.mxu0 %v686
    %1448 = vmatprep.subr.mxu0 %v683
    %1449 = vmatpush1.msra.mxu0 %v682
    %1450 = vmatprep.subr.mxu0 %v679
    %1451 = vmatpush1.msra.mxu0 %v678
    %1452 = vmatprep.subr.mxu0 %v803
    %1453 = vmatpush2.msra.mxu0 %v802
    %1454 = vmatprep.subr.mxu0 %v799
    %1455 = vmatpush2.msra.mxu0 %v798
    %1456 = vmatprep.subr.mxu0 %v795
    %1457 = vmatpush2.msra.mxu0 %v794
    %1458 = vmatprep.subr.mxu0 %v791
    %1459 = vmatpush2.msra.mxu0 %v790
    %1460 = vmatprep.subr.mxu0 %v787
    %1461 = vmatpush2.msra.mxu0 %v786
    %1462 = vmatprep.subr.mxu0 %v783
    %1463 = vmatpush2.msra.mxu0 %v782
    %1464 = vmatprep.subr.mxu0 %v779
    %1465 = vmatpush2.msra.mxu0 %v778
    %1466 = vmatprep.subr.mxu0 %v775
    %1467 = vmatpush2.msra.mxu0 %v774
    %1468 = vmatprep.subr.mxu0 %v771
    %1469 = vmatpush2.msra.mxu0 %v770
    %1470 = vmatprep.subr.mxu0 %v767
    %1471 = vmatpush2.msra.mxu0 %v766
    %1472 = vmatprep.subr.mxu0 %v763
    %1473 = vmatpush2.msra.mxu0 %v762
    %1474 = vmatprep.subr.mxu0 %v759
    %1475 = vmatpush2.msra.mxu0 %v758
    %1476 = vmatprep.subr.mxu0 %v755
    %1477 = vmatpush2.msra.mxu0 %v754
    %1478 = vmatprep.subr.mxu0 %v751
    %1479 = vmatpush2.msra.mxu0 %v750
    %1480 = vmatprep.subr.mxu0 %v747
    %1481 = vmatpush2.msra.mxu0 %v746
    %1482 = vmatprep.subr.mxu0 %v743
    %1483 = vmatpush2.msra.mxu0 %v742
    %1484 = vmatprep.mubr.f32.mxu0 %v1247
    %1485 = vmatmul.mubr.f32.gmra.mxu0 %v1239
    %v1486 = vpop.f32.mrf.mxu0
    %v1487 = vadd.f32 %v1416, %v1486
    %v1488 = vpop.f32.mrf.mxu0
    %v1489 = vadd.f32 %v1418, %v1488
    %1490 = vdwg.mxu0
    %1491 = vmatprep.subr.mxu0 %v867
    %1492 = vmatpush1.msra.mxu0 %v866
    %1493 = vmatprep.subr.mxu0 %v863
    %1494 = vmatpush1.msra.mxu0 %v862
    %1495 = vmatprep.subr.mxu0 %v859
    %1496 = vmatpush1.msra.mxu0 %v858
    %1497 = vmatprep.subr.mxu0 %v855
    %1498 = vmatpush1.msra.mxu0 %v854
    %1499 = vmatprep.subr.mxu0 %v851
    %1500 = vmatpush1.msra.mxu0 %v850
    %1501 = vmatprep.subr.mxu0 %v847
    %1502 = vmatpush1.msra.mxu0 %v846
    %1503 = vmatprep.subr.mxu0 %v843
    %1504 = vmatpush1.msra.mxu0 %v842
    %1505 = vmatprep.subr.mxu0 %v839
    %1506 = vmatpush1.msra.mxu0 %v838
    %1507 = vmatprep.subr.mxu0 %v835
    %1508 = vmatpush1.msra.mxu0 %v834
    %1509 = vmatprep.subr.mxu0 %v831
    %1510 = vmatpush1.msra.mxu0 %v830
    %1511 = vmatprep.subr.mxu0 %v827
    %1512 = vmatpush1.msra.mxu0 %v826
    %1513 = vmatprep.subr.mxu0 %v823
    %1514 = vmatpush1.msra.mxu0 %v822
    %1515 = vmatprep.subr.mxu0 %v819
    %1516 = vmatpush1.msra.mxu0 %v818
    %1517 = vmatprep.subr.mxu0 %v815
    %1518 = vmatpush1.msra.mxu0 %v814
    %1519 = vmatprep.subr.mxu0 %v811
    %1520 = vmatpush1.msra.mxu0 %v810
    %1521 = vmatprep.subr.mxu0 %v807
    %1522 = vmatpush1.msra.mxu0 %v806
    %1523 = vmatprep.subr.mxu0 %v931
    %1524 = vmatpush2.msra.mxu0 %v930
    %1525 = vmatprep.subr.mxu0 %v927
    %1526 = vmatpush2.msra.mxu0 %v926
    %1527 = vmatprep.subr.mxu0 %v923
    %1528 = vmatpush2.msra.mxu0 %v922
    %1529 = vmatprep.subr.mxu0 %v919
    %1530 = vmatpush2.msra.mxu0 %v918
    %1531 = vmatprep.subr.mxu0 %v915
    %1532 = vmatpush2.msra.mxu0 %v914
    %1533 = vmatprep.subr.mxu0 %v911
    %1534 = vmatpush2.msra.mxu0 %v910
    %1535 = vmatprep.subr.mxu0 %v907
    %1536 = vmatpush2.msra.mxu0 %v906
    %1537 = vmatprep.subr.mxu0 %v903
    %1538 = vmatpush2.msra.mxu0 %v902
    %1539 = vmatprep.subr.mxu0 %v899
    %1540 = vmatpush2.msra.mxu0 %v898
    %1541 = vmatprep.subr.mxu0 %v895
    %1542 = vmatpush2.msra.mxu0 %v894
    %1543 = vmatprep.subr.mxu0 %v891
    %1544 = vmatpush2.msra.mxu0 %v890
    %1545 = vmatprep.subr.mxu0 %v887
    %1546 = vmatpush2.msra.mxu0 %v886
    %1547 = vmatprep.subr.mxu0 %v883
    %1548 = vmatpush2.msra.mxu0 %v882
    %1549 = vmatprep.subr.mxu0 %v879
    %1550 = vmatpush2.msra.mxu0 %v878
    %1551 = vmatprep.subr.mxu0 %v875
    %1552 = vmatpush2.msra.mxu0 %v874
    %1553 = vmatprep.subr.mxu0 %v871
    %1554 = vmatpush2.msra.mxu0 %v870
    %1555 = vmatprep.mubr.f32.mxu0 %v1248
    %1556 = vmatmul.mubr.f32.gmra.mxu0 %v1246
    %v1557 = vpop.f32.mrf.mxu0
    %v1558 = vadd.f32 %v1487, %v1557
    %v1559 = vpop.f32.mrf.mxu0
    %v1560 = vadd.f32 %v1489, %v1559
    %1561 = vdwg.mxu0
    %1562 = vmatprep.subr.mxu0 %v995
    %1563 = vmatpush1.msra.mxu0 %v994
    %1564 = vmatprep.subr.mxu0 %v991
    %1565 = vmatpush1.msra.mxu0 %v990
    %1566 = vmatprep.subr.mxu0 %v987
    %1567 = vmatpush1.msra.mxu0 %v986
    %1568 = vmatprep.subr.mxu0 %v983
    %1569 = vmatpush1.msra.mxu0 %v982
    %1570 = vmatprep.subr.mxu0 %v979
    %1571 = vmatpush1.msra.mxu0 %v978
    %1572 = vmatprep.subr.mxu0 %v975
    %1573 = vmatpush1.msra.mxu0 %v974
    %1574 = vmatprep.subr.mxu0 %v971
    %1575 = vmatpush1.msra.mxu0 %v970
    %1576 = vmatprep.subr.mxu0 %v967
    %1577 = vmatpush1.msra.mxu0 %v966
    %1578 = vmatprep.subr.mxu0 %v963
    %1579 = vmatpush1.msra.mxu0 %v962
    %1580 = vmatprep.subr.mxu0 %v959
    %1581 = vmatpush1.msra.mxu0 %v958
    %1582 = vmatprep.subr.mxu0 %v955
    %1583 = vmatpush1.msra.mxu0 %v954
    %1584 = vmatprep.subr.mxu0 %v951
    %1585 = vmatpush1.msra.mxu0 %v950
    %1586 = vmatprep.subr.mxu0 %v947
    %1587 = vmatpush1.msra.mxu0 %v946
    %1588 = vmatprep.subr.mxu0 %v943
    %1589 = vmatpush1.msra.mxu0 %v942
    %1590 = vmatprep.subr.mxu0 %v939
    %1591 = vmatpush1.msra.mxu0 %v938
    %1592 = vmatprep.subr.mxu0 %v935
    %1593 = vmatpush1.msra.mxu0 %v934
    %1594 = vmatprep.subr.mxu0 %v1059
    %1595 = vmatpush2.msra.mxu0 %v1058
    %1596 = vmatprep.subr.mxu0 %v1055
    %1597 = vmatpush2.msra.mxu0 %v1054
    %1598 = vmatprep.subr.mxu0 %v1051
    %1599 = vmatpush2.msra.mxu0 %v1050
    %1600 = vmatprep.subr.mxu0 %v1047
    %1601 = vmatpush2.msra.mxu0 %v1046
    %1602 = vmatprep.subr.mxu0 %v1043
    %1603 = vmatpush2.msra.mxu0 %v1042
    %1604 = vmatprep.subr.mxu0 %v1039
    %1605 = vmatpush2.msra.mxu0 %v1038
    %1606 = vmatprep.subr.mxu0 %v1035
    %1607 = vmatpush2.msra.mxu0 %v1034
    %1608 = vmatprep.subr.mxu0 %v1031
    %1609 = vmatpush2.msra.mxu0 %v1030
    %1610 = vmatprep.subr.mxu0 %v1027
    %1611 = vmatpush2.msra.mxu0 %v1026
    %1612 = vmatprep.subr.mxu0 %v1023
    %1613 = vmatpush2.msra.mxu0 %v1022
    %1614 = vmatprep.subr.mxu0 %v1019
    %1615 = vmatpush2.msra.mxu0 %v1018
    %1616 = vmatprep.subr.mxu0 %v1015
    %1617 = vmatpush2.msra.mxu0 %v1014
    %1618 = vmatprep.subr.mxu0 %v1011
    %1619 = vmatpush2.msra.mxu0 %v1010
    %1620 = vmatprep.subr.mxu0 %v1007
    %1621 = vmatpush2.msra.mxu0 %v1006
    %1622 = vmatprep.subr.mxu0 %v1003
    %1623 = vmatpush2.msra.mxu0 %v1002
    %1624 = vmatprep.subr.mxu0 %v999
    %1625 = vmatpush2.msra.mxu0 %v998
    %1626 = vmatprep.mubr.f32.mxu0 %v1264
    %1627 = vmatmul.mubr.f32.gmra.mxu0 %v1256
    %v1628 = vpop.f32.mrf.mxu0
    %v1629 = vadd.f32 %v1558, %v1628
    %v1630 = vpop.f32.mrf.mxu0
    %v1631 = vadd.f32 %v1560, %v1630
    %1632 = vdwg.mxu0
    %1633 = vmatprep.subr.mxu0 %v1123
    %1634 = vmatpush1.msra.mxu0 %v1122
    %1635 = vmatprep.subr.mxu0 %v1119
    %1636 = vmatpush1.msra.mxu0 %v1118
    %1637 = vmatprep.subr.mxu0 %v1115
    %1638 = vmatpush1.msra.mxu0 %v1114
    %1639 = vmatprep.subr.mxu0 %v1111
    %1640 = vmatpush1.msra.mxu0 %v1110
    %1641 = vmatprep.subr.mxu0 %v1107
    %1642 = vmatpush1.msra.mxu0 %v1106
    %1643 = vmatprep.subr.mxu0 %v1103
    %1644 = vmatpush1.msra.mxu0 %v1102
    %1645 = vmatprep.subr.mxu0 %v1099
    %1646 = vmatpush1.msra.mxu0 %v1098
    %1647 = vmatprep.subr.mxu0 %v1095
    %1648 = vmatpush1.msra.mxu0 %v1094
    %1649 = vmatprep.subr.mxu0 %v1091
    %1650 = vmatpush1.msra.mxu0 %v1090
    %1651 = vmatprep.subr.mxu0 %v1087
    %1652 = vmatpush1.msra.mxu0 %v1086
    %1653 = vmatprep.subr.mxu0 %v1083
    %1654 = vmatpush1.msra.mxu0 %v1082
    %1655 = vmatprep.subr.mxu0 %v1079
    %1656 = vmatpush1.msra.mxu0 %v1078
    %1657 = vmatprep.subr.mxu0 %v1075
    %1658 = vmatpush1.msra.mxu0 %v1074
    %1659 = vmatprep.subr.mxu0 %v1071
    %1660 = vmatpush1.msra.mxu0 %v1070
    %1661 = vmatprep.subr.mxu0 %v1067
    %1662 = vmatpush1.msra.mxu0 %v1066
    %1663 = vmatprep.subr.mxu0 %v1063
    %1664 = vmatpush1.msra.mxu0 %v1062
    %1665 = vmatprep.subr.mxu0 %v1187
    %1666 = vmatpush2.msra.mxu0 %v1186
    %1667 = vmatprep.subr.mxu0 %v1183
    %1668 = vmatpush2.msra.mxu0 %v1182
    %1669 = vmatprep.subr.mxu0 %v1179
    %1670 = vmatpush2.msra.mxu0 %v1178
    %1671 = vmatprep.subr.mxu0 %v1175
    %1672 = vmatpush2.msra.mxu0 %v1174
    %1673 = vmatprep.subr.mxu0 %v1171
    %1674 = vmatpush2.msra.mxu0 %v1170
    %1675 = vmatprep.subr.mxu0 %v1167
    %1676 = vmatpush2.msra.mxu0 %v1166
    %1677 = vmatprep.subr.mxu0 %v1163
    %1678 = vmatpush2.msra.mxu0 %v1162
    %1679 = vmatprep.subr.mxu0 %v1159
    %1680 = vmatpush2.msra.mxu0 %v1158
    %1681 = vmatprep.subr.mxu0 %v1155
    %1682 = vmatpush2.msra.mxu0 %v1154
    %1683 = vmatprep.subr.mxu0 %v1151
    %1684 = vmatpush2.msra.mxu0 %v1150
    %1685 = vmatprep.subr.mxu0 %v1147
    %1686 = vmatpush2.msra.mxu0 %v1146
    %1687 = vmatprep.subr.mxu0 %v1143
    %1688 = vmatpush2.msra.mxu0 %v1142
    %1689 = vmatprep.subr.mxu0 %v1139
    %1690 = vmatpush2.msra.mxu0 %v1138
    %1691 = vmatprep.subr.mxu0 %v1135
    %1692 = vmatpush2.msra.mxu0 %v1134
    %1693 = vmatprep.subr.mxu0 %v1131
    %1694 = vmatpush2.msra.mxu0 %v1130
    %1695 = vmatprep.subr.mxu0 %v1127
    %1696 = vmatpush2.msra.mxu0 %v1126
    %1697 = vmatprep.mubr.f32.mxu0 %v1265
    %1698 = vmatmul.mubr.f32.gmra.mxu0 %v1263
    %v1699 = vpop.f32.mrf.mxu0
    %v1700 = vadd.f32 %v1629, %v1699
    %v1701 = vpop.f32.mrf.mxu0
    %v1702 = vadd.f32 %v1631, %v1701
    %1703 = vdwg.mxu0
    %1704 = vmatprep.subr.mxu0 %v485
    %1705 = vmatpush1.msra.mxu0 %v484
    %1706 = vmatprep.subr.mxu0 %v481
    %1707 = vmatpush1.msra.mxu0 %v480
    %1708 = vmatprep.subr.mxu0 %v477
    %1709 = vmatpush1.msra.mxu0 %v476
    %1710 = vmatprep.subr.mxu0 %v473
    %1711 = vmatpush1.msra.mxu0 %v472
    %1712 = vmatprep.subr.mxu0 %v469
    %1713 = vmatpush1.msra.mxu0 %v468
    %1714 = vmatprep.subr.mxu0 %v465
    %1715 = vmatpush1.msra.mxu0 %v464
    %1716 = vmatprep.subr.mxu0 %v461
    %1717 = vmatpush1.msra.mxu0 %v460
    %1718 = vmatprep.subr.mxu0 %v457
    %1719 = vmatpush1.msra.mxu0 %v456
    %1720 = vmatprep.subr.mxu0 %v453
    %1721 = vmatpush1.msra.mxu0 %v452
    %1722 = vmatprep.subr.mxu0 %v449
    %1723 = vmatpush1.msra.mxu0 %v448
    %1724 = vmatprep.subr.mxu0 %v445
    %1725 = vmatpush1.msra.mxu0 %v444
    %1726 = vmatprep.subr.mxu0 %v441
    %1727 = vmatpush1.msra.mxu0 %v440
    %1728 = vmatprep.subr.mxu0 %v437
    %1729 = vmatpush1.msra.mxu0 %v436
    %1730 = vmatprep.subr.mxu0 %v433
    %1731 = vmatpush1.msra.mxu0 %v432
    %1732 = vmatprep.subr.mxu0 %v429
    %1733 = vmatpush1.msra.mxu0 %v428
    %1734 = vmatprep.subr.mxu0 %v425
    %1735 = vmatpush1.msra.mxu0 %v424
    %1736 = vmatprep.subr.mxu0 %v549
    %1737 = vmatpush2.msra.mxu0 %v548
    %1738 = vmatprep.subr.mxu0 %v545
    %1739 = vmatpush2.msra.mxu0 %v544
    %1740 = vmatprep.subr.mxu0 %v541
    %1741 = vmatpush2.msra.mxu0 %v540
    %1742 = vmatprep.subr.mxu0 %v537
    %1743 = vmatpush2.msra.mxu0 %v536
    %1744 = vmatprep.subr.mxu0 %v533
    %1745 = vmatpush2.msra.mxu0 %v532
    %1746 = vmatprep.subr.mxu0 %v529
    %1747 = vmatpush2.msra.mxu0 %v528
    %1748 = vmatprep.subr.mxu0 %v525
    %1749 = vmatpush2.msra.mxu0 %v524
    %1750 = vmatprep.subr.mxu0 %v521
    %1751 = vmatpush2.msra.mxu0 %v520
    %1752 = vmatprep.subr.mxu0 %v517
    %1753 = vmatpush2.msra.mxu0 %v516
    %1754 = vmatprep.subr.mxu0 %v513
    %1755 = vmatpush2.msra.mxu0 %v512
    %1756 = vmatprep.subr.mxu0 %v509
    %1757 = vmatpush2.msra.mxu0 %v508
    %1758 = vmatprep.subr.mxu0 %v505
    %1759 = vmatpush2.msra.mxu0 %v504
    %1760 = vmatprep.subr.mxu0 %v501
    %1761 = vmatpush2.msra.mxu0 %v500
    %1762 = vmatprep.subr.mxu0 %v497
    %1763 = vmatpush2.msra.mxu0 %v496
    %1764 = vmatprep.subr.mxu0 %v493
    %1765 = vmatpush2.msra.mxu0 %v492
    %1766 = vmatprep.subr.mxu0 %v489
    %1767 = vmatpush2.msra.mxu0 %v488
    %1768 = vmatprep.mubr.f32.mxu0 %v1230
    %1769 = vmatmul.mubr.f32.gmra.mxu0 %v1222
    %v1770 = vpop.f32.mrf.mxu0
    %v1771 = vadd.f32 %v1203, %v1770
    %v1772 = vpop.f32.mrf.mxu0
    %v1773 = vadd.f32 %v1207, %v1772
    %1774 = vdwg.mxu0
    %1775 = vmatprep.subr.mxu0 %v613
    %1776 = vmatpush1.msra.mxu0 %v612
    %1777 = vmatprep.subr.mxu0 %v609
    %1778 = vmatpush1.msra.mxu0 %v608
    %1779 = vmatprep.subr.mxu0 %v605
    %1780 = vmatpush1.msra.mxu0 %v604
    %1781 = vmatprep.subr.mxu0 %v601
    %1782 = vmatpush1.msra.mxu0 %v600
    %1783 = vmatprep.subr.mxu0 %v597
    %1784 = vmatpush1.msra.mxu0 %v596
    %1785 = vmatprep.subr.mxu0 %v593
    %1786 = vmatpush1.msra.mxu0 %v592
    %1787 = vmatprep.subr.mxu0 %v589
    %1788 = vmatpush1.msra.mxu0 %v588
    %1789 = vmatprep.subr.mxu0 %v585
    %1790 = vmatpush1.msra.mxu0 %v584
    %1791 = vmatprep.subr.mxu0 %v581
    %1792 = vmatpush1.msra.mxu0 %v580
    %1793 = vmatprep.subr.mxu0 %v577
    %1794 = vmatpush1.msra.mxu0 %v576
    %1795 = vmatprep.subr.mxu0 %v573
    %1796 = vmatpush1.msra.mxu0 %v572
    %1797 = vmatprep.subr.mxu0 %v569
    %1798 = vmatpush1.msra.mxu0 %v568
    %1799 = vmatprep.subr.mxu0 %v565
    %1800 = vmatpush1.msra.mxu0 %v564
    %1801 = vmatprep.subr.mxu0 %v561
    %1802 = vmatpush1.msra.mxu0 %v560
    %1803 = vmatprep.subr.mxu0 %v557
    %1804 = vmatpush1.msra.mxu0 %v556
    %1805 = vmatprep.subr.mxu0 %v553
    %1806 = vmatpush1.msra.mxu0 %v552
    %1807 = vmatprep.subr.mxu0 %v677
    %1808 = vmatpush2.msra.mxu0 %v676
    %1809 = vmatprep.subr.mxu0 %v673
    %1810 = vmatpush2.msra.mxu0 %v672
    %1811 = vmatprep.subr.mxu0 %v669
    %1812 = vmatpush2.msra.mxu0 %v668
    %1813 = vmatprep.subr.mxu0 %v665
    %1814 = vmatpush2.msra.mxu0 %v664
    %1815 = vmatprep.subr.mxu0 %v661
    %1816 = vmatpush2.msra.mxu0 %v660
    %1817 = vmatprep.subr.mxu0 %v657
    %1818 = vmatpush2.msra.mxu0 %v656
    %1819 = vmatprep.subr.mxu0 %v653
    %1820 = vmatpush2.msra.mxu0 %v652
    %1821 = vmatprep.subr.mxu0 %v649
    %1822 = vmatpush2.msra.mxu0 %v648
    %1823 = vmatprep.subr.mxu0 %v645
    %1824 = vmatpush2.msra.mxu0 %v644
    %1825 = vmatprep.subr.mxu0 %v641
    %1826 = vmatpush2.msra.mxu0 %v640
    %1827 = vmatprep.subr.mxu0 %v637
    %1828 = vmatpush2.msra.mxu0 %v636
    %1829 = vmatprep.subr.mxu0 %v633
    %1830 = vmatpush2.msra.mxu0 %v632
    %1831 = vmatprep.subr.mxu0 %v629
    %1832 = vmatpush2.msra.mxu0 %v628
    %1833 = vmatprep.subr.mxu0 %v625
    %1834 = vmatpush2.msra.mxu0 %v624
    %1835 = vmatprep.subr.mxu0 %v621
    %1836 = vmatpush2.msra.mxu0 %v620
    %1837 = vmatprep.subr.mxu0 %v617
    %1838 = vmatpush2.msra.mxu0 %v616
    %1839 = vmatprep.mubr.f32.mxu0 %v1231
    %1840 = vmatmul.mubr.f32.gmra.mxu0 %v1229
    %v1841 = vpop.f32.mrf.mxu0
    %v1842 = vadd.f32 %v1771, %v1841
    %v1843 = vpop.f32.mrf.mxu0
    %v1844 = vadd.f32 %v1773, %v1843
    %1845 = vdwg.mxu0
    %1846 = vmatprep.subr.mxu0 %v741
    %1847 = vmatpush1.msra.mxu0 %v740
    %1848 = vmatprep.subr.mxu0 %v737
    %1849 = vmatpush1.msra.mxu0 %v736
    %1850 = vmatprep.subr.mxu0 %v733
    %1851 = vmatpush1.msra.mxu0 %v732
    %1852 = vmatprep.subr.mxu0 %v729
    %1853 = vmatpush1.msra.mxu0 %v728
    %1854 = vmatprep.subr.mxu0 %v725
    %1855 = vmatpush1.msra.mxu0 %v724
    %1856 = vmatprep.subr.mxu0 %v721
    %1857 = vmatpush1.msra.mxu0 %v720
    %1858 = vmatprep.subr.mxu0 %v717
    %1859 = vmatpush1.msra.mxu0 %v716
    %1860 = vmatprep.subr.mxu0 %v713
    %1861 = vmatpush1.msra.mxu0 %v712
    %1862 = vmatprep.subr.mxu0 %v709
    %1863 = vmatpush1.msra.mxu0 %v708
    %1864 = vmatprep.subr.mxu0 %v705
    %1865 = vmatpush1.msra.mxu0 %v704
    %1866 = vmatprep.subr.mxu0 %v701
    %1867 = vmatpush1.msra.mxu0 %v700
    %1868 = vmatprep.subr.mxu0 %v697
    %1869 = vmatpush1.msra.mxu0 %v696
    %1870 = vmatprep.subr.mxu0 %v693
    %1871 = vmatpush1.msra.mxu0 %v692
    %1872 = vmatprep.subr.mxu0 %v689
    %1873 = vmatpush1.msra.mxu0 %v688
    %1874 = vmatprep.subr.mxu0 %v685
    %1875 = vmatpush1.msra.mxu0 %v684
    %1876 = vmatprep.subr.mxu0 %v681
    %1877 = vmatpush1.msra.mxu0 %v680
    %1878 = vmatprep.subr.mxu0 %v805
    %1879 = vmatpush2.msra.mxu0 %v804
    %1880 = vmatprep.subr.mxu0 %v801
    %1881 = vmatpush2.msra.mxu0 %v800
    %1882 = vmatprep.subr.mxu0 %v797
    %1883 = vmatpush2.msra.mxu0 %v796
    %1884 = vmatprep.subr.mxu0 %v793
    %1885 = vmatpush2.msra.mxu0 %v792
    %1886 = vmatprep.subr.mxu0 %v789
    %1887 = vmatpush2.msra.mxu0 %v788
    %1888 = vmatprep.subr.mxu0 %v785
    %1889 = vmatpush2.msra.mxu0 %v784
    %1890 = vmatprep.subr.mxu0 %v781
    %1891 = vmatpush2.msra.mxu0 %v780
    %1892 = vmatprep.subr.mxu0 %v777
    %1893 = vmatpush2.msra.mxu0 %v776
    %1894 = vmatprep.subr.mxu0 %v773
    %1895 = vmatpush2.msra.mxu0 %v772
    %1896 = vmatprep.subr.mxu0 %v769
    %1897 = vmatpush2.msra.mxu0 %v768
    %1898 = vmatprep.subr.mxu0 %v765
    %1899 = vmatpush2.msra.mxu0 %v764
    %1900 = vmatprep.subr.mxu0 %v761
    %1901 = vmatpush2.msra.mxu0 %v760
    %1902 = vmatprep.subr.mxu0 %v757
    %1903 = vmatpush2.msra.mxu0 %v756
    %1904 = vmatprep.subr.mxu0 %v753
    %1905 = vmatpush2.msra.mxu0 %v752
    %1906 = vmatprep.subr.mxu0 %v749
    %1907 = vmatpush2.msra.mxu0 %v748
    %1908 = vmatprep.subr.mxu0 %v745
    %1909 = vmatpush2.msra.mxu0 %v744
    %1910 = vmatprep.mubr.f32.mxu0 %v1247
    %1911 = vmatmul.mubr.f32.gmra.mxu0 %v1239
    %v1912 = vpop.f32.mrf.mxu0
    %v1913 = vadd.f32 %v1842, %v1912
    %v1914 = vpop.f32.mrf.mxu0
    %v1915 = vadd.f32 %v1844, %v1914
    %1916 = vdwg.mxu0
    %1917 = vmatprep.subr.mxu0 %v869
    %1918 = vmatpush1.msra.mxu0 %v868
    %1919 = vmatprep.subr.mxu0 %v865
    %1920 = vmatpush1.msra.mxu0 %v864
    %1921 = vmatprep.subr.mxu0 %v861
    %1922 = vmatpush1.msra.mxu0 %v860
    %1923 = vmatprep.subr.mxu0 %v857
    %1924 = vmatpush1.msra.mxu0 %v856
    %1925 = vmatprep.subr.mxu0 %v853
    %1926 = vmatpush1.msra.mxu0 %v852
    %1927 = vmatprep.subr.mxu0 %v849
    %1928 = vmatpush1.msra.mxu0 %v848
    %1929 = vmatprep.subr.mxu0 %v845
    %1930 = vmatpush1.msra.mxu0 %v844
    %1931 = vmatprep.subr.mxu0 %v841
    %1932 = vmatpush1.msra.mxu0 %v840
    %1933 = vmatprep.subr.mxu0 %v837
    %1934 = vmatpush1.msra.mxu0 %v836
    %1935 = vmatprep.subr.mxu0 %v833
    %1936 = vmatpush1.msra.mxu0 %v832
    %1937 = vmatprep.subr.mxu0 %v829
    %1938 = vmatpush1.msra.mxu0 %v828
    %1939 = vmatprep.subr.mxu0 %v825
    %1940 = vmatpush1.msra.mxu0 %v824
    %1941 = vmatprep.subr.mxu0 %v821
    %1942 = vmatpush1.msra.mxu0 %v820
    %1943 = vmatprep.subr.mxu0 %v817
    %1944 = vmatpush1.msra.mxu0 %v816
    %1945 = vmatprep.subr.mxu0 %v813
    %1946 = vmatpush1.msra.mxu0 %v812
    %1947 = vmatprep.subr.mxu0 %v809
    %1948 = vmatpush1.msra.mxu0 %v808
    %1949 = vmatprep.subr.mxu0 %v933
    %1950 = vmatpush2.msra.mxu0 %v932
    %1951 = vmatprep.subr.mxu0 %v929
    %1952 = vmatpush2.msra.mxu0 %v928
    %1953 = vmatprep.subr.mxu0 %v925
    %1954 = vmatpush2.msra.mxu0 %v924
    %1955 = vmatprep.subr.mxu0 %v921
    %1956 = vmatpush2.msra.mxu0 %v920
    %1957 = vmatprep.subr.mxu0 %v917
    %1958 = vmatpush2.msra.mxu0 %v916
    %1959 = vmatprep.subr.mxu0 %v913
    %1960 = vmatpush2.msra.mxu0 %v912
    %1961 = vmatprep.subr.mxu0 %v909
    %1962 = vmatpush2.msra.mxu0 %v908
    %1963 = vmatprep.subr.mxu0 %v905
    %1964 = vmatpush2.msra.mxu0 %v904
    %1965 = vmatprep.subr.mxu0 %v901
    %1966 = vmatpush2.msra.mxu0 %v900
    %1967 = vmatprep.subr.mxu0 %v897
    %1968 = vmatpush2.msra.mxu0 %v896
    %1969 = vmatprep.subr.mxu0 %v893
    %1970 = vmatpush2.msra.mxu0 %v892
    %1971 = vmatprep.subr.mxu0 %v889
    %1972 = vmatpush2.msra.mxu0 %v888
    %1973 = vmatprep.subr.mxu0 %v885
    %1974 = vmatpush2.msra.mxu0 %v884
    %1975 = vmatprep.subr.mxu0 %v881
    %1976 = vmatpush2.msra.mxu0 %v880
    %1977 = vmatprep.subr.mxu0 %v877
    %1978 = vmatpush2.msra.mxu0 %v876
    %1979 = vmatprep.subr.mxu0 %v873
    %1980 = vmatpush2.msra.mxu0 %v872
    %1981 = vmatprep.mubr.f32.mxu0 %v1248
    %1982 = vmatmul.mubr.f32.gmra.mxu0 %v1246
    %v1983 = vpop.f32.mrf.mxu0
    %v1984 = vadd.f32 %v1913, %v1983
    %v1985 = vpop.f32.mrf.mxu0
    %v1986 = vadd.f32 %v1915, %v1985
    %1987 = vdwg.mxu0
    %1988 = vmatprep.subr.mxu0 %v997
    %1989 = vmatpush1.msra.mxu0 %v996
    %1990 = vmatprep.subr.mxu0 %v993
    %1991 = vmatpush1.msra.mxu0 %v992
    %1992 = vmatprep.subr.mxu0 %v989
    %1993 = vmatpush1.msra.mxu0 %v988
    %1994 = vmatprep.subr.mxu0 %v985
    %1995 = vmatpush1.msra.mxu0 %v984
    %1996 = vmatprep.subr.mxu0 %v981
    %1997 = vmatpush1.msra.mxu0 %v980
    %1998 = vmatprep.subr.mxu0 %v977
    %1999 = vmatpush1.msra.mxu0 %v976
    %2000 = vmatprep.subr.mxu0 %v973
    %2001 = vmatpush1.msra.mxu0 %v972
    %2002 = vmatprep.subr.mxu0 %v969
    %2003 = vmatpush1.msra.mxu0 %v968
    %2004 = vmatprep.subr.mxu0 %v965
    %2005 = vmatpush1.msra.mxu0 %v964
    %2006 = vmatprep.subr.mxu0 %v961
    %2007 = vmatpush1.msra.mxu0 %v960
    %2008 = vmatprep.subr.mxu0 %v957
    %2009 = vmatpush1.msra.mxu0 %v956
    %2010 = vmatprep.subr.mxu0 %v953
    %2011 = vmatpush1.msra.mxu0 %v952
    %2012 = vmatprep.subr.mxu0 %v949
    %2013 = vmatpush1.msra.mxu0 %v948
    %2014 = vmatprep.subr.mxu0 %v945
    %2015 = vmatpush1.msra.mxu0 %v944
    %2016 = vmatprep.subr.mxu0 %v941
    %2017 = vmatpush1.msra.mxu0 %v940
    %2018 = vmatprep.subr.mxu0 %v937
    %2019 = vmatpush1.msra.mxu0 %v936
    %2020 = vmatprep.subr.mxu0 %v1061
    %2021 = vmatpush2.msra.mxu0 %v1060
    %2022 = vmatprep.subr.mxu0 %v1057
    %2023 = vmatpush2.msra.mxu0 %v1056
    %2024 = vmatprep.subr.mxu0 %v1053
    %2025 = vmatpush2.msra.mxu0 %v1052
    %2026 = vmatprep.subr.mxu0 %v1049
    %2027 = vmatpush2.msra.mxu0 %v1048
    %2028 = vmatprep.subr.mxu0 %v1045
    %2029 = vmatpush2.msra.mxu0 %v1044
    %2030 = vmatprep.subr.mxu0 %v1041
    %2031 = vmatpush2.msra.mxu0 %v1040
    %2032 = vmatprep.subr.mxu0 %v1037
    %2033 = vmatpush2.msra.mxu0 %v1036
    %2034 = vmatprep.subr.mxu0 %v1033
    %2035 = vmatpush2.msra.mxu0 %v1032
    %2036 = vmatprep.subr.mxu0 %v1029
    %2037 = vmatpush2.msra.mxu0 %v1028
    %2038 = vmatprep.subr.mxu0 %v1025
    %2039 = vmatpush2.msra.mxu0 %v1024
    %2040 = vmatprep.subr.mxu0 %v1021
    %2041 = vmatpush2.msra.mxu0 %v1020
    %2042 = vmatprep.subr.mxu0 %v1017
    %2043 = vmatpush2.msra.mxu0 %v1016
    %2044 = vmatprep.subr.mxu0 %v1013
    %2045 = vmatpush2.msra.mxu0 %v1012
    %2046 = vmatprep.subr.mxu0 %v1009
    %2047 = vmatpush2.msra.mxu0 %v1008
    %2048 = vmatprep.subr.mxu0 %v1005
    %2049 = vmatpush2.msra.mxu0 %v1004
    %2050 = vmatprep.subr.mxu0 %v1001
    %2051 = vmatpush2.msra.mxu0 %v1000
    %2052 = vmatprep.mubr.f32.mxu0 %v1264
    %2053 = vmatmul.mubr.f32.gmra.mxu0 %v1256
    %v2054 = vpop.f32.mrf.mxu0
    %v2055 = vadd.f32 %v1984, %v2054
    %v2056 = vpop.f32.mrf.mxu0
    %v2057 = vadd.f32 %v1986, %v2056
    %2058 = vdwg.mxu0
    %2059 = vmatprep.subr.mxu0 %v1125
    %2060 = vmatpush1.msra.mxu0 %v1124
    %2061 = vmatprep.subr.mxu0 %v1121
    %2062 = vmatpush1.msra.mxu0 %v1120
    %2063 = vmatprep.subr.mxu0 %v1117
    %2064 = vmatpush1.msra.mxu0 %v1116
    %2065 = vmatprep.subr.mxu0 %v1113
    %2066 = vmatpush1.msra.mxu0 %v1112
    %2067 = vmatprep.subr.mxu0 %v1109
    %2068 = vmatpush1.msra.mxu0 %v1108
    %2069 = vmatprep.subr.mxu0 %v1105
    %2070 = vmatpush1.msra.mxu0 %v1104
    %2071 = vmatprep.subr.mxu0 %v1101
    %2072 = vmatpush1.msra.mxu0 %v1100
    %2073 = vmatprep.subr.mxu0 %v1097
    %2074 = vmatpush1.msra.mxu0 %v1096
    %2075 = vmatprep.subr.mxu0 %v1093
    %2076 = vmatpush1.msra.mxu0 %v1092
    %2077 = vmatprep.subr.mxu0 %v1089
    %2078 = vmatpush1.msra.mxu0 %v1088
    %2079 = vmatprep.subr.mxu0 %v1085
    %2080 = vmatpush1.msra.mxu0 %v1084
    %2081 = vmatprep.subr.mxu0 %v1081
    %2082 = vmatpush1.msra.mxu0 %v1080
    %2083 = vmatprep.subr.mxu0 %v1077
    %2084 = vmatpush1.msra.mxu0 %v1076
    %2085 = vmatprep.subr.mxu0 %v1073
    %2086 = vmatpush1.msra.mxu0 %v1072
    %2087 = vmatprep.subr.mxu0 %v1069
    %2088 = vmatpush1.msra.mxu0 %v1068
    %2089 = vmatprep.subr.mxu0 %v1065
    %2090 = vmatpush1.msra.mxu0 %v1064
    %2091 = vmatprep.subr.mxu0 %v1189
    %2092 = vmatpush2.msra.mxu0 %v1188
    %2093 = vmatprep.subr.mxu0 %v1185
    %2094 = vmatpush2.msra.mxu0 %v1184
    %2095 = vmatprep.subr.mxu0 %v1181
    %2096 = vmatpush2.msra.mxu0 %v1180
    %2097 = vmatprep.subr.mxu0 %v1177
    %2098 = vmatpush2.msra.mxu0 %v1176
    %2099 = vmatprep.subr.mxu0 %v1173
    %2100 = vmatpush2.msra.mxu0 %v1172
    %2101 = vmatprep.subr.mxu0 %v1169
    %2102 = vmatpush2.msra.mxu0 %v1168
    %2103 = vmatprep.subr.mxu0 %v1165
    %2104 = vmatpush2.msra.mxu0 %v1164
    %2105 = vmatprep.subr.mxu0 %v1161
    %2106 = vmatpush2.msra.mxu0 %v1160
    %2107 = vmatprep.subr.mxu0 %v1157
    %2108 = vmatpush2.msra.mxu0 %v1156
    %2109 = vmatprep.subr.mxu0 %v1153
    %2110 = vmatpush2.msra.mxu0 %v1152
    %2111 = vmatprep.subr.mxu0 %v1149
    %2112 = vmatpush2.msra.mxu0 %v1148
    %2113 = vmatprep.subr.mxu0 %v1145
    %2114 = vmatpush2.msra.mxu0 %v1144
    %2115 = vmatprep.subr.mxu0 %v1141
    %2116 = vmatpush2.msra.mxu0 %v1140
    %2117 = vmatprep.subr.mxu0 %v1137
    %2118 = vmatpush2.msra.mxu0 %v1136
    %2119 = vmatprep.subr.mxu0 %v1133
    %2120 = vmatpush2.msra.mxu0 %v1132
    %2121 = vmatprep.subr.mxu0 %v1129
    %2122 = vmatpush2.msra.mxu0 %v1128
    %2123 = vmatprep.mubr.f32.mxu0 %v1265
    %2124 = vmatmul.mubr.f32.gmra.mxu0 %v1263
    %v2125 = vpop.f32.mrf.mxu0
    %v2126 = vadd.f32 %v2055, %v2125
    %v2127 = vpop.f32.mrf.mxu0
    %v2128 = vadd.f32 %v2057, %v2127
    %2129 = vdwg.mxu0
    %v2130 = vmax.f32 %v1700, 0.0
    %v2131 = vmax.f32 %v1702, 0.0
    %v2132 = vmax.f32 %v2126, 0.0
    %v2133 = vmax.f32 %v2128, 0.0
    %v2134 = vld [vmem:[%s3] sm:$0xf]
    %v2135 = vld [vmem:[%s3 + $0x4] sm:$0xf]
    %v2136 = vld [vmem:[%s3 + $0x8] sm:$0xf]
    %v2137 = vld [vmem:[%s3 + $0xc] sm:$0xf]
    %v2138 = vld [vmem:[%s3 + $0x10] sm:$0xf]
    %v2139 = vld [vmem:[%s3 + $0x14] sm:$0xf]
    %v2140 = vld [vmem:[%s3 + $0x18] sm:$0xf]
    %v2141 = vld [vmem:[%s3 + $0x1c] sm:$0xf]
    %v2142 = vld [vmem:[%s3 + $0x20] sm:$0xf]
    %v2143 = vld [vmem:[%s3 + $0x24] sm:$0xf]
    %v2144 = vld [vmem:[%s3 + $0x28] sm:$0xf]
    %v2145 = vld [vmem:[%s3 + $0x2c] sm:$0xf]
    %v2146 = vld [vmem:[%s3 + $0x30] sm:$0xf]
    %v2147 = vld [vmem:[%s3 + $0x34] sm:$0xf]
    %v2148 = vld [vmem:[%s3 + $0x38] sm:$0xf]
    %v2149 = vld [vmem:[%s3 + $0x3c] sm:$0xf]
    %v2150 = vld [vmem:[%s3 + $0x40] sm:$0xf]
    %v2151 = vld [vmem:[%s3 + $0x44] sm:$0xf]
    %v2152 = vld [vmem:[%s3 + $0x48] sm:$0xf]
    %v2153 = vld [vmem:[%s3 + $0x4c] sm:$0xf]
    %v2154 = vld [vmem:[%s3 + $0x50] sm:$0xf]
    %v2155 = vld [vmem:[%s3 + $0x54] sm:$0xf]
    %v2156 = vld [vmem:[%s3 + $0x58] sm:$0xf]
    %v2157 = vld [vmem:[%s3 + $0x5c] sm:$0xf]
    %v2158 = vld [vmem:[%s3 + $0x60] sm:$0xf]
    %v2159 = vld [vmem:[%s3 + $0x64] sm:$0xf]
    %v2160 = vld [vmem:[%s3 + $0x68] sm:$0xf]
    %v2161 = vld [vmem:[%s3 + $0x6c] sm:$0xf]
    %v2162 = vld [vmem:[%s3 + $0x70] sm:$0xf]
    %v2163 = vld [vmem:[%s3 + $0x74] sm:$0xf]
    %v2164 = vld [vmem:[%s3 + $0x78] sm:$0xf]
    %v2165 = vld [vmem:[%s3 + $0x7c] sm:$0xf]
    %v2166 = vld [vmem:[%s3 + $0x80] sm:$0xf]
    %v2167 = vld [vmem:[%s3 + $0x84] sm:$0xf]
    %v2168 = vld [vmem:[%s3 + $0x88] sm:$0xf]
    %v2169 = vld [vmem:[%s3 + $0x8c] sm:$0xf]
    %v2170 = vld [vmem:[%s3 + $0x90] sm:$0xf]
    %v2171 = vld [vmem:[%s3 + $0x94] sm:$0xf]
    %v2172 = vld [vmem:[%s3 + $0x98] sm:$0xf]
    %v2173 = vld [vmem:[%s3 + $0x9c] sm:$0xf]
    %v2174 = vld [vmem:[%s3 + $0xa0] sm:$0xf]
    %v2175 = vld [vmem:[%s3 + $0xa4] sm:$0xf]
    %v2176 = vld [vmem:[%s3 + $0xa8] sm:$0xf]
    %v2177 = vld [vmem:[%s3 + $0xac] sm:$0xf]
    %v2178 = vld [vmem:[%s3 + $0xb0] sm:$0xf]
    %v2179 = vld [vmem:[%s3 + $0xb4] sm:$0xf]
    %v2180 = vld [vmem:[%s3 + $0xb8] sm:$0xf]
    %v2181 = vld [vmem:[%s3 + $0xbc] sm:$0xf]
    %v2182 = vld [vmem:[%s3 + $0xc0] sm:$0xf]
    %v2183 = vld [vmem:[%s3 + $0xc4] sm:$0xf]
    %v2184 = vld [vmem:[%s3 + $0xc8] sm:$0xf]
    %v2185 = vld [vmem:[%s3 + $0xcc] sm:$0xf]
    %v2186 = vld [vmem:[%s3 + $0xd0] sm:$0xf]
    %v2187 = vld [vmem:[%s3 + $0xd4] sm:$0xf]
    %v2188 = vld [vmem:[%s3 + $0xd8] sm:$0xf]
    %v2189 = vld [vmem:[%s3 + $0xdc] sm:$0xf]
    %v2190 = vld [vmem:[%s3 + $0xe0] sm:$0xf]
    %v2191 = vld [vmem:[%s3 + $0xe4] sm:$0xf]
    %v2192 = vld [vmem:[%s3 + $0xe8] sm:$0xf]
    %v2193 = vld [vmem:[%s3 + $0xec] sm:$0xf]
    %v2194 = vunpack.c.l.bf16 %v2134
    %v2195 = vunpack.c.l.bf16 %v2135
    %v2196 = vunpack.c.l.bf16 %v2136
    %v2197 = vunpack.c.l.bf16 %v2137
    %v2198 = vunpack.c.l.bf16 %v2138
    %v2199 = vunpack.c.l.bf16 %v2139
    %v2200 = vunpack.c.l.bf16 %v2140
    %v2201 = vunpack.c.l.bf16 %v2141
    %v2202 = vunpack.c.l.bf16 %v2142
    %v2203 = vunpack.c.l.bf16 %v2143
    %v2204 = vunpack.c.l.bf16 %v2144
    %v2205 = vunpack.c.l.bf16 %v2145
    %v2206 = vunpack.c.l.bf16 %v2146
    %v2207 = vunpack.c.l.bf16 %v2147
    %v2208 = vunpack.c.l.bf16 %v2148
    %v2209 = vunpack.c.l.bf16 %v2149
    %v2210 = vunpack.c.l.bf16 %v2150
    %v2211 = vunpack.c.l.bf16 %v2151
    %v2212 = vunpack.c.l.bf16 %v2152
    %v2213 = vunpack.c.l.bf16 %v2153
    %v2214 = vunpack.c.l.bf16 %v2154
    %v2215 = vunpack.c.l.bf16 %v2155
    %v2216 = vunpack.c.l.bf16 %v2156
    %v2217 = vunpack.c.l.bf16 %v2157
    %v2218 = vunpack.c.l.bf16 %v2158
    %v2219 = vunpack.c.l.bf16 %v2159
    %v2220 = vunpack.c.l.bf16 %v2160
    %v2221 = vunpack.c.l.bf16 %v2161
    %v2222 = vunpack.c.l.bf16 %v2162
    %v2223 = vunpack.c.l.bf16 %v2163
    %v2224 = vunpack.c.l.bf16 %v2164
    %v2225 = vunpack.c.l.bf16 %v2165
    %v2226 = vunpack.c.l.bf16 %v2166
    %v2227 = vunpack.c.l.bf16 %v2167
    %v2228 = vunpack.c.l.bf16 %v2168
    %v2229 = vunpack.c.l.bf16 %v2169
    %v2230 = vunpack.c.l.bf16 %v2170
    %v2231 = vunpack.c.l.bf16 %v2171
    %v2232 = vunpack.c.l.bf16 %v2172
    %v2233 = vunpack.c.l.bf16 %v2173
    %v2234 = vunpack.c.l.bf16 %v2174
    %v2235 = vunpack.c.l.bf16 %v2175
    %v2236 = vunpack.c.l.bf16 %v2176
    %v2237 = vunpack.c.l.bf16 %v2177
    %v2238 = vunpack.c.l.bf16 %v2178
    %v2239 = vunpack.c.l.bf16 %v2179
    %v2240 = vunpack.c.l.bf16 %v2180
    %v2241 = vunpack.c.l.bf16 %v2181
    %v2242 = vunpack.c.l.bf16 %v2182
    %v2243 = vunpack.c.l.bf16 %v2183
    %v2244 = vunpack.c.l.bf16 %v2184
    %v2245 = vunpack.c.l.bf16 %v2185
    %v2246 = vunpack.c.l.bf16 %v2186
    %v2247 = vunpack.c.l.bf16 %v2187
    %v2248 = vunpack.c.l.bf16 %v2188
    %v2249 = vunpack.c.l.bf16 %v2189
    %v2250 = vunpack.c.l.bf16 %v2190
    %v2251 = vunpack.c.l.bf16 %v2191
    %v2252 = vunpack.c.l.bf16 %v2192
    %v2253 = vunpack.c.l.bf16 %v2193
    %v2254 = vld [vmem:[%s4] sm:$0x1]
    %v2256 = vlaneseq
    %v2257 = vshrl.u32 %v2256, 7
    %v2258 = vsub.s32 0, %v2257
    %v2259 = vrot.slane %v2254, %v2258
    %vm2261 = vcmask 785408
    %v2263 = vsel %vm2261, %v2133, 0
    %2265 = vmatprep.subr.mxu0 0.0
    %2266 = vmatpush1.msra.mxu0 %v2209
    %2267 = vmatprep.subr.mxu0 0.0
    %2268 = vmatpush1.msra.mxu0 %v2208
    %2269 = vmatprep.subr.mxu0 0.0
    %2270 = vmatpush1.msra.mxu0 %v2207
    %2271 = vmatprep.subr.mxu0 0.0
    %2272 = vmatpush1.msra.mxu0 %v2206
    %2273 = vmatprep.subr.mxu0 0.0
    %2274 = vmatpush1.msra.mxu0 %v2205
    %2275 = vmatprep.subr.mxu0 0.0
    %2276 = vmatpush1.msra.mxu0 %v2204
    %2277 = vmatprep.subr.mxu0 0.0
    %2278 = vmatpush1.msra.mxu0 %v2203
    %2279 = vmatprep.subr.mxu0 0.0
    %2280 = vmatpush1.msra.mxu0 %v2202
    %2281 = vmatprep.subr.mxu0 0.0
    %2282 = vmatpush1.msra.mxu0 %v2201
    %2283 = vmatprep.subr.mxu0 0.0
    %2284 = vmatpush1.msra.mxu0 %v2200
    %2285 = vmatprep.subr.mxu0 0.0
    %2286 = vmatpush1.msra.mxu0 %v2199
    %2287 = vmatprep.subr.mxu0 0.0
    %2288 = vmatpush1.msra.mxu0 %v2198
    %2289 = vmatprep.subr.mxu0 0.0
    %2290 = vmatpush1.msra.mxu0 %v2197
    %2291 = vmatprep.subr.mxu0 0.0
    %2292 = vmatpush1.msra.mxu0 %v2196
    %2293 = vmatprep.subr.mxu0 0.0
    %2294 = vmatpush1.msra.mxu0 %v2195
    %2295 = vmatprep.subr.mxu0 0.0
    %2296 = vmatpush1.msra.mxu0 %v2194
    %2297 = vmatprep.subr.mxu0 0.0
    %2298 = vmatpush2.msra.mxu0 %v2225
    %2299 = vmatprep.subr.mxu0 0.0
    %2300 = vmatpush2.msra.mxu0 %v2224
    %2301 = vmatprep.subr.mxu0 0.0
    %2302 = vmatpush2.msra.mxu0 %v2223
    %2303 = vmatprep.subr.mxu0 0.0
    %2304 = vmatpush2.msra.mxu0 %v2222
    %2305 = vmatprep.subr.mxu0 0.0
    %2306 = vmatpush2.msra.mxu0 %v2221
    %2307 = vmatprep.subr.mxu0 0.0
    %2308 = vmatpush2.msra.mxu0 %v2220
    %2309 = vmatprep.subr.mxu0 0.0
    %2310 = vmatpush2.msra.mxu0 %v2219
    %2311 = vmatprep.subr.mxu0 0.0
    %2312 = vmatpush2.msra.mxu0 %v2218
    %2313 = vmatprep.subr.mxu0 0.0
    %2314 = vmatpush2.msra.mxu0 %v2217
    %2315 = vmatprep.subr.mxu0 0.0
    %2316 = vmatpush2.msra.mxu0 %v2216
    %2317 = vmatprep.subr.mxu0 0.0
    %2318 = vmatpush2.msra.mxu0 %v2215
    %2319 = vmatprep.subr.mxu0 0.0
    %2320 = vmatpush2.msra.mxu0 %v2214
    %2321 = vmatprep.subr.mxu0 0.0
    %2322 = vmatpush2.msra.mxu0 %v2213
    %2323 = vmatprep.subr.mxu0 0.0
    %2324 = vmatpush2.msra.mxu0 %v2212
    %2325 = vmatprep.subr.mxu0 0.0
    %2326 = vmatpush2.msra.mxu0 %v2211
    %2327 = vmatprep.subr.mxu0 0.0
    %2328 = vmatpush2.msra.mxu0 %v2210
    %2329 = vmatprep.mubr.f32.mxu0 %v2131
    %2330 = vmatmul.mubr.f32.gmra.mxu0 %v2130
    %v2331 = vpop.f32.mrf.mxu0
    %v2332 = vadd.f32 %v2259, %v2331
    %v2333 = vpop.f32.mrf.mxu0
    %2334 = vdwg.mxu0
    %2335 = vmatprep.subr.mxu0 0.0
    %2336 = vmatpush1.msra.mxu0 %v2241
    %2337 = vmatprep.subr.mxu0 0.0
    %2338 = vmatpush1.msra.mxu0 %v2240
    %2339 = vmatprep.subr.mxu0 0.0
    %2340 = vmatpush1.msra.mxu0 %v2239
    %2341 = vmatprep.subr.mxu0 0.0
    %2342 = vmatpush1.msra.mxu0 %v2238
    %2343 = vmatprep.subr.mxu0 0.0
    %2344 = vmatpush1.msra.mxu0 %v2237
    %2345 = vmatprep.subr.mxu0 0.0
    %2346 = vmatpush1.msra.mxu0 %v2236
    %2347 = vmatprep.subr.mxu0 0.0
    %2348 = vmatpush1.msra.mxu0 %v2235
    %2349 = vmatprep.subr.mxu0 0.0
    %2350 = vmatpush1.msra.mxu0 %v2234
    %2351 = vmatprep.subr.mxu0 0.0
    %2352 = vmatpush1.msra.mxu0 %v2233
    %2353 = vmatprep.subr.mxu0 0.0
    %2354 = vmatpush1.msra.mxu0 %v2232
    %2355 = vmatprep.subr.mxu0 0.0
    %2356 = vmatpush1.msra.mxu0 %v2231
    %2357 = vmatprep.subr.mxu0 0.0
    %2358 = vmatpush1.msra.mxu0 %v2230
    %2359 = vmatprep.subr.mxu0 0.0
    %2360 = vmatpush1.msra.mxu0 %v2229
    %2361 = vmatprep.subr.mxu0 0.0
    %2362 = vmatpush1.msra.mxu0 %v2228
    %2363 = vmatprep.subr.mxu0 0.0
    %2364 = vmatpush1.msra.mxu0 %v2227
    %2365 = vmatprep.subr.mxu0 0.0
    %2366 = vmatpush1.msra.mxu0 %v2226
    %2367 = vmatprep.subr.mxu0 0.0
    %2368 = vmatpush2.msra.mxu0 0.0
    %2369 = vmatprep.subr.mxu0 0.0
    %2370 = vmatpush2.msra.mxu0 0.0
    %2371 = vmatprep.subr.mxu0 0.0
    %2372 = vmatpush2.msra.mxu0 0.0
    %2373 = vmatprep.subr.mxu0 0.0
    %2374 = vmatpush2.msra.mxu0 0.0
    %2375 = vmatprep.subr.mxu0 0.0
    %2376 = vmatpush2.msra.mxu0 %v2253
    %2377 = vmatprep.subr.mxu0 0.0
    %2378 = vmatpush2.msra.mxu0 %v2252
    %2379 = vmatprep.subr.mxu0 0.0
    %2380 = vmatpush2.msra.mxu0 %v2251
    %2381 = vmatprep.subr.mxu0 0.0
    %2382 = vmatpush2.msra.mxu0 %v2250
    %2383 = vmatprep.subr.mxu0 0.0
    %2384 = vmatpush2.msra.mxu0 %v2249
    %2385 = vmatprep.subr.mxu0 0.0
    %2386 = vmatpush2.msra.mxu0 %v2248
    %2387 = vmatprep.subr.mxu0 0.0
    %2388 = vmatpush2.msra.mxu0 %v2247
    %2389 = vmatprep.subr.mxu0 0.0
    %2390 = vmatpush2.msra.mxu0 %v2246
    %2391 = vmatprep.subr.mxu0 0.0
    %2392 = vmatpush2.msra.mxu0 %v2245
    %2393 = vmatprep.subr.mxu0 0.0
    %2394 = vmatpush2.msra.mxu0 %v2244
    %2395 = vmatprep.subr.mxu0 0.0
    %2396 = vmatpush2.msra.mxu0 %v2243
    %2397 = vmatprep.subr.mxu0 0.0
    %2398 = vmatpush2.msra.mxu0 %v2242
    %2399 = vmatprep.mubr.f32.mxu0 %v2263
    %2400 = vmatmul.mubr.f32.gmra.mxu0 %v2132
    %v2401 = vpop.f32.mrf.mxu0
    %v2402 = vadd.f32 %v2332, %v2401
    %v2403 = vpop.f32.mrf.mxu0
    %2404 = vdwg.mxu0
    %v2405 = vmax.f32 %v2402, 0.0
    %v2406 = vld [vmem:[%s5] sm:$0xf]
    %v2407 = vld [vmem:[%s5 + $0x4] sm:$0xf]
    %v2408 = vld [vmem:[%s5 + $0x8] sm:$0xf]
    %v2409 = vld [vmem:[%s5 + $0xc] sm:$0xf]
    %v2410 = vld [vmem:[%s5 + $0x10] sm:$0xf]
    %v2411 = vld [vmem:[%s5 + $0x14] sm:$0xf]
    %v2412 = vld [vmem:[%s5 + $0x18] sm:$0xf]
    %v2413 = vld [vmem:[%s5 + $0x1c] sm:$0xf]
    %v2414 = vld [vmem:[%s5 + $0x20] sm:$0xf]
    %v2415 = vld [vmem:[%s5 + $0x24] sm:$0xf]
    %v2416 = vld [vmem:[%s5 + $0x28] sm:$0xf]
    %v2417 = vld [vmem:[%s5 + $0x2c] sm:$0xf]
    %v2418 = vld [vmem:[%s5 + $0x30] sm:$0xf]
    %v2419 = vld [vmem:[%s5 + $0x34] sm:$0xf]
    %v2420 = vld [vmem:[%s5 + $0x38] sm:$0xf]
    %v2421 = vunpack.c.l.bf16 %v2406
    %v2422 = vunpack.c.l.bf16 %v2407
    %v2423 = vunpack.c.l.bf16 %v2408
    %v2424 = vunpack.c.l.bf16 %v2409
    %v2425 = vunpack.c.l.bf16 %v2410
    %v2426 = vunpack.c.l.bf16 %v2411
    %v2427 = vunpack.c.l.bf16 %v2412
    %v2428 = vunpack.c.l.bf16 %v2413
    %v2429 = vunpack.c.l.bf16 %v2414
    %v2430 = vunpack.c.l.bf16 %v2415
    %v2431 = vunpack.c.l.bf16 %v2416
    %v2432 = vunpack.c.l.bf16 %v2417
    %v2433 = vunpack.c.l.bf16 %v2418
    %v2434 = vunpack.c.l.bf16 %v2419
    %v2435 = vunpack.c.l.bf16 %v2420
    %v2436 = vld [vmem:[%s6] sm:$0x1]
    %v2438 = vlaneseq
    %v2439 = vshrl.u32 %v2438, 7
    %v2440 = vsub.s32 0, %v2439
    %v2441 = vrot.slane %v2436, %v2440
    %vm2443 = vcmask 982016
    %v2445 = vsel %vm2443, %v2405, 0
    %2447 = vmatprep.subr.mxu0 0.0
    %2448 = vmatpush1.msra.mxu0 0.0
    %2449 = vmatprep.subr.mxu0 0.0
    %2450 = vmatpush1.msra.mxu0 %v2435
    %2451 = vmatprep.subr.mxu0 0.0
    %2452 = vmatpush1.msra.mxu0 %v2434
    %2453 = vmatprep.subr.mxu0 0.0
    %2454 = vmatpush1.msra.mxu0 %v2433
    %2455 = vmatprep.subr.mxu0 0.0
    %2456 = vmatpush1.msra.mxu0 %v2432
    %2457 = vmatprep.subr.mxu0 0.0
    %2458 = vmatpush1.msra.mxu0 %v2431
    %2459 = vmatprep.subr.mxu0 0.0
    %2460 = vmatpush1.msra.mxu0 %v2430
    %2461 = vmatprep.subr.mxu0 0.0
    %2462 = vmatpush1.msra.mxu0 %v2429
    %2463 = vmatprep.subr.mxu0 0.0
    %2464 = vmatpush1.msra.mxu0 %v2428
    %2465 = vmatprep.subr.mxu0 0.0
    %2466 = vmatpush1.msra.mxu0 %v2427
    %2467 = vmatprep.subr.mxu0 0.0
    %2468 = vmatpush1.msra.mxu0 %v2426
    %2469 = vmatprep.subr.mxu0 0.0
    %2470 = vmatpush1.msra.mxu0 %v2425
    %2471 = vmatprep.subr.mxu0 0.0
    %2472 = vmatpush1.msra.mxu0 %v2424
    %2473 = vmatprep.subr.mxu0 0.0
    %2474 = vmatpush1.msra.mxu0 %v2423
    %2475 = vmatprep.subr.mxu0 0.0
    %2476 = vmatpush1.msra.mxu0 %v2422
    %2477 = vmatprep.subr.mxu0 0.0
    %2478 = vmatpush1.msra.mxu0 %v2421
    %2479 = vmatprep.subr.mxu0 0.0
    %2480 = vmatpush2.msra.mxu0 0.0
    %2481 = vmatprep.subr.mxu0 0.0
    %2482 = vmatpush2.msra.mxu0 0.0
    %2483 = vmatprep.subr.mxu0 0.0
    %2484 = vmatpush2.msra.mxu0 0.0
    %2485 = vmatprep.subr.mxu0 0.0
    %2486 = vmatpush2.msra.mxu0 0.0
    %2487 = vmatprep.subr.mxu0 0.0
    %2488 = vmatpush2.msra.mxu0 0.0
    %2489 = vmatprep.subr.mxu0 0.0
    %2490 = vmatpush2.msra.mxu0 0.0
    %2491 = vmatprep.subr.mxu0 0.0
    %2492 = vmatpush2.msra.mxu0 0.0
    %2493 = vmatprep.subr.mxu0 0.0
    %2494 = vmatpush2.msra.mxu0 0.0
    %2495 = vmatprep.subr.mxu0 0.0
    %2496 = vmatpush2.msra.mxu0 0.0
    %2497 = vmatprep.subr.mxu0 0.0
    %2498 = vmatpush2.msra.mxu0 0.0
    %2499 = vmatprep.subr.mxu0 0.0
    %2500 = vmatpush2.msra.mxu0 0.0
    %2501 = vmatprep.subr.mxu0 0.0
    %2502 = vmatpush2.msra.mxu0 0.0
    %2503 = vmatprep.subr.mxu0 0.0
    %2504 = vmatpush2.msra.mxu0 0.0
    %2505 = vmatprep.subr.mxu0 0.0
    %2506 = vmatpush2.msra.mxu0 0.0
    %2507 = vmatprep.subr.mxu0 0.0
    %2508 = vmatpush2.msra.mxu0 0.0
    %2509 = vmatprep.subr.mxu0 0.0
    %2510 = vmatpush2.msra.mxu0 0.0
    %2511 = vmatprep.mubr.f32.mxu0 0.0
    %2512 = vmatmul.mubr.f32.gmra.mxu0 %v2445
    %v2513 = vpop.f32.mrf.mxu0
    %v2514 = vadd.f32 %v2441, %v2513
    %v2515 = vpop.f32.mrf.mxu0
    %2516 = vdwg.mxu0
    %v2517 = vmax.f32 %v2514, 0.0
    %v2518 = vld [vmem:[%s7] sm:$0xf]
    %v2519 = vld [vmem:[%s7 + $0x4] sm:$0xf]
    %v2520 = vld [vmem:[%s7 + $0x8] sm:$0xf]
    %v2521 = vld [vmem:[%s7 + $0xc] sm:$0x7]
    %v2522 = vunpack.c.l.bf16 %v2518
    %v2523 = vunpack.c.l.bf16 %v2519
    %v2524 = vunpack.c.l.bf16 %v2520
    %v2525 = vunpack.c.l.bf16 %v2521
    %v2526 = vld [vmem:[%s8] sm:$0x1]
    %v2528 = vlaneseq
    %v2529 = vshrl.u32 %v2528, 7
    %v2530 = vsub.s32 0, %v2529
    %v2531 = vrot.slane %v2526, %v2530
    %vm2533 = vcmask 244736
    %v2535 = vsel %vm2533, %v2517, 0
    %vm2537 = vcmask 1045504
    %v2539 = vsel %vm2537, %v2525, 0
    %2541 = vmatprep.subr.mxu0 0.0
    %2542 = vmatpush1.msra.mxu0 0.0
    %2543 = vmatprep.subr.mxu0 0.0
    %2544 = vmatpush1.msra.mxu0 0.0
    %2545 = vmatprep.subr.mxu0 0.0
    %2546 = vmatpush1.msra.mxu0 0.0
    %2547 = vmatprep.subr.mxu0 0.0
    %2548 = vmatpush1.msra.mxu0 0.0
    %2549 = vmatprep.subr.mxu0 0.0
    %2550 = vmatpush1.msra.mxu0 0.0
    %2551 = vmatprep.subr.mxu0 0.0
    %2552 = vmatpush1.msra.mxu0 0.0
    %2553 = vmatprep.subr.mxu0 0.0
    %2554 = vmatpush1.msra.mxu0 0.0
    %2555 = vmatprep.subr.mxu0 0.0
    %2556 = vmatpush1.msra.mxu0 0.0
    %2557 = vmatprep.subr.mxu0 0.0
    %2558 = vmatpush1.msra.mxu0 0.0
    %2559 = vmatprep.subr.mxu0 0.0
    %2560 = vmatpush1.msra.mxu0 0.0
    %2561 = vmatprep.subr.mxu0 0.0
    %2562 = vmatpush1.msra.mxu0 0.0
    %2563 = vmatprep.subr.mxu0 0.0
    %2564 = vmatpush1.msra.mxu0 0.0
    %2565 = vmatprep.subr.mxu0 0.0
    %2566 = vmatpush1.msra.mxu0 %v2539
    %2567 = vmatprep.subr.mxu0 0.0
    %2568 = vmatpush1.msra.mxu0 %v2524
    %2569 = vmatprep.subr.mxu0 0.0
    %2570 = vmatpush1.msra.mxu0 %v2523
    %2571 = vmatprep.subr.mxu0 0.0
    %2572 = vmatpush1.msra.mxu0 %v2522
    %2573 = vmatprep.subr.mxu0 0.0
    %2574 = vmatpush2.msra.mxu0 0.0
    %2575 = vmatprep.subr.mxu0 0.0
    %2576 = vmatpush2.msra.mxu0 0.0
    %2577 = vmatprep.subr.mxu0 0.0
    %2578 = vmatpush2.msra.mxu0 0.0
    %2579 = vmatprep.subr.mxu0 0.0
    %2580 = vmatpush2.msra.mxu0 0.0
    %2581 = vmatprep.subr.mxu0 0.0
    %2582 = vmatpush2.msra.mxu0 0.0
    %2583 = vmatprep.subr.mxu0 0.0
    %2584 = vmatpush2.msra.mxu0 0.0
    %2585 = vmatprep.subr.mxu0 0.0
    %2586 = vmatpush2.msra.mxu0 0.0
    %2587 = vmatprep.subr.mxu0 0.0
    %2588 = vmatpush2.msra.mxu0 0.0
    %2589 = vmatprep.subr.mxu0 0.0
    %2590 = vmatpush2.msra.mxu0 0.0
    %2591 = vmatprep.subr.mxu0 0.0
    %2592 = vmatpush2.msra.mxu0 0.0
    %2593 = vmatprep.subr.mxu0 0.0
    %2594 = vmatpush2.msra.mxu0 0.0
    %2595 = vmatprep.subr.mxu0 0.0
    %2596 = vmatpush2.msra.mxu0 0.0
    %2597 = vmatprep.subr.mxu0 0.0
    %2598 = vmatpush2.msra.mxu0 0.0
    %2599 = vmatprep.subr.mxu0 0.0
    %2600 = vmatpush2.msra.mxu0 0.0
    %2601 = vmatprep.subr.mxu0 0.0
    %2602 = vmatpush2.msra.mxu0 0.0
    %2603 = vmatprep.subr.mxu0 0.0
    %2604 = vmatpush2.msra.mxu0 0.0
    %2605 = vmatprep.mubr.f32.mxu0 0.0
    %2606 = vmatmul.mubr.f32.gmra.mxu0 %v2535
    %v2607 = vpop.f32.mrf.mxu0
    %v2608 = vadd.f32 %v2531, %v2607
    %v2609 = vpop.f32.mrf.mxu0
    %2610 = vdwg.mxu0
    %vm2611 = vcmask 9216
    %2612 = vst.msk [vmem:[#allocation2] sm:$0x3] %vm2611, %v2608
    // Predicated region
    $region38: #{convnet256_forward.7} parent=1 // pred_check
      _
    $region39: #{convnet256_forward.7} parent=1 // pred_check_branch
      %2614 = sbr.rel (0) target = $region41
    $region40: #{convnet256_forward.7} parent=1 // pred_region
      %s2616 = ssub.s32 32, 32
      %2617 = vsyncadd [#allocation3], %s2616
      %s2619 = sshll.u32 [#allocation2], 4
      %s2620 = int_to_ptr.vmem [resolvable:$true] %s2619
      %2622 = dma.vmem_to_hbm [thread:$0]  %s2620, 32, %s9, [#allocation3]
    $region41: #{convnet256_forward.7} parent=1 // pred_fallthru
      _
    // Predicated region
    $region42: #{convnet256_forward.7} parent=1 // pred_check
      _
    $region43: #{convnet256_forward.7} parent=1 // pred_check_branch
      %2624 = sbr.rel (0) target = $region45
    $region44: #{convnet256_forward.7} parent=1 // pred_region
      %2625 = dma.done [#allocation3], 32
    $region45: #{convnet256_forward.7} parent=1 // pred_fallthru
      _
    %2626 = vsyncpa [#allocation3], 1

</llo_original>
